<compile_context>
chip_gen: v5e
topology: v5e:2x2
jax: 0.10.0
libtpu: 0.0.40
codegen_flags: <defaults>
</compile_context>

<pallas_src>
import jax
import jax.numpy as jnp
from jax import lax
from jax.experimental import pallas as pl
from jax.experimental.pallas import tpu as pltpu


def temporal_encoder_kernel(x_ref, wih_ref, whh_ref, bgi_ref, bhn_ref,
                            wl_ref, bl_ref, out_ref, gi_scr, hs_scr):
    """One grid step == one independent chunk of sequences (all T timesteps)."""
    T, NB, F = x_ref.shape
    H = whh_ref.shape[0]

    x_blk = x_ref[...]                                        # (T, NB, F) f32

    # ---- Phase 1: hoisted input projection (off the serial path) ----------
    # One big bf16 MXU matmul with f32 accumulation.  r/z biases already
    # folded (b_ih + b_hh); the n slice carries only b_in here.
    x2d = x_blk.reshape(T * NB, F).astype(jnp.bfloat16)
    gi = jnp.dot(x2d, wih_ref[...], preferred_element_type=jnp.float32)
    gi = gi + bgi_ref[...]
    gi_scr[...] = gi.reshape(T, NB, 3 * H)

    # ---- Phase 2: sequential recurrence (only h @ W_hh^T per step) --------
    whh = whh_ref[...]                                        # (H, 3H) bf16
    bhn = bhn_ref[...]                                        # (1, H)  f32

    def step(t, h):                                           # h: (NB, H) f32
        gi_t = gi_scr[t]                                      # (NB, 3H) f32
        gh = jnp.dot(h.astype(jnp.bfloat16), whh,
                     preferred_element_type=jnp.float32)      # (NB, 3H) f32
        r = jax.nn.sigmoid(gi_t[:, 0:H] + gh[:, 0:H])
        z = jax.nn.sigmoid(gi_t[:, H:2 * H] + gh[:, H:2 * H])
        n = jnp.tanh(gi_t[:, 2 * H:3 * H] + r * (gh[:, 2 * H:3 * H] + bhn))
        h_new = (1.0 - z) * n + z * h
        # ReLU(h_t) is only ever consumed as a bf16 MXU operand -> store bf16.
        hs_scr[t] = jnp.maximum(h_new, 0.0).astype(jnp.bfloat16)
        return h_new

    lax.fori_loop(0, T, step, jnp.zeros((NB, H), jnp.float32), unroll=True)

    # ---- Phase 3: hoisted Linear(ReLU(h)) + bias + residual ----------------
    hs = hs_scr[...].reshape(T * NB, H)                       # (T*NB, H) bf16
    y = jnp.dot(hs, wl_ref[...], preferred_element_type=jnp.float32)
    y = y + bl_ref[...]
    out_ref[...] = (y.reshape(T, NB, F) + x_blk).astype(out_ref.dtype)


def _const_spec(shape, single_buffer):
    """BlockSpec for a block that never changes across the grid."""
    ndim = len(shape)
    index_map = lambda b: (0,) * ndim
    if single_buffer:
        # Constant block: the default double buffer only wastes VMEM.
        return pl.BlockSpec(shape, index_map, pipeline_mode=pl.Buffered(1))
    return pl.BlockSpec(shape, index_map)


def _run_pallas(x_tnf, params, batch_chunk, single_buffer_weights):
    T, N, F = x_tnf.shape
    wih_t, whh_t, b_gi, b_hn, wl_t, b_l = params
    H = whh_t.shape[0]
    n_chunks = N // batch_chunk

    grid_spec = pltpu.PrefetchScalarGridSpec(
        num_scalar_prefetch=0,
        grid=(n_chunks,),                                     # batch chunks only
        in_specs=[
            pl.BlockSpec((T, batch_chunk, F), lambda b: (0, b, 0)),   # x chunk
            _const_spec((F, 3 * H), single_buffer_weights),           # W_ih^T bf16
            _const_spec((H, 3 * H), single_buffer_weights),           # W_hh^T bf16
            _const_spec((1, 3 * H), single_buffer_weights),           # folded gi bias
            _const_spec((1, H), single_buffer_weights),               # b_hh (n gate)
            _const_spec((H, F), single_buffer_weights),               # W_lin^T bf16
            _const_spec((1, F), single_buffer_weights),               # b_lin
        ],
        out_specs=pl.BlockSpec((T, batch_chunk, F), lambda b: (0, b, 0)),
        scratch_shapes=[
            pltpu.VMEM((T, batch_chunk, 3 * H), jnp.float32),  # hoisted gi (f32)
            pltpu.VMEM((T, batch_chunk, H), jnp.bfloat16),     # ReLU(h_t) history
        ],
    )
    return pl.pallas_call(
        temporal_encoder_kernel,
        out_shape=jax.ShapeDtypeStruct((T, N, F), x_tnf.dtype),
        grid_spec=grid_spec,
        compiler_params=pltpu.CompilerParams(
            dimension_semantics=("parallel",),   # chunks independent -> 2 TCs on v7x
            vmem_limit_bytes=64 * 1024 * 1024,   # > scoped default; <= v7x physical
        ),
    )(x_tnf, wih_t, whh_t, b_gi, b_hn, wl_t, b_l)


def temporal_encoder(x, params, *, batch_chunk=16):
    """x: (N, T, F) float32; params from prepare_params(). Returns (N, T, F)."""
    N, T, F = x.shape
    assert N % batch_chunk == 0 and batch_chunk % 8 == 0
    x_tnf = jnp.transpose(x, (1, 0, 2))                       # time-major (T, N, F)
    try:
        y_tnf = _run_pallas(x_tnf, params, batch_chunk, single_buffer_weights=True)
    except Exception:
        # Fallback if this JAX build rejects pl.Buffered(1) on constant blocks.
        y_tnf = _run_pallas(x_tnf, params, batch_chunk, single_buffer_weights=False)
    return jnp.transpose(y_tnf, (1, 0, 2))


def make_raw_params(key, F, H):
    """PyTorch-style uniform(-1/sqrt(H), 1/sqrt(H)) parameters, float32."""
    k = 1.0 / jnp.sqrt(jnp.float32(H))
    keys = jax.random.split(key, 6)
    w_ih = jax.random.uniform(keys[0], (3 * H, F), jnp.float32, -k, k)
    w_hh = jax.random.uniform(keys[1], (3 * H, H), jnp.float32, -k, k)
    b_ih = jax.random.uniform(keys[2], (3 * H,), jnp.float32, -k, k)
    b_hh = jax.random.uniform(keys[3], (3 * H,), jnp.float32, -k, k)
    w_l = jax.random.uniform(keys[4], (F, H), jnp.float32, -k, k)
    b_l = jax.random.uniform(keys[5], (F,), jnp.float32, -k, k)
    return w_ih, w_hh, b_ih, b_hh, w_l, b_l


def prepare_params(raw):
    """Kernel layout: transposed bf16 weights, folded f32 biases."""
    w_ih, w_hh, b_ih, b_hh, w_l, b_l = raw
    H = w_hh.shape[1]
    b_gi = jnp.concatenate([b_ih[:2 * H] + b_hh[:2 * H], b_ih[2 * H:]])
    return (w_ih.T.astype(jnp.bfloat16),                      # (F, 3H)
            w_hh.T.astype(jnp.bfloat16),                      # (H, 3H)
            b_gi.reshape(1, 3 * H).astype(jnp.float32),
            b_hh[2 * H:].reshape(1, H).astype(jnp.float32),
            w_l.T.astype(jnp.bfloat16),                       # (H, F)
            b_l.reshape(1, -1).astype(jnp.float32))


def reference(x, raw):
    """Pure-JAX reference with identical math (bf16 MXU operands, f32 acc)."""
    w_ih, w_hh, b_ih, b_hh, w_l, b_l = raw
    N, T, F = x.shape
    H = w_hh.shape[1]
    x_tnf = jnp.transpose(x, (1, 0, 2))
    wih_t = w_ih.T.astype(jnp.bfloat16)
    whh_t = w_hh.T.astype(jnp.bfloat16)
    wl_t = w_l.T.astype(jnp.bfloat16)

    gi = jnp.dot(x_tnf.reshape(T * N, F).astype(jnp.bfloat16), wih_t,
                 preferred_element_type=jnp.float32) + b_ih
    gi = gi.reshape(T, N, 3 * H)

    def step(h, gi_t):
        gh = jnp.dot(h.astype(jnp.bfloat16), whh_t,
                     preferred_element_type=jnp.float32) + b_hh
        r = jax.nn.sigmoid(gi_t[:, :H] + gh[:, :H])
        z = jax.nn.sigmoid(gi_t[:, H:2 * H] + gh[:, H:2 * H])
        n = jnp.tanh(gi_t[:, 2 * H:] + r * gh[:, 2 * H:])
        h_new = (1.0 - z) * n + z * h
        return h_new, jnp.maximum(h_new, 0.0).astype(jnp.bfloat16)

    _, hs = jax.lax.scan(step, jnp.zeros((N, H), jnp.float32), gi)
    y = jnp.dot(hs.reshape(T * N, H), wl_t,
                preferred_element_type=jnp.float32) + b_l
    y = y.reshape(T, N, F) + x_tnf
    return jnp.transpose(y, (1, 0, 2))


if __name__ == "__main__":
    # Small analogs of the real sizes (batch, seq, 2048, 2048).
    N, T, F, H = 32, 8, 256, 128
    key = jax.random.PRNGKey(0)
    kx, kp = jax.random.split(key)
    x = jax.random.normal(kx, (N, T, F), jnp.float32)
    raw = make_raw_params(kp, F, H)
    params = prepare_params(raw)

    y = jax.block_until_ready(temporal_encoder(x, params, batch_chunk=16))
    y_ref = jax.block_until_ready(reference(x, raw))

    assert y.shape == (N, T, F)
    err = float(jnp.max(jnp.abs(y - y_ref)))
    # Matched bf16-operand reference; tolerance covers accumulation-order and
    # transcendental implementation differences between XLA:TPU and Mosaic.
    assert jnp.allclose(y, y_ref, atol=5e-3, rtol=5e-3), f"max |diff| = {err}"
    print("KERNEL_OK")
</pallas_src>

<mosaic_0001>
module attributes {stable_mosaic.version = 11 : i64} {
  func.func @temporal_encoder_kernel(%arg0: i32, %arg1: memref<8x16x256xf32, #tpu.memory_space<vmem>>, %arg2: memref<256x384xbf16, #tpu.memory_space<vmem>>, %arg3: memref<128x384xbf16, #tpu.memory_space<vmem>>, %arg4: memref<1x384xf32, #tpu.memory_space<vmem>>, %arg5: memref<1x128xf32, #tpu.memory_space<vmem>>, %arg6: memref<128x256xbf16, #tpu.memory_space<vmem>>, %arg7: memref<1x256xf32, #tpu.memory_space<vmem>>, %arg8: memref<8x16x256xf32, #tpu.memory_space<vmem>>, %arg9: memref<8x16x384xf32, #tpu.memory_space<vmem>>, %arg10: memref<8x16x128xbf16, #tpu.memory_space<vmem>>) attributes {dimension_semantics = [#tpu.dimension_semantics<parallel>], iteration_bounds = array<i64: 2>, scalar_prefetch = 0 : i64, scratch_operands = 2 : i64, tpu.core_type = #tpu.core_type<tc>, window_params = [{transform_indices = @transform_0, window_bounds = array<i64: 8, 16, 256>}, {pipeline_mode = #tpu.pipeline_mode<synchronous>, transform_indices = @transform_1, window_bounds = array<i64: 256, 384>}, {pipeline_mode = #tpu.pipeline_mode<synchronous>, transform_indices = @transform_2, window_bounds = array<i64: 128, 384>}, {pipeline_mode = #tpu.pipeline_mode<synchronous>, transform_indices = @transform_3, window_bounds = array<i64: 1, 384>}, {pipeline_mode = #tpu.pipeline_mode<synchronous>, transform_indices = @transform_4, window_bounds = array<i64: 1, 128>}, {pipeline_mode = #tpu.pipeline_mode<synchronous>, transform_indices = @transform_5, window_bounds = array<i64: 128, 256>}, {pipeline_mode = #tpu.pipeline_mode<synchronous>, transform_indices = @transform_6, window_bounds = array<i64: 1, 256>}, {transform_indices = @transform_7, window_bounds = array<i64: 8, 16, 256>}]} {
    %c0 = arith.constant 0 : index
    %c0_0 = arith.constant 0 : index
    %c0_1 = arith.constant 0 : index
    %0 = vector.load %arg1[%c0, %c0_0, %c0_1] : memref<8x16x256xf32, #tpu.memory_space<vmem>>, vector<8x16x256xf32>
    %1 = vector.shape_cast %0 : vector<8x16x256xf32> to vector<128x256xf32>
    %2 = arith.truncf %1 : vector<128x256xf32> to vector<128x256xbf16>
    %c0_2 = arith.constant 0 : index
    %c0_3 = arith.constant 0 : index
    %3 = vector.load %arg2[%c0_2, %c0_3] : memref<256x384xbf16, #tpu.memory_space<vmem>>, vector<256x384xbf16>
    %cst = arith.constant dense<0.000000e+00> : vector<128x384xf32>
    %4 = tpu.matmul %2, %3, %cst {dimension_numbers = #tpu.dot_dimension_numbers<[1], [0], [0], [1], [0, 0, 1, 1], [], []>} : vector<128x256xbf16>, vector<256x384xbf16>, vector<128x384xf32> -> vector<128x384xf32>
    %c0_4 = arith.constant 0 : index
    %c0_5 = arith.constant 0 : index
    %5 = vector.load %arg4[%c0_4, %c0_5] : memref<1x384xf32, #tpu.memory_space<vmem>>, vector<1x384xf32>
    %6 = vector.broadcast %5 : vector<1x384xf32> to vector<128x384xf32>
    %7 = arith.addf %4, %6 : vector<128x384xf32>
    %8 = vector.shape_cast %7 : vector<128x384xf32> to vector<8x16x384xf32>
    %c0_6 = arith.constant 0 : index
    %c0_7 = arith.constant 0 : index
    %c0_8 = arith.constant 0 : index
    %9 = vector.load %arg9[%c0_6, %c0_7, %c0_8] : memref<8x16x384xf32, #tpu.memory_space<vmem>>, vector<8x16x384xf32>
    tpu.vector_store %arg9[%c0_6, %c0_7, %c0_8], %8 {strides = array<i32>} : memref<8x16x384xf32, #tpu.memory_space<vmem>>, vector<8x16x384xf32>,
    %c0_9 = arith.constant 0 : index
    %c0_10 = arith.constant 0 : index
    %10 = vector.load %arg3[%c0_9, %c0_10] : memref<128x384xbf16, #tpu.memory_space<vmem>>, vector<128x384xbf16>
    %c0_11 = arith.constant 0 : index
    %c0_12 = arith.constant 0 : index
    %11 = vector.load %arg5[%c0_11, %c0_12] : memref<1x128xf32, #tpu.memory_space<vmem>>, vector<1x128xf32>
    %cst_13 = arith.constant 0.000000e+00 : f32
    %12 = vector.broadcast %cst_13 : f32 to vector<16x128xf32>
    %c0_i32 = arith.constant 0 : i32
    %13 = arith.index_cast %c0_i32 : i32 to index
    %c0_14 = arith.constant 0 : index
    %c0_15 = arith.constant 0 : index
    %14 = vector.load %arg9[%13, %c0_14, %c0_15] : memref<8x16x384xf32, #tpu.memory_space<vmem>>, vector<1x16x384xf32>
    %15 = vector.shape_cast %14 : vector<1x16x384xf32> to vector<16x384xf32>
    %16 = arith.truncf %12 : vector<16x128xf32> to vector<16x128xbf16>
    %cst_16 = arith.constant dense<0.000000e+00> : vector<16x384xf32>
    %17 = tpu.matmul %16, %10, %cst_16 {dimension_numbers = #tpu.dot_dimension_numbers<[1], [0], [0], [1], [0, 0, 1, 1], [], []>} : vector<16x128xbf16>, vector<128x384xbf16>, vector<16x384xf32> -> vector<16x384xf32>
    %18 = vector.extract_strided_slice %15 {offsets = [0, 0], sizes = [16, 128], strides = [1, 1]} : vector<16x384xf32> to vector<16x128xf32>
    %19 = vector.extract_strided_slice %17 {offsets = [0, 0], sizes = [16, 128], strides = [1, 1]} : vector<16x384xf32> to vector<16x128xf32>
    %20 = arith.addf %18, %19 : vector<16x128xf32>
    %21 = arith.negf %20 : vector<16x128xf32>
    %22 = math.exp %21 : vector<16x128xf32>
    %cst_17 = arith.constant 1.000000e+00 : f32
    %23 = vector.broadcast %cst_17 : f32 to vector<16x128xf32>
    %24 = arith.addf %23, %22 : vector<16x128xf32>
    %25 = arith.divf %23, %24 : vector<16x128xf32>
    %26 = vector.extract_strided_slice %15 {offsets = [0, 128], sizes = [16, 128], strides = [1, 1]} : vector<16x384xf32> to vector<16x128xf32>
    %27 = vector.extract_strided_slice %17 {offsets = [0, 128], sizes = [16, 128], strides = [1, 1]} : vector<16x384xf32> to vector<16x128xf32>
    %28 = arith.addf %26, %27 : vector<16x128xf32>
    %29 = arith.negf %28 : vector<16x128xf32>
    %30 = math.exp %29 : vector<16x128xf32>
    %cst_18 = arith.constant 1.000000e+00 : f32
    %31 = vector.broadcast %cst_18 : f32 to vector<16x128xf32>
    %32 = arith.addf %31, %30 : vector<16x128xf32>
    %33 = arith.divf %31, %32 : vector<16x128xf32>
    %34 = vector.extract_strided_slice %15 {offsets = [0, 256], sizes = [16, 128], strides = [1, 1]} : vector<16x384xf32> to vector<16x128xf32>
    %35 = vector.extract_strided_slice %17 {offsets = [0, 256], sizes = [16, 128], strides = [1, 1]} : vector<16x384xf32> to vector<16x128xf32>
    %36 = vector.broadcast %11 : vector<1x128xf32> to vector<16x128xf32>
    %37 = arith.addf %35, %36 : vector<16x128xf32>
    %38 = arith.mulf %25, %37 : vector<16x128xf32>
    %39 = arith.addf %34, %38 : vector<16x128xf32>
    %40 = math.tanh %39 : vector<16x128xf32>
    %cst_19 = arith.constant 1.000000e+00 : f32
    %41 = vector.broadcast %cst_19 : f32 to vector<16x128xf32>
    %42 = arith.subf %41, %33 : vector<16x128xf32>
    %43 = arith.mulf %42, %40 : vector<16x128xf32>
    %44 = arith.mulf %33, %12 : vector<16x128xf32>
    %45 = arith.addf %43, %44 : vector<16x128xf32>
    %cst_20 = arith.constant 0.000000e+00 : f32
    %46 = vector.broadcast %cst_20 : f32 to vector<16x128xf32>
    %47 = arith.maximumf %45, %46 : vector<16x128xf32>
    %48 = arith.truncf %47 : vector<16x128xf32> to vector<16x128xbf16>
    %49 = arith.index_cast %c0_i32 : i32 to index
    %c0_21 = arith.constant 0 : index
    %c0_22 = arith.constant 0 : index
    %50 = vector.load %arg10[%49, %c0_21, %c0_22] : memref<8x16x128xbf16, #tpu.memory_space<vmem>>, vector<1x16x128xbf16>
    %51 = vector.shape_cast %50 : vector<1x16x128xbf16> to vector<16x128xbf16>
    %52 = vector.shape_cast %48 : vector<16x128xbf16> to vector<1x16x128xbf16>
    tpu.vector_store %arg10[%49, %c0_21, %c0_22], %52 {strides = array<i32>} : memref<8x16x128xbf16, #tpu.memory_space<vmem>>, vector<1x16x128xbf16>,
    %c1_i32 = arith.constant 1 : i32
    %53 = arith.index_cast %c1_i32 : i32 to index
    %c0_23 = arith.constant 0 : index
    %c0_24 = arith.constant 0 : index
    %54 = vector.load %arg9[%53, %c0_23, %c0_24] : memref<8x16x384xf32, #tpu.memory_space<vmem>>, vector<1x16x384xf32>
    %55 = vector.shape_cast %54 : vector<1x16x384xf32> to vector<16x384xf32>
    %56 = arith.truncf %45 : vector<16x128xf32> to vector<16x128xbf16>
    %cst_25 = arith.constant dense<0.000000e+00> : vector<16x384xf32>
    %57 = tpu.matmul %56, %10, %cst_25 {dimension_numbers = #tpu.dot_dimension_numbers<[1], [0], [0], [1], [0, 0, 1, 1], [], []>} : vector<16x128xbf16>, vector<128x384xbf16>, vector<16x384xf32> -> vector<16x384xf32>
    %58 = vector.extract_strided_slice %55 {offsets = [0, 0], sizes = [16, 128], strides = [1, 1]} : vector<16x384xf32> to vector<16x128xf32>
    %59 = vector.extract_strided_slice %57 {offsets = [0, 0], sizes = [16, 128], strides = [1, 1]} : vector<16x384xf32> to vector<16x128xf32>
    %60 = arith.addf %58, %59 : vector<16x128xf32>
    %61 = arith.negf %60 : vector<16x128xf32>
    %62 = math.exp %61 : vector<16x128xf32>
    %cst_26 = arith.constant 1.000000e+00 : f32
    %63 = vector.broadcast %cst_26 : f32 to vector<16x128xf32>
    %64 = arith.addf %63, %62 : vector<16x128xf32>
    %65 = arith.divf %63, %64 : vector<16x128xf32>
    %66 = vector.extract_strided_slice %55 {offsets = [0, 128], sizes = [16, 128], strides = [1, 1]} : vector<16x384xf32> to vector<16x128xf32>
    %67 = vector.extract_strided_slice %57 {offsets = [0, 128], sizes = [16, 128], strides = [1, 1]} : vector<16x384xf32> to vector<16x128xf32>
    %68 = arith.addf %66, %67 : vector<16x128xf32>
    %69 = arith.negf %68 : vector<16x128xf32>
    %70 = math.exp %69 : vector<16x128xf32>
    %cst_27 = arith.constant 1.000000e+00 : f32
    %71 = vector.broadcast %cst_27 : f32 to vector<16x128xf32>
    %72 = arith.addf %71, %70 : vector<16x128xf32>
    %73 = arith.divf %71, %72 : vector<16x128xf32>
    %74 = vector.extract_strided_slice %55 {offsets = [0, 256], sizes = [16, 128], strides = [1, 1]} : vector<16x384xf32> to vector<16x128xf32>
    %75 = vector.extract_strided_slice %57 {offsets = [0, 256], sizes = [16, 128], strides = [1, 1]} : vector<16x384xf32> to vector<16x128xf32>
    %76 = vector.broadcast %11 : vector<1x128xf32> to vector<16x128xf32>
    %77 = arith.addf %75, %76 : vector<16x128xf32>
    %78 = arith.mulf %65, %77 : vector<16x128xf32>
    %79 = arith.addf %74, %78 : vector<16x128xf32>
    %80 = math.tanh %79 : vector<16x128xf32>
    %cst_28 = arith.constant 1.000000e+00 : f32
    %81 = vector.broadcast %cst_28 : f32 to vector<16x128xf32>
    %82 = arith.subf %81, %73 : vector<16x128xf32>
    %83 = arith.mulf %82, %80 : vector<16x128xf32>
    %84 = arith.mulf %73, %45 : vector<16x128xf32>
    %85 = arith.addf %83, %84 : vector<16x128xf32>
    %cst_29 = arith.constant 0.000000e+00 : f32
    %86 = vector.broadcast %cst_29 : f32 to vector<16x128xf32>
    %87 = arith.maximumf %85, %86 : vector<16x128xf32>
    %88 = arith.truncf %87 : vector<16x128xf32> to vector<16x128xbf16>
    %89 = arith.index_cast %c1_i32 : i32 to index
    %c0_30 = arith.constant 0 : index
    %c0_31 = arith.constant 0 : index
    %90 = vector.load %arg10[%89, %c0_30, %c0_31] : memref<8x16x128xbf16, #tpu.memory_space<vmem>>, vector<1x16x128xbf16>
    %91 = vector.shape_cast %90 : vector<1x16x128xbf16> to vector<16x128xbf16>
    %92 = vector.shape_cast %88 : vector<16x128xbf16> to vector<1x16x128xbf16>
    tpu.vector_store %arg10[%89, %c0_30, %c0_31], %92 {strides = array<i32>} : memref<8x16x128xbf16, #tpu.memory_space<vmem>>, vector<1x16x128xbf16>,
    %c2_i32 = arith.constant 2 : i32
    %93 = arith.index_cast %c2_i32 : i32 to index
    %c0_32 = arith.constant 0 : index
    %c0_33 = arith.constant 0 : index
    %94 = vector.load %arg9[%93, %c0_32, %c0_33] : memref<8x16x384xf32, #tpu.memory_space<vmem>>, vector<1x16x384xf32>
    %95 = vector.shape_cast %94 : vector<1x16x384xf32> to vector<16x384xf32>
    %96 = arith.truncf %85 : vector<16x128xf32> to vector<16x128xbf16>
    %cst_34 = arith.constant dense<0.000000e+00> : vector<16x384xf32>
    %97 = tpu.matmul %96, %10, %cst_34 {dimension_numbers = #tpu.dot_dimension_numbers<[1], [0], [0], [1], [0, 0, 1, 1], [], []>} : vector<16x128xbf16>, vector<128x384xbf16>, vector<16x384xf32> -> vector<16x384xf32>
    %98 = vector.extract_strided_slice %95 {offsets = [0, 0], sizes = [16, 128], strides = [1, 1]} : vector<16x384xf32> to vector<16x128xf32>
    %99 = vector.extract_strided_slice %97 {offsets = [0, 0], sizes = [16, 128], strides = [1, 1]} : vector<16x384xf32> to vector<16x128xf32>
    %100 = arith.addf %98, %99 : vector<16x128xf32>
    %101 = arith.negf %100 : vector<16x128xf32>
    %102 = math.exp %101 : vector<16x128xf32>
    %cst_35 = arith.constant 1.000000e+00 : f32
    %103 = vector.broadcast %cst_35 : f32 to vector<16x128xf32>
    %104 = arith.addf %103, %102 : vector<16x128xf32>
    %105 = arith.divf %103, %104 : vector<16x128xf32>
    %106 = vector.extract_strided_slice %95 {offsets = [0, 128], sizes = [16, 128], strides = [1, 1]} : vector<16x384xf32> to vector<16x128xf32>
    %107 = vector.extract_strided_slice %97 {offsets = [0, 128], sizes = [16, 128], strides = [1, 1]} : vector<16x384xf32> to vector<16x128xf32>
    %108 = arith.addf %106, %107 : vector<16x128xf32>
    %109 = arith.negf %108 : vector<16x128xf32>
    %110 = math.exp %109 : vector<16x128xf32>
    %cst_36 = arith.constant 1.000000e+00 : f32
    %111 = vector.broadcast %cst_36 : f32 to vector<16x128xf32>
    %112 = arith.addf %111, %110 : vector<16x128xf32>
    %113 = arith.divf %111, %112 : vector<16x128xf32>
    %114 = vector.extract_strided_slice %95 {offsets = [0, 256], sizes = [16, 128], strides = [1, 1]} : vector<16x384xf32> to vector<16x128xf32>
    %115 = vector.extract_strided_slice %97 {offsets = [0, 256], sizes = [16, 128], strides = [1, 1]} : vector<16x384xf32> to vector<16x128xf32>
    %116 = vector.broadcast %11 : vector<1x128xf32> to vector<16x128xf32>
    %117 = arith.addf %115, %116 : vector<16x128xf32>
    %118 = arith.mulf %105, %117 : vector<16x128xf32>
    %119 = arith.addf %114, %118 : vector<16x128xf32>
    %120 = math.tanh %119 : vector<16x128xf32>
    %cst_37 = arith.constant 1.000000e+00 : f32
    %121 = vector.broadcast %cst_37 : f32 to vector<16x128xf32>
    %122 = arith.subf %121, %113 : vector<16x128xf32>
    %123 = arith.mulf %122, %120 : vector<16x128xf32>
    %124 = arith.mulf %113, %85 : vector<16x128xf32>
    %125 = arith.addf %123, %124 : vector<16x128xf32>
    %cst_38 = arith.constant 0.000000e+00 : f32
    %126 = vector.broadcast %cst_38 : f32 to vector<16x128xf32>
    %127 = arith.maximumf %125, %126 : vector<16x128xf32>
    %128 = arith.truncf %127 : vector<16x128xf32> to vector<16x128xbf16>
    %129 = arith.index_cast %c2_i32 : i32 to index
    %c0_39 = arith.constant 0 : index
    %c0_40 = arith.constant 0 : index
    %130 = vector.load %arg10[%129, %c0_39, %c0_40] : memref<8x16x128xbf16, #tpu.memory_space<vmem>>, vector<1x16x128xbf16>
    %131 = vector.shape_cast %130 : vector<1x16x128xbf16> to vector<16x128xbf16>
    %132 = vector.shape_cast %128 : vector<16x128xbf16> to vector<1x16x128xbf16>
    tpu.vector_store %arg10[%129, %c0_39, %c0_40], %132 {strides = array<i32>} : memref<8x16x128xbf16, #tpu.memory_space<vmem>>, vector<1x16x128xbf16>,
    %c3_i32 = arith.constant 3 : i32
    %133 = arith.index_cast %c3_i32 : i32 to index
    %c0_41 = arith.constant 0 : index
    %c0_42 = arith.constant 0 : index
    %134 = vector.load %arg9[%133, %c0_41, %c0_42] : memref<8x16x384xf32, #tpu.memory_space<vmem>>, vector<1x16x384xf32>
    %135 = vector.shape_cast %134 : vector<1x16x384xf32> to vector<16x384xf32>
    %136 = arith.truncf %125 : vector<16x128xf32> to vector<16x128xbf16>
    %cst_43 = arith.constant dense<0.000000e+00> : vector<16x384xf32>
    %137 = tpu.matmul %136, %10, %cst_43 {dimension_numbers = #tpu.dot_dimension_numbers<[1], [0], [0], [1], [0, 0, 1, 1], [], []>} : vector<16x128xbf16>, vector<128x384xbf16>, vector<16x384xf32> -> vector<16x384xf32>
    %138 = vector.extract_strided_slice %135 {offsets = [0, 0], sizes = [16, 128], strides = [1, 1]} : vector<16x384xf32> to vector<16x128xf32>
    %139 = vector.extract_strided_slice %137 {offsets = [0, 0], sizes = [16, 128], strides = [1, 1]} : vector<16x384xf32> to vector<16x128xf32>
    %140 = arith.addf %138, %139 : vector<16x128xf32>
    %141 = arith.negf %140 : vector<16x128xf32>
    %142 = math.exp %141 : vector<16x128xf32>
    %cst_44 = arith.constant 1.000000e+00 : f32
    %143 = vector.broadcast %cst_44 : f32 to vector<16x128xf32>
    %144 = arith.addf %143, %142 : vector<16x128xf32>
    %145 = arith.divf %143, %144 : vector<16x128xf32>
    %146 = vector.extract_strided_slice %135 {offsets = [0, 128], sizes = [16, 128], strides = [1, 1]} : vector<16x384xf32> to vector<16x128xf32>
    %147 = vector.extract_strided_slice %137 {offsets = [0, 128], sizes = [16, 128], strides = [1, 1]} : vector<16x384xf32> to vector<16x128xf32>
    %148 = arith.addf %146, %147 : vector<16x128xf32>
    %149 = arith.negf %148 : vector<16x128xf32>
    %150 = math.exp %149 : vector<16x128xf32>
    %cst_45 = arith.constant 1.000000e+00 : f32
    %151 = vector.broadcast %cst_45 : f32 to vector<16x128xf32>
    %152 = arith.addf %151, %150 : vector<16x128xf32>
    %153 = arith.divf %151, %152 : vector<16x128xf32>
    %154 = vector.extract_strided_slice %135 {offsets = [0, 256], sizes = [16, 128], strides = [1, 1]} : vector<16x384xf32> to vector<16x128xf32>
    %155 = vector.extract_strided_slice %137 {offsets = [0, 256], sizes = [16, 128], strides = [1, 1]} : vector<16x384xf32> to vector<16x128xf32>
    %156 = vector.broadcast %11 : vector<1x128xf32> to vector<16x128xf32>
    %157 = arith.addf %155, %156 : vector<16x128xf32>
    %158 = arith.mulf %145, %157 : vector<16x128xf32>
    %159 = arith.addf %154, %158 : vector<16x128xf32>
    %160 = math.tanh %159 : vector<16x128xf32>
    %cst_46 = arith.constant 1.000000e+00 : f32
    %161 = vector.broadcast %cst_46 : f32 to vector<16x128xf32>
    %162 = arith.subf %161, %153 : vector<16x128xf32>
    %163 = arith.mulf %162, %160 : vector<16x128xf32>
    %164 = arith.mulf %153, %125 : vector<16x128xf32>
    %165 = arith.addf %163, %164 : vector<16x128xf32>
    %cst_47 = arith.constant 0.000000e+00 : f32
    %166 = vector.broadcast %cst_47 : f32 to vector<16x128xf32>
    %167 = arith.maximumf %165, %166 : vector<16x128xf32>
    %168 = arith.truncf %167 : vector<16x128xf32> to vector<16x128xbf16>
    %169 = arith.index_cast %c3_i32 : i32 to index
    %c0_48 = arith.constant 0 : index
    %c0_49 = arith.constant 0 : index
    %170 = vector.load %arg10[%169, %c0_48, %c0_49] : memref<8x16x128xbf16, #tpu.memory_space<vmem>>, vector<1x16x128xbf16>
    %171 = vector.shape_cast %170 : vector<1x16x128xbf16> to vector<16x128xbf16>
    %172 = vector.shape_cast %168 : vector<16x128xbf16> to vector<1x16x128xbf16>
    tpu.vector_store %arg10[%169, %c0_48, %c0_49], %172 {strides = array<i32>} : memref<8x16x128xbf16, #tpu.memory_space<vmem>>, vector<1x16x128xbf16>,
    %c4_i32 = arith.constant 4 : i32
    %173 = arith.index_cast %c4_i32 : i32 to index
    %c0_50 = arith.constant 0 : index
    %c0_51 = arith.constant 0 : index
    %174 = vector.load %arg9[%173, %c0_50, %c0_51] : memref<8x16x384xf32, #tpu.memory_space<vmem>>, vector<1x16x384xf32>
    %175 = vector.shape_cast %174 : vector<1x16x384xf32> to vector<16x384xf32>
    %176 = arith.truncf %165 : vector<16x128xf32> to vector<16x128xbf16>
    %cst_52 = arith.constant dense<0.000000e+00> : vector<16x384xf32>
    %177 = tpu.matmul %176, %10, %cst_52 {dimension_numbers = #tpu.dot_dimension_numbers<[1], [0], [0], [1], [0, 0, 1, 1], [], []>} : vector<16x128xbf16>, vector<128x384xbf16>, vector<16x384xf32> -> vector<16x384xf32>
    %178 = vector.extract_strided_slice %175 {offsets = [0, 0], sizes = [16, 128], strides = [1, 1]} : vector<16x384xf32> to vector<16x128xf32>
    %179 = vector.extract_strided_slice %177 {offsets = [0, 0], sizes = [16, 128], strides = [1, 1]} : vector<16x384xf32> to vector<16x128xf32>
    %180 = arith.addf %178, %179 : vector<16x128xf32>
    %181 = arith.negf %180 : vector<16x128xf32>
    %182 = math.exp %181 : vector<16x128xf32>
    %cst_53 = arith.constant 1.000000e+00 : f32
    %183 = vector.broadcast %cst_53 : f32 to vector<16x128xf32>
    %184 = arith.addf %183, %182 : vector<16x128xf32>
    %185 = arith.divf %183, %184 : vector<16x128xf32>
    %186 = vector.extract_strided_slice %175 {offsets = [0, 128], sizes = [16, 128], strides = [1, 1]} : vector<16x384xf32> to vector<16x128xf32>
    %187 = vector.extract_strided_slice %177 {offsets = [0, 128], sizes = [16, 128], strides = [1, 1]} : vector<16x384xf32> to vector<16x128xf32>
    %188 = arith.addf %186, %187 : vector<16x128xf32>
    %189 = arith.negf %188 : vector<16x128xf32>
    %190 = math.exp %189 : vector<16x128xf32>
    %cst_54 = arith.constant 1.000000e+00 : f32
    %191 = vector.broadcast %cst_54 : f32 to vector<16x128xf32>
    %192 = arith.addf %191, %190 : vector<16x128xf32>
    %193 = arith.divf %191, %192 : vector<16x128xf32>
    %194 = vector.extract_strided_slice %175 {offsets = [0, 256], sizes = [16, 128], strides = [1, 1]} : vector<16x384xf32> to vector<16x128xf32>
    %195 = vector.extract_strided_slice %177 {offsets = [0, 256], sizes = [16, 128], strides = [1, 1]} : vector<16x384xf32> to vector<16x128xf32>
    %196 = vector.broadcast %11 : vector<1x128xf32> to vector<16x128xf32>
    %197 = arith.addf %195, %196 : vector<16x128xf32>
    %198 = arith.mulf %185, %197 : vector<16x128xf32>
    %199 = arith.addf %194, %198 : vector<16x128xf32>
    %200 = math.tanh %199 : vector<16x128xf32>
    %cst_55 = arith.constant 1.000000e+00 : f32
    %201 = vector.broadcast %cst_55 : f32 to vector<16x128xf32>
    %202 = arith.subf %201, %193 : vector<16x128xf32>
    %203 = arith.mulf %202, %200 : vector<16x128xf32>
    %204 = arith.mulf %193, %165 : vector<16x128xf32>
    %205 = arith.addf %203, %204 : vector<16x128xf32>
    %cst_56 = arith.constant 0.000000e+00 : f32
    %206 = vector.broadcast %cst_56 : f32 to vector<16x128xf32>
    %207 = arith.maximumf %205, %206 : vector<16x128xf32>
    %208 = arith.truncf %207 : vector<16x128xf32> to vector<16x128xbf16>
    %209 = arith.index_cast %c4_i32 : i32 to index
    %c0_57 = arith.constant 0 : index
    %c0_58 = arith.constant 0 : index
    %210 = vector.load %arg10[%209, %c0_57, %c0_58] : memref<8x16x128xbf16, #tpu.memory_space<vmem>>, vector<1x16x128xbf16>
    %211 = vector.shape_cast %210 : vector<1x16x128xbf16> to vector<16x128xbf16>
    %212 = vector.shape_cast %208 : vector<16x128xbf16> to vector<1x16x128xbf16>
    tpu.vector_store %arg10[%209, %c0_57, %c0_58], %212 {strides = array<i32>} : memref<8x16x128xbf16, #tpu.memory_space<vmem>>, vector<1x16x128xbf16>,
    %c5_i32 = arith.constant 5 : i32
    %213 = arith.index_cast %c5_i32 : i32 to index
    %c0_59 = arith.constant 0 : index
    %c0_60 = arith.constant 0 : index
    %214 = vector.load %arg9[%213, %c0_59, %c0_60] : memref<8x16x384xf32, #tpu.memory_space<vmem>>, vector<1x16x384xf32>
    %215 = vector.shape_cast %214 : vector<1x16x384xf32> to vector<16x384xf32>
    %216 = arith.truncf %205 : vector<16x128xf32> to vector<16x128xbf16>
    %cst_61 = arith.constant dense<0.000000e+00> : vector<16x384xf32>
    %217 = tpu.matmul %216, %10, %cst_61 {dimension_numbers = #tpu.dot_dimension_numbers<[1], [0], [0], [1], [0, 0, 1, 1], [], []>} : vector<16x128xbf16>, vector<128x384xbf16>, vector<16x384xf32> -> vector<16x384xf32>
    %218 = vector.extract_strided_slice %215 {offsets = [0, 0], sizes = [16, 128], strides = [1, 1]} : vector<16x384xf32> to vector<16x128xf32>
    %219 = vector.extract_strided_slice %217 {offsets = [0, 0], sizes = [16, 128], strides = [1, 1]} : vector<16x384xf32> to vector<16x128xf32>
    %220 = arith.addf %218, %219 : vector<16x128xf32>
    %221 = arith.negf %220 : vector<16x128xf32>
    %222 = math.exp %221 : vector<16x128xf32>
    %cst_62 = arith.constant 1.000000e+00 : f32
    %223 = vector.broadcast %cst_62 : f32 to vector<16x128xf32>
    %224 = arith.addf %223, %222 : vector<16x128xf32>
    %225 = arith.divf %223, %224 : vector<16x128xf32>
    %226 = vector.extract_strided_slice %215 {offsets = [0, 128], sizes = [16, 128], strides = [1, 1]} : vector<16x384xf32> to vector<16x128xf32>
    %227 = vector.extract_strided_slice %217 {offsets = [0, 128], sizes = [16, 128], strides = [1, 1]} : vector<16x384xf32> to vector<16x128xf32>
    %228 = arith.addf %226, %227 : vector<16x128xf32>
    %229 = arith.negf %228 : vector<16x128xf32>
    %230 = math.exp %229 : vector<16x128xf32>
    %cst_63 = arith.constant 1.000000e+00 : f32
    %231 = vector.broadcast %cst_63 : f32 to vector<16x128xf32>
    %232 = arith.addf %231, %230 : vector<16x128xf32>
    %233 = arith.divf %231, %232 : vector<16x128xf32>
    %234 = vector.extract_strided_slice %215 {offsets = [0, 256], sizes = [16, 128], strides = [1, 1]} : vector<16x384xf32> to vector<16x128xf32>
    %235 = vector.extract_strided_slice %217 {offsets = [0, 256], sizes = [16, 128], strides = [1, 1]} : vector<16x384xf32> to vector<16x128xf32>
    %236 = vector.broadcast %11 : vector<1x128xf32> to vector<16x128xf32>
    %237 = arith.addf %235, %236 : vector<16x128xf32>
    %238 = arith.mulf %225, %237 : vector<16x128xf32>
    %239 = arith.addf %234, %238 : vector<16x128xf32>
    %240 = math.tanh %239 : vector<16x128xf32>
    %cst_64 = arith.constant 1.000000e+00 : f32
    %241 = vector.broadcast %cst_64 : f32 to vector<16x128xf32>
    %242 = arith.subf %241, %233 : vector<16x128xf32>
    %243 = arith.mulf %242, %240 : vector<16x128xf32>
    %244 = arith.mulf %233, %205 : vector<16x128xf32>
    %245 = arith.addf %243, %244 : vector<16x128xf32>
    %cst_65 = arith.constant 0.000000e+00 : f32
    %246 = vector.broadcast %cst_65 : f32 to vector<16x128xf32>
    %247 = arith.maximumf %245, %246 : vector<16x128xf32>
    %248 = arith.truncf %247 : vector<16x128xf32> to vector<16x128xbf16>
    %249 = arith.index_cast %c5_i32 : i32 to index
    %c0_66 = arith.constant 0 : index
    %c0_67 = arith.constant 0 : index
    %250 = vector.load %arg10[%249, %c0_66, %c0_67] : memref<8x16x128xbf16, #tpu.memory_space<vmem>>, vector<1x16x128xbf16>
    %251 = vector.shape_cast %250 : vector<1x16x128xbf16> to vector<16x128xbf16>
    %252 = vector.shape_cast %248 : vector<16x128xbf16> to vector<1x16x128xbf16>
    tpu.vector_store %arg10[%249, %c0_66, %c0_67], %252 {strides = array<i32>} : memref<8x16x128xbf16, #tpu.memory_space<vmem>>, vector<1x16x128xbf16>,
    %c6_i32 = arith.constant 6 : i32
    %253 = arith.index_cast %c6_i32 : i32 to index
    %c0_68 = arith.constant 0 : index
    %c0_69 = arith.constant 0 : index
    %254 = vector.load %arg9[%253, %c0_68, %c0_69] : memref<8x16x384xf32, #tpu.memory_space<vmem>>, vector<1x16x384xf32>
    %255 = vector.shape_cast %254 : vector<1x16x384xf32> to vector<16x384xf32>
    %256 = arith.truncf %245 : vector<16x128xf32> to vector<16x128xbf16>
    %cst_70 = arith.constant dense<0.000000e+00> : vector<16x384xf32>
    %257 = tpu.matmul %256, %10, %cst_70 {dimension_numbers = #tpu.dot_dimension_numbers<[1], [0], [0], [1], [0, 0, 1, 1], [], []>} : vector<16x128xbf16>, vector<128x384xbf16>, vector<16x384xf32> -> vector<16x384xf32>
    %258 = vector.extract_strided_slice %255 {offsets = [0, 0], sizes = [16, 128], strides = [1, 1]} : vector<16x384xf32> to vector<16x128xf32>
    %259 = vector.extract_strided_slice %257 {offsets = [0, 0], sizes = [16, 128], strides = [1, 1]} : vector<16x384xf32> to vector<16x128xf32>
    %260 = arith.addf %258, %259 : vector<16x128xf32>
    %261 = arith.negf %260 : vector<16x128xf32>
    %262 = math.exp %261 : vector<16x128xf32>
    %cst_71 = arith.constant 1.000000e+00 : f32
    %263 = vector.broadcast %cst_71 : f32 to vector<16x128xf32>
    %264 = arith.addf %263, %262 : vector<16x128xf32>
    %265 = arith.divf %263, %264 : vector<16x128xf32>
    %266 = vector.extract_strided_slice %255 {offsets = [0, 128], sizes = [16, 128], strides = [1, 1]} : vector<16x384xf32> to vector<16x128xf32>
    %267 = vector.extract_strided_slice %257 {offsets = [0, 128], sizes = [16, 128], strides = [1, 1]} : vector<16x384xf32> to vector<16x128xf32>
    %268 = arith.addf %266, %267 : vector<16x128xf32>
    %269 = arith.negf %268 : vector<16x128xf32>
    %270 = math.exp %269 : vector<16x128xf32>
    %cst_72 = arith.constant 1.000000e+00 : f32
    %271 = vector.broadcast %cst_72 : f32 to vector<16x128xf32>
    %272 = arith.addf %271, %270 : vector<16x128xf32>
    %273 = arith.divf %271, %272 : vector<16x128xf32>
    %274 = vector.extract_strided_slice %255 {offsets = [0, 256], sizes = [16, 128], strides = [1, 1]} : vector<16x384xf32> to vector<16x128xf32>
    %275 = vector.extract_strided_slice %257 {offsets = [0, 256], sizes = [16, 128], strides = [1, 1]} : vector<16x384xf32> to vector<16x128xf32>
    %276 = vector.broadcast %11 : vector<1x128xf32> to vector<16x128xf32>
    %277 = arith.addf %275, %276 : vector<16x128xf32>
    %278 = arith.mulf %265, %277 : vector<16x128xf32>
    %279 = arith.addf %274, %278 : vector<16x128xf32>
    %280 = math.tanh %279 : vector<16x128xf32>
    %cst_73 = arith.constant 1.000000e+00 : f32
    %281 = vector.broadcast %cst_73 : f32 to vector<16x128xf32>
    %282 = arith.subf %281, %273 : vector<16x128xf32>
    %283 = arith.mulf %282, %280 : vector<16x128xf32>
    %284 = arith.mulf %273, %245 : vector<16x128xf32>
    %285 = arith.addf %283, %284 : vector<16x128xf32>
    %cst_74 = arith.constant 0.000000e+00 : f32
    %286 = vector.broadcast %cst_74 : f32 to vector<16x128xf32>
    %287 = arith.maximumf %285, %286 : vector<16x128xf32>
    %288 = arith.truncf %287 : vector<16x128xf32> to vector<16x128xbf16>
    %289 = arith.index_cast %c6_i32 : i32 to index
    %c0_75 = arith.constant 0 : index
    %c0_76 = arith.constant 0 : index
    %290 = vector.load %arg10[%289, %c0_75, %c0_76] : memref<8x16x128xbf16, #tpu.memory_space<vmem>>, vector<1x16x128xbf16>
    %291 = vector.shape_cast %290 : vector<1x16x128xbf16> to vector<16x128xbf16>
    %292 = vector.shape_cast %288 : vector<16x128xbf16> to vector<1x16x128xbf16>
    tpu.vector_store %arg10[%289, %c0_75, %c0_76], %292 {strides = array<i32>} : memref<8x16x128xbf16, #tpu.memory_space<vmem>>, vector<1x16x128xbf16>,
    %c7_i32 = arith.constant 7 : i32
    %293 = arith.index_cast %c7_i32 : i32 to index
    %c0_77 = arith.constant 0 : index
    %c0_78 = arith.constant 0 : index
    %294 = vector.load %arg9[%293, %c0_77, %c0_78] : memref<8x16x384xf32, #tpu.memory_space<vmem>>, vector<1x16x384xf32>
    %295 = vector.shape_cast %294 : vector<1x16x384xf32> to vector<16x384xf32>
    %296 = arith.truncf %285 : vector<16x128xf32> to vector<16x128xbf16>
    %cst_79 = arith.constant dense<0.000000e+00> : vector<16x384xf32>
    %297 = tpu.matmul %296, %10, %cst_79 {dimension_numbers = #tpu.dot_dimension_numbers<[1], [0], [0], [1], [0, 0, 1, 1], [], []>} : vector<16x128xbf16>, vector<128x384xbf16>, vector<16x384xf32> -> vector<16x384xf32>
    %298 = vector.extract_strided_slice %295 {offsets = [0, 0], sizes = [16, 128], strides = [1, 1]} : vector<16x384xf32> to vector<16x128xf32>
    %299 = vector.extract_strided_slice %297 {offsets = [0, 0], sizes = [16, 128], strides = [1, 1]} : vector<16x384xf32> to vector<16x128xf32>
    %300 = arith.addf %298, %299 : vector<16x128xf32>
    %301 = arith.negf %300 : vector<16x128xf32>
    %302 = math.exp %301 : vector<16x128xf32>
    %cst_80 = arith.constant 1.000000e+00 : f32
    %303 = vector.broadcast %cst_80 : f32 to vector<16x128xf32>
    %304 = arith.addf %303, %302 : vector<16x128xf32>
    %305 = arith.divf %303, %304 : vector<16x128xf32>
    %306 = vector.extract_strided_slice %295 {offsets = [0, 128], sizes = [16, 128], strides = [1, 1]} : vector<16x384xf32> to vector<16x128xf32>
    %307 = vector.extract_strided_slice %297 {offsets = [0, 128], sizes = [16, 128], strides = [1, 1]} : vector<16x384xf32> to vector<16x128xf32>
    %308 = arith.addf %306, %307 : vector<16x128xf32>
    %309 = arith.negf %308 : vector<16x128xf32>
    %310 = math.exp %309 : vector<16x128xf32>
    %cst_81 = arith.constant 1.000000e+00 : f32
    %311 = vector.broadcast %cst_81 : f32 to vector<16x128xf32>
    %312 = arith.addf %311, %310 : vector<16x128xf32>
    %313 = arith.divf %311, %312 : vector<16x128xf32>
    %314 = vector.extract_strided_slice %295 {offsets = [0, 256], sizes = [16, 128], strides = [1, 1]} : vector<16x384xf32> to vector<16x128xf32>
    %315 = vector.extract_strided_slice %297 {offsets = [0, 256], sizes = [16, 128], strides = [1, 1]} : vector<16x384xf32> to vector<16x128xf32>
    %316 = vector.broadcast %11 : vector<1x128xf32> to vector<16x128xf32>
    %317 = arith.addf %315, %316 : vector<16x128xf32>
    %318 = arith.mulf %305, %317 : vector<16x128xf32>
    %319 = arith.addf %314, %318 : vector<16x128xf32>
    %320 = math.tanh %319 : vector<16x128xf32>
    %cst_82 = arith.constant 1.000000e+00 : f32
    %321 = vector.broadcast %cst_82 : f32 to vector<16x128xf32>
    %322 = arith.subf %321, %313 : vector<16x128xf32>
    %323 = arith.mulf %322, %320 : vector<16x128xf32>
    %324 = arith.mulf %313, %285 : vector<16x128xf32>
    %325 = arith.addf %323, %324 : vector<16x128xf32>
    %cst_83 = arith.constant 0.000000e+00 : f32
    %326 = vector.broadcast %cst_83 : f32 to vector<16x128xf32>
    %327 = arith.maximumf %325, %326 : vector<16x128xf32>
    %328 = arith.truncf %327 : vector<16x128xf32> to vector<16x128xbf16>
    %329 = arith.index_cast %c7_i32 : i32 to index
    %c0_84 = arith.constant 0 : index
    %c0_85 = arith.constant 0 : index
    %330 = vector.load %arg10[%329, %c0_84, %c0_85] : memref<8x16x128xbf16, #tpu.memory_space<vmem>>, vector<1x16x128xbf16>
    %331 = vector.shape_cast %330 : vector<1x16x128xbf16> to vector<16x128xbf16>
    %332 = vector.shape_cast %328 : vector<16x128xbf16> to vector<1x16x128xbf16>
    tpu.vector_store %arg10[%329, %c0_84, %c0_85], %332 {strides = array<i32>} : memref<8x16x128xbf16, #tpu.memory_space<vmem>>, vector<1x16x128xbf16>,
    %c8_i32 = arith.constant 8 : i32
    %c0_86 = arith.constant 0 : index
    %c0_87 = arith.constant 0 : index
    %c0_88 = arith.constant 0 : index
    %333 = vector.load %arg10[%c0_86, %c0_87, %c0_88] : memref<8x16x128xbf16, #tpu.memory_space<vmem>>, vector<8x16x128xbf16>
    %334 = vector.shape_cast %333 : vector<8x16x128xbf16> to vector<128x128xbf16>
    %c0_89 = arith.constant 0 : index
    %c0_90 = arith.constant 0 : index
    %335 = vector.load %arg6[%c0_89, %c0_90] : memref<128x256xbf16, #tpu.memory_space<vmem>>, vector<128x256xbf16>
    %cst_91 = arith.constant dense<0.000000e+00> : vector<128x256xf32>
    %336 = tpu.matmul %334, %335, %cst_91 {dimension_numbers = #tpu.dot_dimension_numbers<[1], [0], [0], [1], [0, 0, 1, 1], [], []>} : vector<128x128xbf16>, vector<128x256xbf16>, vector<128x256xf32> -> vector<128x256xf32>
    %c0_92 = arith.constant 0 : index
    %c0_93 = arith.constant 0 : index
    %337 = vector.load %arg7[%c0_92, %c0_93] : memref<1x256xf32, #tpu.memory_space<vmem>>, vector<1x256xf32>
    %338 = vector.broadcast %337 : vector<1x256xf32> to vector<128x256xf32>
    %339 = arith.addf %336, %338 : vector<128x256xf32>
    %340 = vector.shape_cast %339 : vector<128x256xf32> to vector<8x16x256xf32>
    %341 = arith.addf %340, %0 : vector<8x16x256xf32>
    %c0_94 = arith.constant 0 : index
    %c0_95 = arith.constant 0 : index
    %c0_96 = arith.constant 0 : index
    %342 = vector.load %arg8[%c0_94, %c0_95, %c0_96] : memref<8x16x256xf32, #tpu.memory_space<vmem>>, vector<8x16x256xf32>
    tpu.vector_store %arg8[%c0_94, %c0_95, %c0_96], %341 {strides = array<i32>} : memref<8x16x256xf32, #tpu.memory_space<vmem>>, vector<8x16x256xf32>,
    return
  }
  func.func @transform_0(%arg0: i32) -> (i32, i32, i32) {
    %c0_i32 = arith.constant 0 : i32
    %c0_i32_0 = arith.constant 0 : i32
    %c0_i32_1 = arith.constant 0 : i32
    return %c0_i32, %arg0, %c0_i32_0 : i32, i32, i32
  }
  func.func @transform_1(%arg0: i32) -> (i32, i32) {
    %c0_i32 = arith.constant 0 : i32
    %c0_i32_0 = arith.constant 0 : i32
    %c0_i32_1 = arith.constant 0 : i32
    return %c0_i32, %c0_i32_0 : i32, i32
  }
  func.func @transform_2(%arg0: i32) -> (i32, i32) {
    %c0_i32 = arith.constant 0 : i32
    %c0_i32_0 = arith.constant 0 : i32
    %c0_i32_1 = arith.constant 0 : i32
    return %c0_i32, %c0_i32_0 : i32, i32
  }
  func.func @transform_3(%arg0: i32) -> (i32, i32) {
    %c0_i32 = arith.constant 0 : i32
    %c0_i32_0 = arith.constant 0 : i32
    %c0_i32_1 = arith.constant 0 : i32
    return %c0_i32, %c0_i32_0 : i32, i32
  }
  func.func @transform_4(%arg0: i32) -> (i32, i32) {
    %c0_i32 = arith.constant 0 : i32
    %c0_i32_0 = arith.constant 0 : i32
    %c0_i32_1 = arith.constant 0 : i32
    return %c0_i32, %c0_i32_0 : i32, i32
  }
  func.func @transform_5(%arg0: i32) -> (i32, i32) {
    %c0_i32 = arith.constant 0 : i32
    %c0_i32_0 = arith.constant 0 : i32
    %c0_i32_1 = arith.constant 0 : i32
    return %c0_i32, %c0_i32_0 : i32, i32
  }
  func.func @transform_6(%arg0: i32) -> (i32, i32) {
    %c0_i32 = arith.constant 0 : i32
    %c0_i32_0 = arith.constant 0 : i32
    %c0_i32_1 = arith.constant 0 : i32
    return %c0_i32, %c0_i32_0 : i32, i32
  }
  func.func @transform_7(%arg0: i32) -> (i32, i32, i32) {
    %c0_i32 = arith.constant 0 : i32
    %c0_i32_0 = arith.constant 0 : i32
    %c0_i32_1 = arith.constant 0 : i32
    return %c0_i32, %arg0, %c0_i32_0 : i32, i32, i32
  }
}

module attributes {stable_mosaic.version = 11 : i64} {
  func.func @temporal_encoder_kernel(%arg0: i32, %arg1: memref<8x16x256xf32, #tpu.memory_space<vmem>>, %arg2: memref<256x384xbf16, #tpu.memory_space<vmem>>, %arg3: memref<128x384xbf16, #tpu.memory_space<vmem>>, %arg4: memref<1x384xf32, #tpu.memory_space<vmem>>, %arg5: memref<1x128xf32, #tpu.memory_space<vmem>>, %arg6: memref<128x256xbf16, #tpu.memory_space<vmem>>, %arg7: memref<1x256xf32, #tpu.memory_space<vmem>>, %arg8: memref<8x16x256xf32, #tpu.memory_space<vmem>>, %arg9: memref<8x16x384xf32, #tpu.memory_space<vmem>>, %arg10: memref<8x16x128xbf16, #tpu.memory_space<vmem>>) attributes {dimension_semantics = [#tpu.dimension_semantics<parallel>], iteration_bounds = array<i64: 2>, scalar_prefetch = 0 : i64, scratch_operands = 2 : i64, tpu.core_type = #tpu.core_type<tc>, window_params = [{transform_indices = @transform_0, window_bounds = array<i64: 8, 16, 256>}, {pipeline_mode = #tpu.pipeline_mode<synchronous>, transform_indices = @transform_1, window_bounds = array<i64: 256, 384>}, {pipeline_mode = #tpu.pipeline_mode<synchronous>, transform_indices = @transform_2, window_bounds = array<i64: 128, 384>}, {pipeline_mode = #tpu.pipeline_mode<synchronous>, transform_indices = @transform_3, window_bounds = array<i64: 1, 384>}, {pipeline_mode = #tpu.pipeline_mode<synchronous>, transform_indices = @transform_4, window_bounds = array<i64: 1, 128>}, {pipeline_mode = #tpu.pipeline_mode<synchronous>, transform_indices = @transform_5, window_bounds = array<i64: 128, 256>}, {pipeline_mode = #tpu.pipeline_mode<synchronous>, transform_indices = @transform_6, window_bounds = array<i64: 1, 256>}, {transform_indices = @transform_7, window_bounds = array<i64: 8, 16, 256>}]} {
    %c0 = arith.constant 0 : index
    %c0_0 = arith.constant 0 : index
    %c0_1 = arith.constant 0 : index
    %0 = vector.load %arg1[%c0, %c0_0, %c0_1] : memref<8x16x256xf32, #tpu.memory_space<vmem>>, vector<8x16x256xf32>
    %1 = vector.shape_cast %0 : vector<8x16x256xf32> to vector<128x256xf32>
    %2 = arith.truncf %1 : vector<128x256xf32> to vector<128x256xbf16>
    %c0_2 = arith.constant 0 : index
    %c0_3 = arith.constant 0 : index
    %3 = vector.load %arg2[%c0_2, %c0_3] : memref<256x384xbf16, #tpu.memory_space<vmem>>, vector<256x384xbf16>
    %cst = arith.constant dense<0.000000e+00> : vector<128x384xf32>
    %4 = tpu.matmul %2, %3, %cst {dimension_numbers = #tpu.dot_dimension_numbers<[1], [0], [0], [1], [0, 0, 1, 1], [], []>} : vector<128x256xbf16>, vector<256x384xbf16>, vector<128x384xf32> -> vector<128x384xf32>
    %c0_4 = arith.constant 0 : index
    %c0_5 = arith.constant 0 : index
    %5 = vector.load %arg4[%c0_4, %c0_5] : memref<1x384xf32, #tpu.memory_space<vmem>>, vector<1x384xf32>
    %6 = vector.broadcast %5 : vector<1x384xf32> to vector<128x384xf32>
    %7 = arith.addf %4, %6 : vector<128x384xf32>
    %8 = vector.shape_cast %7 : vector<128x384xf32> to vector<8x16x384xf32>
    %c0_6 = arith.constant 0 : index
    %c0_7 = arith.constant 0 : index
    %c0_8 = arith.constant 0 : index
    %9 = vector.load %arg9[%c0_6, %c0_7, %c0_8] : memref<8x16x384xf32, #tpu.memory_space<vmem>>, vector<8x16x384xf32>
    tpu.vector_store %arg9[%c0_6, %c0_7, %c0_8], %8 {strides = array<i32>} : memref<8x16x384xf32, #tpu.memory_space<vmem>>, vector<8x16x384xf32>,
    %c0_9 = arith.constant 0 : index
    %c0_10 = arith.constant 0 : index
    %10 = vector.load %arg3[%c0_9, %c0_10] : memref<128x384xbf16, #tpu.memory_space<vmem>>, vector<128x384xbf16>
    %c0_11 = arith.constant 0 : index
    %c0_12 = arith.constant 0 : index
    %11 = vector.load %arg5[%c0_11, %c0_12] : memref<1x128xf32, #tpu.memory_space<vmem>>, vector<1x128xf32>
    %cst_13 = arith.constant 0.000000e+00 : f32
    %12 = vector.broadcast %cst_13 : f32 to vector<16x128xf32>
    %c0_i32 = arith.constant 0 : i32
    %13 = arith.index_cast %c0_i32 : i32 to index
    %c0_14 = arith.constant 0 : index
    %c0_15 = arith.constant 0 : index
    %14 = vector.load %arg9[%13, %c0_14, %c0_15] : memref<8x16x384xf32, #tpu.memory_space<vmem>>, vector<1x16x384xf32>
    %15 = vector.shape_cast %14 : vector<1x16x384xf32> to vector<16x384xf32>
    %16 = arith.truncf %12 : vector<16x128xf32> to vector<16x128xbf16>
    %cst_16 = arith.constant dense<0.000000e+00> : vector<16x384xf32>
    %17 = tpu.matmul %16, %10, %cst_16 {dimension_numbers = #tpu.dot_dimension_numbers<[1], [0], [0], [1], [0, 0, 1, 1], [], []>} : vector<16x128xbf16>, vector<128x384xbf16>, vector<16x384xf32> -> vector<16x384xf32>
    %18 = vector.extract_strided_slice %15 {offsets = [0, 0], sizes = [16, 128], strides = [1, 1]} : vector<16x384xf32> to vector<16x128xf32>
    %19 = vector.extract_strided_slice %17 {offsets = [0, 0], sizes = [16, 128], strides = [1, 1]} : vector<16x384xf32> to vector<16x128xf32>
    %20 = arith.addf %18, %19 : vector<16x128xf32>
    %21 = arith.negf %20 : vector<16x128xf32>
    %22 = math.exp %21 : vector<16x128xf32>
    %cst_17 = arith.constant 1.000000e+00 : f32
    %23 = vector.broadcast %cst_17 : f32 to vector<16x128xf32>
    %24 = arith.addf %23, %22 : vector<16x128xf32>
    %25 = arith.divf %23, %24 : vector<16x128xf32>
    %26 = vector.extract_strided_slice %15 {offsets = [0, 128], sizes = [16, 128], strides = [1, 1]} : vector<16x384xf32> to vector<16x128xf32>
    %27 = vector.extract_strided_slice %17 {offsets = [0, 128], sizes = [16, 128], strides = [1, 1]} : vector<16x384xf32> to vector<16x128xf32>
    %28 = arith.addf %26, %27 : vector<16x128xf32>
    %29 = arith.negf %28 : vector<16x128xf32>
    %30 = math.exp %29 : vector<16x128xf32>
    %cst_18 = arith.constant 1.000000e+00 : f32
    %31 = vector.broadcast %cst_18 : f32 to vector<16x128xf32>
    %32 = arith.addf %31, %30 : vector<16x128xf32>
    %33 = arith.divf %31, %32 : vector<16x128xf32>
    %34 = vector.extract_strided_slice %15 {offsets = [0, 256], sizes = [16, 128], strides = [1, 1]} : vector<16x384xf32> to vector<16x128xf32>
    %35 = vector.extract_strided_slice %17 {offsets = [0, 256], sizes = [16, 128], strides = [1, 1]} : vector<16x384xf32> to vector<16x128xf32>
    %36 = vector.broadcast %11 : vector<1x128xf32> to vector<16x128xf32>
    %37 = arith.addf %35, %36 : vector<16x128xf32>
    %38 = arith.mulf %25, %37 : vector<16x128xf32>
    %39 = arith.addf %34, %38 : vector<16x128xf32>
    %40 = math.tanh %39 : vector<16x128xf32>
    %cst_19 = arith.constant 1.000000e+00 : f32
    %41 = vector.broadcast %cst_19 : f32 to vector<16x128xf32>
    %42 = arith.subf %41, %33 : vector<16x128xf32>
    %43 = arith.mulf %42, %40 : vector<16x128xf32>
    %44 = arith.mulf %33, %12 : vector<16x128xf32>
    %45 = arith.addf %43, %44 : vector<16x128xf32>
    %cst_20 = arith.constant 0.000000e+00 : f32
    %46 = vector.broadcast %cst_20 : f32 to vector<16x128xf32>
    %47 = arith.maximumf %45, %46 : vector<16x128xf32>
    %48 = arith.truncf %47 : vector<16x128xf32> to vector<16x128xbf16>
    %49 = arith.index_cast %c0_i32 : i32 to index
    %c0_21 = arith.constant 0 : index
    %c0_22 = arith.constant 0 : index
    %50 = vector.load %arg10[%49, %c0_21, %c0_22] : memref<8x16x128xbf16, #tpu.memory_space<vmem>>, vector<1x16x128xbf16>
    %51 = vector.shape_cast %50 : vector<1x16x128xbf16> to vector<16x128xbf16>
    %52 = vector.shape_cast %48 : vector<16x128xbf16> to vector<1x16x128xbf16>
    tpu.vector_store %arg10[%49, %c0_21, %c0_22], %52 {strides = array<i32>} : memref<8x16x128xbf16, #tpu.memory_space<vmem>>, vector<1x16x128xbf16>,
    %c1_i32 = arith.constant 1 : i32
    %53 = arith.index_cast %c1_i32 : i32 to index
    %c0_23 = arith.constant 0 : index
    %c0_24 = arith.constant 0 : index
    %54 = vector.load %arg9[%53, %c0_23, %c0_24] : memref<8x16x384xf32, #tpu.memory_space<vmem>>, vector<1x16x384xf32>
    %55 = vector.shape_cast %54 : vector<1x16x384xf32> to vector<16x384xf32>
    %56 = arith.truncf %45 : vector<16x128xf32> to vector<16x128xbf16>
    %cst_25 = arith.constant dense<0.000000e+00> : vector<16x384xf32>
    %57 = tpu.matmul %56, %10, %cst_25 {dimension_numbers = #tpu.dot_dimension_numbers<[1], [0], [0], [1], [0, 0, 1, 1], [], []>} : vector<16x128xbf16>, vector<128x384xbf16>, vector<16x384xf32> -> vector<16x384xf32>
    %58 = vector.extract_strided_slice %55 {offsets = [0, 0], sizes = [16, 128], strides = [1, 1]} : vector<16x384xf32> to vector<16x128xf32>
    %59 = vector.extract_strided_slice %57 {offsets = [0, 0], sizes = [16, 128], strides = [1, 1]} : vector<16x384xf32> to vector<16x128xf32>
    %60 = arith.addf %58, %59 : vector<16x128xf32>
    %61 = arith.negf %60 : vector<16x128xf32>
    %62 = math.exp %61 : vector<16x128xf32>
    %cst_26 = arith.constant 1.000000e+00 : f32
    %63 = vector.broadcast %cst_26 : f32 to vector<16x128xf32>
    %64 = arith.addf %63, %62 : vector<16x128xf32>
    %65 = arith.divf %63, %64 : vector<16x128xf32>
    %66 = vector.extract_strided_slice %55 {offsets = [0, 128], sizes = [16, 128], strides = [1, 1]} : vector<16x384xf32> to vector<16x128xf32>
    %67 = vector.extract_strided_slice %57 {offsets = [0, 128], sizes = [16, 128], strides = [1, 1]} : vector<16x384xf32> to vector<16x128xf32>
    %68 = arith.addf %66, %67 : vector<16x128xf32>
    %69 = arith.negf %68 : vector<16x128xf32>
    %70 = math.exp %69 : vector<16x128xf32>
    %cst_27 = arith.constant 1.000000e+00 : f32
    %71 = vector.broadcast %cst_27 : f32 to vector<16x128xf32>
    %72 = arith.addf %71, %70 : vector<16x128xf32>
    %73 = arith.divf %71, %72 : vector<16x128xf32>
    %74 = vector.extract_strided_slice %55 {offsets = [0, 256], sizes = [16, 128], strides = [1, 1]} : vector<16x384xf32> to vector<16x128xf32>
    %75 = vector.extract_strided_slice %57 {offsets = [0, 256], sizes = [16, 128], strides = [1, 1]} : vector<16x384xf32> to vector<16x128xf32>
    %76 = vector.broadcast %11 : vector<1x128xf32> to vector<16x128xf32>
    %77 = arith.addf %75, %76 : vector<16x128xf32>
    %78 = arith.mulf %65, %77 : vector<16x128xf32>
    %79 = arith.addf %74, %78 : vector<16x128xf32>
    %80 = math.tanh %79 : vector<16x128xf32>
    %cst_28 = arith.constant 1.000000e+00 : f32
    %81 = vector.broadcast %cst_28 : f32 to vector<16x128xf32>
    %82 = arith.subf %81, %73 : vector<16x128xf32>
    %83 = arith.mulf %82, %80 : vector<16x128xf32>
    %84 = arith.mulf %73, %45 : vector<16x128xf32>
    %85 = arith.addf %83, %84 : vector<16x128xf32>
    %cst_29 = arith.constant 0.000000e+00 : f32
    %86 = vector.broadcast %cst_29 : f32 to vector<16x128xf32>
    %87 = arith.maximumf %85, %86 : vector<16x128xf32>
    %88 = arith.truncf %87 : vector<16x128xf32> to vector<16x128xbf16>
    %89 = arith.index_cast %c1_i32 : i32 to index
    %c0_30 = arith.constant 0 : index
    %c0_31 = arith.constant 0 : index
    %90 = vector.load %arg10[%89, %c0_30, %c0_31] : memref<8x16x128xbf16, #tpu.memory_space<vmem>>, vector<1x16x128xbf16>
    %91 = vector.shape_cast %90 : vector<1x16x128xbf16> to vector<16x128xbf16>
    %92 = vector.shape_cast %88 : vector<16x128xbf16> to vector<1x16x128xbf16>
    tpu.vector_store %arg10[%89, %c0_30, %c0_31], %92 {strides = array<i32>} : memref<8x16x128xbf16, #tpu.memory_space<vmem>>, vector<1x16x128xbf16>,
    %c2_i32 = arith.constant 2 : i32
    %93 = arith.index_cast %c2_i32 : i32 to index
    %c0_32 = arith.constant 0 : index
    %c0_33 = arith.constant 0 : index
    %94 = vector.load %arg9[%93, %c0_32, %c0_33] : memref<8x16x384xf32, #tpu.memory_space<vmem>>, vector<1x16x384xf32>
    %95 = vector.shape_cast %94 : vector<1x16x384xf32> to vector<16x384xf32>
    %96 = arith.truncf %85 : vector<16x128xf32> to vector<16x128xbf16>
    %cst_34 = arith.constant dense<0.000000e+00> : vector<16x384xf32>
    %97 = tpu.matmul %96, %10, %cst_34 {dimension_numbers = #tpu.dot_dimension_numbers<[1], [0], [0], [1], [0, 0, 1, 1], [], []>} : vector<16x128xbf16>, vector<128x384xbf16>, vector<16x384xf32> -> vector<16x384xf32>
    %98 = vector.extract_strided_slice %95 {offsets = [0, 0], sizes = [16, 128], strides = [1, 1]} : vector<16x384xf32> to vector<16x128xf32>
    %99 = vector.extract_strided_slice %97 {offsets = [0, 0], sizes = [16, 128], strides = [1, 1]} : vector<16x384xf32> to vector<16x128xf32>
    %100 = arith.addf %98, %99 : vector<16x128xf32>
    %101 = arith.negf %100 : vector<16x128xf32>
    %102 = math.exp %101 : vector<16x128xf32>
    %cst_35 = arith.constant 1.000000e+00 : f32
    %103 = vector.broadcast %cst_35 : f32 to vector<16x128xf32>
    %104 = arith.addf %103, %102 : vector<16x128xf32>
    %105 = arith.divf %103, %104 : vector<16x128xf32>
    %106 = vector.extract_strided_slice %95 {offsets = [0, 128], sizes = [16, 128], strides = [1, 1]} : vector<16x384xf32> to vector<16x128xf32>
    %107 = vector.extract_strided_slice %97 {offsets = [0, 128], sizes = [16, 128], strides = [1, 1]} : vector<16x384xf32> to vector<16x128xf32>
    %108 = arith.addf %106, %107 : vector<16x128xf32>
    %109 = arith.negf %108 : vector<16x128xf32>
    %110 = math.exp %109 : vector<16x128xf32>
    %cst_36 = arith.constant 1.000000e+00 : f32
    %111 = vector.broadcast %cst_36 : f32 to vector<16x128xf32>
    %112 = arith.addf %111, %110 : vector<16x128xf32>
    %113 = arith.divf %111, %112 : vector<16x128xf32>
    %114 = vector.extract_strided_slice %95 {offsets = [0, 256], sizes = [16, 128], strides = [1, 1]} : vector<16x384xf32> to vector<16x128xf32>
    %115 = vector.extract_strided_slice %97 {offsets = [0, 256], sizes = [16, 128], strides = [1, 1]} : vector<16x384xf32> to vector<16x128xf32>
    %116 = vector.broadcast %11 : vector<1x128xf32> to vector<16x128xf32>
    %117 = arith.addf %115, %116 : vector<16x128xf32>
    %118 = arith.mulf %105, %117 : vector<16x128xf32>
    %119 = arith.addf %114, %118 : vector<16x128xf32>
    %120 = math.tanh %119 : vector<16x128xf32>
    %cst_37 = arith.constant 1.000000e+00 : f32
    %121 = vector.broadcast %cst_37 : f32 to vector<16x128xf32>
    %122 = arith.subf %121, %113 : vector<16x128xf32>
    %123 = arith.mulf %122, %120 : vector<16x128xf32>
    %124 = arith.mulf %113, %85 : vector<16x128xf32>
    %125 = arith.addf %123, %124 : vector<16x128xf32>
    %cst_38 = arith.constant 0.000000e+00 : f32
    %126 = vector.broadcast %cst_38 : f32 to vector<16x128xf32>
    %127 = arith.maximumf %125, %126 : vector<16x128xf32>
    %128 = arith.truncf %127 : vector<16x128xf32> to vector<16x128xbf16>
    %129 = arith.index_cast %c2_i32 : i32 to index
    %c0_39 = arith.constant 0 : index
    %c0_40 = arith.constant 0 : index
    %130 = vector.load %arg10[%129, %c0_39, %c0_40] : memref<8x16x128xbf16, #tpu.memory_space<vmem>>, vector<1x16x128xbf16>
    %131 = vector.shape_cast %130 : vector<1x16x128xbf16> to vector<16x128xbf16>
    %132 = vector.shape_cast %128 : vector<16x128xbf16> to vector<1x16x128xbf16>
    tpu.vector_store %arg10[%129, %c0_39, %c0_40], %132 {strides = array<i32>} : memref<8x16x128xbf16, #tpu.memory_space<vmem>>, vector<1x16x128xbf16>,
    %c3_i32 = arith.constant 3 : i32
    %133 = arith.index_cast %c3_i32 : i32 to index
    %c0_41 = arith.constant 0 : index
    %c0_42 = arith.constant 0 : index
    %134 = vector.load %arg9[%133, %c0_41, %c0_42] : memref<8x16x384xf32, #tpu.memory_space<vmem>>, vector<1x16x384xf32>
    %135 = vector.shape_cast %134 : vector<1x16x384xf32> to vector<16x384xf32>
    %136 = arith.truncf %125 : vector<16x128xf32> to vector<16x128xbf16>
    %cst_43 = arith.constant dense<0.000000e+00> : vector<16x384xf32>
    %137 = tpu.matmul %136, %10, %cst_43 {dimension_numbers = #tpu.dot_dimension_numbers<[1], [0], [0], [1], [0, 0, 1, 1], [], []>} : vector<16x128xbf16>, vector<128x384xbf16>, vector<16x384xf32> -> vector<16x384xf32>
    %138 = vector.extract_strided_slice %135 {offsets = [0, 0], sizes = [16, 128], strides = [1, 1]} : vector<16x384xf32> to vector<16x128xf32>
    %139 = vector.extract_strided_slice %137 {offsets = [0, 0], sizes = [16, 128], strides = [1, 1]} : vector<16x384xf32> to vector<16x128xf32>
    %140 = arith.addf %138, %139 : vector<16x128xf32>
    %141 = arith.negf %140 : vector<16x128xf32>
    %142 = math.exp %141 : vector<16x128xf32>
    %cst_44 = arith.constant 1.000000e+00 : f32
    %143 = vector.broadcast %cst_44 : f32 to vector<16x128xf32>
    %144 = arith.addf %143, %142 : vector<16x128xf32>
    %145 = arith.divf %143, %144 : vector<16x128xf32>
    %146 = vector.extract_strided_slice %135 {offsets = [0, 128], sizes = [16, 128], strides = [1, 1]} : vector<16x384xf32> to vector<16x128xf32>
    %147 = vector.extract_strided_slice %137 {offsets = [0, 128], sizes = [16, 128], strides = [1, 1]} : vector<16x384xf32> to vector<16x128xf32>
    %148 = arith.addf %146, %147 : vector<16x128xf32>
    %149 = arith.negf %148 : vector<16x128xf32>
    %150 = math.exp %149 : vector<16x128xf32>
    %cst_45 = arith.constant 1.000000e+00 : f32
    %151 = vector.broadcast %cst_45 : f32 to vector<16x128xf32>
    %152 = arith.addf %151, %150 : vector<16x128xf32>
    %153 = arith.divf %151, %152 : vector<16x128xf32>
    %154 = vector.extract_strided_slice %135 {offsets = [0, 256], sizes = [16, 128], strides = [1, 1]} : vector<16x384xf32> to vector<16x128xf32>
    %155 = vector.extract_strided_slice %137 {offsets = [0, 256], sizes = [16, 128], strides = [1, 1]} : vector<16x384xf32> to vector<16x128xf32>
    %156 = vector.broadcast %11 : vector<1x128xf32> to vector<16x128xf32>
    %157 = arith.addf %155, %156 : vector<16x128xf32>
    %158 = arith.mulf %145, %157 : vector<16x128xf32>
    %159 = arith.addf %154, %158 : vector<16x128xf32>
    %160 = math.tanh %159 : vector<16x128xf32>
    %cst_46 = arith.constant 1.000000e+00 : f32
    %161 = vector.broadcast %cst_46 : f32 to vector<16x128xf32>
    %162 = arith.subf %161, %153 : vector<16x128xf32>
    %163 = arith.mulf %162, %160 : vector<16x128xf32>
    %164 = arith.mulf %153, %125 : vector<16x128xf32>
    %165 = arith.addf %163, %164 : vector<16x128xf32>
    %cst_47 = arith.constant 0.000000e+00 : f32
    %166 = vector.broadcast %cst_47 : f32 to vector<16x128xf32>
    %167 = arith.maximumf %165, %166 : vector<16x128xf32>
    %168 = arith.truncf %167 : vector<16x128xf32> to vector<16x128xbf16>
    %169 = arith.index_cast %c3_i32 : i32 to index
    %c0_48 = arith.constant 0 : index
    %c0_49 = arith.constant 0 : index
    %170 = vector.load %arg10[%169, %c0_48, %c0_49] : memref<8x16x128xbf16, #tpu.memory_space<vmem>>, vector<1x16x128xbf16>
    %171 = vector.shape_cast %170 : vector<1x16x128xbf16> to vector<16x128xbf16>
    %172 = vector.shape_cast %168 : vector<16x128xbf16> to vector<1x16x128xbf16>
    tpu.vector_store %arg10[%169, %c0_48, %c0_49], %172 {strides = array<i32>} : memref<8x16x128xbf16, #tpu.memory_space<vmem>>, vector<1x16x128xbf16>,
    %c4_i32 = arith.constant 4 : i32
    %173 = arith.index_cast %c4_i32 : i32 to index
    %c0_50 = arith.constant 0 : index
    %c0_51 = arith.constant 0 : index
    %174 = vector.load %arg9[%173, %c0_50, %c0_51] : memref<8x16x384xf32, #tpu.memory_space<vmem>>, vector<1x16x384xf32>
    %175 = vector.shape_cast %174 : vector<1x16x384xf32> to vector<16x384xf32>
    %176 = arith.truncf %165 : vector<16x128xf32> to vector<16x128xbf16>
    %cst_52 = arith.constant dense<0.000000e+00> : vector<16x384xf32>
    %177 = tpu.matmul %176, %10, %cst_52 {dimension_numbers = #tpu.dot_dimension_numbers<[1], [0], [0], [1], [0, 0, 1, 1], [], []>} : vector<16x128xbf16>, vector<128x384xbf16>, vector<16x384xf32> -> vector<16x384xf32>
    %178 = vector.extract_strided_slice %175 {offsets = [0, 0], sizes = [16, 128], strides = [1, 1]} : vector<16x384xf32> to vector<16x128xf32>
    %179 = vector.extract_strided_slice %177 {offsets = [0, 0], sizes = [16, 128], strides = [1, 1]} : vector<16x384xf32> to vector<16x128xf32>
    %180 = arith.addf %178, %179 : vector<16x128xf32>
    %181 = arith.negf %180 : vector<16x128xf32>
    %182 = math.exp %181 : vector<16x128xf32>
    %cst_53 = arith.constant 1.000000e+00 : f32
    %183 = vector.broadcast %cst_53 : f32 to vector<16x128xf32>
    %184 = arith.addf %183, %182 : vector<16x128xf32>
    %185 = arith.divf %183, %184 : vector<16x128xf32>
    %186 = vector.extract_strided_slice %175 {offsets = [0, 128], sizes = [16, 128], strides = [1, 1]} : vector<16x384xf32> to vector<16x128xf32>
    %187 = vector.extract_strided_slice %177 {offsets = [0, 128], sizes = [16, 128], strides = [1, 1]} : vector<16x384xf32> to vector<16x128xf32>
    %188 = arith.addf %186, %187 : vector<16x128xf32>
    %189 = arith.negf %188 : vector<16x128xf32>
    %190 = math.exp %189 : vector<16x128xf32>
    %cst_54 = arith.constant 1.000000e+00 : f32
    %191 = vector.broadcast %cst_54 : f32 to vector<16x128xf32>
    %192 = arith.addf %191, %190 : vector<16x128xf32>
    %193 = arith.divf %191, %192 : vector<16x128xf32>
    %194 = vector.extract_strided_slice %175 {offsets = [0, 256], sizes = [16, 128], strides = [1, 1]} : vector<16x384xf32> to vector<16x128xf32>
    %195 = vector.extract_strided_slice %177 {offsets = [0, 256], sizes = [16, 128], strides = [1, 1]} : vector<16x384xf32> to vector<16x128xf32>
    %196 = vector.broadcast %11 : vector<1x128xf32> to vector<16x128xf32>
    %197 = arith.addf %195, %196 : vector<16x128xf32>
    %198 = arith.mulf %185, %197 : vector<16x128xf32>
    %199 = arith.addf %194, %198 : vector<16x128xf32>
    %200 = math.tanh %199 : vector<16x128xf32>
    %cst_55 = arith.constant 1.000000e+00 : f32
    %201 = vector.broadcast %cst_55 : f32 to vector<16x128xf32>
    %202 = arith.subf %201, %193 : vector<16x128xf32>
    %203 = arith.mulf %202, %200 : vector<16x128xf32>
    %204 = arith.mulf %193, %165 : vector<16x128xf32>
    %205 = arith.addf %203, %204 : vector<16x128xf32>
    %cst_56 = arith.constant 0.000000e+00 : f32
    %206 = vector.broadcast %cst_56 : f32 to vector<16x128xf32>
    %207 = arith.maximumf %205, %206 : vector<16x128xf32>
    %208 = arith.truncf %207 : vector<16x128xf32> to vector<16x128xbf16>
    %209 = arith.index_cast %c4_i32 : i32 to index
    %c0_57 = arith.constant 0 : index
    %c0_58 = arith.constant 0 : index
    %210 = vector.load %arg10[%209, %c0_57, %c0_58] : memref<8x16x128xbf16, #tpu.memory_space<vmem>>, vector<1x16x128xbf16>
    %211 = vector.shape_cast %210 : vector<1x16x128xbf16> to vector<16x128xbf16>
    %212 = vector.shape_cast %208 : vector<16x128xbf16> to vector<1x16x128xbf16>
    tpu.vector_store %arg10[%209, %c0_57, %c0_58], %212 {strides = array<i32>} : memref<8x16x128xbf16, #tpu.memory_space<vmem>>, vector<1x16x128xbf16>,
    %c5_i32 = arith.constant 5 : i32
    %213 = arith.index_cast %c5_i32 : i32 to index
    %c0_59 = arith.constant 0 : index
    %c0_60 = arith.constant 0 : index
    %214 = vector.load %arg9[%213, %c0_59, %c0_60] : memref<8x16x384xf32, #tpu.memory_space<vmem>>, vector<1x16x384xf32>
    %215 = vector.shape_cast %214 : vector<1x16x384xf32> to vector<16x384xf32>
    %216 = arith.truncf %205 : vector<16x128xf32> to vector<16x128xbf16>
    %cst_61 = arith.constant dense<0.000000e+00> : vector<16x384xf32>
    %217 = tpu.matmul %216, %10, %cst_61 {dimension_numbers = #tpu.dot_dimension_numbers<[1], [0], [0], [1], [0, 0, 1, 1], [], []>} : vector<16x128xbf16>, vector<128x384xbf16>, vector<16x384xf32> -> vector<16x384xf32>
    %218 = vector.extract_strided_slice %215 {offsets = [0, 0], sizes = [16, 128], strides = [1, 1]} : vector<16x384xf32> to vector<16x128xf32>
    %219 = vector.extract_strided_slice %217 {offsets = [0, 0], sizes = [16, 128], strides = [1, 1]} : vector<16x384xf32> to vector<16x128xf32>
    %220 = arith.addf %218, %219 : vector<16x128xf32>
    %221 = arith.negf %220 : vector<16x128xf32>
    %222 = math.exp %221 : vector<16x128xf32>
    %cst_62 = arith.constant 1.000000e+00 : f32
    %223 = vector.broadcast %cst_62 : f32 to vector<16x128xf32>
    %224 = arith.addf %223, %222 : vector<16x128xf32>
    %225 = arith.divf %223, %224 : vector<16x128xf32>
    %226 = vector.extract_strided_slice %215 {offsets = [0, 128], sizes = [16, 128], strides = [1, 1]} : vector<16x384xf32> to vector<16x128xf32>
    %227 = vector.extract_strided_slice %217 {offsets = [0, 128], sizes = [16, 128], strides = [1, 1]} : vector<16x384xf32> to vector<16x128xf32>
    %228 = arith.addf %226, %227 : vector<16x128xf32>
    %229 = arith.negf %228 : vector<16x128xf32>
    %230 = math.exp %229 : vector<16x128xf32>
    %cst_63 = arith.constant 1.000000e+00 : f32
    %231 = vector.broadcast %cst_63 : f32 to vector<16x128xf32>
    %232 = arith.addf %231, %230 : vector<16x128xf32>
    %233 = arith.divf %231, %232 : vector<16x128xf32>
    %234 = vector.extract_strided_slice %215 {offsets = [0, 256], sizes = [16, 128], strides = [1, 1]} : vector<16x384xf32> to vector<16x128xf32>
    %235 = vector.extract_strided_slice %217 {offsets = [0, 256], sizes = [16, 128], strides = [1, 1]} : vector<16x384xf32> to vector<16x128xf32>
    %236 = vector.broadcast %11 : vector<1x128xf32> to vector<16x128xf32>
    %237 = arith.addf %235, %236 : vector<16x128xf32>
    %238 = arith.mulf %225, %237 : vector<16x128xf32>
    %239 = arith.addf %234, %238 : vector<16x128xf32>
    %240 = math.tanh %239 : vector<16x128xf32>
    %cst_64 = arith.constant 1.000000e+00 : f32
    %241 = vector.broadcast %cst_64 : f32 to vector<16x128xf32>
    %242 = arith.subf %241, %233 : vector<16x128xf32>
    %243 = arith.mulf %242, %240 : vector<16x128xf32>
    %244 = arith.mulf %233, %205 : vector<16x128xf32>
    %245 = arith.addf %243, %244 : vector<16x128xf32>
    %cst_65 = arith.constant 0.000000e+00 : f32
    %246 = vector.broadcast %cst_65 : f32 to vector<16x128xf32>
    %247 = arith.maximumf %245, %246 : vector<16x128xf32>
    %248 = arith.truncf %247 : vector<16x128xf32> to vector<16x128xbf16>
    %249 = arith.index_cast %c5_i32 : i32 to index
    %c0_66 = arith.constant 0 : index
    %c0_67 = arith.constant 0 : index
    %250 = vector.load %arg10[%249, %c0_66, %c0_67] : memref<8x16x128xbf16, #tpu.memory_space<vmem>>, vector<1x16x128xbf16>
    %251 = vector.shape_cast %250 : vector<1x16x128xbf16> to vector<16x128xbf16>
    %252 = vector.shape_cast %248 : vector<16x128xbf16> to vector<1x16x128xbf16>
    tpu.vector_store %arg10[%249, %c0_66, %c0_67], %252 {strides = array<i32>} : memref<8x16x128xbf16, #tpu.memory_space<vmem>>, vector<1x16x128xbf16>,
    %c6_i32 = arith.constant 6 : i32
    %253 = arith.index_cast %c6_i32 : i32 to index
    %c0_68 = arith.constant 0 : index
    %c0_69 = arith.constant 0 : index
    %254 = vector.load %arg9[%253, %c0_68, %c0_69] : memref<8x16x384xf32, #tpu.memory_space<vmem>>, vector<1x16x384xf32>
    %255 = vector.shape_cast %254 : vector<1x16x384xf32> to vector<16x384xf32>
    %256 = arith.truncf %245 : vector<16x128xf32> to vector<16x128xbf16>
    %cst_70 = arith.constant dense<0.000000e+00> : vector<16x384xf32>
    %257 = tpu.matmul %256, %10, %cst_70 {dimension_numbers = #tpu.dot_dimension_numbers<[1], [0], [0], [1], [0, 0, 1, 1], [], []>} : vector<16x128xbf16>, vector<128x384xbf16>, vector<16x384xf32> -> vector<16x384xf32>
    %258 = vector.extract_strided_slice %255 {offsets = [0, 0], sizes = [16, 128], strides = [1, 1]} : vector<16x384xf32> to vector<16x128xf32>
    %259 = vector.extract_strided_slice %257 {offsets = [0, 0], sizes = [16, 128], strides = [1, 1]} : vector<16x384xf32> to vector<16x128xf32>
    %260 = arith.addf %258, %259 : vector<16x128xf32>
    %261 = arith.negf %260 : vector<16x128xf32>
    %262 = math.exp %261 : vector<16x128xf32>
    %cst_71 = arith.constant 1.000000e+00 : f32
    %263 = vector.broadcast %cst_71 : f32 to vector<16x128xf32>
    %264 = arith.addf %263, %262 : vector<16x128xf32>
    %265 = arith.divf %263, %264 : vector<16x128xf32>
    %266 = vector.extract_strided_slice %255 {offsets = [0, 128], sizes = [16, 128], strides = [1, 1]} : vector<16x384xf32> to vector<16x128xf32>
    %267 = vector.extract_strided_slice %257 {offsets = [0, 128], sizes = [16, 128], strides = [1, 1]} : vector<16x384xf32> to vector<16x128xf32>
    %268 = arith.addf %266, %267 : vector<16x128xf32>
    %269 = arith.negf %268 : vector<16x128xf32>
    %270 = math.exp %269 : vector<16x128xf32>
    %cst_72 = arith.constant 1.000000e+00 : f32
    %271 = vector.broadcast %cst_72 : f32 to vector<16x128xf32>
    %272 = arith.addf %271, %270 : vector<16x128xf32>
    %273 = arith.divf %271, %272 : vector<16x128xf32>
    %274 = vector.extract_strided_slice %255 {offsets = [0, 256], sizes = [16, 128], strides = [1, 1]} : vector<16x384xf32> to vector<16x128xf32>
    %275 = vector.extract_strided_slice %257 {offsets = [0, 256], sizes = [16, 128], strides = [1, 1]} : vector<16x384xf32> to vector<16x128xf32>
    %276 = vector.broadcast %11 : vector<1x128xf32> to vector<16x128xf32>
    %277 = arith.addf %275, %276 : vector<16x128xf32>
    %278 = arith.mulf %265, %277 : vector<16x128xf32>
    %279 = arith.addf %274, %278 : vector<16x128xf32>
    %280 = math.tanh %279 : vector<16x128xf32>
    %cst_73 = arith.constant 1.000000e+00 : f32
    %281 = vector.broadcast %cst_73 : f32 to vector<16x128xf32>
    %282 = arith.subf %281, %273 : vector<16x128xf32>
    %283 = arith.mulf %282, %280 : vector<16x128xf32>
    %284 = arith.mulf %273, %245 : vector<16x128xf32>
    %285 = arith.addf %283, %284 : vector<16x128xf32>
    %cst_74 = arith.constant 0.000000e+00 : f32
    %286 = vector.broadcast %cst_74 : f32 to vector<16x128xf32>
    %287 = arith.maximumf %285, %286 : vector<16x128xf32>
    %288 = arith.truncf %287 : vector<16x128xf32> to vector<16x128xbf16>
    %289 = arith.index_cast %c6_i32 : i32 to index
    %c0_75 = arith.constant 0 : index
    %c0_76 = arith.constant 0 : index
    %290 = vector.load %arg10[%289, %c0_75, %c0_76] : memref<8x16x128xbf16, #tpu.memory_space<vmem>>, vector<1x16x128xbf16>
    %291 = vector.shape_cast %290 : vector<1x16x128xbf16> to vector<16x128xbf16>
    %292 = vector.shape_cast %288 : vector<16x128xbf16> to vector<1x16x128xbf16>
    tpu.vector_store %arg10[%289, %c0_75, %c0_76], %292 {strides = array<i32>} : memref<8x16x128xbf16, #tpu.memory_space<vmem>>, vector<1x16x128xbf16>,
    %c7_i32 = arith.constant 7 : i32
    %293 = arith.index_cast %c7_i32 : i32 to index
    %c0_77 = arith.constant 0 : index
    %c0_78 = arith.constant 0 : index
    %294 = vector.load %arg9[%293, %c0_77, %c0_78] : memref<8x16x384xf32, #tpu.memory_space<vmem>>, vector<1x16x384xf32>
    %295 = vector.shape_cast %294 : vector<1x16x384xf32> to vector<16x384xf32>
    %296 = arith.truncf %285 : vector<16x128xf32> to vector<16x128xbf16>
    %cst_79 = arith.constant dense<0.000000e+00> : vector<16x384xf32>
    %297 = tpu.matmul %296, %10, %cst_79 {dimension_numbers = #tpu.dot_dimension_numbers<[1], [0], [0], [1], [0, 0, 1, 1], [], []>} : vector<16x128xbf16>, vector<128x384xbf16>, vector<16x384xf32> -> vector<16x384xf32>
    %298 = vector.extract_strided_slice %295 {offsets = [0, 0], sizes = [16, 128], strides = [1, 1]} : vector<16x384xf32> to vector<16x128xf32>
    %299 = vector.extract_strided_slice %297 {offsets = [0, 0], sizes = [16, 128], strides = [1, 1]} : vector<16x384xf32> to vector<16x128xf32>
    %300 = arith.addf %298, %299 : vector<16x128xf32>
    %301 = arith.negf %300 : vector<16x128xf32>
    %302 = math.exp %301 : vector<16x128xf32>
    %cst_80 = arith.constant 1.000000e+00 : f32
    %303 = vector.broadcast %cst_80 : f32 to vector<16x128xf32>
    %304 = arith.addf %303, %302 : vector<16x128xf32>
    %305 = arith.divf %303, %304 : vector<16x128xf32>
    %306 = vector.extract_strided_slice %295 {offsets = [0, 128], sizes = [16, 128], strides = [1, 1]} : vector<16x384xf32> to vector<16x128xf32>
    %307 = vector.extract_strided_slice %297 {offsets = [0, 128], sizes = [16, 128], strides = [1, 1]} : vector<16x384xf32> to vector<16x128xf32>
    %308 = arith.addf %306, %307 : vector<16x128xf32>
    %309 = arith.negf %308 : vector<16x128xf32>
    %310 = math.exp %309 : vector<16x128xf32>
    %cst_81 = arith.constant 1.000000e+00 : f32
    %311 = vector.broadcast %cst_81 : f32 to vector<16x128xf32>
    %312 = arith.addf %311, %310 : vector<16x128xf32>
    %313 = arith.divf %311, %312 : vector<16x128xf32>
    %314 = vector.extract_strided_slice %295 {offsets = [0, 256], sizes = [16, 128], strides = [1, 1]} : vector<16x384xf32> to vector<16x128xf32>
    %315 = vector.extract_strided_slice %297 {offsets = [0, 256], sizes = [16, 128], strides = [1, 1]} : vector<16x384xf32> to vector<16x128xf32>
    %316 = vector.broadcast %11 : vector<1x128xf32> to vector<16x128xf32>
    %317 = arith.addf %315, %316 : vector<16x128xf32>
    %318 = arith.mulf %305, %317 : vector<16x128xf32>
    %319 = arith.addf %314, %318 : vector<16x128xf32>
    %320 = math.tanh %319 : vector<16x128xf32>
    %cst_82 = arith.constant 1.000000e+00 : f32
    %321 = vector.broadcast %cst_82 : f32 to vector<16x128xf32>
    %322 = arith.subf %321, %313 : vector<16x128xf32>
    %323 = arith.mulf %322, %320 : vector<16x128xf32>
    %324 = arith.mulf %313, %285 : vector<16x128xf32>
    %325 = arith.addf %323, %324 : vector<16x128xf32>
    %cst_83 = arith.constant 0.000000e+00 : f32
    %326 = vector.broadcast %cst_83 : f32 to vector<16x128xf32>
    %327 = arith.maximumf %325, %326 : vector<16x128xf32>
    %328 = arith.truncf %327 : vector<16x128xf32> to vector<16x128xbf16>
    %329 = arith.index_cast %c7_i32 : i32 to index
    %c0_84 = arith.constant 0 : index
    %c0_85 = arith.constant 0 : index
    %330 = vector.load %arg10[%329, %c0_84, %c0_85] : memref<8x16x128xbf16, #tpu.memory_space<vmem>>, vector<1x16x128xbf16>
    %331 = vector.shape_cast %330 : vector<1x16x128xbf16> to vector<16x128xbf16>
    %332 = vector.shape_cast %328 : vector<16x128xbf16> to vector<1x16x128xbf16>
    tpu.vector_store %arg10[%329, %c0_84, %c0_85], %332 {strides = array<i32>} : memref<8x16x128xbf16, #tpu.memory_space<vmem>>, vector<1x16x128xbf16>,
    %c8_i32 = arith.constant 8 : i32
    %c0_86 = arith.constant 0 : index
    %c0_87 = arith.constant 0 : index
    %c0_88 = arith.constant 0 : index
    %333 = vector.load %arg10[%c0_86, %c0_87, %c0_88] : memref<8x16x128xbf16, #tpu.memory_space<vmem>>, vector<8x16x128xbf16>
    %334 = vector.shape_cast %333 : vector<8x16x128xbf16> to vector<128x128xbf16>
    %c0_89 = arith.constant 0 : index
    %c0_90 = arith.constant 0 : index
    %335 = vector.load %arg6[%c0_89, %c0_90] : memref<128x256xbf16, #tpu.memory_space<vmem>>, vector<128x256xbf16>
    %cst_91 = arith.constant dense<0.000000e+00> : vector<128x256xf32>
    %336 = tpu.matmul %334, %335, %cst_91 {dimension_numbers = #tpu.dot_dimension_numbers<[1], [0], [0], [1], [0, 0, 1, 1], [], []>} : vector<128x128xbf16>, vector<128x256xbf16>, vector<128x256xf32> -> vector<128x256xf32>
    %c0_92 = arith.constant 0 : index
    %c0_93 = arith.constant 0 : index
    %337 = vector.load %arg7[%c0_92, %c0_93] : memref<1x256xf32, #tpu.memory_space<vmem>>, vector<1x256xf32>
    %338 = vector.broadcast %337 : vector<1x256xf32> to vector<128x256xf32>
    %339 = arith.addf %336, %338 : vector<128x256xf32>
    %340 = vector.shape_cast %339 : vector<128x256xf32> to vector<8x16x256xf32>
    %341 = arith.addf %340, %0 : vector<8x16x256xf32>
    %c0_94 = arith.constant 0 : index
    %c0_95 = arith.constant 0 : index
    %c0_96 = arith.constant 0 : index
    %342 = vector.load %arg8[%c0_94, %c0_95, %c0_96] : memref<8x16x256xf32, #tpu.memory_space<vmem>>, vector<8x16x256xf32>
    tpu.vector_store %arg8[%c0_94, %c0_95, %c0_96], %341 {strides = array<i32>} : memref<8x16x256xf32, #tpu.memory_space<vmem>>, vector<8x16x256xf32>,
    return
  }
  func.func @transform_0(%arg0: i32) -> (i32, i32, i32) {
    %c0_i32 = arith.constant 0 : i32
    %c0_i32_0 = arith.constant 0 : i32
    %c0_i32_1 = arith.constant 0 : i32
    return %c0_i32, %arg0, %c0_i32_0 : i32, i32, i32
  }
  func.func @transform_1(%arg0: i32) -> (i32, i32) {
    %c0_i32 = arith.constant 0 : i32
    %c0_i32_0 = arith.constant 0 : i32
    %c0_i32_1 = arith.constant 0 : i32
    return %c0_i32, %c0_i32_0 : i32, i32
  }
  func.func @transform_2(%arg0: i32) -> (i32, i32) {
    %c0_i32 = arith.constant 0 : i32
    %c0_i32_0 = arith.constant 0 : i32
    %c0_i32_1 = arith.constant 0 : i32
    return %c0_i32, %c0_i32_0 : i32, i32
  }
  func.func @transform_3(%arg0: i32) -> (i32, i32) {
    %c0_i32 = arith.constant 0 : i32
    %c0_i32_0 = arith.constant 0 : i32
    %c0_i32_1 = arith.constant 0 : i32
    return %c0_i32, %c0_i32_0 : i32, i32
  }
  func.func @transform_4(%arg0: i32) -> (i32, i32) {
    %c0_i32 = arith.constant 0 : i32
    %c0_i32_0 = arith.constant 0 : i32
    %c0_i32_1 = arith.constant 0 : i32
    return %c0_i32, %c0_i32_0 : i32, i32
  }
  func.func @transform_5(%arg0: i32) -> (i32, i32) {
    %c0_i32 = arith.constant 0 : i32
    %c0_i32_0 = arith.constant 0 : i32
    %c0_i32_1 = arith.constant 0 : i32
    return %c0_i32, %c0_i32_0 : i32, i32
  }
  func.func @transform_6(%arg0: i32) -> (i32, i32) {
    %c0_i32 = arith.constant 0 : i32
    %c0_i32_0 = arith.constant 0 : i32
    %c0_i32_1 = arith.constant 0 : i32
    return %c0_i32, %c0_i32_0 : i32, i32
  }
  func.func @transform_7(%arg0: i32) -> (i32, i32, i32) {
    %c0_i32 = arith.constant 0 : i32
    %c0_i32_0 = arith.constant 0 : i32
    %c0_i32_1 = arith.constant 0 : i32
    return %c0_i32, %arg0, %c0_i32_0 : i32, i32, i32
  }
}

</mosaic_0001>

<llo_original>
// kernel: tpu_custom_call.1
$region0: #{tpu_custom_call.1}
  #allocation0 [shape = 'u32[]', space=smem, size = 0x4, offset = 0x4, fixed_abs, tag = 'smem constant byte address 0x4 - core index']
  #allocation1 [shape = 'u32[72,128]{1,0:T(1,128)}', space=vmem, size = 0x9000, scoped, tag = 'internal scratch']
  #allocation2 [shape = 'f32[8,16,384]{2,1,0:T(8,128)}', space=vmem, size = 0x30000, scoped, tag = 'scratch operand']
  #allocation3 [shape = 'bf16[8,16,128]{2,1,0:T(8,128)(2,1)}', space=vmem, size = 0x8000, scoped, tag = 'scratch operand']
  #allocation14 [shape = 's32[]', space=sflag, size = 0x4, offset = 0, fixed_abs, tag = 'sflag constant byte address 0x0 - dummy sync flag']
  #allocation16 [shape = 's32[]', space=sflag, size = 0x4, offset = 0, fixed_abs, tag = 'sflag constant byte address 0x0 - dummy sync flag']
  %s0 = inlined_call_operand.hbm [shape: f32[8,32,256], index: 0, kind: input, shape index: {}]
  %s1 = inlined_call_operand.hbm [shape: bf16[256,384], index: 1, kind: input, shape index: {}]
  %s2 = inlined_call_operand.hbm [shape: bf16[128,384], index: 2, kind: input, shape index: {}]
  %s3 = inlined_call_operand.hbm [shape: f32[1,384], index: 3, kind: input, shape index: {}]
  %s4 = inlined_call_operand.vmem [shape: f32[1,128], index: 4, kind: input, shape index: {}]
  %s5 = inlined_call_operand.hbm [shape: bf16[128,256], index: 5, kind: input, shape index: {}]
  %s6 = inlined_call_operand.vmem [shape: f32[1,256], index: 6, kind: input, shape index: {}]
  %s7 = inlined_call_operand.hbm [shape: f32[8,32,256], index: 7, kind: output, shape index: {}]
  %s8 = sld [smem:[#allocation0]]
  $region81: #{tpu_custom_call.1} parent=0
    _
  %s10 = ssub.s32 1, %s8
  %s11 = scalar_select 0, %s10, %s8
  $region1: #{tpu_custom_call.1} parent=0
    #allocation4 [shape = 'u8[262144]{0}', space=vmem, size = 0x40000, scoped, tag = 'input window, operand 0']
    #allocation5 [shape = 's32[2]{0}', space=sflag, size = 0x8, scoped, tag = 'scoped memory for tpu_custom_call.1']
    #allocation6 [shape = 's32[2]{0}', space=sflag, size = 0x8, scoped, tag = 'scoped memory for tpu_custom_call.1']
    #allocation7 [shape = 'u8[196608]{0}', space=vmem, size = 0x30000, scoped, tag = 'input window, operand 1, single buffered']
    #allocation8 [shape = 's32[1]{0}', space=sflag, size = 0x4, scoped, tag = 'scoped memory for tpu_custom_call.1']
    #allocation9 [shape = 'u8[98304]{0}', space=vmem, size = 0x18000, scoped, tag = 'input window, operand 2, single buffered']
    #allocation10 [shape = 'u8[1536]{0}', space=vmem, size = 0x800, scoped, tag = 'input window, operand 3, single buffered']
    #allocation11 [shape = 's32[1]{0}', space=sflag, size = 0x4, scoped, tag = 'scoped memory for tpu_custom_call.1']
    #allocation12 [shape = 'u8[65536]{0}', space=vmem, size = 0x10000, scoped, tag = 'input window, operand 5, single buffered']
    #allocation13 [shape = 'u8[262144]{0}', space=vmem, size = 0x40000, scoped, tag = 'output window, operand 0']
    %12 = vsyncpa [#allocation5], 0
    %s13 = scalar_lea.sflag [#allocation5], 1
    %14 = vsyncpa %s13, 0
    %15 = vsyncpa [#allocation8], 0
    %16 = vsyncpa [#allocation11], 0
    %17 = vsyncpa [#allocation6], 0
    %s18 = scalar_lea.sflag [#allocation6], 1
    %19 = vsyncpa %s18, 0
    loop: start=0, step=1, limit=4
    $region2: #{tpu_custom_call.1} parent=1 // loop_pre_header
      _
    $region3: #{tpu_custom_call.1} parent=1 // loop_header
      %s21 = sphi 0, %s25
      %p22 = scmp.ge.s32.totalorder %s21, 4
      %s31 = sphi 0, %s33
      %s34 = sphi 0, %s31
      %s35 = sphi 0, %s34
      %s51 = sphi 0, %s35
      %s55 = sphi 0, %s55
      %s57 = sphi 0, %s55
      %s58 = sphi 0, %s57
      %s72 = sphi 0, %s58
      %s76 = sphi 0, %s76
      %s78 = sphi 0, %s76
      %s79 = sphi 0, %s78
      %s93 = sphi 0, %s79
      %s97 = sphi 0, %s97
      %s99 = sphi 0, %s97
      %s100 = sphi 0, %s99
      %s114 = sphi 0, %s100
      %s118 = sphi 0, %s118
      %s120 = sphi 0, %s118
      %s121 = sphi 0, %s120
      %s135 = sphi 0, %s121
      %s139 = sphi 0, %s139
      %s141 = sphi 0, %s139
      %s142 = sphi 0, %s141
      %s156 = sphi 0, %s142
      %s160 = sphi 0, %s160
      %s162 = sphi 0, %s160
      %s163 = sphi 0, %s162
      %s177 = sphi 0, %s163
      %s183 = sphi 0, %s185
      %s186 = sphi 0, %s183
      %s187 = sphi 0, %s186
      %s203 = sphi 0, %s187
    $region4: #{tpu_custom_call.1} parent=1 // loop_header_branch
      %24 = sbr.rel (%p22) target = $region8
    $region5: #{tpu_custom_call.1} parent=1 // loop_body
      %s26 = ssub.s32 %s21, 1
      %s27 = ssub.s32 %s21, 2
      %s28 = sadd.s32 %s21, 1
      %s29 = ssub.s32 %s21, %s28
      %p30 = scmp.eq.s32.totalorder %s29, 0
      %s32 = sadd.s32 %s31, 1
      %s33 = scalar_select %p30, %s31, %s32
      %p36 = pneg %p30
      %p37 = scmp.eq.s32.totalorder %s21, 1
      %p38 = por %p36, %p37
      %p39 = scmp.ne.s32.totalorder %s31, %s34
      %p40 = scmp.eq.s32.totalorder %s21, 0
      %p41 = por %p39, %p40
      %p42 = scmp.ne.s32.totalorder %s31, %s34
      %p43 = scmp.eq.s32.totalorder %s26, 1
      %p44 = por %p42, %p43
      %p45 = scmp.ne.s32.totalorder %s34, %s35
      %p46 = scmp.eq.s32.totalorder %s26, 0
      %p47 = por %p45, %p46
      %p48 = scmp.ne.s32.totalorder %s34, %s35
      %p49 = scmp.eq.s32.totalorder %s27, 1
      %p50 = por %p48, %p49
      %p52 = scmp.ne.s32.totalorder %s35, %s51
      %p53 = scmp.eq.s32.totalorder %s27, 0
      %p54 = por %p52, %p53
      %s56 = sadd.s32 %s55, 1
      %p59 = scmp.eq.s32.totalorder %s21, 1
      %p60 = scmp.ne.s32.totalorder %s55, %s57
      %p61 = scmp.eq.s32.totalorder %s21, 0
      %p62 = por %p60, %p61
      %p63 = scmp.ne.s32.totalorder %s55, %s57
      %p64 = scmp.eq.s32.totalorder %s26, 1
      %p65 = por %p63, %p64
      %p66 = scmp.ne.s32.totalorder %s57, %s58
      %p67 = scmp.eq.s32.totalorder %s26, 0
      %p68 = por %p66, %p67
      %p69 = scmp.ne.s32.totalorder %s57, %s58
      %p70 = scmp.eq.s32.totalorder %s27, 1
      %p71 = por %p69, %p70
      %p73 = scmp.ne.s32.totalorder %s58, %s72
      %p74 = scmp.eq.s32.totalorder %s27, 0
      %p75 = por %p73, %p74
      %s77 = sadd.s32 %s76, 1
      %p80 = scmp.eq.s32.totalorder %s21, 1
      %p81 = scmp.ne.s32.totalorder %s76, %s78
      %p82 = scmp.eq.s32.totalorder %s21, 0
      %p83 = por %p81, %p82
      %p84 = scmp.ne.s32.totalorder %s76, %s78
      %p85 = scmp.eq.s32.totalorder %s26, 1
      %p86 = por %p84, %p85
      %p87 = scmp.ne.s32.totalorder %s78, %s79
      %p88 = scmp.eq.s32.totalorder %s26, 0
      %p89 = por %p87, %p88
      %p90 = scmp.ne.s32.totalorder %s78, %s79
      %p91 = scmp.eq.s32.totalorder %s27, 1
      %p92 = por %p90, %p91
      %p94 = scmp.ne.s32.totalorder %s79, %s93
      %p95 = scmp.eq.s32.totalorder %s27, 0
      %p96 = por %p94, %p95
      %s98 = sadd.s32 %s97, 1
      %p101 = scmp.eq.s32.totalorder %s21, 1
      %p102 = scmp.ne.s32.totalorder %s97, %s99
      %p103 = scmp.eq.s32.totalorder %s21, 0
      %p104 = por %p102, %p103
      %p105 = scmp.ne.s32.totalorder %s97, %s99
      %p106 = scmp.eq.s32.totalorder %s26, 1
      %p107 = por %p105, %p106
      %p108 = scmp.ne.s32.totalorder %s99, %s100
      %p109 = scmp.eq.s32.totalorder %s26, 0
      %p110 = por %p108, %p109
      %p111 = scmp.ne.s32.totalorder %s99, %s100
      %p112 = scmp.eq.s32.totalorder %s27, 1
      %p113 = por %p111, %p112
      %p115 = scmp.ne.s32.totalorder %s100, %s114
      %p116 = scmp.eq.s32.totalorder %s27, 0
      %p117 = por %p115, %p116
      %s119 = sadd.s32 %s118, 1
      %p122 = scmp.eq.s32.totalorder %s21, 1
      %p123 = scmp.ne.s32.totalorder %s118, %s120
      %p124 = scmp.eq.s32.totalorder %s21, 0
      %p125 = por %p123, %p124
      %p126 = scmp.ne.s32.totalorder %s118, %s120
      %p127 = scmp.eq.s32.totalorder %s26, 1
      %p128 = por %p126, %p127
      %p129 = scmp.ne.s32.totalorder %s120, %s121
      %p130 = scmp.eq.s32.totalorder %s26, 0
      %p131 = por %p129, %p130
      %p132 = scmp.ne.s32.totalorder %s120, %s121
      %p133 = scmp.eq.s32.totalorder %s27, 1
      %p134 = por %p132, %p133
      %p136 = scmp.ne.s32.totalorder %s121, %s135
      %p137 = scmp.eq.s32.totalorder %s27, 0
      %p138 = por %p136, %p137
      %s140 = sadd.s32 %s139, 1
      %p143 = scmp.eq.s32.totalorder %s21, 1
      %p144 = scmp.ne.s32.totalorder %s139, %s141
      %p145 = scmp.eq.s32.totalorder %s21, 0
      %p146 = por %p144, %p145
      %p147 = scmp.ne.s32.totalorder %s139, %s141
      %p148 = scmp.eq.s32.totalorder %s26, 1
      %p149 = por %p147, %p148
      %p150 = scmp.ne.s32.totalorder %s141, %s142
      %p151 = scmp.eq.s32.totalorder %s26, 0
      %p152 = por %p150, %p151
      %p153 = scmp.ne.s32.totalorder %s141, %s142
      %p154 = scmp.eq.s32.totalorder %s27, 1
      %p155 = por %p153, %p154
      %p157 = scmp.ne.s32.totalorder %s142, %s156
      %p158 = scmp.eq.s32.totalorder %s27, 0
      %p159 = por %p157, %p158
      %s161 = sadd.s32 %s160, 1
      %p164 = scmp.eq.s32.totalorder %s21, 1
      %p165 = scmp.ne.s32.totalorder %s160, %s162
      %p166 = scmp.eq.s32.totalorder %s21, 0
      %p167 = por %p165, %p166
      %p168 = scmp.ne.s32.totalorder %s160, %s162
      %p169 = scmp.eq.s32.totalorder %s26, 1
      %p170 = por %p168, %p169
      %p171 = scmp.ne.s32.totalorder %s162, %s163
      %p172 = scmp.eq.s32.totalorder %s26, 0
      %p173 = por %p171, %p172
      %p174 = scmp.ne.s32.totalorder %s162, %s163
      %p175 = scmp.eq.s32.totalorder %s27, 1
      %p176 = por %p174, %p175
      %p178 = scmp.ne.s32.totalorder %s163, %s177
      %p179 = scmp.eq.s32.totalorder %s27, 0
      %p180 = por %p178, %p179
      %s181 = ssub.s32 %s21, %s28
      %p182 = scmp.eq.s32.totalorder %s181, 0
      %s184 = sadd.s32 %s183, 1
      %s185 = scalar_select %p182, %s183, %s184
      %p188 = pneg %p182
      %p189 = scmp.eq.s32.totalorder %s21, 1
      %p190 = por %p188, %p189
      %p191 = scmp.ne.s32.totalorder %s183, %s186
      %p192 = scmp.eq.s32.totalorder %s21, 0
      %p193 = por %p191, %p192
      %p194 = scmp.ne.s32.totalorder %s183, %s186
      %p195 = scmp.eq.s32.totalorder %s26, 1
      %p196 = por %p194, %p195
      %p197 = scmp.ne.s32.totalorder %s186, %s187
      %p198 = scmp.eq.s32.totalorder %s26, 0
      %p199 = por %p197, %p198
      %p200 = scmp.ne.s32.totalorder %s186, %s187
      %p201 = scmp.eq.s32.totalorder %s27, 1
      %p202 = por %p200, %p201
      %p204 = scmp.ne.s32.totalorder %s187, %s203
      %p205 = scmp.eq.s32.totalorder %s27, 0
      %p206 = por %p204, %p205
      %p207 = scmp.le.s32.totalorder 1, %s21
      %p208 = scmp.lt.s32.totalorder %s21, 3
      %p209 = pnand %p207, %p208
      %p210 = pneg %p209
      // Predicated region
      $region9: #{tpu_custom_call.1} parent=5 // pred_check
        _
      $region10: #{tpu_custom_call.1} parent=5 // pred_check_branch
        %212 = sbr.rel (%p209) target = $region12
      $region11: #{tpu_custom_call.1} parent=5 // pred_region
        %s213 = ssub.s32 %s21, 1
        // Predicated region
        $region13: #{tpu_custom_call.1} parent=11 // pred_check
          %p214 = pneg %p68
        $region14: #{tpu_custom_call.1} parent=11 // pred_check_branch
          %216 = sbr.rel (%p214) target = $region16
        $region15: #{tpu_custom_call.1} parent=11 // pred_region
          %218 = vsyncadd [#allocation8], 0
          %s219 = sshll.u32 %s1, 4
          %s220 = int_to_ptr.hbm [resolvable:$true] %s219
          %s221 = sshll.u32 [#allocation7], 4
          %s222 = int_to_ptr.vmem [resolvable:$true] %s221
          %227 = dma.hbm_to_vmem [thread:$0]  %s220, 6144, %s222, [#allocation8], 192, 192, 12
        $region16: #{tpu_custom_call.1} parent=11 // pred_fallthru
          _
        // Predicated region
        $region17: #{tpu_custom_call.1} parent=11 // pred_check
          %p228 = pneg %p89
        $region18: #{tpu_custom_call.1} parent=11 // pred_check_branch
          %230 = sbr.rel (%p228) target = $region20
        $region19: #{tpu_custom_call.1} parent=11 // pred_region
          %232 = vsyncadd [#allocation8], 0
          %s233 = sshll.u32 %s2, 4
          %s234 = int_to_ptr.hbm [resolvable:$true] %s233
          %s235 = sshll.u32 [#allocation9], 4
          %s236 = int_to_ptr.vmem [resolvable:$true] %s235
          %241 = dma.hbm_to_vmem [thread:$0]  %s234, 3072, %s236, [#allocation8], 192, 192, 12
        $region20: #{tpu_custom_call.1} parent=11 // pred_fallthru
          _
        // Predicated region
        $region21: #{tpu_custom_call.1} parent=11 // pred_check
          %p242 = pneg %p110
        $region22: #{tpu_custom_call.1} parent=11 // pred_check_branch
          %244 = sbr.rel (%p242) target = $region24
        $region23: #{tpu_custom_call.1} parent=11 // pred_region
          %246 = vsyncadd [#allocation11], 0
          %s248 = sshll.u32 %s3, 4
          %s249 = int_to_ptr.hbm [resolvable:$true] %s248
          %s250 = sshll.u32 [#allocation10], 4
          %s251 = int_to_ptr.vmem [resolvable:$true] %s250
          %253 = dma.hbm_to_vmem [thread:$0]  %s249, 48, %s251, [#allocation11]
        $region24: #{tpu_custom_call.1} parent=11 // pred_fallthru
          _
        // Predicated region
        $region25: #{tpu_custom_call.1} parent=11 // pred_check
          %p254 = pneg %p131
        $region26: #{tpu_custom_call.1} parent=11 // pred_check_branch
          %256 = sbr.rel (%p254) target = $region28
        $region27: #{tpu_custom_call.1} parent=11 // pred_region
          _
        $region28: #{tpu_custom_call.1} parent=11 // pred_fallthru
          _
        // Predicated region
        $region29: #{tpu_custom_call.1} parent=11 // pred_check
          %p257 = pneg %p152
        $region30: #{tpu_custom_call.1} parent=11 // pred_check_branch
          %259 = sbr.rel (%p257) target = $region32
        $region31: #{tpu_custom_call.1} parent=11 // pred_region
          %261 = vsyncadd [#allocation11], 0
          %s262 = sshll.u32 %s5, 4
          %s263 = int_to_ptr.hbm [resolvable:$true] %s262
          %s264 = sshll.u32 [#allocation12], 4
          %s265 = int_to_ptr.vmem [resolvable:$true] %s264
          %270 = dma.hbm_to_vmem [thread:$0]  %s263, 2048, %s265, [#allocation11], 128, 128, 8
        $region32: #{tpu_custom_call.1} parent=11 // pred_fallthru
          _
        // Predicated region
        $region33: #{tpu_custom_call.1} parent=11 // pred_check
          %p271 = pneg %p173
        $region34: #{tpu_custom_call.1} parent=11 // pred_check_branch
          %273 = sbr.rel (%p271) target = $region36
        $region35: #{tpu_custom_call.1} parent=11 // pred_region
          _
        $region36: #{tpu_custom_call.1} parent=11 // pred_fallthru
          _
      $region12: #{tpu_custom_call.1} parent=5 // pred_fallthru
        _
      %p274 = scmp.lt.s32.totalorder %s21, 2
      // Predicated region
      $region37: #{tpu_custom_call.1} parent=5 // pred_check
        %p275 = pneg %p274
      $region38: #{tpu_custom_call.1} parent=5 // pred_check_branch
        %277 = sbr.rel (%p275) target = $region40
      $region39: #{tpu_custom_call.1} parent=5 // pred_region
        // Predicated region
        $region41: #{tpu_custom_call.1} parent=39 // pred_check
          %p278 = pneg %p41
        $region42: #{tpu_custom_call.1} parent=39 // pred_check_branch
          %280 = sbr.rel (%p278) target = $region44
        $region43: #{tpu_custom_call.1} parent=39 // pred_region
          #allocation15 [shape = 'u32[6]{0}', space=smem, size = 0x18, scoped, tag = 'DMA stride descriptor']
          %s281 = sand.u32 %s31, 1
          %s282 = scalar_lea.sflag [#allocation5], %s281
          %s283 = sand.u32 %s31, 1
          %s284 = smul.addr %s283, 256
          %s285 = scalar_lea.vmem [#allocation4], %s284
          %s286 = smul.u32 2, %s21
          %288 = vsyncadd %s282, 0
          %s289 = smul.addr %s286, 2
          %s290 = smul.addr %s289, 8
          %s291 = scalar_lea.hbm %s0, %s290
          %s293 = sshll.u32 1, 14
          %s294 = sxor.u32 4294967295, %s293
          %s296 = sld [smem:[#allocation0]]
          %s297 = sadd.s32 2, %s296
          %s299 = sshll.u32 7, 26
          %s300 = sxor.u32 4294967295, %s299
          %s301 = sand.u32 0, %s300
          %s302 = sshll.u32 %s297, 26
          %s303 = sor.u32 %s301, %s302
          %s304 = sshll.u32 %s291, 4
          %s305 = int_to_ptr.hbm [resolvable:$true] %s304
          %s306 = sshll.u32 %s285, 4
          %s307 = int_to_ptr.vmem [resolvable:$true] %s306
          %313 = sst [smem:[#allocation15]] 1024
          %s314 = scalar_lea.smem [#allocation15], 1
          %315 = sst [smem:[%s314]] 512
          %s316 = scalar_lea.smem [#allocation15], 2
          %317 = sst [smem:[%s316]] 2
          %s318 = scalar_lea.smem [#allocation15], 3
          %319 = sst [smem:[%s318]] 256
          %s320 = scalar_lea.smem [#allocation15], 4
          %321 = sst [smem:[%s320]] 256
          %s322 = scalar_lea.smem [#allocation15], 5
          %323 = sst [smem:[%s322]] 16
          %325 = dma.general %s305, 4096, %s307, %s282, [#allocation14], [#allocation15], %s303, 0
        $region44: #{tpu_custom_call.1} parent=39 // pred_fallthru
          _
      $region40: #{tpu_custom_call.1} parent=5 // pred_fallthru
        _
      %p326 = scmp.le.s32.totalorder 1, %s21
      %p327 = scmp.lt.s32.totalorder %s21, 3
      %p328 = pnand %p326, %p327
      %p329 = pneg %p328
      // Predicated region
      $region45: #{tpu_custom_call.1} parent=5 // pred_check
        _
      $region46: #{tpu_custom_call.1} parent=5 // pred_check_branch
        %331 = sbr.rel (%p328) target = $region48
      $region47: #{tpu_custom_call.1} parent=5 // pred_region
        %s332 = ssub.s32 %s21, 1
        %s333 = sand.u32 %s34, 1
        %s334 = scalar_lea.sflag [#allocation5], %s333
        %s335 = sand.u32 %s34, 1
        %s336 = smul.addr %s335, 256
        %s337 = scalar_lea.vmem [#allocation4], %s336
        // Predicated region
        $region49: #{tpu_custom_call.1} parent=47 // pred_check
          %p338 = pneg %p47
        $region50: #{tpu_custom_call.1} parent=47 // pred_check_branch
          %340 = sbr.rel (%p338) target = $region52
        $region51: #{tpu_custom_call.1} parent=47 // pred_region
          %342 = dma.done %s334, 4096
        $region52: #{tpu_custom_call.1} parent=47 // pred_fallthru
          _
        // Predicated region
        $region53: #{tpu_custom_call.1} parent=47 // pred_check
          %p343 = pneg %p68
        $region54: #{tpu_custom_call.1} parent=47 // pred_check_branch
          %345 = sbr.rel (%p343) target = $region56
        $region55: #{tpu_custom_call.1} parent=47 // pred_region
          %347 = dma.done [#allocation8], 6144
        $region56: #{tpu_custom_call.1} parent=47 // pred_fallthru
          _
        // Predicated region
        $region57: #{tpu_custom_call.1} parent=47 // pred_check
          %p348 = pneg %p89
        $region58: #{tpu_custom_call.1} parent=47 // pred_check_branch
          %350 = sbr.rel (%p348) target = $region60
        $region59: #{tpu_custom_call.1} parent=47 // pred_region
          %352 = dma.done [#allocation8], 3072
        $region60: #{tpu_custom_call.1} parent=47 // pred_fallthru
          _
        // Predicated region
        $region61: #{tpu_custom_call.1} parent=47 // pred_check
          %p353 = pneg %p110
        $region62: #{tpu_custom_call.1} parent=47 // pred_check_branch
          %355 = sbr.rel (%p353) target = $region64
        $region63: #{tpu_custom_call.1} parent=47 // pred_region
          %357 = dma.done [#allocation11], 48
        $region64: #{tpu_custom_call.1} parent=47 // pred_fallthru
          _
        // Predicated region
        $region65: #{tpu_custom_call.1} parent=47 // pred_check
          %p358 = pneg %p152
        $region66: #{tpu_custom_call.1} parent=47 // pred_check_branch
          %360 = sbr.rel (%p358) target = $region68
        $region67: #{tpu_custom_call.1} parent=47 // pred_region
          %362 = dma.done [#allocation11], 2048
        $region68: #{tpu_custom_call.1} parent=47 // pred_fallthru
          _
        %s363 = sand.u32 %s34, 1
        %s364 = scalar_lea.sflag [#allocation5], %s363
        %s365 = sand.u32 %s34, 1
        %s366 = smul.addr %s365, 256
        %s367 = scalar_lea.vmem [#allocation4], %s366
        %p368 = pneg %p47
        %p369 = pneg %p44
        %p370 = pneg %p68
        %p371 = pneg %p65
        %p372 = pneg %p89
        %p373 = pneg %p86
        %p374 = pneg %p110
        %p375 = pneg %p107
        %p376 = pneg %p131
        %p377 = pneg %p128
        %p378 = pneg %p152
        %p379 = pneg %p149
        %p380 = pneg %p173
        %p381 = pneg %p170
        %p382 = pneg %p199
        %p383 = pneg %p196
        %s384 = sand.u32 %s186, 1
        %s385 = scalar_lea.sflag [#allocation6], %s384
        %s386 = sand.u32 %s186, 1
        %s387 = smul.addr %s386, 256
        %s388 = scalar_lea.vmem [#allocation13], %s387
        %s389 = smul.u32 2, %s26
        %s390 = smul.u32 2, %s26
        %v392 = vld [vmem:[%s337] sm:$0xff]
        %v393 = vld [vmem:[%s337 + $0x8] sm:$0xff]
        %v394 = vld [vmem:[%s337 + $0x10] sm:$0xff]
        %v395 = vld [vmem:[%s337 + $0x18] sm:$0xff]
        %v396 = vld [vmem:[%s337 + $0x20] sm:$0xff]
        %v397 = vld [vmem:[%s337 + $0x28] sm:$0xff]
        %v398 = vld [vmem:[%s337 + $0x30] sm:$0xff]
        %v399 = vld [vmem:[%s337 + $0x38] sm:$0xff]
        %v400 = vld [vmem:[%s337 + $0x40] sm:$0xff]
        %v401 = vld [vmem:[%s337 + $0x48] sm:$0xff]
        %v402 = vld [vmem:[%s337 + $0x50] sm:$0xff]
        %v403 = vld [vmem:[%s337 + $0x58] sm:$0xff]
        %v404 = vld [vmem:[%s337 + $0x60] sm:$0xff]
        %v405 = vld [vmem:[%s337 + $0x68] sm:$0xff]
        %v406 = vld [vmem:[%s337 + $0x70] sm:$0xff]
        %v407 = vld [vmem:[%s337 + $0x78] sm:$0xff]
        %v408 = vld [vmem:[%s337 + $0x80] sm:$0xff]
        %v409 = vld [vmem:[%s337 + $0x88] sm:$0xff]
        %v410 = vld [vmem:[%s337 + $0x90] sm:$0xff]
        %v411 = vld [vmem:[%s337 + $0x98] sm:$0xff]
        %v412 = vld [vmem:[%s337 + $0xa0] sm:$0xff]
        %v413 = vld [vmem:[%s337 + $0xa8] sm:$0xff]
        %v414 = vld [vmem:[%s337 + $0xb0] sm:$0xff]
        %v415 = vld [vmem:[%s337 + $0xb8] sm:$0xff]
        %v416 = vld [vmem:[%s337 + $0xc0] sm:$0xff]
        %v417 = vld [vmem:[%s337 + $0xc8] sm:$0xff]
        %v418 = vld [vmem:[%s337 + $0xd0] sm:$0xff]
        %v419 = vld [vmem:[%s337 + $0xd8] sm:$0xff]
        %v420 = vld [vmem:[%s337 + $0xe0] sm:$0xff]
        %v421 = vld [vmem:[%s337 + $0xe8] sm:$0xff]
        %v422 = vld [vmem:[%s337 + $0xf0] sm:$0xff]
        %v423 = vld [vmem:[%s337 + $0xf8] sm:$0xff]
        %v424 = vpack.c.bf16 %v394, %v392
        %v425 = vpack.c.bf16 %v395, %v393
        %v426 = vpack.c.bf16 %v398, %v396
        %v427 = vpack.c.bf16 %v399, %v397
        %v428 = vpack.c.bf16 %v402, %v400
        %v429 = vpack.c.bf16 %v403, %v401
        %v430 = vpack.c.bf16 %v406, %v404
        %v431 = vpack.c.bf16 %v407, %v405
        %v432 = vpack.c.bf16 %v410, %v408
        %v433 = vpack.c.bf16 %v411, %v409
        %v434 = vpack.c.bf16 %v414, %v412
        %v435 = vpack.c.bf16 %v415, %v413
        %v436 = vpack.c.bf16 %v418, %v416
        %v437 = vpack.c.bf16 %v419, %v417
        %v438 = vpack.c.bf16 %v422, %v420
        %v439 = vpack.c.bf16 %v423, %v421
        %v440 = vld [vmem:[#allocation7] sm:$0xff]
        %v441 = vld [vmem:[#allocation7 + $0x8] sm:$0xf]
        %v442 = vld [vmem:[#allocation7 + $0xc] sm:$0xff]
        %v443 = vld [vmem:[#allocation7 + $0x14] sm:$0xf]
        %v444 = vld [vmem:[#allocation7 + $0x18] sm:$0xff]
        %v445 = vld [vmem:[#allocation7 + $0x20] sm:$0xf]
        %v446 = vld [vmem:[#allocation7 + $0x24] sm:$0xff]
        %v447 = vld [vmem:[#allocation7 + $0x2c] sm:$0xf]
        %v448 = vld [vmem:[#allocation7 + $0x30] sm:$0xff]
        %v449 = vld [vmem:[#allocation7 + $0x38] sm:$0xf]
        %v450 = vld [vmem:[#allocation7 + $0x3c] sm:$0xff]
        %v451 = vld [vmem:[#allocation7 + $0x44] sm:$0xf]
        %v452 = vld [vmem:[#allocation7 + $0x48] sm:$0xff]
        %v453 = vld [vmem:[#allocation7 + $0x50] sm:$0xf]
        %v454 = vld [vmem:[#allocation7 + $0x54] sm:$0xff]
        %v455 = vld [vmem:[#allocation7 + $0x5c] sm:$0xf]
        %v456 = vld [vmem:[#allocation7 + $0x60] sm:$0xff]
        %v457 = vld [vmem:[#allocation7 + $0x68] sm:$0xf]
        %v458 = vld [vmem:[#allocation7 + $0x6c] sm:$0xff]
        %v459 = vld [vmem:[#allocation7 + $0x74] sm:$0xf]
        %v460 = vld [vmem:[#allocation7 + $0x78] sm:$0xff]
        %v461 = vld [vmem:[#allocation7 + $0x80] sm:$0xf]
        %v462 = vld [vmem:[#allocation7 + $0x84] sm:$0xff]
        %v463 = vld [vmem:[#allocation7 + $0x8c] sm:$0xf]
        %v464 = vld [vmem:[#allocation7 + $0x90] sm:$0xff]
        %v465 = vld [vmem:[#allocation7 + $0x98] sm:$0xf]
        %v466 = vld [vmem:[#allocation7 + $0x9c] sm:$0xff]
        %v467 = vld [vmem:[#allocation7 + $0xa4] sm:$0xf]
        %v468 = vld [vmem:[#allocation7 + $0xa8] sm:$0xff]
        %v469 = vld [vmem:[#allocation7 + $0xb0] sm:$0xf]
        %v470 = vld [vmem:[#allocation7 + $0xb4] sm:$0xff]
        %v471 = vld [vmem:[#allocation7 + $0xbc] sm:$0xf]
        %v472 = vld [vmem:[#allocation7 + $0xc0] sm:$0xff]
        %v473 = vld [vmem:[#allocation7 + $0xc8] sm:$0xf]
        %v474 = vld [vmem:[#allocation7 + $0xcc] sm:$0xff]
        %v475 = vld [vmem:[#allocation7 + $0xd4] sm:$0xf]
        %v476 = vld [vmem:[#allocation7 + $0xd8] sm:$0xff]
        %v477 = vld [vmem:[#allocation7 + $0xe0] sm:$0xf]
        %v478 = vld [vmem:[#allocation7 + $0xe4] sm:$0xff]
        %v479 = vld [vmem:[#allocation7 + $0xec] sm:$0xf]
        %v480 = vld [vmem:[#allocation7 + $0xf0] sm:$0xff]
        %v481 = vld [vmem:[#allocation7 + $0xf8] sm:$0xf]
        %v482 = vld [vmem:[#allocation7 + $0xfc] sm:$0xff]
        %v483 = vld [vmem:[#allocation7 + $0x104] sm:$0xf]
        %v484 = vld [vmem:[#allocation7 + $0x108] sm:$0xff]
        %v485 = vld [vmem:[#allocation7 + $0x110] sm:$0xf]
        %v486 = vld [vmem:[#allocation7 + $0x114] sm:$0xff]
        %v487 = vld [vmem:[#allocation7 + $0x11c] sm:$0xf]
        %v488 = vld [vmem:[#allocation7 + $0x120] sm:$0xff]
        %v489 = vld [vmem:[#allocation7 + $0x128] sm:$0xf]
        %v490 = vld [vmem:[#allocation7 + $0x12c] sm:$0xff]
        %v491 = vld [vmem:[#allocation7 + $0x134] sm:$0xf]
        %v492 = vld [vmem:[#allocation7 + $0x138] sm:$0xff]
        %v493 = vld [vmem:[#allocation7 + $0x140] sm:$0xf]
        %v494 = vld [vmem:[#allocation7 + $0x144] sm:$0xff]
        %v495 = vld [vmem:[#allocation7 + $0x14c] sm:$0xf]
        %v496 = vld [vmem:[#allocation7 + $0x150] sm:$0xff]
        %v497 = vld [vmem:[#allocation7 + $0x158] sm:$0xf]
        %v498 = vld [vmem:[#allocation7 + $0x15c] sm:$0xff]
        %v499 = vld [vmem:[#allocation7 + $0x164] sm:$0xf]
        %v500 = vld [vmem:[#allocation7 + $0x168] sm:$0xff]
        %v501 = vld [vmem:[#allocation7 + $0x170] sm:$0xf]
        %v502 = vld [vmem:[#allocation7 + $0x174] sm:$0xff]
        %v503 = vld [vmem:[#allocation7 + $0x17c] sm:$0xf]
        %v504 = vld [vmem:[#allocation10] sm:$0x7]
        %v506 = vperm.slane %v504, 0
        %v507 = vperm.slane %v504, 1
        %v508 = vperm.slane %v504, 2
        %v576 = vunpack.c.l.b16 %v440
        %v577 = vunpack.c.h.b16 %v440
        %v578 = vunpack.c.l.b16 %v441
        %v579 = vunpack.c.l.b16 %v442
        %v580 = vunpack.c.h.b16 %v442
        %v581 = vunpack.c.l.b16 %v443
        %v582 = vunpack.c.l.b16 %v444
        %v583 = vunpack.c.h.b16 %v444
        %v584 = vunpack.c.l.b16 %v445
        %v585 = vunpack.c.l.b16 %v446
        %v586 = vunpack.c.h.b16 %v446
        %v587 = vunpack.c.l.b16 %v447
        %v588 = vunpack.c.l.b16 %v448
        %v589 = vunpack.c.h.b16 %v448
        %v590 = vunpack.c.l.b16 %v449
        %v591 = vunpack.c.l.b16 %v450
        %v592 = vunpack.c.h.b16 %v450
        %v593 = vunpack.c.l.b16 %v451
        %v594 = vunpack.c.l.b16 %v452
        %v595 = vunpack.c.h.b16 %v452
        %v596 = vunpack.c.l.b16 %v453
        %v597 = vunpack.c.l.b16 %v454
        %v598 = vunpack.c.h.b16 %v454
        %v599 = vunpack.c.l.b16 %v455
        %v600 = vunpack.c.l.b16 %v456
        %v601 = vunpack.c.h.b16 %v456
        %v602 = vunpack.c.l.b16 %v457
        %v603 = vunpack.c.l.b16 %v458
        %v604 = vunpack.c.h.b16 %v458
        %v605 = vunpack.c.l.b16 %v459
        %v606 = vunpack.c.l.b16 %v460
        %v607 = vunpack.c.h.b16 %v460
        %v608 = vunpack.c.l.b16 %v461
        %v609 = vunpack.c.l.b16 %v462
        %v610 = vunpack.c.h.b16 %v462
        %v611 = vunpack.c.l.b16 %v463
        %v612 = vunpack.c.l.b16 %v464
        %v613 = vunpack.c.h.b16 %v464
        %v614 = vunpack.c.l.b16 %v465
        %v615 = vunpack.c.l.b16 %v466
        %v616 = vunpack.c.h.b16 %v466
        %v617 = vunpack.c.l.b16 %v467
        %v618 = vunpack.c.l.b16 %v468
        %v619 = vunpack.c.h.b16 %v468
        %v620 = vunpack.c.l.b16 %v469
        %v621 = vunpack.c.l.b16 %v470
        %v622 = vunpack.c.h.b16 %v470
        %v623 = vunpack.c.l.b16 %v471
        %v624 = vunpack.c.l.b16 %v472
        %v625 = vunpack.c.h.b16 %v472
        %v626 = vunpack.c.l.b16 %v473
        %v627 = vunpack.c.l.b16 %v474
        %v628 = vunpack.c.h.b16 %v474
        %v629 = vunpack.c.l.b16 %v475
        %v630 = vunpack.c.l.b16 %v476
        %v631 = vunpack.c.h.b16 %v476
        %v632 = vunpack.c.l.b16 %v477
        %v633 = vunpack.c.l.b16 %v478
        %v634 = vunpack.c.h.b16 %v478
        %v635 = vunpack.c.l.b16 %v479
        %v636 = vunpack.c.l.b16 %v480
        %v637 = vunpack.c.h.b16 %v480
        %v638 = vunpack.c.l.b16 %v481
        %v639 = vunpack.c.l.b16 %v482
        %v640 = vunpack.c.h.b16 %v482
        %v641 = vunpack.c.l.b16 %v483
        %v642 = vunpack.c.l.b16 %v484
        %v643 = vunpack.c.h.b16 %v484
        %v644 = vunpack.c.l.b16 %v485
        %v645 = vunpack.c.l.b16 %v486
        %v646 = vunpack.c.h.b16 %v486
        %v647 = vunpack.c.l.b16 %v487
        %v648 = vunpack.c.l.b16 %v488
        %v649 = vunpack.c.h.b16 %v488
        %v650 = vunpack.c.l.b16 %v489
        %v651 = vunpack.c.l.b16 %v490
        %v652 = vunpack.c.h.b16 %v490
        %v653 = vunpack.c.l.b16 %v491
        %v654 = vunpack.c.l.b16 %v492
        %v655 = vunpack.c.h.b16 %v492
        %v656 = vunpack.c.l.b16 %v493
        %v657 = vunpack.c.l.b16 %v494
        %v658 = vunpack.c.h.b16 %v494
        %v659 = vunpack.c.l.b16 %v495
        %v660 = vunpack.c.l.b16 %v496
        %v661 = vunpack.c.h.b16 %v496
        %v662 = vunpack.c.l.b16 %v497
        %v663 = vunpack.c.l.b16 %v498
        %v664 = vunpack.c.h.b16 %v498
        %v665 = vunpack.c.l.b16 %v499
        %v666 = vunpack.c.l.b16 %v500
        %v667 = vunpack.c.h.b16 %v500
        %v668 = vunpack.c.l.b16 %v501
        %v669 = vunpack.c.l.b16 %v502
        %v670 = vunpack.c.h.b16 %v502
        %v671 = vunpack.c.l.b16 %v503
        %v672 = vpack.c.b16 %v579, %v576
        %v673 = vpack.c.b16 %v580, %v577
        %v674 = vpack.c.b16 %v581, %v578
        %v675 = vpack.c.b16 %v585, %v582
        %v676 = vpack.c.b16 %v586, %v583
        %v677 = vpack.c.b16 %v587, %v584
        %v678 = vpack.c.b16 %v591, %v588
        %v679 = vpack.c.b16 %v592, %v589
        %v680 = vpack.c.b16 %v593, %v590
        %v681 = vpack.c.b16 %v597, %v594
        %v682 = vpack.c.b16 %v598, %v595
        %v683 = vpack.c.b16 %v599, %v596
        %v684 = vpack.c.b16 %v603, %v600
        %v685 = vpack.c.b16 %v604, %v601
        %v686 = vpack.c.b16 %v605, %v602
        %v687 = vpack.c.b16 %v609, %v606
        %v688 = vpack.c.b16 %v610, %v607
        %v689 = vpack.c.b16 %v611, %v608
        %v690 = vpack.c.b16 %v615, %v612
        %v691 = vpack.c.b16 %v616, %v613
        %v692 = vpack.c.b16 %v617, %v614
        %v693 = vpack.c.b16 %v621, %v618
        %v694 = vpack.c.b16 %v622, %v619
        %v695 = vpack.c.b16 %v623, %v620
        %v696 = vpack.c.b16 %v627, %v624
        %v697 = vpack.c.b16 %v628, %v625
        %v698 = vpack.c.b16 %v629, %v626
        %v699 = vpack.c.b16 %v633, %v630
        %v700 = vpack.c.b16 %v634, %v631
        %v701 = vpack.c.b16 %v635, %v632
        %v702 = vpack.c.b16 %v639, %v636
        %v703 = vpack.c.b16 %v640, %v637
        %v704 = vpack.c.b16 %v641, %v638
        %v705 = vpack.c.b16 %v645, %v642
        %v706 = vpack.c.b16 %v646, %v643
        %v707 = vpack.c.b16 %v647, %v644
        %v708 = vpack.c.b16 %v651, %v648
        %v709 = vpack.c.b16 %v652, %v649
        %v710 = vpack.c.b16 %v653, %v650
        %v711 = vpack.c.b16 %v657, %v654
        %v712 = vpack.c.b16 %v658, %v655
        %v713 = vpack.c.b16 %v659, %v656
        %v714 = vpack.c.b16 %v663, %v660
        %v715 = vpack.c.b16 %v664, %v661
        %v716 = vpack.c.b16 %v665, %v662
        %v717 = vpack.c.b16 %v669, %v666
        %v718 = vpack.c.b16 %v670, %v667
        %v719 = vpack.c.b16 %v671, %v668
        %768 = vmatpush.bf16.msra.mxu0 %v693
        %769 = vmatpush.bf16.msra.mxu0 %v690
        %770 = vmatpush.bf16.msra.mxu0 %v687
        %771 = vmatpush.bf16.msra.mxu0 %v684
        %772 = vmatpush.bf16.msra.mxu0 %v681
        %773 = vmatpush.bf16.msra.mxu0 %v678
        %774 = vmatpush.bf16.msra.mxu0 %v675
        %775 = vmatpush.bf16.msra.mxu0 %v672
        %776 = vmatmul.bf16.gmra.mxu0 %v424
        %v777 = vpop.f32.mrf.mxu0
        %v778 = vadd.f32 %v506, %v777
        %v779 = vpop.f32.mrf.mxu0
        %v780 = vadd.f32 %v506, %v779
        %781 = vmatmul.bf16.gmra.mxu0 %v426
        %v782 = vpop.f32.mrf.mxu0
        %v783 = vadd.f32 %v506, %v782
        %v784 = vpop.f32.mrf.mxu0
        %v785 = vadd.f32 %v506, %v784
        %786 = vmatmul.bf16.gmra.mxu0 %v428
        %v787 = vpop.f32.mrf.mxu0
        %v788 = vadd.f32 %v506, %v787
        %v789 = vpop.f32.mrf.mxu0
        %v790 = vadd.f32 %v506, %v789
        %791 = vmatmul.bf16.gmra.mxu0 %v430
        %v792 = vpop.f32.mrf.mxu0
        %v793 = vadd.f32 %v506, %v792
        %v794 = vpop.f32.mrf.mxu0
        %v795 = vadd.f32 %v506, %v794
        %796 = vmatmul.bf16.gmra.mxu0 %v432
        %v797 = vpop.f32.mrf.mxu0
        %v798 = vadd.f32 %v506, %v797
        %v799 = vpop.f32.mrf.mxu0
        %v800 = vadd.f32 %v506, %v799
        %801 = vmatmul.bf16.gmra.mxu0 %v434
        %v802 = vpop.f32.mrf.mxu0
        %v803 = vadd.f32 %v506, %v802
        %v804 = vpop.f32.mrf.mxu0
        %v805 = vadd.f32 %v506, %v804
        %806 = vmatmul.bf16.gmra.mxu0 %v436
        %v807 = vpop.f32.mrf.mxu0
        %v808 = vadd.f32 %v506, %v807
        %v809 = vpop.f32.mrf.mxu0
        %v810 = vadd.f32 %v506, %v809
        %811 = vmatmul.bf16.gmra.mxu0 %v438
        %v812 = vpop.f32.mrf.mxu0
        %v813 = vadd.f32 %v506, %v812
        %v814 = vpop.f32.mrf.mxu0
        %v815 = vadd.f32 %v506, %v814
        %816 = vdwg.mxu0
        %817 = vmatpush.bf16.msra.mxu0 %v717
        %818 = vmatpush.bf16.msra.mxu0 %v714
        %819 = vmatpush.bf16.msra.mxu0 %v711
        %820 = vmatpush.bf16.msra.mxu0 %v708
        %821 = vmatpush.bf16.msra.mxu0 %v705
        %822 = vmatpush.bf16.msra.mxu0 %v702
        %823 = vmatpush.bf16.msra.mxu0 %v699
        %824 = vmatpush.bf16.msra.mxu0 %v696
        %825 = vmatmul.bf16.gmra.mxu0 %v425
        %v826 = vpop.f32.mrf.mxu0
        %v827 = vadd.f32 %v778, %v826
        %v828 = vpop.f32.mrf.mxu0
        %v829 = vadd.f32 %v780, %v828
        %830 = vmatmul.bf16.gmra.mxu0 %v427
        %v831 = vpop.f32.mrf.mxu0
        %v832 = vadd.f32 %v783, %v831
        %v833 = vpop.f32.mrf.mxu0
        %v834 = vadd.f32 %v785, %v833
        %835 = vmatmul.bf16.gmra.mxu0 %v429
        %v836 = vpop.f32.mrf.mxu0
        %v837 = vadd.f32 %v788, %v836
        %v838 = vpop.f32.mrf.mxu0
        %v839 = vadd.f32 %v790, %v838
        %840 = vmatmul.bf16.gmra.mxu0 %v431
        %v841 = vpop.f32.mrf.mxu0
        %v842 = vadd.f32 %v793, %v841
        %v843 = vpop.f32.mrf.mxu0
        %v844 = vadd.f32 %v795, %v843
        %845 = vmatmul.bf16.gmra.mxu0 %v433
        %v846 = vpop.f32.mrf.mxu0
        %v847 = vadd.f32 %v798, %v846
        %v848 = vpop.f32.mrf.mxu0
        %v849 = vadd.f32 %v800, %v848
        %850 = vmatmul.bf16.gmra.mxu0 %v435
        %v851 = vpop.f32.mrf.mxu0
        %v852 = vadd.f32 %v803, %v851
        %v853 = vpop.f32.mrf.mxu0
        %v854 = vadd.f32 %v805, %v853
        %855 = vmatmul.bf16.gmra.mxu0 %v437
        %v856 = vpop.f32.mrf.mxu0
        %v857 = vadd.f32 %v808, %v856
        %v858 = vpop.f32.mrf.mxu0
        %v859 = vadd.f32 %v810, %v858
        %860 = vmatmul.bf16.gmra.mxu0 %v439
        %v861 = vpop.f32.mrf.mxu0
        %v862 = vadd.f32 %v813, %v861
        %v863 = vpop.f32.mrf.mxu0
        %v864 = vadd.f32 %v815, %v863
        %865 = vdwg.mxu0
        %866 = vmatpush.bf16.msra.mxu0 %v694
        %867 = vmatpush.bf16.msra.mxu0 %v691
        %868 = vmatpush.bf16.msra.mxu0 %v688
        %869 = vmatpush.bf16.msra.mxu0 %v685
        %870 = vmatpush.bf16.msra.mxu0 %v682
        %871 = vmatpush.bf16.msra.mxu0 %v679
        %872 = vmatpush.bf16.msra.mxu0 %v676
        %873 = vmatpush.bf16.msra.mxu0 %v673
        %874 = vmatmul.bf16.gmra.mxu0 %v424
        %v875 = vpop.f32.mrf.mxu0
        %v876 = vadd.f32 %v507, %v875
        %v877 = vpop.f32.mrf.mxu0
        %v878 = vadd.f32 %v507, %v877
        %879 = vmatmul.bf16.gmra.mxu0 %v426
        %v880 = vpop.f32.mrf.mxu0
        %v881 = vadd.f32 %v507, %v880
        %v882 = vpop.f32.mrf.mxu0
        %v883 = vadd.f32 %v507, %v882
        %884 = vmatmul.bf16.gmra.mxu0 %v428
        %v885 = vpop.f32.mrf.mxu0
        %v886 = vadd.f32 %v507, %v885
        %v887 = vpop.f32.mrf.mxu0
        %v888 = vadd.f32 %v507, %v887
        %889 = vmatmul.bf16.gmra.mxu0 %v430
        %v890 = vpop.f32.mrf.mxu0
        %v891 = vadd.f32 %v507, %v890
        %v892 = vpop.f32.mrf.mxu0
        %v893 = vadd.f32 %v507, %v892
        %894 = vmatmul.bf16.gmra.mxu0 %v432
        %v895 = vpop.f32.mrf.mxu0
        %v896 = vadd.f32 %v507, %v895
        %v897 = vpop.f32.mrf.mxu0
        %v898 = vadd.f32 %v507, %v897
        %899 = vmatmul.bf16.gmra.mxu0 %v434
        %v900 = vpop.f32.mrf.mxu0
        %v901 = vadd.f32 %v507, %v900
        %v902 = vpop.f32.mrf.mxu0
        %v903 = vadd.f32 %v507, %v902
        %904 = vmatmul.bf16.gmra.mxu0 %v436
        %v905 = vpop.f32.mrf.mxu0
        %v906 = vadd.f32 %v507, %v905
        %v907 = vpop.f32.mrf.mxu0
        %v908 = vadd.f32 %v507, %v907
        %909 = vmatmul.bf16.gmra.mxu0 %v438
        %v910 = vpop.f32.mrf.mxu0
        %v911 = vadd.f32 %v507, %v910
        %v912 = vpop.f32.mrf.mxu0
        %v913 = vadd.f32 %v507, %v912
        %914 = vdwg.mxu0
        %915 = vmatpush.bf16.msra.mxu0 %v718
        %916 = vmatpush.bf16.msra.mxu0 %v715
        %917 = vmatpush.bf16.msra.mxu0 %v712
        %918 = vmatpush.bf16.msra.mxu0 %v709
        %919 = vmatpush.bf16.msra.mxu0 %v706
        %920 = vmatpush.bf16.msra.mxu0 %v703
        %921 = vmatpush.bf16.msra.mxu0 %v700
        %922 = vmatpush.bf16.msra.mxu0 %v697
        %923 = vmatmul.bf16.gmra.mxu0 %v425
        %v924 = vpop.f32.mrf.mxu0
        %v925 = vadd.f32 %v876, %v924
        %v926 = vpop.f32.mrf.mxu0
        %v927 = vadd.f32 %v878, %v926
        %928 = vmatmul.bf16.gmra.mxu0 %v427
        %v929 = vpop.f32.mrf.mxu0
        %v930 = vadd.f32 %v881, %v929
        %v931 = vpop.f32.mrf.mxu0
        %v932 = vadd.f32 %v883, %v931
        %933 = vmatmul.bf16.gmra.mxu0 %v429
        %v934 = vpop.f32.mrf.mxu0
        %v935 = vadd.f32 %v886, %v934
        %v936 = vpop.f32.mrf.mxu0
        %v937 = vadd.f32 %v888, %v936
        %938 = vmatmul.bf16.gmra.mxu0 %v431
        %v939 = vpop.f32.mrf.mxu0
        %v940 = vadd.f32 %v891, %v939
        %v941 = vpop.f32.mrf.mxu0
        %v942 = vadd.f32 %v893, %v941
        %943 = vmatmul.bf16.gmra.mxu0 %v433
        %v944 = vpop.f32.mrf.mxu0
        %v945 = vadd.f32 %v896, %v944
        %v946 = vpop.f32.mrf.mxu0
        %v947 = vadd.f32 %v898, %v946
        %948 = vmatmul.bf16.gmra.mxu0 %v435
        %v949 = vpop.f32.mrf.mxu0
        %v950 = vadd.f32 %v901, %v949
        %v951 = vpop.f32.mrf.mxu0
        %v952 = vadd.f32 %v903, %v951
        %953 = vmatmul.bf16.gmra.mxu0 %v437
        %v954 = vpop.f32.mrf.mxu0
        %v955 = vadd.f32 %v906, %v954
        %v956 = vpop.f32.mrf.mxu0
        %v957 = vadd.f32 %v908, %v956
        %958 = vmatmul.bf16.gmra.mxu0 %v439
        %v959 = vpop.f32.mrf.mxu0
        %v960 = vadd.f32 %v911, %v959
        %v961 = vpop.f32.mrf.mxu0
        %v962 = vadd.f32 %v913, %v961
        %963 = vdwg.mxu0
        %964 = vmatpush.bf16.msra.mxu0 %v695
        %965 = vmatpush.bf16.msra.mxu0 %v692
        %966 = vmatpush.bf16.msra.mxu0 %v689
        %967 = vmatpush.bf16.msra.mxu0 %v686
        %968 = vmatpush.bf16.msra.mxu0 %v683
        %969 = vmatpush.bf16.msra.mxu0 %v680
        %970 = vmatpush.bf16.msra.mxu0 %v677
        %971 = vmatpush.bf16.msra.mxu0 %v674
        %972 = vmatmul.bf16.gmra.mxu0 %v424
        %v973 = vpop.f32.mrf.mxu0
        %v974 = vadd.f32 %v508, %v973
        %v975 = vpop.f32.mrf.mxu0
        %v976 = vadd.f32 %v508, %v975
        %977 = vmatmul.bf16.gmra.mxu0 %v426
        %v978 = vpop.f32.mrf.mxu0
        %v979 = vadd.f32 %v508, %v978
        %v980 = vpop.f32.mrf.mxu0
        %v981 = vadd.f32 %v508, %v980
        %982 = vmatmul.bf16.gmra.mxu0 %v428
        %v983 = vpop.f32.mrf.mxu0
        %v984 = vadd.f32 %v508, %v983
        %v985 = vpop.f32.mrf.mxu0
        %v986 = vadd.f32 %v508, %v985
        %987 = vmatmul.bf16.gmra.mxu0 %v430
        %v988 = vpop.f32.mrf.mxu0
        %v989 = vadd.f32 %v508, %v988
        %v990 = vpop.f32.mrf.mxu0
        %v991 = vadd.f32 %v508, %v990
        %992 = vmatmul.bf16.gmra.mxu0 %v432
        %v993 = vpop.f32.mrf.mxu0
        %v994 = vadd.f32 %v508, %v993
        %v995 = vpop.f32.mrf.mxu0
        %v996 = vadd.f32 %v508, %v995
        %997 = vmatmul.bf16.gmra.mxu0 %v434
        %v998 = vpop.f32.mrf.mxu0
        %v999 = vadd.f32 %v508, %v998
        %v1000 = vpop.f32.mrf.mxu0
        %v1001 = vadd.f32 %v508, %v1000
        %1002 = vmatmul.bf16.gmra.mxu0 %v436
        %v1003 = vpop.f32.mrf.mxu0
        %v1004 = vadd.f32 %v508, %v1003
        %v1005 = vpop.f32.mrf.mxu0
        %v1006 = vadd.f32 %v508, %v1005
        %1007 = vmatmul.bf16.gmra.mxu0 %v438
        %v1008 = vpop.f32.mrf.mxu0
        %v1009 = vadd.f32 %v508, %v1008
        %v1010 = vpop.f32.mrf.mxu0
        %v1011 = vadd.f32 %v508, %v1010
        %1012 = vdwg.mxu0
        %1013 = vmatpush.bf16.msra.mxu0 %v719
        %1014 = vmatpush.bf16.msra.mxu0 %v716
        %1015 = vmatpush.bf16.msra.mxu0 %v713
        %1016 = vmatpush.bf16.msra.mxu0 %v710
        %1017 = vmatpush.bf16.msra.mxu0 %v707
        %1018 = vmatpush.bf16.msra.mxu0 %v704
        %1019 = vmatpush.bf16.msra.mxu0 %v701
        %1020 = vmatpush.bf16.msra.mxu0 %v698
        %1021 = vmatmul.bf16.gmra.mxu0 %v425
        %v1022 = vpop.f32.mrf.mxu0
        %v1023 = vadd.f32 %v974, %v1022
        %v1024 = vpop.f32.mrf.mxu0
        %v1025 = vadd.f32 %v976, %v1024
        %1026 = vmatmul.bf16.gmra.mxu0 %v427
        %v1027 = vpop.f32.mrf.mxu0
        %v1028 = vadd.f32 %v979, %v1027
        %v1029 = vpop.f32.mrf.mxu0
        %v1030 = vadd.f32 %v981, %v1029
        %1031 = vmatmul.bf16.gmra.mxu0 %v429
        %v1032 = vpop.f32.mrf.mxu0
        %v1033 = vadd.f32 %v984, %v1032
        %v1034 = vpop.f32.mrf.mxu0
        %v1035 = vadd.f32 %v986, %v1034
        %1036 = vmatmul.bf16.gmra.mxu0 %v431
        %v1037 = vpop.f32.mrf.mxu0
        %v1038 = vadd.f32 %v989, %v1037
        %v1039 = vpop.f32.mrf.mxu0
        %v1040 = vadd.f32 %v991, %v1039
        %1041 = vmatmul.bf16.gmra.mxu0 %v433
        %v1042 = vpop.f32.mrf.mxu0
        %v1043 = vadd.f32 %v994, %v1042
        %v1044 = vpop.f32.mrf.mxu0
        %v1045 = vadd.f32 %v996, %v1044
        %1046 = vmatmul.bf16.gmra.mxu0 %v435
        %v1047 = vpop.f32.mrf.mxu0
        %v1048 = vadd.f32 %v999, %v1047
        %v1049 = vpop.f32.mrf.mxu0
        %v1050 = vadd.f32 %v1001, %v1049
        %1051 = vmatmul.bf16.gmra.mxu0 %v437
        %v1052 = vpop.f32.mrf.mxu0
        %v1053 = vadd.f32 %v1004, %v1052
        %v1054 = vpop.f32.mrf.mxu0
        %v1055 = vadd.f32 %v1006, %v1054
        %1056 = vmatmul.bf16.gmra.mxu0 %v439
        %v1057 = vpop.f32.mrf.mxu0
        %v1058 = vadd.f32 %v1009, %v1057
        %v1059 = vpop.f32.mrf.mxu0
        %v1060 = vadd.f32 %v1011, %v1059
        %1061 = vdwg.mxu0
        %1062 = vst [vmem:[#allocation2] sm:$0xff] %v827
        %1063 = vst [vmem:[#allocation2 + $0x8] sm:$0xff] %v925
        %1064 = vst [vmem:[#allocation2 + $0x10] sm:$0xff] %v1023
        %1065 = vst [vmem:[#allocation2 + $0x18] sm:$0xff] %v829
        %1066 = vst [vmem:[#allocation2 + $0x20] sm:$0xff] %v927
        %1067 = vst [vmem:[#allocation2 + $0x28] sm:$0xff] %v1025
        %1068 = vst [vmem:[#allocation2 + $0x30] sm:$0xff] %v832
        %1069 = vst [vmem:[#allocation2 + $0x38] sm:$0xff] %v930
        %1070 = vst [vmem:[#allocation2 + $0x40] sm:$0xff] %v1028
        %1071 = vst [vmem:[#allocation2 + $0x48] sm:$0xff] %v834
        %1072 = vst [vmem:[#allocation2 + $0x50] sm:$0xff] %v932
        %1073 = vst [vmem:[#allocation2 + $0x58] sm:$0xff] %v1030
        %1074 = vst [vmem:[#allocation2 + $0x60] sm:$0xff] %v837
        %1075 = vst [vmem:[#allocation2 + $0x68] sm:$0xff] %v935
        %1076 = vst [vmem:[#allocation2 + $0x70] sm:$0xff] %v1033
        %1077 = vst [vmem:[#allocation2 + $0x78] sm:$0xff] %v839
        %1078 = vst [vmem:[#allocation2 + $0x80] sm:$0xff] %v937
        %1079 = vst [vmem:[#allocation2 + $0x88] sm:$0xff] %v1035
        %1080 = vst [vmem:[#allocation2 + $0x90] sm:$0xff] %v842
        %1081 = vst [vmem:[#allocation2 + $0x98] sm:$0xff] %v940
        %1082 = vst [vmem:[#allocation2 + $0xa0] sm:$0xff] %v1038
        %1083 = vst [vmem:[#allocation2 + $0xa8] sm:$0xff] %v844
        %1084 = vst [vmem:[#allocation2 + $0xb0] sm:$0xff] %v942
        %1085 = vst [vmem:[#allocation2 + $0xb8] sm:$0xff] %v1040
        %1086 = vst [vmem:[#allocation2 + $0xc0] sm:$0xff] %v847
        %1087 = vst [vmem:[#allocation2 + $0xc8] sm:$0xff] %v945
        %1088 = vst [vmem:[#allocation2 + $0xd0] sm:$0xff] %v1043
        %1089 = vst [vmem:[#allocation2 + $0xd8] sm:$0xff] %v849
        %1090 = vst [vmem:[#allocation2 + $0xe0] sm:$0xff] %v947
        %1091 = vst [vmem:[#allocation2 + $0xe8] sm:$0xff] %v1045
        %1092 = vst [vmem:[#allocation2 + $0xf0] sm:$0xff] %v852
        %1093 = vst [vmem:[#allocation2 + $0xf8] sm:$0xff] %v950
        %1094 = vst [vmem:[#allocation2 + $0x100] sm:$0xff] %v1048
        %1095 = vst [vmem:[#allocation2 + $0x108] sm:$0xff] %v854
        %1096 = vst [vmem:[#allocation2 + $0x110] sm:$0xff] %v952
        %1097 = vst [vmem:[#allocation2 + $0x118] sm:$0xff] %v1050
        %1098 = vst [vmem:[#allocation2 + $0x120] sm:$0xff] %v857
        %1099 = vst [vmem:[#allocation2 + $0x128] sm:$0xff] %v955
        %1100 = vst [vmem:[#allocation2 + $0x130] sm:$0xff] %v1053
        %1101 = vst [vmem:[#allocation2 + $0x138] sm:$0xff] %v859
        %1102 = vst [vmem:[#allocation2 + $0x140] sm:$0xff] %v957
        %1103 = vst [vmem:[#allocation2 + $0x148] sm:$0xff] %v1055
        %1104 = vst [vmem:[#allocation2 + $0x150] sm:$0xff] %v862
        %1105 = vst [vmem:[#allocation2 + $0x158] sm:$0xff] %v960
        %1106 = vst [vmem:[#allocation2 + $0x160] sm:$0xff] %v1058
        %1107 = vst [vmem:[#allocation2 + $0x168] sm:$0xff] %v864
        %1108 = vst [vmem:[#allocation2 + $0x170] sm:$0xff] %v962
        %1109 = vst [vmem:[#allocation2 + $0x178] sm:$0xff] %v1060
        %v1110 = vld [vmem:[#allocation9] sm:$0xff]
        %v1111 = vld [vmem:[#allocation9 + $0x8] sm:$0xf]
        %v1112 = vld [vmem:[#allocation9 + $0xc] sm:$0xff]
        %v1113 = vld [vmem:[#allocation9 + $0x14] sm:$0xf]
        %v1114 = vld [vmem:[#allocation9 + $0x18] sm:$0xff]
        %v1115 = vld [vmem:[#allocation9 + $0x20] sm:$0xf]
        %v1116 = vld [vmem:[#allocation9 + $0x24] sm:$0xff]
        %v1117 = vld [vmem:[#allocation9 + $0x2c] sm:$0xf]
        %v1118 = vld [vmem:[#allocation9 + $0x30] sm:$0xff]
        %v1119 = vld [vmem:[#allocation9 + $0x38] sm:$0xf]
        %v1120 = vld [vmem:[#allocation9 + $0x3c] sm:$0xff]
        %v1121 = vld [vmem:[#allocation9 + $0x44] sm:$0xf]
        %v1122 = vld [vmem:[#allocation9 + $0x48] sm:$0xff]
        %v1123 = vld [vmem:[#allocation9 + $0x50] sm:$0xf]
        %v1124 = vld [vmem:[#allocation9 + $0x54] sm:$0xff]
        %v1125 = vld [vmem:[#allocation9 + $0x5c] sm:$0xf]
        %v1126 = vld [vmem:[#allocation9 + $0x60] sm:$0xff]
        %v1127 = vld [vmem:[#allocation9 + $0x68] sm:$0xf]
        %v1128 = vld [vmem:[#allocation9 + $0x6c] sm:$0xff]
        %v1129 = vld [vmem:[#allocation9 + $0x74] sm:$0xf]
        %v1130 = vld [vmem:[#allocation9 + $0x78] sm:$0xff]
        %v1131 = vld [vmem:[#allocation9 + $0x80] sm:$0xf]
        %v1132 = vld [vmem:[#allocation9 + $0x84] sm:$0xff]
        %v1133 = vld [vmem:[#allocation9 + $0x8c] sm:$0xf]
        %v1134 = vld [vmem:[#allocation9 + $0x90] sm:$0xff]
        %v1135 = vld [vmem:[#allocation9 + $0x98] sm:$0xf]
        %v1136 = vld [vmem:[#allocation9 + $0x9c] sm:$0xff]
        %v1137 = vld [vmem:[#allocation9 + $0xa4] sm:$0xf]
        %v1138 = vld [vmem:[#allocation9 + $0xa8] sm:$0xff]
        %v1139 = vld [vmem:[#allocation9 + $0xb0] sm:$0xf]
        %v1140 = vld [vmem:[#allocation9 + $0xb4] sm:$0xff]
        %v1141 = vld [vmem:[#allocation9 + $0xbc] sm:$0xf]
        %v1142 = vld [vmem:[%s4] sm:$0x1]
        %v1143 = vld [vmem:[#allocation2] sm:$0xff]
        %v1144 = vld [vmem:[#allocation2 + $0x8] sm:$0xff]
        %v1145 = vld [vmem:[#allocation2 + $0x10] sm:$0xff]
        %v1146 = vld [vmem:[#allocation2 + $0x18] sm:$0xff]
        %v1147 = vld [vmem:[#allocation2 + $0x20] sm:$0xff]
        %v1148 = vld [vmem:[#allocation2 + $0x28] sm:$0xff]
        %v1181 = vunpack.c.l.b16 %v1110
        %v1182 = vunpack.c.h.b16 %v1110
        %v1183 = vunpack.c.l.b16 %v1111
        %v1184 = vunpack.c.l.b16 %v1112
        %v1185 = vunpack.c.h.b16 %v1112
        %v1186 = vunpack.c.l.b16 %v1113
        %v1187 = vunpack.c.l.b16 %v1114
        %v1188 = vunpack.c.h.b16 %v1114
        %v1189 = vunpack.c.l.b16 %v1115
        %v1190 = vunpack.c.l.b16 %v1116
        %v1191 = vunpack.c.h.b16 %v1116
        %v1192 = vunpack.c.l.b16 %v1117
        %v1193 = vunpack.c.l.b16 %v1118
        %v1194 = vunpack.c.h.b16 %v1118
        %v1195 = vunpack.c.l.b16 %v1119
        %v1196 = vunpack.c.l.b16 %v1120
        %v1197 = vunpack.c.h.b16 %v1120
        %v1198 = vunpack.c.l.b16 %v1121
        %v1199 = vunpack.c.l.b16 %v1122
        %v1200 = vunpack.c.h.b16 %v1122
        %v1201 = vunpack.c.l.b16 %v1123
        %v1202 = vunpack.c.l.b16 %v1124
        %v1203 = vunpack.c.h.b16 %v1124
        %v1204 = vunpack.c.l.b16 %v1125
        %v1205 = vunpack.c.l.b16 %v1126
        %v1206 = vunpack.c.h.b16 %v1126
        %v1207 = vunpack.c.l.b16 %v1127
        %v1208 = vunpack.c.l.b16 %v1128
        %v1209 = vunpack.c.h.b16 %v1128
        %v1210 = vunpack.c.l.b16 %v1129
        %v1211 = vunpack.c.l.b16 %v1130
        %v1212 = vunpack.c.h.b16 %v1130
        %v1213 = vunpack.c.l.b16 %v1131
        %v1214 = vunpack.c.l.b16 %v1132
        %v1215 = vunpack.c.h.b16 %v1132
        %v1216 = vunpack.c.l.b16 %v1133
        %v1217 = vunpack.c.l.b16 %v1134
        %v1218 = vunpack.c.h.b16 %v1134
        %v1219 = vunpack.c.l.b16 %v1135
        %v1220 = vunpack.c.l.b16 %v1136
        %v1221 = vunpack.c.h.b16 %v1136
        %v1222 = vunpack.c.l.b16 %v1137
        %v1223 = vunpack.c.l.b16 %v1138
        %v1224 = vunpack.c.h.b16 %v1138
        %v1225 = vunpack.c.l.b16 %v1139
        %v1226 = vunpack.c.l.b16 %v1140
        %v1227 = vunpack.c.h.b16 %v1140
        %v1228 = vunpack.c.l.b16 %v1141
        %v1229 = vpack.c.b16 %v1184, %v1181
        %v1230 = vpack.c.b16 %v1185, %v1182
        %v1231 = vpack.c.b16 %v1186, %v1183
        %v1232 = vpack.c.b16 %v1190, %v1187
        %v1233 = vpack.c.b16 %v1191, %v1188
        %v1234 = vpack.c.b16 %v1192, %v1189
        %v1235 = vpack.c.b16 %v1196, %v1193
        %v1236 = vpack.c.b16 %v1197, %v1194
        %v1237 = vpack.c.b16 %v1198, %v1195
        %v1238 = vpack.c.b16 %v1202, %v1199
        %v1239 = vpack.c.b16 %v1203, %v1200
        %v1240 = vpack.c.b16 %v1204, %v1201
        %v1241 = vpack.c.b16 %v1208, %v1205
        %v1242 = vpack.c.b16 %v1209, %v1206
        %v1243 = vpack.c.b16 %v1210, %v1207
        %v1244 = vpack.c.b16 %v1214, %v1211
        %v1245 = vpack.c.b16 %v1215, %v1212
        %v1246 = vpack.c.b16 %v1216, %v1213
        %v1247 = vpack.c.b16 %v1220, %v1217
        %v1248 = vpack.c.b16 %v1221, %v1218
        %v1249 = vpack.c.b16 %v1222, %v1219
        %v1250 = vpack.c.b16 %v1226, %v1223
        %v1251 = vpack.c.b16 %v1227, %v1224
        %v1252 = vpack.c.b16 %v1228, %v1225
        %1277 = vmatpush.bf16.msra.mxu0 %v1250
        %1278 = vmatpush.bf16.msra.mxu0 %v1247
        %1279 = vmatpush.bf16.msra.mxu0 %v1244
        %1280 = vmatpush.bf16.msra.mxu0 %v1241
        %1281 = vmatpush.bf16.msra.mxu0 %v1238
        %1282 = vmatpush.bf16.msra.mxu0 %v1235
        %1283 = vmatpush.bf16.msra.mxu0 %v1232
        %1284 = vmatpush.bf16.msra.mxu0 %v1229
        %1285 = vmatmul.bf16.gmra.mxu0 0
        %v1286 = vpop.f32.mrf.mxu0
        %v1287 = vadd.f32 0.0, %v1286
        %v1288 = vpop.f32.mrf.mxu0
        %v1289 = vadd.f32 0.0, %v1288
        %1290 = vdwg.mxu0
        %1291 = vmatpush.bf16.msra.mxu0 %v1251
        %1292 = vmatpush.bf16.msra.mxu0 %v1248
        %1293 = vmatpush.bf16.msra.mxu0 %v1245
        %1294 = vmatpush.bf16.msra.mxu0 %v1242
        %1295 = vmatpush.bf16.msra.mxu0 %v1239
        %1296 = vmatpush.bf16.msra.mxu0 %v1236
        %1297 = vmatpush.bf16.msra.mxu0 %v1233
        %1298 = vmatpush.bf16.msra.mxu0 %v1230
        %1299 = vmatmul.bf16.gmra.mxu0 0
        %v1300 = vpop.f32.mrf.mxu0
        %v1301 = vadd.f32 0.0, %v1300
        %v1302 = vpop.f32.mrf.mxu0
        %v1303 = vadd.f32 0.0, %v1302
        %1304 = vdwg.mxu0
        %1305 = vmatpush.bf16.msra.mxu0 %v1252
        %1306 = vmatpush.bf16.msra.mxu0 %v1249
        %1307 = vmatpush.bf16.msra.mxu0 %v1246
        %1308 = vmatpush.bf16.msra.mxu0 %v1243
        %1309 = vmatpush.bf16.msra.mxu0 %v1240
        %1310 = vmatpush.bf16.msra.mxu0 %v1237
        %1311 = vmatpush.bf16.msra.mxu0 %v1234
        %1312 = vmatpush.bf16.msra.mxu0 %v1231
        %1313 = vmatmul.bf16.gmra.mxu0 0
        %v1314 = vpop.f32.mrf.mxu0
        %v1315 = vadd.f32 0.0, %v1314
        %v1316 = vpop.f32.mrf.mxu0
        %v1317 = vadd.f32 0.0, %v1316
        %1318 = vdwg.mxu0
        %v1319 = vadd.f32 %v1143, %v1287
        %v1320 = vadd.f32 %v1146, %v1289
        %v1321 = vxor.u32 %v1319, 2147483648
        %v1322 = vxor.u32 %v1320, 2147483648
        %v1323 = vmul.f32 %v1321, 1.442695
        %v1324 = vpow.pop %v1323
        %v1325 = vmul.f32 %v1322, 1.442695
        %v1326 = vpow.pop %v1325
        %v1327 = vadd.f32 %v1324, 1.0
        %v1328 = vadd.f32 %v1326, 1.0
        %v1329 = vrcp.pop %v1327
        %v1330 = vmul.f32 %v1327, %v1329
        %v1331 = vsub.f32 1.0, %v1330
        %v1332 = vmul.f32 %v1329, %v1331
        %v1333 = vadd.f32 %v1329, %v1332
        %vm1334 = vweird.f32 %v1327
        %vm1335 = vweird.f32 %v1329
        %vm1336 = vmor %vm1334, %vm1335
        %v1337 = vsel %vm1336, %v1329, %v1333
        %v1338 = vand.u32 2147483647, %v1327
        %vm1339 = vcmp.eq.f32.partialorder %v1338, 8.507059e+37
        %v1340 = vand.u32 %v1327, 2147483648
        %v1341 = vor.u32 1.1754944e-38, %v1340
        %v1342 = vsel %vm1339, %v1341, %v1337
        %v1343 = vmul.f32 1.0, %v1342
        %v1344 = vrcp.pop %v1328
        %v1345 = vmul.f32 %v1328, %v1344
        %v1346 = vsub.f32 1.0, %v1345
        %v1347 = vmul.f32 %v1344, %v1346
        %v1348 = vadd.f32 %v1344, %v1347
        %vm1349 = vweird.f32 %v1328
        %vm1350 = vweird.f32 %v1344
        %vm1351 = vmor %vm1349, %vm1350
        %v1352 = vsel %vm1351, %v1344, %v1348
        %v1353 = vand.u32 2147483647, %v1328
        %vm1354 = vcmp.eq.f32.partialorder %v1353, 8.507059e+37
        %v1355 = vand.u32 %v1328, 2147483648
        %v1356 = vor.u32 1.1754944e-38, %v1355
        %v1357 = vsel %vm1354, %v1356, %v1352
        %v1358 = vmul.f32 1.0, %v1357
        %v1359 = vadd.f32 %v1144, %v1301
        %v1360 = vadd.f32 %v1147, %v1303
        %v1361 = vxor.u32 %v1359, 2147483648
        %v1362 = vxor.u32 %v1360, 2147483648
        %v1363 = vmul.f32 %v1361, 1.442695
        %v1364 = vpow.pop %v1363
        %v1365 = vmul.f32 %v1362, 1.442695
        %v1366 = vpow.pop %v1365
        %v1367 = vadd.f32 %v1364, 1.0
        %v1368 = vadd.f32 %v1366, 1.0
        %v1369 = vrcp.pop %v1367
        %v1370 = vmul.f32 %v1367, %v1369
        %v1371 = vsub.f32 1.0, %v1370
        %v1372 = vmul.f32 %v1369, %v1371
        %v1373 = vadd.f32 %v1369, %v1372
        %vm1374 = vweird.f32 %v1367
        %vm1375 = vweird.f32 %v1369
        %vm1376 = vmor %vm1374, %vm1375
        %v1377 = vsel %vm1376, %v1369, %v1373
        %v1378 = vand.u32 2147483647, %v1367
        %vm1379 = vcmp.eq.f32.partialorder %v1378, 8.507059e+37
        %v1380 = vand.u32 %v1367, 2147483648
        %v1381 = vor.u32 1.1754944e-38, %v1380
        %v1382 = vsel %vm1379, %v1381, %v1377
        %v1383 = vmul.f32 1.0, %v1382
        %v1384 = vrcp.pop %v1368
        %v1385 = vmul.f32 %v1368, %v1384
        %v1386 = vsub.f32 1.0, %v1385
        %v1387 = vmul.f32 %v1384, %v1386
        %v1388 = vadd.f32 %v1384, %v1387
        %vm1389 = vweird.f32 %v1368
        %vm1390 = vweird.f32 %v1384
        %vm1391 = vmor %vm1389, %vm1390
        %v1392 = vsel %vm1391, %v1384, %v1388
        %v1393 = vand.u32 2147483647, %v1368
        %vm1394 = vcmp.eq.f32.partialorder %v1393, 8.507059e+37
        %v1395 = vand.u32 %v1368, 2147483648
        %v1396 = vor.u32 1.1754944e-38, %v1395
        %v1397 = vsel %vm1394, %v1396, %v1392
        %v1398 = vmul.f32 1.0, %v1397
        %v1400 = vperm.slane %v1142, 0
        %v1402 = vadd.f32 %v1315, %v1400
        %v1403 = vadd.f32 %v1317, %v1400
        %v1404 = vmul.f32 %v1343, %v1402
        %v1405 = vmul.f32 %v1358, %v1403
        %v1406 = vadd.f32 %v1145, %v1404
        %v1407 = vadd.f32 %v1148, %v1405
        %v1408 = vtanh.pop %v1406
        %v1409 = vtanh.pop %v1407
        %v1410 = vsub.f32 1.0, %v1383
        %v1411 = vsub.f32 1.0, %v1398
        %v1412 = vmul.f32 %v1410, %v1408
        %v1413 = vmul.f32 %v1411, %v1409
        %v1414 = vmul.f32 %v1383, 0.0
        %v1415 = vmul.f32 %v1398, 0.0
        %v1416 = vadd.f32 %v1412, %v1414
        %v1417 = vadd.f32 %v1413, %v1415
        %v1418 = vmax.f32 %v1416, 0.0
        %v1419 = vmax.f32 %v1417, 0.0
        %v1420 = vpack.c.bf16 %v1418, %v1418
        %v1421 = vpack.c.bf16 %v1419, %v1419
        %1422 = vst [vmem:[#allocation3] sm:$0xf] %v1420
        %1423 = vst [vmem:[#allocation3 + $0x4] sm:$0xf] %v1421
        %s1424 = scalar_lea.vmem [#allocation2], 48
        %v1425 = vld [vmem:[%s1424] sm:$0xff]
        %v1426 = vld [vmem:[%s1424 + $0x8] sm:$0xff]
        %v1427 = vld [vmem:[%s1424 + $0x10] sm:$0xff]
        %v1428 = vld [vmem:[%s1424 + $0x18] sm:$0xff]
        %v1429 = vld [vmem:[%s1424 + $0x20] sm:$0xff]
        %v1430 = vld [vmem:[%s1424 + $0x28] sm:$0xff]
        %v1431 = vpack.c.bf16 %v1417, %v1416
        %1432 = vmatpush.bf16.msra.mxu0 %v1250
        %1433 = vmatpush.bf16.msra.mxu0 %v1247
        %1434 = vmatpush.bf16.msra.mxu0 %v1244
        %1435 = vmatpush.bf16.msra.mxu0 %v1241
        %1436 = vmatpush.bf16.msra.mxu0 %v1238
        %1437 = vmatpush.bf16.msra.mxu0 %v1235
        %1438 = vmatpush.bf16.msra.mxu0 %v1232
        %1439 = vmatpush.bf16.msra.mxu0 %v1229
        %1440 = vmatmul.bf16.gmra.mxu0 %v1431
        %v1441 = vpop.f32.mrf.mxu0
        %v1442 = vadd.f32 0.0, %v1441
        %v1443 = vpop.f32.mrf.mxu0
        %v1444 = vadd.f32 0.0, %v1443
        %1445 = vdwg.mxu0
        %1446 = vmatpush.bf16.msra.mxu0 %v1251
        %1447 = vmatpush.bf16.msra.mxu0 %v1248
        %1448 = vmatpush.bf16.msra.mxu0 %v1245
        %1449 = vmatpush.bf16.msra.mxu0 %v1242
        %1450 = vmatpush.bf16.msra.mxu0 %v1239
        %1451 = vmatpush.bf16.msra.mxu0 %v1236
        %1452 = vmatpush.bf16.msra.mxu0 %v1233
        %1453 = vmatpush.bf16.msra.mxu0 %v1230
        %1454 = vmatmul.bf16.gmra.mxu0 %v1431
        %v1455 = vpop.f32.mrf.mxu0
        %v1456 = vadd.f32 0.0, %v1455
        %v1457 = vpop.f32.mrf.mxu0
        %v1458 = vadd.f32 0.0, %v1457
        %1459 = vdwg.mxu0
        %1460 = vmatpush.bf16.msra.mxu0 %v1252
        %1461 = vmatpush.bf16.msra.mxu0 %v1249
        %1462 = vmatpush.bf16.msra.mxu0 %v1246
        %1463 = vmatpush.bf16.msra.mxu0 %v1243
        %1464 = vmatpush.bf16.msra.mxu0 %v1240
        %1465 = vmatpush.bf16.msra.mxu0 %v1237
        %1466 = vmatpush.bf16.msra.mxu0 %v1234
        %1467 = vmatpush.bf16.msra.mxu0 %v1231
        %1468 = vmatmul.bf16.gmra.mxu0 %v1431
        %v1469 = vpop.f32.mrf.mxu0
        %v1470 = vadd.f32 0.0, %v1469
        %v1471 = vpop.f32.mrf.mxu0
        %v1472 = vadd.f32 0.0, %v1471
        %1473 = vdwg.mxu0
        %v1474 = vadd.f32 %v1425, %v1442
        %v1475 = vadd.f32 %v1428, %v1444
        %v1476 = vxor.u32 %v1474, 2147483648
        %v1477 = vxor.u32 %v1475, 2147483648
        %v1478 = vmul.f32 %v1476, 1.442695
        %v1479 = vpow.pop %v1478
        %v1480 = vmul.f32 %v1477, 1.442695
        %v1481 = vpow.pop %v1480
        %v1482 = vadd.f32 %v1479, 1.0
        %v1483 = vadd.f32 %v1481, 1.0
        %v1484 = vrcp.pop %v1482
        %v1485 = vmul.f32 %v1482, %v1484
        %v1486 = vsub.f32 1.0, %v1485
        %v1487 = vmul.f32 %v1484, %v1486
        %v1488 = vadd.f32 %v1484, %v1487
        %vm1489 = vweird.f32 %v1482
        %vm1490 = vweird.f32 %v1484
        %vm1491 = vmor %vm1489, %vm1490
        %v1492 = vsel %vm1491, %v1484, %v1488
        %v1493 = vand.u32 2147483647, %v1482
        %vm1494 = vcmp.eq.f32.partialorder %v1493, 8.507059e+37
        %v1495 = vand.u32 %v1482, 2147483648
        %v1496 = vor.u32 1.1754944e-38, %v1495
        %v1497 = vsel %vm1494, %v1496, %v1492
        %v1498 = vmul.f32 1.0, %v1497
        %v1499 = vrcp.pop %v1483
        %v1500 = vmul.f32 %v1483, %v1499
        %v1501 = vsub.f32 1.0, %v1500
        %v1502 = vmul.f32 %v1499, %v1501
        %v1503 = vadd.f32 %v1499, %v1502
        %vm1504 = vweird.f32 %v1483
        %vm1505 = vweird.f32 %v1499
        %vm1506 = vmor %vm1504, %vm1505
        %v1507 = vsel %vm1506, %v1499, %v1503
        %v1508 = vand.u32 2147483647, %v1483
        %vm1509 = vcmp.eq.f32.partialorder %v1508, 8.507059e+37
        %v1510 = vand.u32 %v1483, 2147483648
        %v1511 = vor.u32 1.1754944e-38, %v1510
        %v1512 = vsel %vm1509, %v1511, %v1507
        %v1513 = vmul.f32 1.0, %v1512
        %v1514 = vadd.f32 %v1426, %v1456
        %v1515 = vadd.f32 %v1429, %v1458
        %v1516 = vxor.u32 %v1514, 2147483648
        %v1517 = vxor.u32 %v1515, 2147483648
        %v1518 = vmul.f32 %v1516, 1.442695
        %v1519 = vpow.pop %v1518
        %v1520 = vmul.f32 %v1517, 1.442695
        %v1521 = vpow.pop %v1520
        %v1522 = vadd.f32 %v1519, 1.0
        %v1523 = vadd.f32 %v1521, 1.0
        %v1524 = vrcp.pop %v1522
        %v1525 = vmul.f32 %v1522, %v1524
        %v1526 = vsub.f32 1.0, %v1525
        %v1527 = vmul.f32 %v1524, %v1526
        %v1528 = vadd.f32 %v1524, %v1527
        %vm1529 = vweird.f32 %v1522
        %vm1530 = vweird.f32 %v1524
        %vm1531 = vmor %vm1529, %vm1530
        %v1532 = vsel %vm1531, %v1524, %v1528
        %v1533 = vand.u32 2147483647, %v1522
        %vm1534 = vcmp.eq.f32.partialorder %v1533, 8.507059e+37
        %v1535 = vand.u32 %v1522, 2147483648
        %v1536 = vor.u32 1.1754944e-38, %v1535
        %v1537 = vsel %vm1534, %v1536, %v1532
        %v1538 = vmul.f32 1.0, %v1537
        %v1539 = vrcp.pop %v1523
        %v1540 = vmul.f32 %v1523, %v1539
        %v1541 = vsub.f32 1.0, %v1540
        %v1542 = vmul.f32 %v1539, %v1541
        %v1543 = vadd.f32 %v1539, %v1542
        %vm1544 = vweird.f32 %v1523
        %vm1545 = vweird.f32 %v1539
        %vm1546 = vmor %vm1544, %vm1545
        %v1547 = vsel %vm1546, %v1539, %v1543
        %v1548 = vand.u32 2147483647, %v1523
        %vm1549 = vcmp.eq.f32.partialorder %v1548, 8.507059e+37
        %v1550 = vand.u32 %v1523, 2147483648
        %v1551 = vor.u32 1.1754944e-38, %v1550
        %v1552 = vsel %vm1549, %v1551, %v1547
        %v1553 = vmul.f32 1.0, %v1552
        %v1554 = vadd.f32 %v1470, %v1400
        %v1555 = vadd.f32 %v1472, %v1400
        %v1556 = vmul.f32 %v1498, %v1554
        %v1557 = vmul.f32 %v1513, %v1555
        %v1558 = vadd.f32 %v1427, %v1556
        %v1559 = vadd.f32 %v1430, %v1557
        %v1560 = vtanh.pop %v1558
        %v1561 = vtanh.pop %v1559
        %v1562 = vsub.f32 1.0, %v1538
        %v1563 = vsub.f32 1.0, %v1553
        %v1564 = vmul.f32 %v1562, %v1560
        %v1565 = vmul.f32 %v1563, %v1561
        %v1566 = vmul.f32 %v1538, %v1416
        %v1567 = vmul.f32 %v1553, %v1417
        %v1568 = vadd.f32 %v1564, %v1566
        %v1569 = vadd.f32 %v1565, %v1567
        %v1570 = vmax.f32 %v1568, 0.0
        %v1571 = vmax.f32 %v1569, 0.0
        %v1572 = vpack.c.bf16 %v1570, %v1570
        %v1573 = vpack.c.bf16 %v1571, %v1571
        %s1574 = scalar_lea.vmem [#allocation3], 8
        %1575 = vst [vmem:[%s1574] sm:$0xf] %v1572
        %1576 = vst [vmem:[%s1574 + $0x4] sm:$0xf] %v1573
        %s1577 = scalar_lea.vmem [#allocation2], 96
        %v1578 = vld [vmem:[%s1577] sm:$0xff]
        %v1579 = vld [vmem:[%s1577 + $0x8] sm:$0xff]
        %v1580 = vld [vmem:[%s1577 + $0x10] sm:$0xff]
        %v1581 = vld [vmem:[%s1577 + $0x18] sm:$0xff]
        %v1582 = vld [vmem:[%s1577 + $0x20] sm:$0xff]
        %v1583 = vld [vmem:[%s1577 + $0x28] sm:$0xff]
        %v1584 = vpack.c.bf16 %v1569, %v1568
        %1585 = vmatpush.bf16.msra.mxu0 %v1250
        %1586 = vmatpush.bf16.msra.mxu0 %v1247
        %1587 = vmatpush.bf16.msra.mxu0 %v1244
        %1588 = vmatpush.bf16.msra.mxu0 %v1241
        %1589 = vmatpush.bf16.msra.mxu0 %v1238
        %1590 = vmatpush.bf16.msra.mxu0 %v1235
        %1591 = vmatpush.bf16.msra.mxu0 %v1232
        %1592 = vmatpush.bf16.msra.mxu0 %v1229
        %1593 = vmatmul.bf16.gmra.mxu0 %v1584
        %v1594 = vpop.f32.mrf.mxu0
        %v1595 = vadd.f32 0.0, %v1594
        %v1596 = vpop.f32.mrf.mxu0
        %v1597 = vadd.f32 0.0, %v1596
        %1598 = vdwg.mxu0
        %1599 = vmatpush.bf16.msra.mxu0 %v1251
        %1600 = vmatpush.bf16.msra.mxu0 %v1248
        %1601 = vmatpush.bf16.msra.mxu0 %v1245
        %1602 = vmatpush.bf16.msra.mxu0 %v1242
        %1603 = vmatpush.bf16.msra.mxu0 %v1239
        %1604 = vmatpush.bf16.msra.mxu0 %v1236
        %1605 = vmatpush.bf16.msra.mxu0 %v1233
        %1606 = vmatpush.bf16.msra.mxu0 %v1230
        %1607 = vmatmul.bf16.gmra.mxu0 %v1584
        %v1608 = vpop.f32.mrf.mxu0
        %v1609 = vadd.f32 0.0, %v1608
        %v1610 = vpop.f32.mrf.mxu0
        %v1611 = vadd.f32 0.0, %v1610
        %1612 = vdwg.mxu0
        %1613 = vmatpush.bf16.msra.mxu0 %v1252
        %1614 = vmatpush.bf16.msra.mxu0 %v1249
        %1615 = vmatpush.bf16.msra.mxu0 %v1246
        %1616 = vmatpush.bf16.msra.mxu0 %v1243
        %1617 = vmatpush.bf16.msra.mxu0 %v1240
        %1618 = vmatpush.bf16.msra.mxu0 %v1237
        %1619 = vmatpush.bf16.msra.mxu0 %v1234
        %1620 = vmatpush.bf16.msra.mxu0 %v1231
        %1621 = vmatmul.bf16.gmra.mxu0 %v1584
        %v1622 = vpop.f32.mrf.mxu0
        %v1623 = vadd.f32 0.0, %v1622
        %v1624 = vpop.f32.mrf.mxu0
        %v1625 = vadd.f32 0.0, %v1624
        %1626 = vdwg.mxu0
        %v1627 = vadd.f32 %v1578, %v1595
        %v1628 = vadd.f32 %v1581, %v1597
        %v1629 = vxor.u32 %v1627, 2147483648
        %v1630 = vxor.u32 %v1628, 2147483648
        %v1631 = vmul.f32 %v1629, 1.442695
        %v1632 = vpow.pop %v1631
        %v1633 = vmul.f32 %v1630, 1.442695
        %v1634 = vpow.pop %v1633
        %v1635 = vadd.f32 %v1632, 1.0
        %v1636 = vadd.f32 %v1634, 1.0
        %v1637 = vrcp.pop %v1635
        %v1638 = vmul.f32 %v1635, %v1637
        %v1639 = vsub.f32 1.0, %v1638
        %v1640 = vmul.f32 %v1637, %v1639
        %v1641 = vadd.f32 %v1637, %v1640
        %vm1642 = vweird.f32 %v1635
        %vm1643 = vweird.f32 %v1637
        %vm1644 = vmor %vm1642, %vm1643
        %v1645 = vsel %vm1644, %v1637, %v1641
        %v1646 = vand.u32 2147483647, %v1635
        %vm1647 = vcmp.eq.f32.partialorder %v1646, 8.507059e+37
        %v1648 = vand.u32 %v1635, 2147483648
        %v1649 = vor.u32 1.1754944e-38, %v1648
        %v1650 = vsel %vm1647, %v1649, %v1645
        %v1651 = vmul.f32 1.0, %v1650
        %v1652 = vrcp.pop %v1636
        %v1653 = vmul.f32 %v1636, %v1652
        %v1654 = vsub.f32 1.0, %v1653
        %v1655 = vmul.f32 %v1652, %v1654
        %v1656 = vadd.f32 %v1652, %v1655
        %vm1657 = vweird.f32 %v1636
        %vm1658 = vweird.f32 %v1652
        %vm1659 = vmor %vm1657, %vm1658
        %v1660 = vsel %vm1659, %v1652, %v1656
        %v1661 = vand.u32 2147483647, %v1636
        %vm1662 = vcmp.eq.f32.partialorder %v1661, 8.507059e+37
        %v1663 = vand.u32 %v1636, 2147483648
        %v1664 = vor.u32 1.1754944e-38, %v1663
        %v1665 = vsel %vm1662, %v1664, %v1660
        %v1666 = vmul.f32 1.0, %v1665
        %v1667 = vadd.f32 %v1579, %v1609
        %v1668 = vadd.f32 %v1582, %v1611
        %v1669 = vxor.u32 %v1667, 2147483648
        %v1670 = vxor.u32 %v1668, 2147483648
        %v1671 = vmul.f32 %v1669, 1.442695
        %v1672 = vpow.pop %v1671
        %v1673 = vmul.f32 %v1670, 1.442695
        %v1674 = vpow.pop %v1673
        %v1675 = vadd.f32 %v1672, 1.0
        %v1676 = vadd.f32 %v1674, 1.0
        %v1677 = vrcp.pop %v1675
        %v1678 = vmul.f32 %v1675, %v1677
        %v1679 = vsub.f32 1.0, %v1678
        %v1680 = vmul.f32 %v1677, %v1679
        %v1681 = vadd.f32 %v1677, %v1680
        %vm1682 = vweird.f32 %v1675
        %vm1683 = vweird.f32 %v1677
        %vm1684 = vmor %vm1682, %vm1683
        %v1685 = vsel %vm1684, %v1677, %v1681
        %v1686 = vand.u32 2147483647, %v1675
        %vm1687 = vcmp.eq.f32.partialorder %v1686, 8.507059e+37
        %v1688 = vand.u32 %v1675, 2147483648
        %v1689 = vor.u32 1.1754944e-38, %v1688
        %v1690 = vsel %vm1687, %v1689, %v1685
        %v1691 = vmul.f32 1.0, %v1690
        %v1692 = vrcp.pop %v1676
        %v1693 = vmul.f32 %v1676, %v1692
        %v1694 = vsub.f32 1.0, %v1693
        %v1695 = vmul.f32 %v1692, %v1694
        %v1696 = vadd.f32 %v1692, %v1695
        %vm1697 = vweird.f32 %v1676
        %vm1698 = vweird.f32 %v1692
        %vm1699 = vmor %vm1697, %vm1698
        %v1700 = vsel %vm1699, %v1692, %v1696
        %v1701 = vand.u32 2147483647, %v1676
        %vm1702 = vcmp.eq.f32.partialorder %v1701, 8.507059e+37
        %v1703 = vand.u32 %v1676, 2147483648
        %v1704 = vor.u32 1.1754944e-38, %v1703
        %v1705 = vsel %vm1702, %v1704, %v1700
        %v1706 = vmul.f32 1.0, %v1705
        %v1707 = vadd.f32 %v1623, %v1400
        %v1708 = vadd.f32 %v1625, %v1400
        %v1709 = vmul.f32 %v1651, %v1707
        %v1710 = vmul.f32 %v1666, %v1708
        %v1711 = vadd.f32 %v1580, %v1709
        %v1712 = vadd.f32 %v1583, %v1710
        %v1713 = vtanh.pop %v1711
        %v1714 = vtanh.pop %v1712
        %v1715 = vsub.f32 1.0, %v1691
        %v1716 = vsub.f32 1.0, %v1706
        %v1717 = vmul.f32 %v1715, %v1713
        %v1718 = vmul.f32 %v1716, %v1714
        %v1719 = vmul.f32 %v1691, %v1568
        %v1720 = vmul.f32 %v1706, %v1569
        %v1721 = vadd.f32 %v1717, %v1719
        %v1722 = vadd.f32 %v1718, %v1720
        %v1723 = vmax.f32 %v1721, 0.0
        %v1724 = vmax.f32 %v1722, 0.0
        %v1725 = vpack.c.bf16 %v1723, %v1723
        %v1726 = vpack.c.bf16 %v1724, %v1724
        %s1727 = scalar_lea.vmem [#allocation3], 16
        %1728 = vst [vmem:[%s1727] sm:$0xf] %v1725
        %1729 = vst [vmem:[%s1727 + $0x4] sm:$0xf] %v1726
        %s1730 = scalar_lea.vmem [#allocation2], 144
        %v1731 = vld [vmem:[%s1730] sm:$0xff]
        %v1732 = vld [vmem:[%s1730 + $0x8] sm:$0xff]
        %v1733 = vld [vmem:[%s1730 + $0x10] sm:$0xff]
        %v1734 = vld [vmem:[%s1730 + $0x18] sm:$0xff]
        %v1735 = vld [vmem:[%s1730 + $0x20] sm:$0xff]
        %v1736 = vld [vmem:[%s1730 + $0x28] sm:$0xff]
        %v1737 = vpack.c.bf16 %v1722, %v1721
        %1738 = vmatpush.bf16.msra.mxu0 %v1250
        %1739 = vmatpush.bf16.msra.mxu0 %v1247
        %1740 = vmatpush.bf16.msra.mxu0 %v1244
        %1741 = vmatpush.bf16.msra.mxu0 %v1241
        %1742 = vmatpush.bf16.msra.mxu0 %v1238
        %1743 = vmatpush.bf16.msra.mxu0 %v1235
        %1744 = vmatpush.bf16.msra.mxu0 %v1232
        %1745 = vmatpush.bf16.msra.mxu0 %v1229
        %1746 = vmatmul.bf16.gmra.mxu0 %v1737
        %v1747 = vpop.f32.mrf.mxu0
        %v1748 = vadd.f32 0.0, %v1747
        %v1749 = vpop.f32.mrf.mxu0
        %v1750 = vadd.f32 0.0, %v1749
        %1751 = vdwg.mxu0
        %1752 = vmatpush.bf16.msra.mxu0 %v1251
        %1753 = vmatpush.bf16.msra.mxu0 %v1248
        %1754 = vmatpush.bf16.msra.mxu0 %v1245
        %1755 = vmatpush.bf16.msra.mxu0 %v1242
        %1756 = vmatpush.bf16.msra.mxu0 %v1239
        %1757 = vmatpush.bf16.msra.mxu0 %v1236
        %1758 = vmatpush.bf16.msra.mxu0 %v1233
        %1759 = vmatpush.bf16.msra.mxu0 %v1230
        %1760 = vmatmul.bf16.gmra.mxu0 %v1737
        %v1761 = vpop.f32.mrf.mxu0
        %v1762 = vadd.f32 0.0, %v1761
        %v1763 = vpop.f32.mrf.mxu0
        %v1764 = vadd.f32 0.0, %v1763
        %1765 = vdwg.mxu0
        %1766 = vmatpush.bf16.msra.mxu0 %v1252
        %1767 = vmatpush.bf16.msra.mxu0 %v1249
        %1768 = vmatpush.bf16.msra.mxu0 %v1246
        %1769 = vmatpush.bf16.msra.mxu0 %v1243
        %1770 = vmatpush.bf16.msra.mxu0 %v1240
        %1771 = vmatpush.bf16.msra.mxu0 %v1237
        %1772 = vmatpush.bf16.msra.mxu0 %v1234
        %1773 = vmatpush.bf16.msra.mxu0 %v1231
        %1774 = vmatmul.bf16.gmra.mxu0 %v1737
        %v1775 = vpop.f32.mrf.mxu0
        %v1776 = vadd.f32 0.0, %v1775
        %v1777 = vpop.f32.mrf.mxu0
        %v1778 = vadd.f32 0.0, %v1777
        %1779 = vdwg.mxu0
        %v1780 = vadd.f32 %v1731, %v1748
        %v1781 = vadd.f32 %v1734, %v1750
        %v1782 = vxor.u32 %v1780, 2147483648
        %v1783 = vxor.u32 %v1781, 2147483648
        %v1784 = vmul.f32 %v1782, 1.442695
        %v1785 = vpow.pop %v1784
        %v1786 = vmul.f32 %v1783, 1.442695
        %v1787 = vpow.pop %v1786
        %v1788 = vadd.f32 %v1785, 1.0
        %v1789 = vadd.f32 %v1787, 1.0
        %v1790 = vrcp.pop %v1788
        %v1791 = vmul.f32 %v1788, %v1790
        %v1792 = vsub.f32 1.0, %v1791
        %v1793 = vmul.f32 %v1790, %v1792
        %v1794 = vadd.f32 %v1790, %v1793
        %vm1795 = vweird.f32 %v1788
        %vm1796 = vweird.f32 %v1790
        %vm1797 = vmor %vm1795, %vm1796
        %v1798 = vsel %vm1797, %v1790, %v1794
        %v1799 = vand.u32 2147483647, %v1788
        %vm1800 = vcmp.eq.f32.partialorder %v1799, 8.507059e+37
        %v1801 = vand.u32 %v1788, 2147483648
        %v1802 = vor.u32 1.1754944e-38, %v1801
        %v1803 = vsel %vm1800, %v1802, %v1798
        %v1804 = vmul.f32 1.0, %v1803
        %v1805 = vrcp.pop %v1789
        %v1806 = vmul.f32 %v1789, %v1805
        %v1807 = vsub.f32 1.0, %v1806
        %v1808 = vmul.f32 %v1805, %v1807
        %v1809 = vadd.f32 %v1805, %v1808
        %vm1810 = vweird.f32 %v1789
        %vm1811 = vweird.f32 %v1805
        %vm1812 = vmor %vm1810, %vm1811
        %v1813 = vsel %vm1812, %v1805, %v1809
        %v1814 = vand.u32 2147483647, %v1789
        %vm1815 = vcmp.eq.f32.partialorder %v1814, 8.507059e+37
        %v1816 = vand.u32 %v1789, 2147483648
        %v1817 = vor.u32 1.1754944e-38, %v1816
        %v1818 = vsel %vm1815, %v1817, %v1813
        %v1819 = vmul.f32 1.0, %v1818
        %v1820 = vadd.f32 %v1732, %v1762
        %v1821 = vadd.f32 %v1735, %v1764
        %v1822 = vxor.u32 %v1820, 2147483648
        %v1823 = vxor.u32 %v1821, 2147483648
        %v1824 = vmul.f32 %v1822, 1.442695
        %v1825 = vpow.pop %v1824
        %v1826 = vmul.f32 %v1823, 1.442695
        %v1827 = vpow.pop %v1826
        %v1828 = vadd.f32 %v1825, 1.0
        %v1829 = vadd.f32 %v1827, 1.0
        %v1830 = vrcp.pop %v1828
        %v1831 = vmul.f32 %v1828, %v1830
        %v1832 = vsub.f32 1.0, %v1831
        %v1833 = vmul.f32 %v1830, %v1832
        %v1834 = vadd.f32 %v1830, %v1833
        %vm1835 = vweird.f32 %v1828
        %vm1836 = vweird.f32 %v1830
        %vm1837 = vmor %vm1835, %vm1836
        %v1838 = vsel %vm1837, %v1830, %v1834
        %v1839 = vand.u32 2147483647, %v1828
        %vm1840 = vcmp.eq.f32.partialorder %v1839, 8.507059e+37
        %v1841 = vand.u32 %v1828, 2147483648
        %v1842 = vor.u32 1.1754944e-38, %v1841
        %v1843 = vsel %vm1840, %v1842, %v1838
        %v1844 = vmul.f32 1.0, %v1843
        %v1845 = vrcp.pop %v1829
        %v1846 = vmul.f32 %v1829, %v1845
        %v1847 = vsub.f32 1.0, %v1846
        %v1848 = vmul.f32 %v1845, %v1847
        %v1849 = vadd.f32 %v1845, %v1848
        %vm1850 = vweird.f32 %v1829
        %vm1851 = vweird.f32 %v1845
        %vm1852 = vmor %vm1850, %vm1851
        %v1853 = vsel %vm1852, %v1845, %v1849
        %v1854 = vand.u32 2147483647, %v1829
        %vm1855 = vcmp.eq.f32.partialorder %v1854, 8.507059e+37
        %v1856 = vand.u32 %v1829, 2147483648
        %v1857 = vor.u32 1.1754944e-38, %v1856
        %v1858 = vsel %vm1855, %v1857, %v1853
        %v1859 = vmul.f32 1.0, %v1858
        %v1860 = vadd.f32 %v1776, %v1400
        %v1861 = vadd.f32 %v1778, %v1400
        %v1862 = vmul.f32 %v1804, %v1860
        %v1863 = vmul.f32 %v1819, %v1861
        %v1864 = vadd.f32 %v1733, %v1862
        %v1865 = vadd.f32 %v1736, %v1863
        %v1866 = vtanh.pop %v1864
        %v1867 = vtanh.pop %v1865
        %v1868 = vsub.f32 1.0, %v1844
        %v1869 = vsub.f32 1.0, %v1859
        %v1870 = vmul.f32 %v1868, %v1866
        %v1871 = vmul.f32 %v1869, %v1867
        %v1872 = vmul.f32 %v1844, %v1721
        %v1873 = vmul.f32 %v1859, %v1722
        %v1874 = vadd.f32 %v1870, %v1872
        %v1875 = vadd.f32 %v1871, %v1873
        %v1876 = vmax.f32 %v1874, 0.0
        %v1877 = vmax.f32 %v1875, 0.0
        %v1878 = vpack.c.bf16 %v1876, %v1876
        %v1879 = vpack.c.bf16 %v1877, %v1877
        %s1880 = scalar_lea.vmem [#allocation3], 24
        %1881 = vst [vmem:[%s1880] sm:$0xf] %v1878
        %1882 = vst [vmem:[%s1880 + $0x4] sm:$0xf] %v1879
        %s1883 = scalar_lea.vmem [#allocation2], 192
        %v1884 = vld [vmem:[%s1883] sm:$0xff]
        %v1885 = vld [vmem:[%s1883 + $0x8] sm:$0xff]
        %v1886 = vld [vmem:[%s1883 + $0x10] sm:$0xff]
        %v1887 = vld [vmem:[%s1883 + $0x18] sm:$0xff]
        %v1888 = vld [vmem:[%s1883 + $0x20] sm:$0xff]
        %v1889 = vld [vmem:[%s1883 + $0x28] sm:$0xff]
        %v1890 = vpack.c.bf16 %v1875, %v1874
        %1891 = vmatpush.bf16.msra.mxu0 %v1250
        %1892 = vmatpush.bf16.msra.mxu0 %v1247
        %1893 = vmatpush.bf16.msra.mxu0 %v1244
        %1894 = vmatpush.bf16.msra.mxu0 %v1241
        %1895 = vmatpush.bf16.msra.mxu0 %v1238
        %1896 = vmatpush.bf16.msra.mxu0 %v1235
        %1897 = vmatpush.bf16.msra.mxu0 %v1232
        %1898 = vmatpush.bf16.msra.mxu0 %v1229
        %1899 = vmatmul.bf16.gmra.mxu0 %v1890
        %v1900 = vpop.f32.mrf.mxu0
        %v1901 = vadd.f32 0.0, %v1900
        %v1902 = vpop.f32.mrf.mxu0
        %v1903 = vadd.f32 0.0, %v1902
        %1904 = vdwg.mxu0
        %1905 = vmatpush.bf16.msra.mxu0 %v1251
        %1906 = vmatpush.bf16.msra.mxu0 %v1248
        %1907 = vmatpush.bf16.msra.mxu0 %v1245
        %1908 = vmatpush.bf16.msra.mxu0 %v1242
        %1909 = vmatpush.bf16.msra.mxu0 %v1239
        %1910 = vmatpush.bf16.msra.mxu0 %v1236
        %1911 = vmatpush.bf16.msra.mxu0 %v1233
        %1912 = vmatpush.bf16.msra.mxu0 %v1230
        %1913 = vmatmul.bf16.gmra.mxu0 %v1890
        %v1914 = vpop.f32.mrf.mxu0
        %v1915 = vadd.f32 0.0, %v1914
        %v1916 = vpop.f32.mrf.mxu0
        %v1917 = vadd.f32 0.0, %v1916
        %1918 = vdwg.mxu0
        %1919 = vmatpush.bf16.msra.mxu0 %v1252
        %1920 = vmatpush.bf16.msra.mxu0 %v1249
        %1921 = vmatpush.bf16.msra.mxu0 %v1246
        %1922 = vmatpush.bf16.msra.mxu0 %v1243
        %1923 = vmatpush.bf16.msra.mxu0 %v1240
        %1924 = vmatpush.bf16.msra.mxu0 %v1237
        %1925 = vmatpush.bf16.msra.mxu0 %v1234
        %1926 = vmatpush.bf16.msra.mxu0 %v1231
        %1927 = vmatmul.bf16.gmra.mxu0 %v1890
        %v1928 = vpop.f32.mrf.mxu0
        %v1929 = vadd.f32 0.0, %v1928
        %v1930 = vpop.f32.mrf.mxu0
        %v1931 = vadd.f32 0.0, %v1930
        %1932 = vdwg.mxu0
        %v1933 = vadd.f32 %v1884, %v1901
        %v1934 = vadd.f32 %v1887, %v1903
        %v1935 = vxor.u32 %v1933, 2147483648
        %v1936 = vxor.u32 %v1934, 2147483648
        %v1937 = vmul.f32 %v1935, 1.442695
        %v1938 = vpow.pop %v1937
        %v1939 = vmul.f32 %v1936, 1.442695
        %v1940 = vpow.pop %v1939
        %v1941 = vadd.f32 %v1938, 1.0
        %v1942 = vadd.f32 %v1940, 1.0
        %v1943 = vrcp.pop %v1941
        %v1944 = vmul.f32 %v1941, %v1943
        %v1945 = vsub.f32 1.0, %v1944
        %v1946 = vmul.f32 %v1943, %v1945
        %v1947 = vadd.f32 %v1943, %v1946
        %vm1948 = vweird.f32 %v1941
        %vm1949 = vweird.f32 %v1943
        %vm1950 = vmor %vm1948, %vm1949
        %v1951 = vsel %vm1950, %v1943, %v1947
        %v1952 = vand.u32 2147483647, %v1941
        %vm1953 = vcmp.eq.f32.partialorder %v1952, 8.507059e+37
        %v1954 = vand.u32 %v1941, 2147483648
        %v1955 = vor.u32 1.1754944e-38, %v1954
        %v1956 = vsel %vm1953, %v1955, %v1951
        %v1957 = vmul.f32 1.0, %v1956
        %v1958 = vrcp.pop %v1942
        %v1959 = vmul.f32 %v1942, %v1958
        %v1960 = vsub.f32 1.0, %v1959
        %v1961 = vmul.f32 %v1958, %v1960
        %v1962 = vadd.f32 %v1958, %v1961
        %vm1963 = vweird.f32 %v1942
        %vm1964 = vweird.f32 %v1958
        %vm1965 = vmor %vm1963, %vm1964
        %v1966 = vsel %vm1965, %v1958, %v1962
        %v1967 = vand.u32 2147483647, %v1942
        %vm1968 = vcmp.eq.f32.partialorder %v1967, 8.507059e+37
        %v1969 = vand.u32 %v1942, 2147483648
        %v1970 = vor.u32 1.1754944e-38, %v1969
        %v1971 = vsel %vm1968, %v1970, %v1966
        %v1972 = vmul.f32 1.0, %v1971
        %v1973 = vadd.f32 %v1885, %v1915
        %v1974 = vadd.f32 %v1888, %v1917
        %v1975 = vxor.u32 %v1973, 2147483648
        %v1976 = vxor.u32 %v1974, 2147483648
        %v1977 = vmul.f32 %v1975, 1.442695
        %v1978 = vpow.pop %v1977
        %v1979 = vmul.f32 %v1976, 1.442695
        %v1980 = vpow.pop %v1979
        %v1981 = vadd.f32 %v1978, 1.0
        %v1982 = vadd.f32 %v1980, 1.0
        %v1983 = vrcp.pop %v1981
        %v1984 = vmul.f32 %v1981, %v1983
        %v1985 = vsub.f32 1.0, %v1984
        %v1986 = vmul.f32 %v1983, %v1985
        %v1987 = vadd.f32 %v1983, %v1986
        %vm1988 = vweird.f32 %v1981
        %vm1989 = vweird.f32 %v1983
        %vm1990 = vmor %vm1988, %vm1989
        %v1991 = vsel %vm1990, %v1983, %v1987
        %v1992 = vand.u32 2147483647, %v1981
        %vm1993 = vcmp.eq.f32.partialorder %v1992, 8.507059e+37
        %v1994 = vand.u32 %v1981, 2147483648
        %v1995 = vor.u32 1.1754944e-38, %v1994
        %v1996 = vsel %vm1993, %v1995, %v1991
        %v1997 = vmul.f32 1.0, %v1996
        %v1998 = vrcp.pop %v1982
        %v1999 = vmul.f32 %v1982, %v1998
        %v2000 = vsub.f32 1.0, %v1999
        %v2001 = vmul.f32 %v1998, %v2000
        %v2002 = vadd.f32 %v1998, %v2001
        %vm2003 = vweird.f32 %v1982
        %vm2004 = vweird.f32 %v1998
        %vm2005 = vmor %vm2003, %vm2004
        %v2006 = vsel %vm2005, %v1998, %v2002
        %v2007 = vand.u32 2147483647, %v1982
        %vm2008 = vcmp.eq.f32.partialorder %v2007, 8.507059e+37
        %v2009 = vand.u32 %v1982, 2147483648
        %v2010 = vor.u32 1.1754944e-38, %v2009
        %v2011 = vsel %vm2008, %v2010, %v2006
        %v2012 = vmul.f32 1.0, %v2011
        %v2013 = vadd.f32 %v1929, %v1400
        %v2014 = vadd.f32 %v1931, %v1400
        %v2015 = vmul.f32 %v1957, %v2013
        %v2016 = vmul.f32 %v1972, %v2014
        %v2017 = vadd.f32 %v1886, %v2015
        %v2018 = vadd.f32 %v1889, %v2016
        %v2019 = vtanh.pop %v2017
        %v2020 = vtanh.pop %v2018
        %v2021 = vsub.f32 1.0, %v1997
        %v2022 = vsub.f32 1.0, %v2012
        %v2023 = vmul.f32 %v2021, %v2019
        %v2024 = vmul.f32 %v2022, %v2020
        %v2025 = vmul.f32 %v1997, %v1874
        %v2026 = vmul.f32 %v2012, %v1875
        %v2027 = vadd.f32 %v2023, %v2025
        %v2028 = vadd.f32 %v2024, %v2026
        %v2029 = vmax.f32 %v2027, 0.0
        %v2030 = vmax.f32 %v2028, 0.0
        %v2031 = vpack.c.bf16 %v2029, %v2029
        %v2032 = vpack.c.bf16 %v2030, %v2030
        %s2033 = scalar_lea.vmem [#allocation3], 32
        %2034 = vst [vmem:[%s2033] sm:$0xf] %v2031
        %2035 = vst [vmem:[%s2033 + $0x4] sm:$0xf] %v2032
        %s2036 = scalar_lea.vmem [#allocation2], 240
        %v2037 = vld [vmem:[%s2036] sm:$0xff]
        %v2038 = vld [vmem:[%s2036 + $0x8] sm:$0xff]
        %v2039 = vld [vmem:[%s2036 + $0x10] sm:$0xff]
        %v2040 = vld [vmem:[%s2036 + $0x18] sm:$0xff]
        %v2041 = vld [vmem:[%s2036 + $0x20] sm:$0xff]
        %v2042 = vld [vmem:[%s2036 + $0x28] sm:$0xff]
        %v2043 = vpack.c.bf16 %v2028, %v2027
        %2044 = vmatpush.bf16.msra.mxu0 %v1250
        %2045 = vmatpush.bf16.msra.mxu0 %v1247
        %2046 = vmatpush.bf16.msra.mxu0 %v1244
        %2047 = vmatpush.bf16.msra.mxu0 %v1241
        %2048 = vmatpush.bf16.msra.mxu0 %v1238
        %2049 = vmatpush.bf16.msra.mxu0 %v1235
        %2050 = vmatpush.bf16.msra.mxu0 %v1232
        %2051 = vmatpush.bf16.msra.mxu0 %v1229
        %2052 = vmatmul.bf16.gmra.mxu0 %v2043
        %v2053 = vpop.f32.mrf.mxu0
        %v2054 = vadd.f32 0.0, %v2053
        %v2055 = vpop.f32.mrf.mxu0
        %v2056 = vadd.f32 0.0, %v2055
        %2057 = vdwg.mxu0
        %2058 = vmatpush.bf16.msra.mxu0 %v1251
        %2059 = vmatpush.bf16.msra.mxu0 %v1248
        %2060 = vmatpush.bf16.msra.mxu0 %v1245
        %2061 = vmatpush.bf16.msra.mxu0 %v1242
        %2062 = vmatpush.bf16.msra.mxu0 %v1239
        %2063 = vmatpush.bf16.msra.mxu0 %v1236
        %2064 = vmatpush.bf16.msra.mxu0 %v1233
        %2065 = vmatpush.bf16.msra.mxu0 %v1230
        %2066 = vmatmul.bf16.gmra.mxu0 %v2043
        %v2067 = vpop.f32.mrf.mxu0
        %v2068 = vadd.f32 0.0, %v2067
        %v2069 = vpop.f32.mrf.mxu0
        %v2070 = vadd.f32 0.0, %v2069
        %2071 = vdwg.mxu0
        %2072 = vmatpush.bf16.msra.mxu0 %v1252
        %2073 = vmatpush.bf16.msra.mxu0 %v1249
        %2074 = vmatpush.bf16.msra.mxu0 %v1246
        %2075 = vmatpush.bf16.msra.mxu0 %v1243
        %2076 = vmatpush.bf16.msra.mxu0 %v1240
        %2077 = vmatpush.bf16.msra.mxu0 %v1237
        %2078 = vmatpush.bf16.msra.mxu0 %v1234
        %2079 = vmatpush.bf16.msra.mxu0 %v1231
        %2080 = vmatmul.bf16.gmra.mxu0 %v2043
        %v2081 = vpop.f32.mrf.mxu0
        %v2082 = vadd.f32 0.0, %v2081
        %v2083 = vpop.f32.mrf.mxu0
        %v2084 = vadd.f32 0.0, %v2083
        %2085 = vdwg.mxu0
        %v2086 = vadd.f32 %v2037, %v2054
        %v2087 = vadd.f32 %v2040, %v2056
        %v2088 = vxor.u32 %v2086, 2147483648
        %v2089 = vxor.u32 %v2087, 2147483648
        %v2090 = vmul.f32 %v2088, 1.442695
        %v2091 = vpow.pop %v2090
        %v2092 = vmul.f32 %v2089, 1.442695
        %v2093 = vpow.pop %v2092
        %v2094 = vadd.f32 %v2091, 1.0
        %v2095 = vadd.f32 %v2093, 1.0
        %v2096 = vrcp.pop %v2094
        %v2097 = vmul.f32 %v2094, %v2096
        %v2098 = vsub.f32 1.0, %v2097
        %v2099 = vmul.f32 %v2096, %v2098
        %v2100 = vadd.f32 %v2096, %v2099
        %vm2101 = vweird.f32 %v2094
        %vm2102 = vweird.f32 %v2096
        %vm2103 = vmor %vm2101, %vm2102
        %v2104 = vsel %vm2103, %v2096, %v2100
        %v2105 = vand.u32 2147483647, %v2094
        %vm2106 = vcmp.eq.f32.partialorder %v2105, 8.507059e+37
        %v2107 = vand.u32 %v2094, 2147483648
        %v2108 = vor.u32 1.1754944e-38, %v2107
        %v2109 = vsel %vm2106, %v2108, %v2104
        %v2110 = vmul.f32 1.0, %v2109
        %v2111 = vrcp.pop %v2095
        %v2112 = vmul.f32 %v2095, %v2111
        %v2113 = vsub.f32 1.0, %v2112
        %v2114 = vmul.f32 %v2111, %v2113
        %v2115 = vadd.f32 %v2111, %v2114
        %vm2116 = vweird.f32 %v2095
        %vm2117 = vweird.f32 %v2111
        %vm2118 = vmor %vm2116, %vm2117
        %v2119 = vsel %vm2118, %v2111, %v2115
        %v2120 = vand.u32 2147483647, %v2095
        %vm2121 = vcmp.eq.f32.partialorder %v2120, 8.507059e+37
        %v2122 = vand.u32 %v2095, 2147483648
        %v2123 = vor.u32 1.1754944e-38, %v2122
        %v2124 = vsel %vm2121, %v2123, %v2119
        %v2125 = vmul.f32 1.0, %v2124
        %v2126 = vadd.f32 %v2038, %v2068
        %v2127 = vadd.f32 %v2041, %v2070
        %v2128 = vxor.u32 %v2126, 2147483648
        %v2129 = vxor.u32 %v2127, 2147483648
        %v2130 = vmul.f32 %v2128, 1.442695
        %v2131 = vpow.pop %v2130
        %v2132 = vmul.f32 %v2129, 1.442695
        %v2133 = vpow.pop %v2132
        %v2134 = vadd.f32 %v2131, 1.0
        %v2135 = vadd.f32 %v2133, 1.0
        %v2136 = vrcp.pop %v2134
        %v2137 = vmul.f32 %v2134, %v2136
        %v2138 = vsub.f32 1.0, %v2137
        %v2139 = vmul.f32 %v2136, %v2138
        %v2140 = vadd.f32 %v2136, %v2139
        %vm2141 = vweird.f32 %v2134
        %vm2142 = vweird.f32 %v2136
        %vm2143 = vmor %vm2141, %vm2142
        %v2144 = vsel %vm2143, %v2136, %v2140
        %v2145 = vand.u32 2147483647, %v2134
        %vm2146 = vcmp.eq.f32.partialorder %v2145, 8.507059e+37
        %v2147 = vand.u32 %v2134, 2147483648
        %v2148 = vor.u32 1.1754944e-38, %v2147
        %v2149 = vsel %vm2146, %v2148, %v2144
        %v2150 = vmul.f32 1.0, %v2149
        %v2151 = vrcp.pop %v2135
        %v2152 = vmul.f32 %v2135, %v2151
        %v2153 = vsub.f32 1.0, %v2152
        %v2154 = vmul.f32 %v2151, %v2153
        %v2155 = vadd.f32 %v2151, %v2154
        %vm2156 = vweird.f32 %v2135
        %vm2157 = vweird.f32 %v2151
        %vm2158 = vmor %vm2156, %vm2157
        %v2159 = vsel %vm2158, %v2151, %v2155
        %v2160 = vand.u32 2147483647, %v2135
        %vm2161 = vcmp.eq.f32.partialorder %v2160, 8.507059e+37
        %v2162 = vand.u32 %v2135, 2147483648
        %v2163 = vor.u32 1.1754944e-38, %v2162
        %v2164 = vsel %vm2161, %v2163, %v2159
        %v2165 = vmul.f32 1.0, %v2164
        %v2166 = vadd.f32 %v2082, %v1400
        %v2167 = vadd.f32 %v2084, %v1400
        %v2168 = vmul.f32 %v2110, %v2166
        %v2169 = vmul.f32 %v2125, %v2167
        %v2170 = vadd.f32 %v2039, %v2168
        %v2171 = vadd.f32 %v2042, %v2169
        %v2172 = vtanh.pop %v2170
        %v2173 = vtanh.pop %v2171
        %v2174 = vsub.f32 1.0, %v2150
        %v2175 = vsub.f32 1.0, %v2165
        %v2176 = vmul.f32 %v2174, %v2172
        %v2177 = vmul.f32 %v2175, %v2173
        %v2178 = vmul.f32 %v2150, %v2027
        %v2179 = vmul.f32 %v2165, %v2028
        %v2180 = vadd.f32 %v2176, %v2178
        %v2181 = vadd.f32 %v2177, %v2179
        %v2182 = vmax.f32 %v2180, 0.0
        %v2183 = vmax.f32 %v2181, 0.0
        %v2184 = vpack.c.bf16 %v2182, %v2182
        %v2185 = vpack.c.bf16 %v2183, %v2183
        %s2186 = scalar_lea.vmem [#allocation3], 40
        %2187 = vst [vmem:[%s2186] sm:$0xf] %v2184
        %2188 = vst [vmem:[%s2186 + $0x4] sm:$0xf] %v2185
        %s2189 = scalar_lea.vmem [#allocation2], 288
        %v2190 = vld [vmem:[%s2189] sm:$0xff]
        %v2191 = vld [vmem:[%s2189 + $0x8] sm:$0xff]
        %v2192 = vld [vmem:[%s2189 + $0x10] sm:$0xff]
        %v2193 = vld [vmem:[%s2189 + $0x18] sm:$0xff]
        %v2194 = vld [vmem:[%s2189 + $0x20] sm:$0xff]
        %v2195 = vld [vmem:[%s2189 + $0x28] sm:$0xff]
        %v2196 = vpack.c.bf16 %v2181, %v2180
        %2197 = vmatpush.bf16.msra.mxu0 %v1250
        %2198 = vmatpush.bf16.msra.mxu0 %v1247
        %2199 = vmatpush.bf16.msra.mxu0 %v1244
        %2200 = vmatpush.bf16.msra.mxu0 %v1241
        %2201 = vmatpush.bf16.msra.mxu0 %v1238
        %2202 = vmatpush.bf16.msra.mxu0 %v1235
        %2203 = vmatpush.bf16.msra.mxu0 %v1232
        %2204 = vmatpush.bf16.msra.mxu0 %v1229
        %2205 = vmatmul.bf16.gmra.mxu0 %v2196
        %v2206 = vpop.f32.mrf.mxu0
        %v2207 = vadd.f32 0.0, %v2206
        %v2208 = vpop.f32.mrf.mxu0
        %v2209 = vadd.f32 0.0, %v2208
        %2210 = vdwg.mxu0
        %2211 = vmatpush.bf16.msra.mxu0 %v1251
        %2212 = vmatpush.bf16.msra.mxu0 %v1248
        %2213 = vmatpush.bf16.msra.mxu0 %v1245
        %2214 = vmatpush.bf16.msra.mxu0 %v1242
        %2215 = vmatpush.bf16.msra.mxu0 %v1239
        %2216 = vmatpush.bf16.msra.mxu0 %v1236
        %2217 = vmatpush.bf16.msra.mxu0 %v1233
        %2218 = vmatpush.bf16.msra.mxu0 %v1230
        %2219 = vmatmul.bf16.gmra.mxu0 %v2196
        %v2220 = vpop.f32.mrf.mxu0
        %v2221 = vadd.f32 0.0, %v2220
        %v2222 = vpop.f32.mrf.mxu0
        %v2223 = vadd.f32 0.0, %v2222
        %2224 = vdwg.mxu0
        %2225 = vmatpush.bf16.msra.mxu0 %v1252
        %2226 = vmatpush.bf16.msra.mxu0 %v1249
        %2227 = vmatpush.bf16.msra.mxu0 %v1246
        %2228 = vmatpush.bf16.msra.mxu0 %v1243
        %2229 = vmatpush.bf16.msra.mxu0 %v1240
        %2230 = vmatpush.bf16.msra.mxu0 %v1237
        %2231 = vmatpush.bf16.msra.mxu0 %v1234
        %2232 = vmatpush.bf16.msra.mxu0 %v1231
        %2233 = vmatmul.bf16.gmra.mxu0 %v2196
        %v2234 = vpop.f32.mrf.mxu0
        %v2235 = vadd.f32 0.0, %v2234
        %v2236 = vpop.f32.mrf.mxu0
        %v2237 = vadd.f32 0.0, %v2236
        %2238 = vdwg.mxu0
        %v2239 = vadd.f32 %v2190, %v2207
        %v2240 = vadd.f32 %v2193, %v2209
        %v2241 = vxor.u32 %v2239, 2147483648
        %v2242 = vxor.u32 %v2240, 2147483648
        %v2243 = vmul.f32 %v2241, 1.442695
        %v2244 = vpow.pop %v2243
        %v2245 = vmul.f32 %v2242, 1.442695
        %v2246 = vpow.pop %v2245
        %v2247 = vadd.f32 %v2244, 1.0
        %v2248 = vadd.f32 %v2246, 1.0
        %v2249 = vrcp.pop %v2247
        %v2250 = vmul.f32 %v2247, %v2249
        %v2251 = vsub.f32 1.0, %v2250
        %v2252 = vmul.f32 %v2249, %v2251
        %v2253 = vadd.f32 %v2249, %v2252
        %vm2254 = vweird.f32 %v2247
        %vm2255 = vweird.f32 %v2249
        %vm2256 = vmor %vm2254, %vm2255
        %v2257 = vsel %vm2256, %v2249, %v2253
        %v2258 = vand.u32 2147483647, %v2247
        %vm2259 = vcmp.eq.f32.partialorder %v2258, 8.507059e+37
        %v2260 = vand.u32 %v2247, 2147483648
        %v2261 = vor.u32 1.1754944e-38, %v2260
        %v2262 = vsel %vm2259, %v2261, %v2257
        %v2263 = vmul.f32 1.0, %v2262
        %v2264 = vrcp.pop %v2248
        %v2265 = vmul.f32 %v2248, %v2264
        %v2266 = vsub.f32 1.0, %v2265
        %v2267 = vmul.f32 %v2264, %v2266
        %v2268 = vadd.f32 %v2264, %v2267
        %vm2269 = vweird.f32 %v2248
        %vm2270 = vweird.f32 %v2264
        %vm2271 = vmor %vm2269, %vm2270
        %v2272 = vsel %vm2271, %v2264, %v2268
        %v2273 = vand.u32 2147483647, %v2248
        %vm2274 = vcmp.eq.f32.partialorder %v2273, 8.507059e+37
        %v2275 = vand.u32 %v2248, 2147483648
        %v2276 = vor.u32 1.1754944e-38, %v2275
        %v2277 = vsel %vm2274, %v2276, %v2272
        %v2278 = vmul.f32 1.0, %v2277
        %v2279 = vadd.f32 %v2191, %v2221
        %v2280 = vadd.f32 %v2194, %v2223
        %v2281 = vxor.u32 %v2279, 2147483648
        %v2282 = vxor.u32 %v2280, 2147483648
        %v2283 = vmul.f32 %v2281, 1.442695
        %v2284 = vpow.pop %v2283
        %v2285 = vmul.f32 %v2282, 1.442695
        %v2286 = vpow.pop %v2285
        %v2287 = vadd.f32 %v2284, 1.0
        %v2288 = vadd.f32 %v2286, 1.0
        %v2289 = vrcp.pop %v2287
        %v2290 = vmul.f32 %v2287, %v2289
        %v2291 = vsub.f32 1.0, %v2290
        %v2292 = vmul.f32 %v2289, %v2291
        %v2293 = vadd.f32 %v2289, %v2292
        %vm2294 = vweird.f32 %v2287
        %vm2295 = vweird.f32 %v2289
        %vm2296 = vmor %vm2294, %vm2295
        %v2297 = vsel %vm2296, %v2289, %v2293
        %v2298 = vand.u32 2147483647, %v2287
        %vm2299 = vcmp.eq.f32.partialorder %v2298, 8.507059e+37
        %v2300 = vand.u32 %v2287, 2147483648
        %v2301 = vor.u32 1.1754944e-38, %v2300
        %v2302 = vsel %vm2299, %v2301, %v2297
        %v2303 = vmul.f32 1.0, %v2302
        %v2304 = vrcp.pop %v2288
        %v2305 = vmul.f32 %v2288, %v2304
        %v2306 = vsub.f32 1.0, %v2305
        %v2307 = vmul.f32 %v2304, %v2306
        %v2308 = vadd.f32 %v2304, %v2307
        %vm2309 = vweird.f32 %v2288
        %vm2310 = vweird.f32 %v2304
        %vm2311 = vmor %vm2309, %vm2310
        %v2312 = vsel %vm2311, %v2304, %v2308
        %v2313 = vand.u32 2147483647, %v2288
        %vm2314 = vcmp.eq.f32.partialorder %v2313, 8.507059e+37
        %v2315 = vand.u32 %v2288, 2147483648
        %v2316 = vor.u32 1.1754944e-38, %v2315
        %v2317 = vsel %vm2314, %v2316, %v2312
        %v2318 = vmul.f32 1.0, %v2317
        %v2319 = vadd.f32 %v2235, %v1400
        %v2320 = vadd.f32 %v2237, %v1400
        %v2321 = vmul.f32 %v2263, %v2319
        %v2322 = vmul.f32 %v2278, %v2320
        %v2323 = vadd.f32 %v2192, %v2321
        %v2324 = vadd.f32 %v2195, %v2322
        %v2325 = vtanh.pop %v2323
        %v2326 = vtanh.pop %v2324
        %v2327 = vsub.f32 1.0, %v2303
        %v2328 = vsub.f32 1.0, %v2318
        %v2329 = vmul.f32 %v2327, %v2325
        %v2330 = vmul.f32 %v2328, %v2326
        %v2331 = vmul.f32 %v2303, %v2180
        %v2332 = vmul.f32 %v2318, %v2181
        %v2333 = vadd.f32 %v2329, %v2331
        %v2334 = vadd.f32 %v2330, %v2332
        %v2335 = vmax.f32 %v2333, 0.0
        %v2336 = vmax.f32 %v2334, 0.0
        %v2337 = vpack.c.bf16 %v2335, %v2335
        %v2338 = vpack.c.bf16 %v2336, %v2336
        %s2339 = scalar_lea.vmem [#allocation3], 48
        %2340 = vst [vmem:[%s2339] sm:$0xf] %v2337
        %2341 = vst [vmem:[%s2339 + $0x4] sm:$0xf] %v2338
        %s2342 = scalar_lea.vmem [#allocation2], 336
        %v2343 = vld [vmem:[%s2342] sm:$0xff]
        %v2344 = vld [vmem:[%s2342 + $0x8] sm:$0xff]
        %v2345 = vld [vmem:[%s2342 + $0x10] sm:$0xff]
        %v2346 = vld [vmem:[%s2342 + $0x18] sm:$0xff]
        %v2347 = vld [vmem:[%s2342 + $0x20] sm:$0xff]
        %v2348 = vld [vmem:[%s2342 + $0x28] sm:$0xff]
        %v2349 = vpack.c.bf16 %v2334, %v2333
        %2350 = vmatpush.bf16.msra.mxu0 %v1250
        %2351 = vmatpush.bf16.msra.mxu0 %v1247
        %2352 = vmatpush.bf16.msra.mxu0 %v1244
        %2353 = vmatpush.bf16.msra.mxu0 %v1241
        %2354 = vmatpush.bf16.msra.mxu0 %v1238
        %2355 = vmatpush.bf16.msra.mxu0 %v1235
        %2356 = vmatpush.bf16.msra.mxu0 %v1232
        %2357 = vmatpush.bf16.msra.mxu0 %v1229
        %2358 = vmatmul.bf16.gmra.mxu0 %v2349
        %v2359 = vpop.f32.mrf.mxu0
        %v2360 = vadd.f32 0.0, %v2359
        %v2361 = vpop.f32.mrf.mxu0
        %v2362 = vadd.f32 0.0, %v2361
        %2363 = vdwg.mxu0
        %2364 = vmatpush.bf16.msra.mxu0 %v1251
        %2365 = vmatpush.bf16.msra.mxu0 %v1248
        %2366 = vmatpush.bf16.msra.mxu0 %v1245
        %2367 = vmatpush.bf16.msra.mxu0 %v1242
        %2368 = vmatpush.bf16.msra.mxu0 %v1239
        %2369 = vmatpush.bf16.msra.mxu0 %v1236
        %2370 = vmatpush.bf16.msra.mxu0 %v1233
        %2371 = vmatpush.bf16.msra.mxu0 %v1230
        %2372 = vmatmul.bf16.gmra.mxu0 %v2349
        %v2373 = vpop.f32.mrf.mxu0
        %v2374 = vadd.f32 0.0, %v2373
        %v2375 = vpop.f32.mrf.mxu0
        %v2376 = vadd.f32 0.0, %v2375
        %2377 = vdwg.mxu0
        %2378 = vmatpush.bf16.msra.mxu0 %v1252
        %2379 = vmatpush.bf16.msra.mxu0 %v1249
        %2380 = vmatpush.bf16.msra.mxu0 %v1246
        %2381 = vmatpush.bf16.msra.mxu0 %v1243
        %2382 = vmatpush.bf16.msra.mxu0 %v1240
        %2383 = vmatpush.bf16.msra.mxu0 %v1237
        %2384 = vmatpush.bf16.msra.mxu0 %v1234
        %2385 = vmatpush.bf16.msra.mxu0 %v1231
        %2386 = vmatmul.bf16.gmra.mxu0 %v2349
        %v2387 = vpop.f32.mrf.mxu0
        %v2388 = vadd.f32 0.0, %v2387
        %v2389 = vpop.f32.mrf.mxu0
        %v2390 = vadd.f32 0.0, %v2389
        %2391 = vdwg.mxu0
        %v2392 = vadd.f32 %v2343, %v2360
        %v2393 = vadd.f32 %v2346, %v2362
        %v2394 = vxor.u32 %v2392, 2147483648
        %v2395 = vxor.u32 %v2393, 2147483648
        %v2396 = vmul.f32 %v2394, 1.442695
        %v2397 = vpow.pop %v2396
        %v2398 = vmul.f32 %v2395, 1.442695
        %v2399 = vpow.pop %v2398
        %v2400 = vadd.f32 %v2397, 1.0
        %v2401 = vadd.f32 %v2399, 1.0
        %v2402 = vrcp.pop %v2400
        %v2403 = vmul.f32 %v2400, %v2402
        %v2404 = vsub.f32 1.0, %v2403
        %v2405 = vmul.f32 %v2402, %v2404
        %v2406 = vadd.f32 %v2402, %v2405
        %vm2407 = vweird.f32 %v2400
        %vm2408 = vweird.f32 %v2402
        %vm2409 = vmor %vm2407, %vm2408
        %v2410 = vsel %vm2409, %v2402, %v2406
        %v2411 = vand.u32 2147483647, %v2400
        %vm2412 = vcmp.eq.f32.partialorder %v2411, 8.507059e+37
        %v2413 = vand.u32 %v2400, 2147483648
        %v2414 = vor.u32 1.1754944e-38, %v2413
        %v2415 = vsel %vm2412, %v2414, %v2410
        %v2416 = vmul.f32 1.0, %v2415
        %v2417 = vrcp.pop %v2401
        %v2418 = vmul.f32 %v2401, %v2417
        %v2419 = vsub.f32 1.0, %v2418
        %v2420 = vmul.f32 %v2417, %v2419
        %v2421 = vadd.f32 %v2417, %v2420
        %vm2422 = vweird.f32 %v2401
        %vm2423 = vweird.f32 %v2417
        %vm2424 = vmor %vm2422, %vm2423
        %v2425 = vsel %vm2424, %v2417, %v2421
        %v2426 = vand.u32 2147483647, %v2401
        %vm2427 = vcmp.eq.f32.partialorder %v2426, 8.507059e+37
        %v2428 = vand.u32 %v2401, 2147483648
        %v2429 = vor.u32 1.1754944e-38, %v2428
        %v2430 = vsel %vm2427, %v2429, %v2425
        %v2431 = vmul.f32 1.0, %v2430
        %v2432 = vadd.f32 %v2344, %v2374
        %v2433 = vadd.f32 %v2347, %v2376
        %v2434 = vxor.u32 %v2432, 2147483648
        %v2435 = vxor.u32 %v2433, 2147483648
        %v2436 = vmul.f32 %v2434, 1.442695
        %v2437 = vpow.pop %v2436
        %v2438 = vmul.f32 %v2435, 1.442695
        %v2439 = vpow.pop %v2438
        %v2440 = vadd.f32 %v2437, 1.0
        %v2441 = vadd.f32 %v2439, 1.0
        %v2442 = vrcp.pop %v2440
        %v2443 = vmul.f32 %v2440, %v2442
        %v2444 = vsub.f32 1.0, %v2443
        %v2445 = vmul.f32 %v2442, %v2444
        %v2446 = vadd.f32 %v2442, %v2445
        %vm2447 = vweird.f32 %v2440
        %vm2448 = vweird.f32 %v2442
        %vm2449 = vmor %vm2447, %vm2448
        %v2450 = vsel %vm2449, %v2442, %v2446
        %v2451 = vand.u32 2147483647, %v2440
        %vm2452 = vcmp.eq.f32.partialorder %v2451, 8.507059e+37
        %v2453 = vand.u32 %v2440, 2147483648
        %v2454 = vor.u32 1.1754944e-38, %v2453
        %v2455 = vsel %vm2452, %v2454, %v2450
        %v2456 = vmul.f32 1.0, %v2455
        %v2457 = vrcp.pop %v2441
        %v2458 = vmul.f32 %v2441, %v2457
        %v2459 = vsub.f32 1.0, %v2458
        %v2460 = vmul.f32 %v2457, %v2459
        %v2461 = vadd.f32 %v2457, %v2460
        %vm2462 = vweird.f32 %v2441
        %vm2463 = vweird.f32 %v2457
        %vm2464 = vmor %vm2462, %vm2463
        %v2465 = vsel %vm2464, %v2457, %v2461
        %v2466 = vand.u32 2147483647, %v2441
        %vm2467 = vcmp.eq.f32.partialorder %v2466, 8.507059e+37
        %v2468 = vand.u32 %v2441, 2147483648
        %v2469 = vor.u32 1.1754944e-38, %v2468
        %v2470 = vsel %vm2467, %v2469, %v2465
        %v2471 = vmul.f32 1.0, %v2470
        %v2472 = vadd.f32 %v2388, %v1400
        %v2473 = vadd.f32 %v2390, %v1400
        %v2474 = vmul.f32 %v2416, %v2472
        %v2475 = vmul.f32 %v2431, %v2473
        %v2476 = vadd.f32 %v2345, %v2474
        %v2477 = vadd.f32 %v2348, %v2475
        %v2478 = vtanh.pop %v2476
        %v2479 = vtanh.pop %v2477
        %v2480 = vsub.f32 1.0, %v2456
        %v2481 = vsub.f32 1.0, %v2471
        %v2482 = vmul.f32 %v2480, %v2478
        %v2483 = vmul.f32 %v2481, %v2479
        %v2484 = vmul.f32 %v2456, %v2333
        %v2485 = vmul.f32 %v2471, %v2334
        %v2486 = vadd.f32 %v2482, %v2484
        %v2487 = vadd.f32 %v2483, %v2485
        %v2488 = vmax.f32 %v2486, 0.0
        %v2489 = vmax.f32 %v2487, 0.0
        %v2490 = vpack.c.bf16 %v2488, %v2488
        %v2491 = vpack.c.bf16 %v2489, %v2489
        %s2492 = scalar_lea.vmem [#allocation3], 56
        %2493 = vst [vmem:[%s2492] sm:$0xf] %v2490
        %2494 = vst [vmem:[%s2492 + $0x4] sm:$0xf] %v2491
        %v2495 = vld [vmem:[#allocation3] sm:$0xf]
        %v2496 = vld [vmem:[#allocation3 + $0x4] sm:$0xf]
        %v2497 = vld [vmem:[#allocation3 + $0x8] sm:$0xf]
        %v2498 = vld [vmem:[#allocation3 + $0xc] sm:$0xf]
        %v2499 = vld [vmem:[#allocation3 + $0x10] sm:$0xf]
        %v2500 = vld [vmem:[#allocation3 + $0x14] sm:$0xf]
        %v2501 = vld [vmem:[#allocation3 + $0x18] sm:$0xf]
        %v2502 = vld [vmem:[#allocation3 + $0x1c] sm:$0xf]
        %v2503 = vld [vmem:[#allocation3 + $0x20] sm:$0xf]
        %v2504 = vld [vmem:[#allocation3 + $0x24] sm:$0xf]
        %v2505 = vld [vmem:[#allocation3 + $0x28] sm:$0xf]
        %v2506 = vld [vmem:[#allocation3 + $0x2c] sm:$0xf]
        %v2507 = vld [vmem:[#allocation3 + $0x30] sm:$0xf]
        %v2508 = vld [vmem:[#allocation3 + $0x34] sm:$0xf]
        %v2509 = vld [vmem:[#allocation3 + $0x38] sm:$0xf]
        %v2510 = vld [vmem:[#allocation3 + $0x3c] sm:$0xf]
        %v2511 = vld [vmem:[#allocation12] sm:$0xff]
        %v2512 = vld [vmem:[#allocation12 + $0x8] sm:$0xff]
        %v2513 = vld [vmem:[#allocation12 + $0x10] sm:$0xff]
        %v2514 = vld [vmem:[#allocation12 + $0x18] sm:$0xff]
        %v2515 = vld [vmem:[#allocation12 + $0x20] sm:$0xff]
        %v2516 = vld [vmem:[#allocation12 + $0x28] sm:$0xff]
        %v2517 = vld [vmem:[#allocation12 + $0x30] sm:$0xff]
        %v2518 = vld [vmem:[#allocation12 + $0x38] sm:$0xff]
        %v2519 = vld [vmem:[#allocation12 + $0x40] sm:$0xff]
        %v2520 = vld [vmem:[#allocation12 + $0x48] sm:$0xff]
        %v2521 = vld [vmem:[#allocation12 + $0x50] sm:$0xff]
        %v2522 = vld [vmem:[#allocation12 + $0x58] sm:$0xff]
        %v2523 = vld [vmem:[#allocation12 + $0x60] sm:$0xff]
        %v2524 = vld [vmem:[#allocation12 + $0x68] sm:$0xff]
        %v2525 = vld [vmem:[#allocation12 + $0x70] sm:$0xff]
        %v2526 = vld [vmem:[#allocation12 + $0x78] sm:$0xff]
        %v2527 = vld [vmem:[%s6] sm:$0x3]
        %v2529 = vperm.slane %v2527, 0
        %v2530 = vperm.slane %v2527, 1
        %v2549 = vunpack.c.l.b16 %v2495
        %v2550 = vunpack.c.l.b16 %v2496
        %v2551 = vunpack.c.l.b16 %v2497
        %v2552 = vunpack.c.l.b16 %v2498
        %v2553 = vunpack.c.l.b16 %v2499
        %v2554 = vunpack.c.l.b16 %v2500
        %v2555 = vunpack.c.l.b16 %v2501
        %v2556 = vunpack.c.l.b16 %v2502
        %v2557 = vunpack.c.l.b16 %v2503
        %v2558 = vunpack.c.l.b16 %v2504
        %v2559 = vunpack.c.l.b16 %v2505
        %v2560 = vunpack.c.l.b16 %v2506
        %v2561 = vunpack.c.l.b16 %v2507
        %v2562 = vunpack.c.l.b16 %v2508
        %v2563 = vunpack.c.l.b16 %v2509
        %v2564 = vunpack.c.l.b16 %v2510
        %v2565 = vpack.c.b16 %v2550, %v2549
        %v2566 = vpack.c.b16 %v2552, %v2551
        %v2567 = vpack.c.b16 %v2554, %v2553
        %v2568 = vpack.c.b16 %v2556, %v2555
        %v2569 = vpack.c.b16 %v2558, %v2557
        %v2570 = vpack.c.b16 %v2560, %v2559
        %v2571 = vpack.c.b16 %v2562, %v2561
        %v2572 = vpack.c.b16 %v2564, %v2563
        %v2597 = vunpack.c.l.b16 %v2511
        %v2598 = vunpack.c.h.b16 %v2511
        %v2599 = vunpack.c.l.b16 %v2512
        %v2600 = vunpack.c.h.b16 %v2512
        %v2601 = vunpack.c.l.b16 %v2513
        %v2602 = vunpack.c.h.b16 %v2513
        %v2603 = vunpack.c.l.b16 %v2514
        %v2604 = vunpack.c.h.b16 %v2514
        %v2605 = vunpack.c.l.b16 %v2515
        %v2606 = vunpack.c.h.b16 %v2515
        %v2607 = vunpack.c.l.b16 %v2516
        %v2608 = vunpack.c.h.b16 %v2516
        %v2609 = vunpack.c.l.b16 %v2517
        %v2610 = vunpack.c.h.b16 %v2517
        %v2611 = vunpack.c.l.b16 %v2518
        %v2612 = vunpack.c.h.b16 %v2518
        %v2613 = vunpack.c.l.b16 %v2519
        %v2614 = vunpack.c.h.b16 %v2519
        %v2615 = vunpack.c.l.b16 %v2520
        %v2616 = vunpack.c.h.b16 %v2520
        %v2617 = vunpack.c.l.b16 %v2521
        %v2618 = vunpack.c.h.b16 %v2521
        %v2619 = vunpack.c.l.b16 %v2522
        %v2620 = vunpack.c.h.b16 %v2522
        %v2621 = vunpack.c.l.b16 %v2523
        %v2622 = vunpack.c.h.b16 %v2523
        %v2623 = vunpack.c.l.b16 %v2524
        %v2624 = vunpack.c.h.b16 %v2524
        %v2625 = vunpack.c.l.b16 %v2525
        %v2626 = vunpack.c.h.b16 %v2525
        %v2627 = vunpack.c.l.b16 %v2526
        %v2628 = vunpack.c.h.b16 %v2526
        %v2629 = vpack.c.b16 %v2599, %v2597
        %v2630 = vpack.c.b16 %v2600, %v2598
        %v2631 = vpack.c.b16 %v2603, %v2601
        %v2632 = vpack.c.b16 %v2604, %v2602
        %v2633 = vpack.c.b16 %v2607, %v2605
        %v2634 = vpack.c.b16 %v2608, %v2606
        %v2635 = vpack.c.b16 %v2611, %v2609
        %v2636 = vpack.c.b16 %v2612, %v2610
        %v2637 = vpack.c.b16 %v2615, %v2613
        %v2638 = vpack.c.b16 %v2616, %v2614
        %v2639 = vpack.c.b16 %v2619, %v2617
        %v2640 = vpack.c.b16 %v2620, %v2618
        %v2641 = vpack.c.b16 %v2623, %v2621
        %v2642 = vpack.c.b16 %v2624, %v2622
        %v2643 = vpack.c.b16 %v2627, %v2625
        %v2644 = vpack.c.b16 %v2628, %v2626
        %2661 = vmatpush.bf16.msra.mxu0 %v2643
        %2662 = vmatpush.bf16.msra.mxu0 %v2641
        %2663 = vmatpush.bf16.msra.mxu0 %v2639
        %2664 = vmatpush.bf16.msra.mxu0 %v2637
        %2665 = vmatpush.bf16.msra.mxu0 %v2635
        %2666 = vmatpush.bf16.msra.mxu0 %v2633
        %2667 = vmatpush.bf16.msra.mxu0 %v2631
        %2668 = vmatpush.bf16.msra.mxu0 %v2629
        %2669 = vmatmul.bf16.gmra.mxu0 %v2565
        %v2670 = vpop.f32.mrf.mxu0
        %v2671 = vadd.f32 %v2529, %v2670
        %v2672 = vpop.f32.mrf.mxu0
        %v2673 = vadd.f32 %v2529, %v2672
        %2674 = vmatmul.bf16.gmra.mxu0 %v2566
        %v2675 = vpop.f32.mrf.mxu0
        %v2676 = vadd.f32 %v2529, %v2675
        %v2677 = vpop.f32.mrf.mxu0
        %v2678 = vadd.f32 %v2529, %v2677
        %2679 = vmatmul.bf16.gmra.mxu0 %v2567
        %v2680 = vpop.f32.mrf.mxu0
        %v2681 = vadd.f32 %v2529, %v2680
        %v2682 = vpop.f32.mrf.mxu0
        %v2683 = vadd.f32 %v2529, %v2682
        %2684 = vmatmul.bf16.gmra.mxu0 %v2568
        %v2685 = vpop.f32.mrf.mxu0
        %v2686 = vadd.f32 %v2529, %v2685
        %v2687 = vpop.f32.mrf.mxu0
        %v2688 = vadd.f32 %v2529, %v2687
        %2689 = vmatmul.bf16.gmra.mxu0 %v2569
        %v2690 = vpop.f32.mrf.mxu0
        %v2691 = vadd.f32 %v2529, %v2690
        %v2692 = vpop.f32.mrf.mxu0
        %v2693 = vadd.f32 %v2529, %v2692
        %2694 = vmatmul.bf16.gmra.mxu0 %v2570
        %v2695 = vpop.f32.mrf.mxu0
        %v2696 = vadd.f32 %v2529, %v2695
        %v2697 = vpop.f32.mrf.mxu0
        %v2698 = vadd.f32 %v2529, %v2697
        %2699 = vmatmul.bf16.gmra.mxu0 %v2571
        %v2700 = vpop.f32.mrf.mxu0
        %v2701 = vadd.f32 %v2529, %v2700
        %v2702 = vpop.f32.mrf.mxu0
        %v2703 = vadd.f32 %v2529, %v2702
        %2704 = vmatmul.bf16.gmra.mxu0 %v2572
        %v2705 = vpop.f32.mrf.mxu0
        %v2706 = vadd.f32 %v2529, %v2705
        %v2707 = vpop.f32.mrf.mxu0
        %v2708 = vadd.f32 %v2529, %v2707
        %2709 = vdwg.mxu0
        %2710 = vmatpush.bf16.msra.mxu0 %v2644
        %2711 = vmatpush.bf16.msra.mxu0 %v2642
        %2712 = vmatpush.bf16.msra.mxu0 %v2640
        %2713 = vmatpush.bf16.msra.mxu0 %v2638
        %2714 = vmatpush.bf16.msra.mxu0 %v2636
        %2715 = vmatpush.bf16.msra.mxu0 %v2634
        %2716 = vmatpush.bf16.msra.mxu0 %v2632
        %2717 = vmatpush.bf16.msra.mxu0 %v2630
        %2718 = vmatmul.bf16.gmra.mxu0 %v2565
        %v2719 = vpop.f32.mrf.mxu0
        %v2720 = vadd.f32 %v2530, %v2719
        %v2721 = vpop.f32.mrf.mxu0
        %v2722 = vadd.f32 %v2530, %v2721
        %2723 = vmatmul.bf16.gmra.mxu0 %v2566
        %v2724 = vpop.f32.mrf.mxu0
        %v2725 = vadd.f32 %v2530, %v2724
        %v2726 = vpop.f32.mrf.mxu0
        %v2727 = vadd.f32 %v2530, %v2726
        %2728 = vmatmul.bf16.gmra.mxu0 %v2567
        %v2729 = vpop.f32.mrf.mxu0
        %v2730 = vadd.f32 %v2530, %v2729
        %v2731 = vpop.f32.mrf.mxu0
        %v2732 = vadd.f32 %v2530, %v2731
        %2733 = vmatmul.bf16.gmra.mxu0 %v2568
        %v2734 = vpop.f32.mrf.mxu0
        %v2735 = vadd.f32 %v2530, %v2734
        %v2736 = vpop.f32.mrf.mxu0
        %v2737 = vadd.f32 %v2530, %v2736
        %2738 = vmatmul.bf16.gmra.mxu0 %v2569
        %v2739 = vpop.f32.mrf.mxu0
        %v2740 = vadd.f32 %v2530, %v2739
        %v2741 = vpop.f32.mrf.mxu0
        %v2742 = vadd.f32 %v2530, %v2741
        %2743 = vmatmul.bf16.gmra.mxu0 %v2570
        %v2744 = vpop.f32.mrf.mxu0
        %v2745 = vadd.f32 %v2530, %v2744
        %v2746 = vpop.f32.mrf.mxu0
        %v2747 = vadd.f32 %v2530, %v2746
        %2748 = vmatmul.bf16.gmra.mxu0 %v2571
        %v2749 = vpop.f32.mrf.mxu0
        %v2750 = vadd.f32 %v2530, %v2749
        %v2751 = vpop.f32.mrf.mxu0
        %v2752 = vadd.f32 %v2530, %v2751
        %2753 = vmatmul.bf16.gmra.mxu0 %v2572
        %v2754 = vpop.f32.mrf.mxu0
        %v2755 = vadd.f32 %v2530, %v2754
        %v2756 = vpop.f32.mrf.mxu0
        %v2757 = vadd.f32 %v2530, %v2756
        %2758 = vdwg.mxu0
        %v2759 = vadd.f32 %v2671, %v392
        %v2760 = vadd.f32 %v2720, %v393
        %v2761 = vadd.f32 %v2673, %v394
        %v2762 = vadd.f32 %v2722, %v395
        %v2763 = vadd.f32 %v2676, %v396
        %v2764 = vadd.f32 %v2725, %v397
        %v2765 = vadd.f32 %v2678, %v398
        %v2766 = vadd.f32 %v2727, %v399
        %v2767 = vadd.f32 %v2681, %v400
        %v2768 = vadd.f32 %v2730, %v401
        %v2769 = vadd.f32 %v2683, %v402
        %v2770 = vadd.f32 %v2732, %v403
        %v2771 = vadd.f32 %v2686, %v404
        %v2772 = vadd.f32 %v2735, %v405
        %v2773 = vadd.f32 %v2688, %v406
        %v2774 = vadd.f32 %v2737, %v407
        %v2775 = vadd.f32 %v2691, %v408
        %v2776 = vadd.f32 %v2740, %v409
        %v2777 = vadd.f32 %v2693, %v410
        %v2778 = vadd.f32 %v2742, %v411
        %v2779 = vadd.f32 %v2696, %v412
        %v2780 = vadd.f32 %v2745, %v413
        %v2781 = vadd.f32 %v2698, %v414
        %v2782 = vadd.f32 %v2747, %v415
        %v2783 = vadd.f32 %v2701, %v416
        %v2784 = vadd.f32 %v2750, %v417
        %v2785 = vadd.f32 %v2703, %v418
        %v2786 = vadd.f32 %v2752, %v419
        %v2787 = vadd.f32 %v2706, %v420
        %v2788 = vadd.f32 %v2755, %v421
        %v2789 = vadd.f32 %v2708, %v422
        %v2790 = vadd.f32 %v2757, %v423
        %2791 = vst [vmem:[%s388] sm:$0xff] %v2759
        %2792 = vst [vmem:[%s388 + $0x8] sm:$0xff] %v2760
        %2793 = vst [vmem:[%s388 + $0x10] sm:$0xff] %v2761
        %2794 = vst [vmem:[%s388 + $0x18] sm:$0xff] %v2762
        %2795 = vst [vmem:[%s388 + $0x20] sm:$0xff] %v2763
        %2796 = vst [vmem:[%s388 + $0x28] sm:$0xff] %v2764
        %2797 = vst [vmem:[%s388 + $0x30] sm:$0xff] %v2765
        %2798 = vst [vmem:[%s388 + $0x38] sm:$0xff] %v2766
        %2799 = vst [vmem:[%s388 + $0x40] sm:$0xff] %v2767
        %2800 = vst [vmem:[%s388 + $0x48] sm:$0xff] %v2768
        %2801 = vst [vmem:[%s388 + $0x50] sm:$0xff] %v2769
        %2802 = vst [vmem:[%s388 + $0x58] sm:$0xff] %v2770
        %2803 = vst [vmem:[%s388 + $0x60] sm:$0xff] %v2771
        %2804 = vst [vmem:[%s388 + $0x68] sm:$0xff] %v2772
        %2805 = vst [vmem:[%s388 + $0x70] sm:$0xff] %v2773
        %2806 = vst [vmem:[%s388 + $0x78] sm:$0xff] %v2774
        %2807 = vst [vmem:[%s388 + $0x80] sm:$0xff] %v2775
        %2808 = vst [vmem:[%s388 + $0x88] sm:$0xff] %v2776
        %2809 = vst [vmem:[%s388 + $0x90] sm:$0xff] %v2777
        %2810 = vst [vmem:[%s388 + $0x98] sm:$0xff] %v2778
        %2811 = vst [vmem:[%s388 + $0xa0] sm:$0xff] %v2779
        %2812 = vst [vmem:[%s388 + $0xa8] sm:$0xff] %v2780
        %2813 = vst [vmem:[%s388 + $0xb0] sm:$0xff] %v2781
        %2814 = vst [vmem:[%s388 + $0xb8] sm:$0xff] %v2782
        %2815 = vst [vmem:[%s388 + $0xc0] sm:$0xff] %v2783
        %2816 = vst [vmem:[%s388 + $0xc8] sm:$0xff] %v2784
        %2817 = vst [vmem:[%s388 + $0xd0] sm:$0xff] %v2785
        %2818 = vst [vmem:[%s388 + $0xd8] sm:$0xff] %v2786
        %2819 = vst [vmem:[%s388 + $0xe0] sm:$0xff] %v2787
        %2820 = vst [vmem:[%s388 + $0xe8] sm:$0xff] %v2788
        %2821 = vst [vmem:[%s388 + $0xf0] sm:$0xff] %v2789
        %2822 = vst [vmem:[%s388 + $0xf8] sm:$0xff] %v2790
        %s2823 = sand.u32 %s186, 1
        %s2824 = scalar_lea.sflag [#allocation6], %s2823
        %s2825 = sand.u32 %s186, 1
        %s2826 = smul.addr %s2825, 256
        %s2827 = scalar_lea.vmem [#allocation13], %s2826
        // Predicated region
        $region69: #{tpu_custom_call.1} parent=47 // pred_check
          %p2828 = pneg %p196
        $region70: #{tpu_custom_call.1} parent=47 // pred_check_branch
          %2830 = sbr.rel (%p2828) target = $region72
        $region71: #{tpu_custom_call.1} parent=47 // pred_region
          #allocation17 [shape = 'u32[6]{0}', space=smem, size = 0x18, scoped, tag = 'DMA stride descriptor']
          %s2831 = smul.u32 2, %s26
          %2833 = vsyncadd %s2824, 0
          %s2834 = smul.addr %s2831, 2
          %s2835 = smul.addr %s2834, 8
          %s2836 = scalar_lea.hbm %s7, %s2835
          %s2838 = sshll.u32 1, 14
          %s2839 = sxor.u32 4294967295, %s2838
          %s2842 = sshll.u32 7, 18
          %s2843 = sxor.u32 4294967295, %s2842
          %s2844 = sand.u32 0, %s2843
          %s2846 = sor.u32 %s2844, 0
          %s2847 = sshll.u32 %s2827, 4
          %s2848 = int_to_ptr.vmem [resolvable:$true] %s2847
          %s2849 = sshll.u32 %s2836, 4
          %s2850 = int_to_ptr.hbm [resolvable:$true] %s2849
          %2856 = sst [smem:[#allocation17]] 512
          %s2857 = scalar_lea.smem [#allocation17], 1
          %2858 = sst [smem:[%s2857]] 1024
          %s2859 = scalar_lea.smem [#allocation17], 2
          %2860 = sst [smem:[%s2859]] 2
          %s2861 = scalar_lea.smem [#allocation17], 3
          %2862 = sst [smem:[%s2861]] 256
          %s2863 = scalar_lea.smem [#allocation17], 4
          %2864 = sst [smem:[%s2863]] 256
          %s2865 = scalar_lea.smem [#allocation17], 5
          %2866 = sst [smem:[%s2865]] 16
          %2868 = dma.general %s2848, 4096, %s2850, %s2824, [#allocation16], [#allocation17], %s2846, 0
        $region72: #{tpu_custom_call.1} parent=47 // pred_fallthru
          _
      $region48: #{tpu_custom_call.1} parent=5 // pred_fallthru
        _
      %p2869 = scmp.le.s32.totalorder 2, %s21
      // Predicated region
      $region73: #{tpu_custom_call.1} parent=5 // pred_check
        %p2870 = pneg %p2869
      $region74: #{tpu_custom_call.1} parent=5 // pred_check_branch
        %2872 = sbr.rel (%p2870) target = $region76
      $region75: #{tpu_custom_call.1} parent=5 // pred_region
        %s2873 = ssub.s32 %s21, 2
        // Predicated region
        $region77: #{tpu_custom_call.1} parent=75 // pred_check
          %p2874 = pneg %p202
        $region78: #{tpu_custom_call.1} parent=75 // pred_check_branch
          %2876 = sbr.rel (%p2874) target = $region80
        $region79: #{tpu_custom_call.1} parent=75 // pred_region
          %s2877 = sand.u32 %s187, 1
          %s2878 = scalar_lea.sflag [#allocation6], %s2877
          %s2879 = sand.u32 %s187, 1
          %s2880 = smul.addr %s2879, 256
          %s2881 = scalar_lea.vmem [#allocation13], %s2880
          %2883 = dma.done %s2878, 4096
        $region80: #{tpu_custom_call.1} parent=75 // pred_fallthru
          _
      $region76: #{tpu_custom_call.1} parent=5 // pred_fallthru
        _
    $region6: #{tpu_custom_call.1} parent=1 // loop_footer
      %s25 = sadd.s32 1, %s21
    $region7: #{tpu_custom_call.1} parent=1 // loop_footer_branch
      %20 = sbr.rel target = $region3
    $region8: #{tpu_custom_call.1} parent=1 // loop_exit
      _
    %2884 = vsyncpa [#allocation5], 1
    %s2885 = scalar_lea.sflag [#allocation5], 1
    %2886 = vsyncpa %s2885, 1
    %2887 = vsyncpa [#allocation8], 1
    %2888 = vsyncpa [#allocation11], 1
    %2889 = vsyncpa [#allocation6], 1
    %s2890 = scalar_lea.sflag [#allocation6], 1
    %2891 = vsyncpa %s2890, 1

// kernel: tpu_custom_call.1
$region0: #{tpu_custom_call.1}
  #allocation0 [shape = 'u32[]', space=smem, size = 0x4, offset = 0x4, fixed_abs, tag = 'smem constant byte address 0x4 - core index']
  #allocation1 [shape = 'u32[72,128]{1,0:T(1,128)}', space=vmem, size = 0x9000, scoped, tag = 'internal scratch']
  #allocation2 [shape = 'f32[8,16,384]{2,1,0:T(8,128)}', space=vmem, size = 0x30000, scoped, tag = 'scratch operand']
  #allocation3 [shape = 'bf16[8,16,128]{2,1,0:T(8,128)(2,1)}', space=vmem, size = 0x8000, scoped, tag = 'scratch operand']
  #allocation14 [shape = 's32[]', space=sflag, size = 0x4, offset = 0, fixed_abs, tag = 'sflag constant byte address 0x0 - dummy sync flag']
  #allocation16 [shape = 's32[]', space=sflag, size = 0x4, offset = 0, fixed_abs, tag = 'sflag constant byte address 0x0 - dummy sync flag']
  %s0 = inlined_call_operand.hbm [shape: f32[8,32,256], index: 0, kind: input, shape index: {}]
  %s1 = inlined_call_operand.hbm [shape: bf16[256,384], index: 1, kind: input, shape index: {}]
  %s2 = inlined_call_operand.hbm [shape: bf16[128,384], index: 2, kind: input, shape index: {}]
  %s3 = inlined_call_operand.hbm [shape: f32[1,384], index: 3, kind: input, shape index: {}]
  %s4 = inlined_call_operand.vmem [shape: f32[1,128], index: 4, kind: input, shape index: {}]
  %s5 = inlined_call_operand.hbm [shape: bf16[128,256], index: 5, kind: input, shape index: {}]
  %s6 = inlined_call_operand.vmem [shape: f32[1,256], index: 6, kind: input, shape index: {}]
  %s7 = inlined_call_operand.hbm [shape: f32[8,32,256], index: 7, kind: output, shape index: {}]
  %s8 = sld [smem:[#allocation0]]
  $region81: #{tpu_custom_call.1} parent=0
    _
  %s10 = ssub.s32 1, %s8
  %s11 = scalar_select 0, %s10, %s8
  $region1: #{tpu_custom_call.1} parent=0
    #allocation4 [shape = 'u8[262144]{0}', space=vmem, size = 0x40000, scoped, tag = 'input window, operand 0']
    #allocation5 [shape = 's32[2]{0}', space=sflag, size = 0x8, scoped, tag = 'scoped memory for tpu_custom_call.1']
    #allocation6 [shape = 's32[2]{0}', space=sflag, size = 0x8, scoped, tag = 'scoped memory for tpu_custom_call.1']
    #allocation7 [shape = 'u8[196608]{0}', space=vmem, size = 0x30000, scoped, tag = 'input window, operand 1, single buffered']
    #allocation8 [shape = 's32[1]{0}', space=sflag, size = 0x4, scoped, tag = 'scoped memory for tpu_custom_call.1']
    #allocation9 [shape = 'u8[98304]{0}', space=vmem, size = 0x18000, scoped, tag = 'input window, operand 2, single buffered']
    #allocation10 [shape = 'u8[1536]{0}', space=vmem, size = 0x800, scoped, tag = 'input window, operand 3, single buffered']
    #allocation11 [shape = 's32[1]{0}', space=sflag, size = 0x4, scoped, tag = 'scoped memory for tpu_custom_call.1']
    #allocation12 [shape = 'u8[65536]{0}', space=vmem, size = 0x10000, scoped, tag = 'input window, operand 5, single buffered']
    #allocation13 [shape = 'u8[262144]{0}', space=vmem, size = 0x40000, scoped, tag = 'output window, operand 0']
    %12 = vsyncpa [#allocation5], 0
    %s13 = scalar_lea.sflag [#allocation5], 1
    %14 = vsyncpa %s13, 0
    %15 = vsyncpa [#allocation8], 0
    %16 = vsyncpa [#allocation11], 0
    %17 = vsyncpa [#allocation6], 0
    %s18 = scalar_lea.sflag [#allocation6], 1
    %19 = vsyncpa %s18, 0
    loop: start=0, step=1, limit=4
    $region2: #{tpu_custom_call.1} parent=1 // loop_pre_header
      _
    $region3: #{tpu_custom_call.1} parent=1 // loop_header
      %s21 = sphi 0, %s25
      %p22 = scmp.ge.s32.totalorder %s21, 4
      %s31 = sphi 0, %s33
      %s34 = sphi 0, %s31
      %s35 = sphi 0, %s34
      %s51 = sphi 0, %s35
      %s55 = sphi 0, %s55
      %s57 = sphi 0, %s55
      %s58 = sphi 0, %s57
      %s72 = sphi 0, %s58
      %s76 = sphi 0, %s76
      %s78 = sphi 0, %s76
      %s79 = sphi 0, %s78
      %s93 = sphi 0, %s79
      %s97 = sphi 0, %s97
      %s99 = sphi 0, %s97
      %s100 = sphi 0, %s99
      %s114 = sphi 0, %s100
      %s118 = sphi 0, %s118
      %s120 = sphi 0, %s118
      %s121 = sphi 0, %s120
      %s135 = sphi 0, %s121
      %s139 = sphi 0, %s139
      %s141 = sphi 0, %s139
      %s142 = sphi 0, %s141
      %s156 = sphi 0, %s142
      %s160 = sphi 0, %s160
      %s162 = sphi 0, %s160
      %s163 = sphi 0, %s162
      %s177 = sphi 0, %s163
      %s183 = sphi 0, %s185
      %s186 = sphi 0, %s183
      %s187 = sphi 0, %s186
      %s203 = sphi 0, %s187
    $region4: #{tpu_custom_call.1} parent=1 // loop_header_branch
      %24 = sbr.rel (%p22) target = $region8
    $region5: #{tpu_custom_call.1} parent=1 // loop_body
      %s26 = ssub.s32 %s21, 1
      %s27 = ssub.s32 %s21, 2
      %s28 = sadd.s32 %s21, 1
      %s29 = ssub.s32 %s21, %s28
      %p30 = scmp.eq.s32.totalorder %s29, 0
      %s32 = sadd.s32 %s31, 1
      %s33 = scalar_select %p30, %s31, %s32
      %p36 = pneg %p30
      %p37 = scmp.eq.s32.totalorder %s21, 1
      %p38 = por %p36, %p37
      %p39 = scmp.ne.s32.totalorder %s31, %s34
      %p40 = scmp.eq.s32.totalorder %s21, 0
      %p41 = por %p39, %p40
      %p42 = scmp.ne.s32.totalorder %s31, %s34
      %p43 = scmp.eq.s32.totalorder %s26, 1
      %p44 = por %p42, %p43
      %p45 = scmp.ne.s32.totalorder %s34, %s35
      %p46 = scmp.eq.s32.totalorder %s26, 0
      %p47 = por %p45, %p46
      %p48 = scmp.ne.s32.totalorder %s34, %s35
      %p49 = scmp.eq.s32.totalorder %s27, 1
      %p50 = por %p48, %p49
      %p52 = scmp.ne.s32.totalorder %s35, %s51
      %p53 = scmp.eq.s32.totalorder %s27, 0
      %p54 = por %p52, %p53
      %s56 = sadd.s32 %s55, 1
      %p59 = scmp.eq.s32.totalorder %s21, 1
      %p60 = scmp.ne.s32.totalorder %s55, %s57
      %p61 = scmp.eq.s32.totalorder %s21, 0
      %p62 = por %p60, %p61
      %p63 = scmp.ne.s32.totalorder %s55, %s57
      %p64 = scmp.eq.s32.totalorder %s26, 1
      %p65 = por %p63, %p64
      %p66 = scmp.ne.s32.totalorder %s57, %s58
      %p67 = scmp.eq.s32.totalorder %s26, 0
      %p68 = por %p66, %p67
      %p69 = scmp.ne.s32.totalorder %s57, %s58
      %p70 = scmp.eq.s32.totalorder %s27, 1
      %p71 = por %p69, %p70
      %p73 = scmp.ne.s32.totalorder %s58, %s72
      %p74 = scmp.eq.s32.totalorder %s27, 0
      %p75 = por %p73, %p74
      %s77 = sadd.s32 %s76, 1
      %p80 = scmp.eq.s32.totalorder %s21, 1
      %p81 = scmp.ne.s32.totalorder %s76, %s78
      %p82 = scmp.eq.s32.totalorder %s21, 0
      %p83 = por %p81, %p82
      %p84 = scmp.ne.s32.totalorder %s76, %s78
      %p85 = scmp.eq.s32.totalorder %s26, 1
      %p86 = por %p84, %p85
      %p87 = scmp.ne.s32.totalorder %s78, %s79
      %p88 = scmp.eq.s32.totalorder %s26, 0
      %p89 = por %p87, %p88
      %p90 = scmp.ne.s32.totalorder %s78, %s79
      %p91 = scmp.eq.s32.totalorder %s27, 1
      %p92 = por %p90, %p91
      %p94 = scmp.ne.s32.totalorder %s79, %s93
      %p95 = scmp.eq.s32.totalorder %s27, 0
      %p96 = por %p94, %p95
      %s98 = sadd.s32 %s97, 1
      %p101 = scmp.eq.s32.totalorder %s21, 1
      %p102 = scmp.ne.s32.totalorder %s97, %s99
      %p103 = scmp.eq.s32.totalorder %s21, 0
      %p104 = por %p102, %p103
      %p105 = scmp.ne.s32.totalorder %s97, %s99
      %p106 = scmp.eq.s32.totalorder %s26, 1
      %p107 = por %p105, %p106
      %p108 = scmp.ne.s32.totalorder %s99, %s100
      %p109 = scmp.eq.s32.totalorder %s26, 0
      %p110 = por %p108, %p109
      %p111 = scmp.ne.s32.totalorder %s99, %s100
      %p112 = scmp.eq.s32.totalorder %s27, 1
      %p113 = por %p111, %p112
      %p115 = scmp.ne.s32.totalorder %s100, %s114
      %p116 = scmp.eq.s32.totalorder %s27, 0
      %p117 = por %p115, %p116
      %s119 = sadd.s32 %s118, 1
      %p122 = scmp.eq.s32.totalorder %s21, 1
      %p123 = scmp.ne.s32.totalorder %s118, %s120
      %p124 = scmp.eq.s32.totalorder %s21, 0
      %p125 = por %p123, %p124
      %p126 = scmp.ne.s32.totalorder %s118, %s120
      %p127 = scmp.eq.s32.totalorder %s26, 1
      %p128 = por %p126, %p127
      %p129 = scmp.ne.s32.totalorder %s120, %s121
      %p130 = scmp.eq.s32.totalorder %s26, 0
      %p131 = por %p129, %p130
      %p132 = scmp.ne.s32.totalorder %s120, %s121
      %p133 = scmp.eq.s32.totalorder %s27, 1
      %p134 = por %p132, %p133
      %p136 = scmp.ne.s32.totalorder %s121, %s135
      %p137 = scmp.eq.s32.totalorder %s27, 0
      %p138 = por %p136, %p137
      %s140 = sadd.s32 %s139, 1
      %p143 = scmp.eq.s32.totalorder %s21, 1
      %p144 = scmp.ne.s32.totalorder %s139, %s141
      %p145 = scmp.eq.s32.totalorder %s21, 0
      %p146 = por %p144, %p145
      %p147 = scmp.ne.s32.totalorder %s139, %s141
      %p148 = scmp.eq.s32.totalorder %s26, 1
      %p149 = por %p147, %p148
      %p150 = scmp.ne.s32.totalorder %s141, %s142
      %p151 = scmp.eq.s32.totalorder %s26, 0
      %p152 = por %p150, %p151
      %p153 = scmp.ne.s32.totalorder %s141, %s142
      %p154 = scmp.eq.s32.totalorder %s27, 1
      %p155 = por %p153, %p154
      %p157 = scmp.ne.s32.totalorder %s142, %s156
      %p158 = scmp.eq.s32.totalorder %s27, 0
      %p159 = por %p157, %p158
      %s161 = sadd.s32 %s160, 1
      %p164 = scmp.eq.s32.totalorder %s21, 1
      %p165 = scmp.ne.s32.totalorder %s160, %s162
      %p166 = scmp.eq.s32.totalorder %s21, 0
      %p167 = por %p165, %p166
      %p168 = scmp.ne.s32.totalorder %s160, %s162
      %p169 = scmp.eq.s32.totalorder %s26, 1
      %p170 = por %p168, %p169
      %p171 = scmp.ne.s32.totalorder %s162, %s163
      %p172 = scmp.eq.s32.totalorder %s26, 0
      %p173 = por %p171, %p172
      %p174 = scmp.ne.s32.totalorder %s162, %s163
      %p175 = scmp.eq.s32.totalorder %s27, 1
      %p176 = por %p174, %p175
      %p178 = scmp.ne.s32.totalorder %s163, %s177
      %p179 = scmp.eq.s32.totalorder %s27, 0
      %p180 = por %p178, %p179
      %s181 = ssub.s32 %s21, %s28
      %p182 = scmp.eq.s32.totalorder %s181, 0
      %s184 = sadd.s32 %s183, 1
      %s185 = scalar_select %p182, %s183, %s184
      %p188 = pneg %p182
      %p189 = scmp.eq.s32.totalorder %s21, 1
      %p190 = por %p188, %p189
      %p191 = scmp.ne.s32.totalorder %s183, %s186
      %p192 = scmp.eq.s32.totalorder %s21, 0
      %p193 = por %p191, %p192
      %p194 = scmp.ne.s32.totalorder %s183, %s186
      %p195 = scmp.eq.s32.totalorder %s26, 1
      %p196 = por %p194, %p195
      %p197 = scmp.ne.s32.totalorder %s186, %s187
      %p198 = scmp.eq.s32.totalorder %s26, 0
      %p199 = por %p197, %p198
      %p200 = scmp.ne.s32.totalorder %s186, %s187
      %p201 = scmp.eq.s32.totalorder %s27, 1
      %p202 = por %p200, %p201
      %p204 = scmp.ne.s32.totalorder %s187, %s203
      %p205 = scmp.eq.s32.totalorder %s27, 0
      %p206 = por %p204, %p205
      %p207 = scmp.le.s32.totalorder 1, %s21
      %p208 = scmp.lt.s32.totalorder %s21, 3
      %p209 = pnand %p207, %p208
      %p210 = pneg %p209
      // Predicated region
      $region9: #{tpu_custom_call.1} parent=5 // pred_check
        _
      $region10: #{tpu_custom_call.1} parent=5 // pred_check_branch
        %212 = sbr.rel (%p209) target = $region12
      $region11: #{tpu_custom_call.1} parent=5 // pred_region
        %s213 = ssub.s32 %s21, 1
        // Predicated region
        $region13: #{tpu_custom_call.1} parent=11 // pred_check
          %p214 = pneg %p68
        $region14: #{tpu_custom_call.1} parent=11 // pred_check_branch
          %216 = sbr.rel (%p214) target = $region16
        $region15: #{tpu_custom_call.1} parent=11 // pred_region
          %218 = vsyncadd [#allocation8], 0
          %s219 = sshll.u32 %s1, 4
          %s220 = int_to_ptr.hbm [resolvable:$true] %s219
          %s221 = sshll.u32 [#allocation7], 4
          %s222 = int_to_ptr.vmem [resolvable:$true] %s221
          %227 = dma.hbm_to_vmem [thread:$0]  %s220, 6144, %s222, [#allocation8], 192, 192, 12
        $region16: #{tpu_custom_call.1} parent=11 // pred_fallthru
          _
        // Predicated region
        $region17: #{tpu_custom_call.1} parent=11 // pred_check
          %p228 = pneg %p89
        $region18: #{tpu_custom_call.1} parent=11 // pred_check_branch
          %230 = sbr.rel (%p228) target = $region20
        $region19: #{tpu_custom_call.1} parent=11 // pred_region
          %232 = vsyncadd [#allocation8], 0
          %s233 = sshll.u32 %s2, 4
          %s234 = int_to_ptr.hbm [resolvable:$true] %s233
          %s235 = sshll.u32 [#allocation9], 4
          %s236 = int_to_ptr.vmem [resolvable:$true] %s235
          %241 = dma.hbm_to_vmem [thread:$0]  %s234, 3072, %s236, [#allocation8], 192, 192, 12
        $region20: #{tpu_custom_call.1} parent=11 // pred_fallthru
          _
        // Predicated region
        $region21: #{tpu_custom_call.1} parent=11 // pred_check
          %p242 = pneg %p110
        $region22: #{tpu_custom_call.1} parent=11 // pred_check_branch
          %244 = sbr.rel (%p242) target = $region24
        $region23: #{tpu_custom_call.1} parent=11 // pred_region
          %246 = vsyncadd [#allocation11], 0
          %s248 = sshll.u32 %s3, 4
          %s249 = int_to_ptr.hbm [resolvable:$true] %s248
          %s250 = sshll.u32 [#allocation10], 4
          %s251 = int_to_ptr.vmem [resolvable:$true] %s250
          %253 = dma.hbm_to_vmem [thread:$0]  %s249, 48, %s251, [#allocation11]
        $region24: #{tpu_custom_call.1} parent=11 // pred_fallthru
          _
        // Predicated region
        $region25: #{tpu_custom_call.1} parent=11 // pred_check
          %p254 = pneg %p131
        $region26: #{tpu_custom_call.1} parent=11 // pred_check_branch
          %256 = sbr.rel (%p254) target = $region28
        $region27: #{tpu_custom_call.1} parent=11 // pred_region
          _
        $region28: #{tpu_custom_call.1} parent=11 // pred_fallthru
          _
        // Predicated region
        $region29: #{tpu_custom_call.1} parent=11 // pred_check
          %p257 = pneg %p152
        $region30: #{tpu_custom_call.1} parent=11 // pred_check_branch
          %259 = sbr.rel (%p257) target = $region32
        $region31: #{tpu_custom_call.1} parent=11 // pred_region
          %261 = vsyncadd [#allocation11], 0
          %s262 = sshll.u32 %s5, 4
          %s263 = int_to_ptr.hbm [resolvable:$true] %s262
          %s264 = sshll.u32 [#allocation12], 4
          %s265 = int_to_ptr.vmem [resolvable:$true] %s264
          %270 = dma.hbm_to_vmem [thread:$0]  %s263, 2048, %s265, [#allocation11], 128, 128, 8
        $region32: #{tpu_custom_call.1} parent=11 // pred_fallthru
          _
        // Predicated region
        $region33: #{tpu_custom_call.1} parent=11 // pred_check
          %p271 = pneg %p173
        $region34: #{tpu_custom_call.1} parent=11 // pred_check_branch
          %273 = sbr.rel (%p271) target = $region36
        $region35: #{tpu_custom_call.1} parent=11 // pred_region
          _
        $region36: #{tpu_custom_call.1} parent=11 // pred_fallthru
          _
      $region12: #{tpu_custom_call.1} parent=5 // pred_fallthru
        _
      %p274 = scmp.lt.s32.totalorder %s21, 2
      // Predicated region
      $region37: #{tpu_custom_call.1} parent=5 // pred_check
        %p275 = pneg %p274
      $region38: #{tpu_custom_call.1} parent=5 // pred_check_branch
        %277 = sbr.rel (%p275) target = $region40
      $region39: #{tpu_custom_call.1} parent=5 // pred_region
        // Predicated region
        $region41: #{tpu_custom_call.1} parent=39 // pred_check
          %p278 = pneg %p41
        $region42: #{tpu_custom_call.1} parent=39 // pred_check_branch
          %280 = sbr.rel (%p278) target = $region44
        $region43: #{tpu_custom_call.1} parent=39 // pred_region
          #allocation15 [shape = 'u32[6]{0}', space=smem, size = 0x18, scoped, tag = 'DMA stride descriptor']
          %s281 = sand.u32 %s31, 1
          %s282 = scalar_lea.sflag [#allocation5], %s281
          %s283 = sand.u32 %s31, 1
          %s284 = smul.addr %s283, 256
          %s285 = scalar_lea.vmem [#allocation4], %s284
          %s286 = smul.u32 2, %s21
          %288 = vsyncadd %s282, 0
          %s289 = smul.addr %s286, 2
          %s290 = smul.addr %s289, 8
          %s291 = scalar_lea.hbm %s0, %s290
          %s293 = sshll.u32 1, 14
          %s294 = sxor.u32 4294967295, %s293
          %s296 = sld [smem:[#allocation0]]
          %s297 = sadd.s32 2, %s296
          %s299 = sshll.u32 7, 26
          %s300 = sxor.u32 4294967295, %s299
          %s301 = sand.u32 0, %s300
          %s302 = sshll.u32 %s297, 26
          %s303 = sor.u32 %s301, %s302
          %s304 = sshll.u32 %s291, 4
          %s305 = int_to_ptr.hbm [resolvable:$true] %s304
          %s306 = sshll.u32 %s285, 4
          %s307 = int_to_ptr.vmem [resolvable:$true] %s306
          %313 = sst [smem:[#allocation15]] 1024
          %s314 = scalar_lea.smem [#allocation15], 1
          %315 = sst [smem:[%s314]] 512
          %s316 = scalar_lea.smem [#allocation15], 2
          %317 = sst [smem:[%s316]] 2
          %s318 = scalar_lea.smem [#allocation15], 3
          %319 = sst [smem:[%s318]] 256
          %s320 = scalar_lea.smem [#allocation15], 4
          %321 = sst [smem:[%s320]] 256
          %s322 = scalar_lea.smem [#allocation15], 5
          %323 = sst [smem:[%s322]] 16
          %325 = dma.general %s305, 4096, %s307, %s282, [#allocation14], [#allocation15], %s303, 0
        $region44: #{tpu_custom_call.1} parent=39 // pred_fallthru
          _
      $region40: #{tpu_custom_call.1} parent=5 // pred_fallthru
        _
      %p326 = scmp.le.s32.totalorder 1, %s21
      %p327 = scmp.lt.s32.totalorder %s21, 3
      %p328 = pnand %p326, %p327
      %p329 = pneg %p328
      // Predicated region
      $region45: #{tpu_custom_call.1} parent=5 // pred_check
        _
      $region46: #{tpu_custom_call.1} parent=5 // pred_check_branch
        %331 = sbr.rel (%p328) target = $region48
      $region47: #{tpu_custom_call.1} parent=5 // pred_region
        %s332 = ssub.s32 %s21, 1
        %s333 = sand.u32 %s34, 1
        %s334 = scalar_lea.sflag [#allocation5], %s333
        %s335 = sand.u32 %s34, 1
        %s336 = smul.addr %s335, 256
        %s337 = scalar_lea.vmem [#allocation4], %s336
        // Predicated region
        $region49: #{tpu_custom_call.1} parent=47 // pred_check
          %p338 = pneg %p47
        $region50: #{tpu_custom_call.1} parent=47 // pred_check_branch
          %340 = sbr.rel (%p338) target = $region52
        $region51: #{tpu_custom_call.1} parent=47 // pred_region
          %342 = dma.done %s334, 4096
        $region52: #{tpu_custom_call.1} parent=47 // pred_fallthru
          _
        // Predicated region
        $region53: #{tpu_custom_call.1} parent=47 // pred_check
          %p343 = pneg %p68
        $region54: #{tpu_custom_call.1} parent=47 // pred_check_branch
          %345 = sbr.rel (%p343) target = $region56
        $region55: #{tpu_custom_call.1} parent=47 // pred_region
          %347 = dma.done [#allocation8], 6144
        $region56: #{tpu_custom_call.1} parent=47 // pred_fallthru
          _
        // Predicated region
        $region57: #{tpu_custom_call.1} parent=47 // pred_check
          %p348 = pneg %p89
        $region58: #{tpu_custom_call.1} parent=47 // pred_check_branch
          %350 = sbr.rel (%p348) target = $region60
        $region59: #{tpu_custom_call.1} parent=47 // pred_region
          %352 = dma.done [#allocation8], 3072
        $region60: #{tpu_custom_call.1} parent=47 // pred_fallthru
          _
        // Predicated region
        $region61: #{tpu_custom_call.1} parent=47 // pred_check
          %p353 = pneg %p110
        $region62: #{tpu_custom_call.1} parent=47 // pred_check_branch
          %355 = sbr.rel (%p353) target = $region64
        $region63: #{tpu_custom_call.1} parent=47 // pred_region
          %357 = dma.done [#allocation11], 48
        $region64: #{tpu_custom_call.1} parent=47 // pred_fallthru
          _
        // Predicated region
        $region65: #{tpu_custom_call.1} parent=47 // pred_check
          %p358 = pneg %p152
        $region66: #{tpu_custom_call.1} parent=47 // pred_check_branch
          %360 = sbr.rel (%p358) target = $region68
        $region67: #{tpu_custom_call.1} parent=47 // pred_region
          %362 = dma.done [#allocation11], 2048
        $region68: #{tpu_custom_call.1} parent=47 // pred_fallthru
          _
        %s363 = sand.u32 %s34, 1
        %s364 = scalar_lea.sflag [#allocation5], %s363
        %s365 = sand.u32 %s34, 1
        %s366 = smul.addr %s365, 256
        %s367 = scalar_lea.vmem [#allocation4], %s366
        %p368 = pneg %p47
        %p369 = pneg %p44
        %p370 = pneg %p68
        %p371 = pneg %p65
        %p372 = pneg %p89
        %p373 = pneg %p86
        %p374 = pneg %p110
        %p375 = pneg %p107
        %p376 = pneg %p131
        %p377 = pneg %p128
        %p378 = pneg %p152
        %p379 = pneg %p149
        %p380 = pneg %p173
        %p381 = pneg %p170
        %p382 = pneg %p199
        %p383 = pneg %p196
        %s384 = sand.u32 %s186, 1
        %s385 = scalar_lea.sflag [#allocation6], %s384
        %s386 = sand.u32 %s186, 1
        %s387 = smul.addr %s386, 256
        %s388 = scalar_lea.vmem [#allocation13], %s387
        %s389 = smul.u32 2, %s26
        %s390 = smul.u32 2, %s26
        %v392 = vld [vmem:[%s337] sm:$0xff]
        %v393 = vld [vmem:[%s337 + $0x8] sm:$0xff]
        %v394 = vld [vmem:[%s337 + $0x10] sm:$0xff]
        %v395 = vld [vmem:[%s337 + $0x18] sm:$0xff]
        %v396 = vld [vmem:[%s337 + $0x20] sm:$0xff]
        %v397 = vld [vmem:[%s337 + $0x28] sm:$0xff]
        %v398 = vld [vmem:[%s337 + $0x30] sm:$0xff]
        %v399 = vld [vmem:[%s337 + $0x38] sm:$0xff]
        %v400 = vld [vmem:[%s337 + $0x40] sm:$0xff]
        %v401 = vld [vmem:[%s337 + $0x48] sm:$0xff]
        %v402 = vld [vmem:[%s337 + $0x50] sm:$0xff]
        %v403 = vld [vmem:[%s337 + $0x58] sm:$0xff]
        %v404 = vld [vmem:[%s337 + $0x60] sm:$0xff]
        %v405 = vld [vmem:[%s337 + $0x68] sm:$0xff]
        %v406 = vld [vmem:[%s337 + $0x70] sm:$0xff]
        %v407 = vld [vmem:[%s337 + $0x78] sm:$0xff]
        %v408 = vld [vmem:[%s337 + $0x80] sm:$0xff]
        %v409 = vld [vmem:[%s337 + $0x88] sm:$0xff]
        %v410 = vld [vmem:[%s337 + $0x90] sm:$0xff]
        %v411 = vld [vmem:[%s337 + $0x98] sm:$0xff]
        %v412 = vld [vmem:[%s337 + $0xa0] sm:$0xff]
        %v413 = vld [vmem:[%s337 + $0xa8] sm:$0xff]
        %v414 = vld [vmem:[%s337 + $0xb0] sm:$0xff]
        %v415 = vld [vmem:[%s337 + $0xb8] sm:$0xff]
        %v416 = vld [vmem:[%s337 + $0xc0] sm:$0xff]
        %v417 = vld [vmem:[%s337 + $0xc8] sm:$0xff]
        %v418 = vld [vmem:[%s337 + $0xd0] sm:$0xff]
        %v419 = vld [vmem:[%s337 + $0xd8] sm:$0xff]
        %v420 = vld [vmem:[%s337 + $0xe0] sm:$0xff]
        %v421 = vld [vmem:[%s337 + $0xe8] sm:$0xff]
        %v422 = vld [vmem:[%s337 + $0xf0] sm:$0xff]
        %v423 = vld [vmem:[%s337 + $0xf8] sm:$0xff]
        %v424 = vpack.c.bf16 %v394, %v392
        %v425 = vpack.c.bf16 %v395, %v393
        %v426 = vpack.c.bf16 %v398, %v396
        %v427 = vpack.c.bf16 %v399, %v397
        %v428 = vpack.c.bf16 %v402, %v400
        %v429 = vpack.c.bf16 %v403, %v401
        %v430 = vpack.c.bf16 %v406, %v404
        %v431 = vpack.c.bf16 %v407, %v405
        %v432 = vpack.c.bf16 %v410, %v408
        %v433 = vpack.c.bf16 %v411, %v409
        %v434 = vpack.c.bf16 %v414, %v412
        %v435 = vpack.c.bf16 %v415, %v413
        %v436 = vpack.c.bf16 %v418, %v416
        %v437 = vpack.c.bf16 %v419, %v417
        %v438 = vpack.c.bf16 %v422, %v420
        %v439 = vpack.c.bf16 %v423, %v421
        %v440 = vld [vmem:[#allocation7] sm:$0xff]
        %v441 = vld [vmem:[#allocation7 + $0x8] sm:$0xf]
        %v442 = vld [vmem:[#allocation7 + $0xc] sm:$0xff]
        %v443 = vld [vmem:[#allocation7 + $0x14] sm:$0xf]
        %v444 = vld [vmem:[#allocation7 + $0x18] sm:$0xff]
        %v445 = vld [vmem:[#allocation7 + $0x20] sm:$0xf]
        %v446 = vld [vmem:[#allocation7 + $0x24] sm:$0xff]
        %v447 = vld [vmem:[#allocation7 + $0x2c] sm:$0xf]
        %v448 = vld [vmem:[#allocation7 + $0x30] sm:$0xff]
        %v449 = vld [vmem:[#allocation7 + $0x38] sm:$0xf]
        %v450 = vld [vmem:[#allocation7 + $0x3c] sm:$0xff]
        %v451 = vld [vmem:[#allocation7 + $0x44] sm:$0xf]
        %v452 = vld [vmem:[#allocation7 + $0x48] sm:$0xff]
        %v453 = vld [vmem:[#allocation7 + $0x50] sm:$0xf]
        %v454 = vld [vmem:[#allocation7 + $0x54] sm:$0xff]
        %v455 = vld [vmem:[#allocation7 + $0x5c] sm:$0xf]
        %v456 = vld [vmem:[#allocation7 + $0x60] sm:$0xff]
        %v457 = vld [vmem:[#allocation7 + $0x68] sm:$0xf]
        %v458 = vld [vmem:[#allocation7 + $0x6c] sm:$0xff]
        %v459 = vld [vmem:[#allocation7 + $0x74] sm:$0xf]
        %v460 = vld [vmem:[#allocation7 + $0x78] sm:$0xff]
        %v461 = vld [vmem:[#allocation7 + $0x80] sm:$0xf]
        %v462 = vld [vmem:[#allocation7 + $0x84] sm:$0xff]
        %v463 = vld [vmem:[#allocation7 + $0x8c] sm:$0xf]
        %v464 = vld [vmem:[#allocation7 + $0x90] sm:$0xff]
        %v465 = vld [vmem:[#allocation7 + $0x98] sm:$0xf]
        %v466 = vld [vmem:[#allocation7 + $0x9c] sm:$0xff]
        %v467 = vld [vmem:[#allocation7 + $0xa4] sm:$0xf]
        %v468 = vld [vmem:[#allocation7 + $0xa8] sm:$0xff]
        %v469 = vld [vmem:[#allocation7 + $0xb0] sm:$0xf]
        %v470 = vld [vmem:[#allocation7 + $0xb4] sm:$0xff]
        %v471 = vld [vmem:[#allocation7 + $0xbc] sm:$0xf]
        %v472 = vld [vmem:[#allocation7 + $0xc0] sm:$0xff]
        %v473 = vld [vmem:[#allocation7 + $0xc8] sm:$0xf]
        %v474 = vld [vmem:[#allocation7 + $0xcc] sm:$0xff]
        %v475 = vld [vmem:[#allocation7 + $0xd4] sm:$0xf]
        %v476 = vld [vmem:[#allocation7 + $0xd8] sm:$0xff]
        %v477 = vld [vmem:[#allocation7 + $0xe0] sm:$0xf]
        %v478 = vld [vmem:[#allocation7 + $0xe4] sm:$0xff]
        %v479 = vld [vmem:[#allocation7 + $0xec] sm:$0xf]
        %v480 = vld [vmem:[#allocation7 + $0xf0] sm:$0xff]
        %v481 = vld [vmem:[#allocation7 + $0xf8] sm:$0xf]
        %v482 = vld [vmem:[#allocation7 + $0xfc] sm:$0xff]
        %v483 = vld [vmem:[#allocation7 + $0x104] sm:$0xf]
        %v484 = vld [vmem:[#allocation7 + $0x108] sm:$0xff]
        %v485 = vld [vmem:[#allocation7 + $0x110] sm:$0xf]
        %v486 = vld [vmem:[#allocation7 + $0x114] sm:$0xff]
        %v487 = vld [vmem:[#allocation7 + $0x11c] sm:$0xf]
        %v488 = vld [vmem:[#allocation7 + $0x120] sm:$0xff]
        %v489 = vld [vmem:[#allocation7 + $0x128] sm:$0xf]
        %v490 = vld [vmem:[#allocation7 + $0x12c] sm:$0xff]
        %v491 = vld [vmem:[#allocation7 + $0x134] sm:$0xf]
        %v492 = vld [vmem:[#allocation7 + $0x138] sm:$0xff]
        %v493 = vld [vmem:[#allocation7 + $0x140] sm:$0xf]
        %v494 = vld [vmem:[#allocation7 + $0x144] sm:$0xff]
        %v495 = vld [vmem:[#allocation7 + $0x14c] sm:$0xf]
        %v496 = vld [vmem:[#allocation7 + $0x150] sm:$0xff]
        %v497 = vld [vmem:[#allocation7 + $0x158] sm:$0xf]
        %v498 = vld [vmem:[#allocation7 + $0x15c] sm:$0xff]
        %v499 = vld [vmem:[#allocation7 + $0x164] sm:$0xf]
        %v500 = vld [vmem:[#allocation7 + $0x168] sm:$0xff]
        %v501 = vld [vmem:[#allocation7 + $0x170] sm:$0xf]
        %v502 = vld [vmem:[#allocation7 + $0x174] sm:$0xff]
        %v503 = vld [vmem:[#allocation7 + $0x17c] sm:$0xf]
        %v504 = vld [vmem:[#allocation10] sm:$0x7]
        %v506 = vperm.slane %v504, 0
        %v507 = vperm.slane %v504, 1
        %v508 = vperm.slane %v504, 2
        %v576 = vunpack.c.l.b16 %v440
        %v577 = vunpack.c.h.b16 %v440
        %v578 = vunpack.c.l.b16 %v441
        %v579 = vunpack.c.l.b16 %v442
        %v580 = vunpack.c.h.b16 %v442
        %v581 = vunpack.c.l.b16 %v443
        %v582 = vunpack.c.l.b16 %v444
        %v583 = vunpack.c.h.b16 %v444
        %v584 = vunpack.c.l.b16 %v445
        %v585 = vunpack.c.l.b16 %v446
        %v586 = vunpack.c.h.b16 %v446
        %v587 = vunpack.c.l.b16 %v447
        %v588 = vunpack.c.l.b16 %v448
        %v589 = vunpack.c.h.b16 %v448
        %v590 = vunpack.c.l.b16 %v449
        %v591 = vunpack.c.l.b16 %v450
        %v592 = vunpack.c.h.b16 %v450
        %v593 = vunpack.c.l.b16 %v451
        %v594 = vunpack.c.l.b16 %v452
        %v595 = vunpack.c.h.b16 %v452
        %v596 = vunpack.c.l.b16 %v453
        %v597 = vunpack.c.l.b16 %v454
        %v598 = vunpack.c.h.b16 %v454
        %v599 = vunpack.c.l.b16 %v455
        %v600 = vunpack.c.l.b16 %v456
        %v601 = vunpack.c.h.b16 %v456
        %v602 = vunpack.c.l.b16 %v457
        %v603 = vunpack.c.l.b16 %v458
        %v604 = vunpack.c.h.b16 %v458
        %v605 = vunpack.c.l.b16 %v459
        %v606 = vunpack.c.l.b16 %v460
        %v607 = vunpack.c.h.b16 %v460
        %v608 = vunpack.c.l.b16 %v461
        %v609 = vunpack.c.l.b16 %v462
        %v610 = vunpack.c.h.b16 %v462
        %v611 = vunpack.c.l.b16 %v463
        %v612 = vunpack.c.l.b16 %v464
        %v613 = vunpack.c.h.b16 %v464
        %v614 = vunpack.c.l.b16 %v465
        %v615 = vunpack.c.l.b16 %v466
        %v616 = vunpack.c.h.b16 %v466
        %v617 = vunpack.c.l.b16 %v467
        %v618 = vunpack.c.l.b16 %v468
        %v619 = vunpack.c.h.b16 %v468
        %v620 = vunpack.c.l.b16 %v469
        %v621 = vunpack.c.l.b16 %v470
        %v622 = vunpack.c.h.b16 %v470
        %v623 = vunpack.c.l.b16 %v471
        %v624 = vunpack.c.l.b16 %v472
        %v625 = vunpack.c.h.b16 %v472
        %v626 = vunpack.c.l.b16 %v473
        %v627 = vunpack.c.l.b16 %v474
        %v628 = vunpack.c.h.b16 %v474
        %v629 = vunpack.c.l.b16 %v475
        %v630 = vunpack.c.l.b16 %v476
        %v631 = vunpack.c.h.b16 %v476
        %v632 = vunpack.c.l.b16 %v477
        %v633 = vunpack.c.l.b16 %v478
        %v634 = vunpack.c.h.b16 %v478
        %v635 = vunpack.c.l.b16 %v479
        %v636 = vunpack.c.l.b16 %v480
        %v637 = vunpack.c.h.b16 %v480
        %v638 = vunpack.c.l.b16 %v481
        %v639 = vunpack.c.l.b16 %v482
        %v640 = vunpack.c.h.b16 %v482
        %v641 = vunpack.c.l.b16 %v483
        %v642 = vunpack.c.l.b16 %v484
        %v643 = vunpack.c.h.b16 %v484
        %v644 = vunpack.c.l.b16 %v485
        %v645 = vunpack.c.l.b16 %v486
        %v646 = vunpack.c.h.b16 %v486
        %v647 = vunpack.c.l.b16 %v487
        %v648 = vunpack.c.l.b16 %v488
        %v649 = vunpack.c.h.b16 %v488
        %v650 = vunpack.c.l.b16 %v489
        %v651 = vunpack.c.l.b16 %v490
        %v652 = vunpack.c.h.b16 %v490
        %v653 = vunpack.c.l.b16 %v491
        %v654 = vunpack.c.l.b16 %v492
        %v655 = vunpack.c.h.b16 %v492
        %v656 = vunpack.c.l.b16 %v493
        %v657 = vunpack.c.l.b16 %v494
        %v658 = vunpack.c.h.b16 %v494
        %v659 = vunpack.c.l.b16 %v495
        %v660 = vunpack.c.l.b16 %v496
        %v661 = vunpack.c.h.b16 %v496
        %v662 = vunpack.c.l.b16 %v497
        %v663 = vunpack.c.l.b16 %v498
        %v664 = vunpack.c.h.b16 %v498
        %v665 = vunpack.c.l.b16 %v499
        %v666 = vunpack.c.l.b16 %v500
        %v667 = vunpack.c.h.b16 %v500
        %v668 = vunpack.c.l.b16 %v501
        %v669 = vunpack.c.l.b16 %v502
        %v670 = vunpack.c.h.b16 %v502
        %v671 = vunpack.c.l.b16 %v503
        %v672 = vpack.c.b16 %v579, %v576
        %v673 = vpack.c.b16 %v580, %v577
        %v674 = vpack.c.b16 %v581, %v578
        %v675 = vpack.c.b16 %v585, %v582
        %v676 = vpack.c.b16 %v586, %v583
        %v677 = vpack.c.b16 %v587, %v584
        %v678 = vpack.c.b16 %v591, %v588
        %v679 = vpack.c.b16 %v592, %v589
        %v680 = vpack.c.b16 %v593, %v590
        %v681 = vpack.c.b16 %v597, %v594
        %v682 = vpack.c.b16 %v598, %v595
        %v683 = vpack.c.b16 %v599, %v596
        %v684 = vpack.c.b16 %v603, %v600
        %v685 = vpack.c.b16 %v604, %v601
        %v686 = vpack.c.b16 %v605, %v602
        %v687 = vpack.c.b16 %v609, %v606
        %v688 = vpack.c.b16 %v610, %v607
        %v689 = vpack.c.b16 %v611, %v608
        %v690 = vpack.c.b16 %v615, %v612
        %v691 = vpack.c.b16 %v616, %v613
        %v692 = vpack.c.b16 %v617, %v614
        %v693 = vpack.c.b16 %v621, %v618
        %v694 = vpack.c.b16 %v622, %v619
        %v695 = vpack.c.b16 %v623, %v620
        %v696 = vpack.c.b16 %v627, %v624
        %v697 = vpack.c.b16 %v628, %v625
        %v698 = vpack.c.b16 %v629, %v626
        %v699 = vpack.c.b16 %v633, %v630
        %v700 = vpack.c.b16 %v634, %v631
        %v701 = vpack.c.b16 %v635, %v632
        %v702 = vpack.c.b16 %v639, %v636
        %v703 = vpack.c.b16 %v640, %v637
        %v704 = vpack.c.b16 %v641, %v638
        %v705 = vpack.c.b16 %v645, %v642
        %v706 = vpack.c.b16 %v646, %v643
        %v707 = vpack.c.b16 %v647, %v644
        %v708 = vpack.c.b16 %v651, %v648
        %v709 = vpack.c.b16 %v652, %v649
        %v710 = vpack.c.b16 %v653, %v650
        %v711 = vpack.c.b16 %v657, %v654
        %v712 = vpack.c.b16 %v658, %v655
        %v713 = vpack.c.b16 %v659, %v656
        %v714 = vpack.c.b16 %v663, %v660
        %v715 = vpack.c.b16 %v664, %v661
        %v716 = vpack.c.b16 %v665, %v662
        %v717 = vpack.c.b16 %v669, %v666
        %v718 = vpack.c.b16 %v670, %v667
        %v719 = vpack.c.b16 %v671, %v668
        %768 = vmatpush.bf16.msra.mxu0 %v693
        %769 = vmatpush.bf16.msra.mxu0 %v690
        %770 = vmatpush.bf16.msra.mxu0 %v687
        %771 = vmatpush.bf16.msra.mxu0 %v684
        %772 = vmatpush.bf16.msra.mxu0 %v681
        %773 = vmatpush.bf16.msra.mxu0 %v678
        %774 = vmatpush.bf16.msra.mxu0 %v675
        %775 = vmatpush.bf16.msra.mxu0 %v672
        %776 = vmatmul.bf16.gmra.mxu0 %v424
        %v777 = vpop.f32.mrf.mxu0
        %v778 = vadd.f32 %v506, %v777
        %v779 = vpop.f32.mrf.mxu0
        %v780 = vadd.f32 %v506, %v779
        %781 = vmatmul.bf16.gmra.mxu0 %v426
        %v782 = vpop.f32.mrf.mxu0
        %v783 = vadd.f32 %v506, %v782
        %v784 = vpop.f32.mrf.mxu0
        %v785 = vadd.f32 %v506, %v784
        %786 = vmatmul.bf16.gmra.mxu0 %v428
        %v787 = vpop.f32.mrf.mxu0
        %v788 = vadd.f32 %v506, %v787
        %v789 = vpop.f32.mrf.mxu0
        %v790 = vadd.f32 %v506, %v789
        %791 = vmatmul.bf16.gmra.mxu0 %v430
        %v792 = vpop.f32.mrf.mxu0
        %v793 = vadd.f32 %v506, %v792
        %v794 = vpop.f32.mrf.mxu0
        %v795 = vadd.f32 %v506, %v794
        %796 = vmatmul.bf16.gmra.mxu0 %v432
        %v797 = vpop.f32.mrf.mxu0
        %v798 = vadd.f32 %v506, %v797
        %v799 = vpop.f32.mrf.mxu0
        %v800 = vadd.f32 %v506, %v799
        %801 = vmatmul.bf16.gmra.mxu0 %v434
        %v802 = vpop.f32.mrf.mxu0
        %v803 = vadd.f32 %v506, %v802
        %v804 = vpop.f32.mrf.mxu0
        %v805 = vadd.f32 %v506, %v804
        %806 = vmatmul.bf16.gmra.mxu0 %v436
        %v807 = vpop.f32.mrf.mxu0
        %v808 = vadd.f32 %v506, %v807
        %v809 = vpop.f32.mrf.mxu0
        %v810 = vadd.f32 %v506, %v809
        %811 = vmatmul.bf16.gmra.mxu0 %v438
        %v812 = vpop.f32.mrf.mxu0
        %v813 = vadd.f32 %v506, %v812
        %v814 = vpop.f32.mrf.mxu0
        %v815 = vadd.f32 %v506, %v814
        %816 = vdwg.mxu0
        %817 = vmatpush.bf16.msra.mxu0 %v717
        %818 = vmatpush.bf16.msra.mxu0 %v714
        %819 = vmatpush.bf16.msra.mxu0 %v711
        %820 = vmatpush.bf16.msra.mxu0 %v708
        %821 = vmatpush.bf16.msra.mxu0 %v705
        %822 = vmatpush.bf16.msra.mxu0 %v702
        %823 = vmatpush.bf16.msra.mxu0 %v699
        %824 = vmatpush.bf16.msra.mxu0 %v696
        %825 = vmatmul.bf16.gmra.mxu0 %v425
        %v826 = vpop.f32.mrf.mxu0
        %v827 = vadd.f32 %v778, %v826
        %v828 = vpop.f32.mrf.mxu0
        %v829 = vadd.f32 %v780, %v828
        %830 = vmatmul.bf16.gmra.mxu0 %v427
        %v831 = vpop.f32.mrf.mxu0
        %v832 = vadd.f32 %v783, %v831
        %v833 = vpop.f32.mrf.mxu0
        %v834 = vadd.f32 %v785, %v833
        %835 = vmatmul.bf16.gmra.mxu0 %v429
        %v836 = vpop.f32.mrf.mxu0
        %v837 = vadd.f32 %v788, %v836
        %v838 = vpop.f32.mrf.mxu0
        %v839 = vadd.f32 %v790, %v838
        %840 = vmatmul.bf16.gmra.mxu0 %v431
        %v841 = vpop.f32.mrf.mxu0
        %v842 = vadd.f32 %v793, %v841
        %v843 = vpop.f32.mrf.mxu0
        %v844 = vadd.f32 %v795, %v843
        %845 = vmatmul.bf16.gmra.mxu0 %v433
        %v846 = vpop.f32.mrf.mxu0
        %v847 = vadd.f32 %v798, %v846
        %v848 = vpop.f32.mrf.mxu0
        %v849 = vadd.f32 %v800, %v848
        %850 = vmatmul.bf16.gmra.mxu0 %v435
        %v851 = vpop.f32.mrf.mxu0
        %v852 = vadd.f32 %v803, %v851
        %v853 = vpop.f32.mrf.mxu0
        %v854 = vadd.f32 %v805, %v853
        %855 = vmatmul.bf16.gmra.mxu0 %v437
        %v856 = vpop.f32.mrf.mxu0
        %v857 = vadd.f32 %v808, %v856
        %v858 = vpop.f32.mrf.mxu0
        %v859 = vadd.f32 %v810, %v858
        %860 = vmatmul.bf16.gmra.mxu0 %v439
        %v861 = vpop.f32.mrf.mxu0
        %v862 = vadd.f32 %v813, %v861
        %v863 = vpop.f32.mrf.mxu0
        %v864 = vadd.f32 %v815, %v863
        %865 = vdwg.mxu0
        %866 = vmatpush.bf16.msra.mxu0 %v694
        %867 = vmatpush.bf16.msra.mxu0 %v691
        %868 = vmatpush.bf16.msra.mxu0 %v688
        %869 = vmatpush.bf16.msra.mxu0 %v685
        %870 = vmatpush.bf16.msra.mxu0 %v682
        %871 = vmatpush.bf16.msra.mxu0 %v679
        %872 = vmatpush.bf16.msra.mxu0 %v676
        %873 = vmatpush.bf16.msra.mxu0 %v673
        %874 = vmatmul.bf16.gmra.mxu0 %v424
        %v875 = vpop.f32.mrf.mxu0
        %v876 = vadd.f32 %v507, %v875
        %v877 = vpop.f32.mrf.mxu0
        %v878 = vadd.f32 %v507, %v877
        %879 = vmatmul.bf16.gmra.mxu0 %v426
        %v880 = vpop.f32.mrf.mxu0
        %v881 = vadd.f32 %v507, %v880
        %v882 = vpop.f32.mrf.mxu0
        %v883 = vadd.f32 %v507, %v882
        %884 = vmatmul.bf16.gmra.mxu0 %v428
        %v885 = vpop.f32.mrf.mxu0
        %v886 = vadd.f32 %v507, %v885
        %v887 = vpop.f32.mrf.mxu0
        %v888 = vadd.f32 %v507, %v887
        %889 = vmatmul.bf16.gmra.mxu0 %v430
        %v890 = vpop.f32.mrf.mxu0
        %v891 = vadd.f32 %v507, %v890
        %v892 = vpop.f32.mrf.mxu0
        %v893 = vadd.f32 %v507, %v892
        %894 = vmatmul.bf16.gmra.mxu0 %v432
        %v895 = vpop.f32.mrf.mxu0
        %v896 = vadd.f32 %v507, %v895
        %v897 = vpop.f32.mrf.mxu0
        %v898 = vadd.f32 %v507, %v897
        %899 = vmatmul.bf16.gmra.mxu0 %v434
        %v900 = vpop.f32.mrf.mxu0
        %v901 = vadd.f32 %v507, %v900
        %v902 = vpop.f32.mrf.mxu0
        %v903 = vadd.f32 %v507, %v902
        %904 = vmatmul.bf16.gmra.mxu0 %v436
        %v905 = vpop.f32.mrf.mxu0
        %v906 = vadd.f32 %v507, %v905
        %v907 = vpop.f32.mrf.mxu0
        %v908 = vadd.f32 %v507, %v907
        %909 = vmatmul.bf16.gmra.mxu0 %v438
        %v910 = vpop.f32.mrf.mxu0
        %v911 = vadd.f32 %v507, %v910
        %v912 = vpop.f32.mrf.mxu0
        %v913 = vadd.f32 %v507, %v912
        %914 = vdwg.mxu0
        %915 = vmatpush.bf16.msra.mxu0 %v718
        %916 = vmatpush.bf16.msra.mxu0 %v715
        %917 = vmatpush.bf16.msra.mxu0 %v712
        %918 = vmatpush.bf16.msra.mxu0 %v709
        %919 = vmatpush.bf16.msra.mxu0 %v706
        %920 = vmatpush.bf16.msra.mxu0 %v703
        %921 = vmatpush.bf16.msra.mxu0 %v700
        %922 = vmatpush.bf16.msra.mxu0 %v697
        %923 = vmatmul.bf16.gmra.mxu0 %v425
        %v924 = vpop.f32.mrf.mxu0
        %v925 = vadd.f32 %v876, %v924
        %v926 = vpop.f32.mrf.mxu0
        %v927 = vadd.f32 %v878, %v926
        %928 = vmatmul.bf16.gmra.mxu0 %v427
        %v929 = vpop.f32.mrf.mxu0
        %v930 = vadd.f32 %v881, %v929
        %v931 = vpop.f32.mrf.mxu0
        %v932 = vadd.f32 %v883, %v931
        %933 = vmatmul.bf16.gmra.mxu0 %v429
        %v934 = vpop.f32.mrf.mxu0
        %v935 = vadd.f32 %v886, %v934
        %v936 = vpop.f32.mrf.mxu0
        %v937 = vadd.f32 %v888, %v936
        %938 = vmatmul.bf16.gmra.mxu0 %v431
        %v939 = vpop.f32.mrf.mxu0
        %v940 = vadd.f32 %v891, %v939
        %v941 = vpop.f32.mrf.mxu0
        %v942 = vadd.f32 %v893, %v941
        %943 = vmatmul.bf16.gmra.mxu0 %v433
        %v944 = vpop.f32.mrf.mxu0
        %v945 = vadd.f32 %v896, %v944
        %v946 = vpop.f32.mrf.mxu0
        %v947 = vadd.f32 %v898, %v946
        %948 = vmatmul.bf16.gmra.mxu0 %v435
        %v949 = vpop.f32.mrf.mxu0
        %v950 = vadd.f32 %v901, %v949
        %v951 = vpop.f32.mrf.mxu0
        %v952 = vadd.f32 %v903, %v951
        %953 = vmatmul.bf16.gmra.mxu0 %v437
        %v954 = vpop.f32.mrf.mxu0
        %v955 = vadd.f32 %v906, %v954
        %v956 = vpop.f32.mrf.mxu0
        %v957 = vadd.f32 %v908, %v956
        %958 = vmatmul.bf16.gmra.mxu0 %v439
        %v959 = vpop.f32.mrf.mxu0
        %v960 = vadd.f32 %v911, %v959
        %v961 = vpop.f32.mrf.mxu0
        %v962 = vadd.f32 %v913, %v961
        %963 = vdwg.mxu0
        %964 = vmatpush.bf16.msra.mxu0 %v695
        %965 = vmatpush.bf16.msra.mxu0 %v692
        %966 = vmatpush.bf16.msra.mxu0 %v689
        %967 = vmatpush.bf16.msra.mxu0 %v686
        %968 = vmatpush.bf16.msra.mxu0 %v683
        %969 = vmatpush.bf16.msra.mxu0 %v680
        %970 = vmatpush.bf16.msra.mxu0 %v677
        %971 = vmatpush.bf16.msra.mxu0 %v674
        %972 = vmatmul.bf16.gmra.mxu0 %v424
        %v973 = vpop.f32.mrf.mxu0
        %v974 = vadd.f32 %v508, %v973
        %v975 = vpop.f32.mrf.mxu0
        %v976 = vadd.f32 %v508, %v975
        %977 = vmatmul.bf16.gmra.mxu0 %v426
        %v978 = vpop.f32.mrf.mxu0
        %v979 = vadd.f32 %v508, %v978
        %v980 = vpop.f32.mrf.mxu0
        %v981 = vadd.f32 %v508, %v980
        %982 = vmatmul.bf16.gmra.mxu0 %v428
        %v983 = vpop.f32.mrf.mxu0
        %v984 = vadd.f32 %v508, %v983
        %v985 = vpop.f32.mrf.mxu0
        %v986 = vadd.f32 %v508, %v985
        %987 = vmatmul.bf16.gmra.mxu0 %v430
        %v988 = vpop.f32.mrf.mxu0
        %v989 = vadd.f32 %v508, %v988
        %v990 = vpop.f32.mrf.mxu0
        %v991 = vadd.f32 %v508, %v990
        %992 = vmatmul.bf16.gmra.mxu0 %v432
        %v993 = vpop.f32.mrf.mxu0
        %v994 = vadd.f32 %v508, %v993
        %v995 = vpop.f32.mrf.mxu0
        %v996 = vadd.f32 %v508, %v995
        %997 = vmatmul.bf16.gmra.mxu0 %v434
        %v998 = vpop.f32.mrf.mxu0
        %v999 = vadd.f32 %v508, %v998
        %v1000 = vpop.f32.mrf.mxu0
        %v1001 = vadd.f32 %v508, %v1000
        %1002 = vmatmul.bf16.gmra.mxu0 %v436
        %v1003 = vpop.f32.mrf.mxu0
        %v1004 = vadd.f32 %v508, %v1003
        %v1005 = vpop.f32.mrf.mxu0
        %v1006 = vadd.f32 %v508, %v1005
        %1007 = vmatmul.bf16.gmra.mxu0 %v438
        %v1008 = vpop.f32.mrf.mxu0
        %v1009 = vadd.f32 %v508, %v1008
        %v1010 = vpop.f32.mrf.mxu0
        %v1011 = vadd.f32 %v508, %v1010
        %1012 = vdwg.mxu0
        %1013 = vmatpush.bf16.msra.mxu0 %v719
        %1014 = vmatpush.bf16.msra.mxu0 %v716
        %1015 = vmatpush.bf16.msra.mxu0 %v713
        %1016 = vmatpush.bf16.msra.mxu0 %v710
        %1017 = vmatpush.bf16.msra.mxu0 %v707
        %1018 = vmatpush.bf16.msra.mxu0 %v704
        %1019 = vmatpush.bf16.msra.mxu0 %v701
        %1020 = vmatpush.bf16.msra.mxu0 %v698
        %1021 = vmatmul.bf16.gmra.mxu0 %v425
        %v1022 = vpop.f32.mrf.mxu0
        %v1023 = vadd.f32 %v974, %v1022
        %v1024 = vpop.f32.mrf.mxu0
        %v1025 = vadd.f32 %v976, %v1024
        %1026 = vmatmul.bf16.gmra.mxu0 %v427
        %v1027 = vpop.f32.mrf.mxu0
        %v1028 = vadd.f32 %v979, %v1027
        %v1029 = vpop.f32.mrf.mxu0
        %v1030 = vadd.f32 %v981, %v1029
        %1031 = vmatmul.bf16.gmra.mxu0 %v429
        %v1032 = vpop.f32.mrf.mxu0
        %v1033 = vadd.f32 %v984, %v1032
        %v1034 = vpop.f32.mrf.mxu0
        %v1035 = vadd.f32 %v986, %v1034
        %1036 = vmatmul.bf16.gmra.mxu0 %v431
        %v1037 = vpop.f32.mrf.mxu0
        %v1038 = vadd.f32 %v989, %v1037
        %v1039 = vpop.f32.mrf.mxu0
        %v1040 = vadd.f32 %v991, %v1039
        %1041 = vmatmul.bf16.gmra.mxu0 %v433
        %v1042 = vpop.f32.mrf.mxu0
        %v1043 = vadd.f32 %v994, %v1042
        %v1044 = vpop.f32.mrf.mxu0
        %v1045 = vadd.f32 %v996, %v1044
        %1046 = vmatmul.bf16.gmra.mxu0 %v435
        %v1047 = vpop.f32.mrf.mxu0
        %v1048 = vadd.f32 %v999, %v1047
        %v1049 = vpop.f32.mrf.mxu0
        %v1050 = vadd.f32 %v1001, %v1049
        %1051 = vmatmul.bf16.gmra.mxu0 %v437
        %v1052 = vpop.f32.mrf.mxu0
        %v1053 = vadd.f32 %v1004, %v1052
        %v1054 = vpop.f32.mrf.mxu0
        %v1055 = vadd.f32 %v1006, %v1054
        %1056 = vmatmul.bf16.gmra.mxu0 %v439
        %v1057 = vpop.f32.mrf.mxu0
        %v1058 = vadd.f32 %v1009, %v1057
        %v1059 = vpop.f32.mrf.mxu0
        %v1060 = vadd.f32 %v1011, %v1059
        %1061 = vdwg.mxu0
        %1062 = vst [vmem:[#allocation2] sm:$0xff] %v827
        %1063 = vst [vmem:[#allocation2 + $0x8] sm:$0xff] %v925
        %1064 = vst [vmem:[#allocation2 + $0x10] sm:$0xff] %v1023
        %1065 = vst [vmem:[#allocation2 + $0x18] sm:$0xff] %v829
        %1066 = vst [vmem:[#allocation2 + $0x20] sm:$0xff] %v927
        %1067 = vst [vmem:[#allocation2 + $0x28] sm:$0xff] %v1025
        %1068 = vst [vmem:[#allocation2 + $0x30] sm:$0xff] %v832
        %1069 = vst [vmem:[#allocation2 + $0x38] sm:$0xff] %v930
        %1070 = vst [vmem:[#allocation2 + $0x40] sm:$0xff] %v1028
        %1071 = vst [vmem:[#allocation2 + $0x48] sm:$0xff] %v834
        %1072 = vst [vmem:[#allocation2 + $0x50] sm:$0xff] %v932
        %1073 = vst [vmem:[#allocation2 + $0x58] sm:$0xff] %v1030
        %1074 = vst [vmem:[#allocation2 + $0x60] sm:$0xff] %v837
        %1075 = vst [vmem:[#allocation2 + $0x68] sm:$0xff] %v935
        %1076 = vst [vmem:[#allocation2 + $0x70] sm:$0xff] %v1033
        %1077 = vst [vmem:[#allocation2 + $0x78] sm:$0xff] %v839
        %1078 = vst [vmem:[#allocation2 + $0x80] sm:$0xff] %v937
        %1079 = vst [vmem:[#allocation2 + $0x88] sm:$0xff] %v1035
        %1080 = vst [vmem:[#allocation2 + $0x90] sm:$0xff] %v842
        %1081 = vst [vmem:[#allocation2 + $0x98] sm:$0xff] %v940
        %1082 = vst [vmem:[#allocation2 + $0xa0] sm:$0xff] %v1038
        %1083 = vst [vmem:[#allocation2 + $0xa8] sm:$0xff] %v844
        %1084 = vst [vmem:[#allocation2 + $0xb0] sm:$0xff] %v942
        %1085 = vst [vmem:[#allocation2 + $0xb8] sm:$0xff] %v1040
        %1086 = vst [vmem:[#allocation2 + $0xc0] sm:$0xff] %v847
        %1087 = vst [vmem:[#allocation2 + $0xc8] sm:$0xff] %v945
        %1088 = vst [vmem:[#allocation2 + $0xd0] sm:$0xff] %v1043
        %1089 = vst [vmem:[#allocation2 + $0xd8] sm:$0xff] %v849
        %1090 = vst [vmem:[#allocation2 + $0xe0] sm:$0xff] %v947
        %1091 = vst [vmem:[#allocation2 + $0xe8] sm:$0xff] %v1045
        %1092 = vst [vmem:[#allocation2 + $0xf0] sm:$0xff] %v852
        %1093 = vst [vmem:[#allocation2 + $0xf8] sm:$0xff] %v950
        %1094 = vst [vmem:[#allocation2 + $0x100] sm:$0xff] %v1048
        %1095 = vst [vmem:[#allocation2 + $0x108] sm:$0xff] %v854
        %1096 = vst [vmem:[#allocation2 + $0x110] sm:$0xff] %v952
        %1097 = vst [vmem:[#allocation2 + $0x118] sm:$0xff] %v1050
        %1098 = vst [vmem:[#allocation2 + $0x120] sm:$0xff] %v857
        %1099 = vst [vmem:[#allocation2 + $0x128] sm:$0xff] %v955
        %1100 = vst [vmem:[#allocation2 + $0x130] sm:$0xff] %v1053
        %1101 = vst [vmem:[#allocation2 + $0x138] sm:$0xff] %v859
        %1102 = vst [vmem:[#allocation2 + $0x140] sm:$0xff] %v957
        %1103 = vst [vmem:[#allocation2 + $0x148] sm:$0xff] %v1055
        %1104 = vst [vmem:[#allocation2 + $0x150] sm:$0xff] %v862
        %1105 = vst [vmem:[#allocation2 + $0x158] sm:$0xff] %v960
        %1106 = vst [vmem:[#allocation2 + $0x160] sm:$0xff] %v1058
        %1107 = vst [vmem:[#allocation2 + $0x168] sm:$0xff] %v864
        %1108 = vst [vmem:[#allocation2 + $0x170] sm:$0xff] %v962
        %1109 = vst [vmem:[#allocation2 + $0x178] sm:$0xff] %v1060
        %v1110 = vld [vmem:[#allocation9] sm:$0xff]
        %v1111 = vld [vmem:[#allocation9 + $0x8] sm:$0xf]
        %v1112 = vld [vmem:[#allocation9 + $0xc] sm:$0xff]
        %v1113 = vld [vmem:[#allocation9 + $0x14] sm:$0xf]
        %v1114 = vld [vmem:[#allocation9 + $0x18] sm:$0xff]
        %v1115 = vld [vmem:[#allocation9 + $0x20] sm:$0xf]
        %v1116 = vld [vmem:[#allocation9 + $0x24] sm:$0xff]
        %v1117 = vld [vmem:[#allocation9 + $0x2c] sm:$0xf]
        %v1118 = vld [vmem:[#allocation9 + $0x30] sm:$0xff]
        %v1119 = vld [vmem:[#allocation9 + $0x38] sm:$0xf]
        %v1120 = vld [vmem:[#allocation9 + $0x3c] sm:$0xff]
        %v1121 = vld [vmem:[#allocation9 + $0x44] sm:$0xf]
        %v1122 = vld [vmem:[#allocation9 + $0x48] sm:$0xff]
        %v1123 = vld [vmem:[#allocation9 + $0x50] sm:$0xf]
        %v1124 = vld [vmem:[#allocation9 + $0x54] sm:$0xff]
        %v1125 = vld [vmem:[#allocation9 + $0x5c] sm:$0xf]
        %v1126 = vld [vmem:[#allocation9 + $0x60] sm:$0xff]
        %v1127 = vld [vmem:[#allocation9 + $0x68] sm:$0xf]
        %v1128 = vld [vmem:[#allocation9 + $0x6c] sm:$0xff]
        %v1129 = vld [vmem:[#allocation9 + $0x74] sm:$0xf]
        %v1130 = vld [vmem:[#allocation9 + $0x78] sm:$0xff]
        %v1131 = vld [vmem:[#allocation9 + $0x80] sm:$0xf]
        %v1132 = vld [vmem:[#allocation9 + $0x84] sm:$0xff]
        %v1133 = vld [vmem:[#allocation9 + $0x8c] sm:$0xf]
        %v1134 = vld [vmem:[#allocation9 + $0x90] sm:$0xff]
        %v1135 = vld [vmem:[#allocation9 + $0x98] sm:$0xf]
        %v1136 = vld [vmem:[#allocation9 + $0x9c] sm:$0xff]
        %v1137 = vld [vmem:[#allocation9 + $0xa4] sm:$0xf]
        %v1138 = vld [vmem:[#allocation9 + $0xa8] sm:$0xff]
        %v1139 = vld [vmem:[#allocation9 + $0xb0] sm:$0xf]
        %v1140 = vld [vmem:[#allocation9 + $0xb4] sm:$0xff]
        %v1141 = vld [vmem:[#allocation9 + $0xbc] sm:$0xf]
        %v1142 = vld [vmem:[%s4] sm:$0x1]
        %v1143 = vld [vmem:[#allocation2] sm:$0xff]
        %v1144 = vld [vmem:[#allocation2 + $0x8] sm:$0xff]
        %v1145 = vld [vmem:[#allocation2 + $0x10] sm:$0xff]
        %v1146 = vld [vmem:[#allocation2 + $0x18] sm:$0xff]
        %v1147 = vld [vmem:[#allocation2 + $0x20] sm:$0xff]
        %v1148 = vld [vmem:[#allocation2 + $0x28] sm:$0xff]
        %v1181 = vunpack.c.l.b16 %v1110
        %v1182 = vunpack.c.h.b16 %v1110
        %v1183 = vunpack.c.l.b16 %v1111
        %v1184 = vunpack.c.l.b16 %v1112
        %v1185 = vunpack.c.h.b16 %v1112
        %v1186 = vunpack.c.l.b16 %v1113
        %v1187 = vunpack.c.l.b16 %v1114
        %v1188 = vunpack.c.h.b16 %v1114
        %v1189 = vunpack.c.l.b16 %v1115
        %v1190 = vunpack.c.l.b16 %v1116
        %v1191 = vunpack.c.h.b16 %v1116
        %v1192 = vunpack.c.l.b16 %v1117
        %v1193 = vunpack.c.l.b16 %v1118
        %v1194 = vunpack.c.h.b16 %v1118
        %v1195 = vunpack.c.l.b16 %v1119
        %v1196 = vunpack.c.l.b16 %v1120
        %v1197 = vunpack.c.h.b16 %v1120
        %v1198 = vunpack.c.l.b16 %v1121
        %v1199 = vunpack.c.l.b16 %v1122
        %v1200 = vunpack.c.h.b16 %v1122
        %v1201 = vunpack.c.l.b16 %v1123
        %v1202 = vunpack.c.l.b16 %v1124
        %v1203 = vunpack.c.h.b16 %v1124
        %v1204 = vunpack.c.l.b16 %v1125
        %v1205 = vunpack.c.l.b16 %v1126
        %v1206 = vunpack.c.h.b16 %v1126
        %v1207 = vunpack.c.l.b16 %v1127
        %v1208 = vunpack.c.l.b16 %v1128
        %v1209 = vunpack.c.h.b16 %v1128
        %v1210 = vunpack.c.l.b16 %v1129
        %v1211 = vunpack.c.l.b16 %v1130
        %v1212 = vunpack.c.h.b16 %v1130
        %v1213 = vunpack.c.l.b16 %v1131
        %v1214 = vunpack.c.l.b16 %v1132
        %v1215 = vunpack.c.h.b16 %v1132
        %v1216 = vunpack.c.l.b16 %v1133
        %v1217 = vunpack.c.l.b16 %v1134
        %v1218 = vunpack.c.h.b16 %v1134
        %v1219 = vunpack.c.l.b16 %v1135
        %v1220 = vunpack.c.l.b16 %v1136
        %v1221 = vunpack.c.h.b16 %v1136
        %v1222 = vunpack.c.l.b16 %v1137
        %v1223 = vunpack.c.l.b16 %v1138
        %v1224 = vunpack.c.h.b16 %v1138
        %v1225 = vunpack.c.l.b16 %v1139
        %v1226 = vunpack.c.l.b16 %v1140
        %v1227 = vunpack.c.h.b16 %v1140
        %v1228 = vunpack.c.l.b16 %v1141
        %v1229 = vpack.c.b16 %v1184, %v1181
        %v1230 = vpack.c.b16 %v1185, %v1182
        %v1231 = vpack.c.b16 %v1186, %v1183
        %v1232 = vpack.c.b16 %v1190, %v1187
        %v1233 = vpack.c.b16 %v1191, %v1188
        %v1234 = vpack.c.b16 %v1192, %v1189
        %v1235 = vpack.c.b16 %v1196, %v1193
        %v1236 = vpack.c.b16 %v1197, %v1194
        %v1237 = vpack.c.b16 %v1198, %v1195
        %v1238 = vpack.c.b16 %v1202, %v1199
        %v1239 = vpack.c.b16 %v1203, %v1200
        %v1240 = vpack.c.b16 %v1204, %v1201
        %v1241 = vpack.c.b16 %v1208, %v1205
        %v1242 = vpack.c.b16 %v1209, %v1206
        %v1243 = vpack.c.b16 %v1210, %v1207
        %v1244 = vpack.c.b16 %v1214, %v1211
        %v1245 = vpack.c.b16 %v1215, %v1212
        %v1246 = vpack.c.b16 %v1216, %v1213
        %v1247 = vpack.c.b16 %v1220, %v1217
        %v1248 = vpack.c.b16 %v1221, %v1218
        %v1249 = vpack.c.b16 %v1222, %v1219
        %v1250 = vpack.c.b16 %v1226, %v1223
        %v1251 = vpack.c.b16 %v1227, %v1224
        %v1252 = vpack.c.b16 %v1228, %v1225
        %1277 = vmatpush.bf16.msra.mxu0 %v1250
        %1278 = vmatpush.bf16.msra.mxu0 %v1247
        %1279 = vmatpush.bf16.msra.mxu0 %v1244
        %1280 = vmatpush.bf16.msra.mxu0 %v1241
        %1281 = vmatpush.bf16.msra.mxu0 %v1238
        %1282 = vmatpush.bf16.msra.mxu0 %v1235
        %1283 = vmatpush.bf16.msra.mxu0 %v1232
        %1284 = vmatpush.bf16.msra.mxu0 %v1229
        %1285 = vmatmul.bf16.gmra.mxu0 0
        %v1286 = vpop.f32.mrf.mxu0
        %v1287 = vadd.f32 0.0, %v1286
        %v1288 = vpop.f32.mrf.mxu0
        %v1289 = vadd.f32 0.0, %v1288
        %1290 = vdwg.mxu0
        %1291 = vmatpush.bf16.msra.mxu0 %v1251
        %1292 = vmatpush.bf16.msra.mxu0 %v1248
        %1293 = vmatpush.bf16.msra.mxu0 %v1245
        %1294 = vmatpush.bf16.msra.mxu0 %v1242
        %1295 = vmatpush.bf16.msra.mxu0 %v1239
        %1296 = vmatpush.bf16.msra.mxu0 %v1236
        %1297 = vmatpush.bf16.msra.mxu0 %v1233
        %1298 = vmatpush.bf16.msra.mxu0 %v1230
        %1299 = vmatmul.bf16.gmra.mxu0 0
        %v1300 = vpop.f32.mrf.mxu0
        %v1301 = vadd.f32 0.0, %v1300
        %v1302 = vpop.f32.mrf.mxu0
        %v1303 = vadd.f32 0.0, %v1302
        %1304 = vdwg.mxu0
        %1305 = vmatpush.bf16.msra.mxu0 %v1252
        %1306 = vmatpush.bf16.msra.mxu0 %v1249
        %1307 = vmatpush.bf16.msra.mxu0 %v1246
        %1308 = vmatpush.bf16.msra.mxu0 %v1243
        %1309 = vmatpush.bf16.msra.mxu0 %v1240
        %1310 = vmatpush.bf16.msra.mxu0 %v1237
        %1311 = vmatpush.bf16.msra.mxu0 %v1234
        %1312 = vmatpush.bf16.msra.mxu0 %v1231
        %1313 = vmatmul.bf16.gmra.mxu0 0
        %v1314 = vpop.f32.mrf.mxu0
        %v1315 = vadd.f32 0.0, %v1314
        %v1316 = vpop.f32.mrf.mxu0
        %v1317 = vadd.f32 0.0, %v1316
        %1318 = vdwg.mxu0
        %v1319 = vadd.f32 %v1143, %v1287
        %v1320 = vadd.f32 %v1146, %v1289
        %v1321 = vxor.u32 %v1319, 2147483648
        %v1322 = vxor.u32 %v1320, 2147483648
        %v1323 = vmul.f32 %v1321, 1.442695
        %v1324 = vpow.pop %v1323
        %v1325 = vmul.f32 %v1322, 1.442695
        %v1326 = vpow.pop %v1325
        %v1327 = vadd.f32 %v1324, 1.0
        %v1328 = vadd.f32 %v1326, 1.0
        %v1329 = vrcp.pop %v1327
        %v1330 = vmul.f32 %v1327, %v1329
        %v1331 = vsub.f32 1.0, %v1330
        %v1332 = vmul.f32 %v1329, %v1331
        %v1333 = vadd.f32 %v1329, %v1332
        %vm1334 = vweird.f32 %v1327
        %vm1335 = vweird.f32 %v1329
        %vm1336 = vmor %vm1334, %vm1335
        %v1337 = vsel %vm1336, %v1329, %v1333
        %v1338 = vand.u32 2147483647, %v1327
        %vm1339 = vcmp.eq.f32.partialorder %v1338, 8.507059e+37
        %v1340 = vand.u32 %v1327, 2147483648
        %v1341 = vor.u32 1.1754944e-38, %v1340
        %v1342 = vsel %vm1339, %v1341, %v1337
        %v1343 = vmul.f32 1.0, %v1342
        %v1344 = vrcp.pop %v1328
        %v1345 = vmul.f32 %v1328, %v1344
        %v1346 = vsub.f32 1.0, %v1345
        %v1347 = vmul.f32 %v1344, %v1346
        %v1348 = vadd.f32 %v1344, %v1347
        %vm1349 = vweird.f32 %v1328
        %vm1350 = vweird.f32 %v1344
        %vm1351 = vmor %vm1349, %vm1350
        %v1352 = vsel %vm1351, %v1344, %v1348
        %v1353 = vand.u32 2147483647, %v1328
        %vm1354 = vcmp.eq.f32.partialorder %v1353, 8.507059e+37
        %v1355 = vand.u32 %v1328, 2147483648
        %v1356 = vor.u32 1.1754944e-38, %v1355
        %v1357 = vsel %vm1354, %v1356, %v1352
        %v1358 = vmul.f32 1.0, %v1357
        %v1359 = vadd.f32 %v1144, %v1301
        %v1360 = vadd.f32 %v1147, %v1303
        %v1361 = vxor.u32 %v1359, 2147483648
        %v1362 = vxor.u32 %v1360, 2147483648
        %v1363 = vmul.f32 %v1361, 1.442695
        %v1364 = vpow.pop %v1363
        %v1365 = vmul.f32 %v1362, 1.442695
        %v1366 = vpow.pop %v1365
        %v1367 = vadd.f32 %v1364, 1.0
        %v1368 = vadd.f32 %v1366, 1.0
        %v1369 = vrcp.pop %v1367
        %v1370 = vmul.f32 %v1367, %v1369
        %v1371 = vsub.f32 1.0, %v1370
        %v1372 = vmul.f32 %v1369, %v1371
        %v1373 = vadd.f32 %v1369, %v1372
        %vm1374 = vweird.f32 %v1367
        %vm1375 = vweird.f32 %v1369
        %vm1376 = vmor %vm1374, %vm1375
        %v1377 = vsel %vm1376, %v1369, %v1373
        %v1378 = vand.u32 2147483647, %v1367
        %vm1379 = vcmp.eq.f32.partialorder %v1378, 8.507059e+37
        %v1380 = vand.u32 %v1367, 2147483648
        %v1381 = vor.u32 1.1754944e-38, %v1380
        %v1382 = vsel %vm1379, %v1381, %v1377
        %v1383 = vmul.f32 1.0, %v1382
        %v1384 = vrcp.pop %v1368
        %v1385 = vmul.f32 %v1368, %v1384
        %v1386 = vsub.f32 1.0, %v1385
        %v1387 = vmul.f32 %v1384, %v1386
        %v1388 = vadd.f32 %v1384, %v1387
        %vm1389 = vweird.f32 %v1368
        %vm1390 = vweird.f32 %v1384
        %vm1391 = vmor %vm1389, %vm1390
        %v1392 = vsel %vm1391, %v1384, %v1388
        %v1393 = vand.u32 2147483647, %v1368
        %vm1394 = vcmp.eq.f32.partialorder %v1393, 8.507059e+37
        %v1395 = vand.u32 %v1368, 2147483648
        %v1396 = vor.u32 1.1754944e-38, %v1395
        %v1397 = vsel %vm1394, %v1396, %v1392
        %v1398 = vmul.f32 1.0, %v1397
        %v1400 = vperm.slane %v1142, 0
        %v1402 = vadd.f32 %v1315, %v1400
        %v1403 = vadd.f32 %v1317, %v1400
        %v1404 = vmul.f32 %v1343, %v1402
        %v1405 = vmul.f32 %v1358, %v1403
        %v1406 = vadd.f32 %v1145, %v1404
        %v1407 = vadd.f32 %v1148, %v1405
        %v1408 = vtanh.pop %v1406
        %v1409 = vtanh.pop %v1407
        %v1410 = vsub.f32 1.0, %v1383
        %v1411 = vsub.f32 1.0, %v1398
        %v1412 = vmul.f32 %v1410, %v1408
        %v1413 = vmul.f32 %v1411, %v1409
        %v1414 = vmul.f32 %v1383, 0.0
        %v1415 = vmul.f32 %v1398, 0.0
        %v1416 = vadd.f32 %v1412, %v1414
        %v1417 = vadd.f32 %v1413, %v1415
        %v1418 = vmax.f32 %v1416, 0.0
        %v1419 = vmax.f32 %v1417, 0.0
        %v1420 = vpack.c.bf16 %v1418, %v1418
        %v1421 = vpack.c.bf16 %v1419, %v1419
        %1422 = vst [vmem:[#allocation3] sm:$0xf] %v1420
        %1423 = vst [vmem:[#allocation3 + $0x4] sm:$0xf] %v1421
        %s1424 = scalar_lea.vmem [#allocation2], 48
        %v1425 = vld [vmem:[%s1424] sm:$0xff]
        %v1426 = vld [vmem:[%s1424 + $0x8] sm:$0xff]
        %v1427 = vld [vmem:[%s1424 + $0x10] sm:$0xff]
        %v1428 = vld [vmem:[%s1424 + $0x18] sm:$0xff]
        %v1429 = vld [vmem:[%s1424 + $0x20] sm:$0xff]
        %v1430 = vld [vmem:[%s1424 + $0x28] sm:$0xff]
        %v1431 = vpack.c.bf16 %v1417, %v1416
        %1432 = vmatpush.bf16.msra.mxu0 %v1250
        %1433 = vmatpush.bf16.msra.mxu0 %v1247
        %1434 = vmatpush.bf16.msra.mxu0 %v1244
        %1435 = vmatpush.bf16.msra.mxu0 %v1241
        %1436 = vmatpush.bf16.msra.mxu0 %v1238
        %1437 = vmatpush.bf16.msra.mxu0 %v1235
        %1438 = vmatpush.bf16.msra.mxu0 %v1232
        %1439 = vmatpush.bf16.msra.mxu0 %v1229
        %1440 = vmatmul.bf16.gmra.mxu0 %v1431
        %v1441 = vpop.f32.mrf.mxu0
        %v1442 = vadd.f32 0.0, %v1441
        %v1443 = vpop.f32.mrf.mxu0
        %v1444 = vadd.f32 0.0, %v1443
        %1445 = vdwg.mxu0
        %1446 = vmatpush.bf16.msra.mxu0 %v1251
        %1447 = vmatpush.bf16.msra.mxu0 %v1248
        %1448 = vmatpush.bf16.msra.mxu0 %v1245
        %1449 = vmatpush.bf16.msra.mxu0 %v1242
        %1450 = vmatpush.bf16.msra.mxu0 %v1239
        %1451 = vmatpush.bf16.msra.mxu0 %v1236
        %1452 = vmatpush.bf16.msra.mxu0 %v1233
        %1453 = vmatpush.bf16.msra.mxu0 %v1230
        %1454 = vmatmul.bf16.gmra.mxu0 %v1431
        %v1455 = vpop.f32.mrf.mxu0
        %v1456 = vadd.f32 0.0, %v1455
        %v1457 = vpop.f32.mrf.mxu0
        %v1458 = vadd.f32 0.0, %v1457
        %1459 = vdwg.mxu0
        %1460 = vmatpush.bf16.msra.mxu0 %v1252
        %1461 = vmatpush.bf16.msra.mxu0 %v1249
        %1462 = vmatpush.bf16.msra.mxu0 %v1246
        %1463 = vmatpush.bf16.msra.mxu0 %v1243
        %1464 = vmatpush.bf16.msra.mxu0 %v1240
        %1465 = vmatpush.bf16.msra.mxu0 %v1237
        %1466 = vmatpush.bf16.msra.mxu0 %v1234
        %1467 = vmatpush.bf16.msra.mxu0 %v1231
        %1468 = vmatmul.bf16.gmra.mxu0 %v1431
        %v1469 = vpop.f32.mrf.mxu0
        %v1470 = vadd.f32 0.0, %v1469
        %v1471 = vpop.f32.mrf.mxu0
        %v1472 = vadd.f32 0.0, %v1471
        %1473 = vdwg.mxu0
        %v1474 = vadd.f32 %v1425, %v1442
        %v1475 = vadd.f32 %v1428, %v1444
        %v1476 = vxor.u32 %v1474, 2147483648
        %v1477 = vxor.u32 %v1475, 2147483648
        %v1478 = vmul.f32 %v1476, 1.442695
        %v1479 = vpow.pop %v1478
        %v1480 = vmul.f32 %v1477, 1.442695
        %v1481 = vpow.pop %v1480
        %v1482 = vadd.f32 %v1479, 1.0
        %v1483 = vadd.f32 %v1481, 1.0
        %v1484 = vrcp.pop %v1482
        %v1485 = vmul.f32 %v1482, %v1484
        %v1486 = vsub.f32 1.0, %v1485
        %v1487 = vmul.f32 %v1484, %v1486
        %v1488 = vadd.f32 %v1484, %v1487
        %vm1489 = vweird.f32 %v1482
        %vm1490 = vweird.f32 %v1484
        %vm1491 = vmor %vm1489, %vm1490
        %v1492 = vsel %vm1491, %v1484, %v1488
        %v1493 = vand.u32 2147483647, %v1482
        %vm1494 = vcmp.eq.f32.partialorder %v1493, 8.507059e+37
        %v1495 = vand.u32 %v1482, 2147483648
        %v1496 = vor.u32 1.1754944e-38, %v1495
        %v1497 = vsel %vm1494, %v1496, %v1492
        %v1498 = vmul.f32 1.0, %v1497
        %v1499 = vrcp.pop %v1483
        %v1500 = vmul.f32 %v1483, %v1499
        %v1501 = vsub.f32 1.0, %v1500
        %v1502 = vmul.f32 %v1499, %v1501
        %v1503 = vadd.f32 %v1499, %v1502
        %vm1504 = vweird.f32 %v1483
        %vm1505 = vweird.f32 %v1499
        %vm1506 = vmor %vm1504, %vm1505
        %v1507 = vsel %vm1506, %v1499, %v1503
        %v1508 = vand.u32 2147483647, %v1483
        %vm1509 = vcmp.eq.f32.partialorder %v1508, 8.507059e+37
        %v1510 = vand.u32 %v1483, 2147483648
        %v1511 = vor.u32 1.1754944e-38, %v1510
        %v1512 = vsel %vm1509, %v1511, %v1507
        %v1513 = vmul.f32 1.0, %v1512
        %v1514 = vadd.f32 %v1426, %v1456
        %v1515 = vadd.f32 %v1429, %v1458
        %v1516 = vxor.u32 %v1514, 2147483648
        %v1517 = vxor.u32 %v1515, 2147483648
        %v1518 = vmul.f32 %v1516, 1.442695
        %v1519 = vpow.pop %v1518
        %v1520 = vmul.f32 %v1517, 1.442695
        %v1521 = vpow.pop %v1520
        %v1522 = vadd.f32 %v1519, 1.0
        %v1523 = vadd.f32 %v1521, 1.0
        %v1524 = vrcp.pop %v1522
        %v1525 = vmul.f32 %v1522, %v1524
        %v1526 = vsub.f32 1.0, %v1525
        %v1527 = vmul.f32 %v1524, %v1526
        %v1528 = vadd.f32 %v1524, %v1527
        %vm1529 = vweird.f32 %v1522
        %vm1530 = vweird.f32 %v1524
        %vm1531 = vmor %vm1529, %vm1530
        %v1532 = vsel %vm1531, %v1524, %v1528
        %v1533 = vand.u32 2147483647, %v1522
        %vm1534 = vcmp.eq.f32.partialorder %v1533, 8.507059e+37
        %v1535 = vand.u32 %v1522, 2147483648
        %v1536 = vor.u32 1.1754944e-38, %v1535
        %v1537 = vsel %vm1534, %v1536, %v1532
        %v1538 = vmul.f32 1.0, %v1537
        %v1539 = vrcp.pop %v1523
        %v1540 = vmul.f32 %v1523, %v1539
        %v1541 = vsub.f32 1.0, %v1540
        %v1542 = vmul.f32 %v1539, %v1541
        %v1543 = vadd.f32 %v1539, %v1542
        %vm1544 = vweird.f32 %v1523
        %vm1545 = vweird.f32 %v1539
        %vm1546 = vmor %vm1544, %vm1545
        %v1547 = vsel %vm1546, %v1539, %v1543
        %v1548 = vand.u32 2147483647, %v1523
        %vm1549 = vcmp.eq.f32.partialorder %v1548, 8.507059e+37
        %v1550 = vand.u32 %v1523, 2147483648
        %v1551 = vor.u32 1.1754944e-38, %v1550
        %v1552 = vsel %vm1549, %v1551, %v1547
        %v1553 = vmul.f32 1.0, %v1552
        %v1554 = vadd.f32 %v1470, %v1400
        %v1555 = vadd.f32 %v1472, %v1400
        %v1556 = vmul.f32 %v1498, %v1554
        %v1557 = vmul.f32 %v1513, %v1555
        %v1558 = vadd.f32 %v1427, %v1556
        %v1559 = vadd.f32 %v1430, %v1557
        %v1560 = vtanh.pop %v1558
        %v1561 = vtanh.pop %v1559
        %v1562 = vsub.f32 1.0, %v1538
        %v1563 = vsub.f32 1.0, %v1553
        %v1564 = vmul.f32 %v1562, %v1560
        %v1565 = vmul.f32 %v1563, %v1561
        %v1566 = vmul.f32 %v1538, %v1416
        %v1567 = vmul.f32 %v1553, %v1417
        %v1568 = vadd.f32 %v1564, %v1566
        %v1569 = vadd.f32 %v1565, %v1567
        %v1570 = vmax.f32 %v1568, 0.0
        %v1571 = vmax.f32 %v1569, 0.0
        %v1572 = vpack.c.bf16 %v1570, %v1570
        %v1573 = vpack.c.bf16 %v1571, %v1571
        %s1574 = scalar_lea.vmem [#allocation3], 8
        %1575 = vst [vmem:[%s1574] sm:$0xf] %v1572
        %1576 = vst [vmem:[%s1574 + $0x4] sm:$0xf] %v1573
        %s1577 = scalar_lea.vmem [#allocation2], 96
        %v1578 = vld [vmem:[%s1577] sm:$0xff]
        %v1579 = vld [vmem:[%s1577 + $0x8] sm:$0xff]
        %v1580 = vld [vmem:[%s1577 + $0x10] sm:$0xff]
        %v1581 = vld [vmem:[%s1577 + $0x18] sm:$0xff]
        %v1582 = vld [vmem:[%s1577 + $0x20] sm:$0xff]
        %v1583 = vld [vmem:[%s1577 + $0x28] sm:$0xff]
        %v1584 = vpack.c.bf16 %v1569, %v1568
        %1585 = vmatpush.bf16.msra.mxu0 %v1250
        %1586 = vmatpush.bf16.msra.mxu0 %v1247
        %1587 = vmatpush.bf16.msra.mxu0 %v1244
        %1588 = vmatpush.bf16.msra.mxu0 %v1241
        %1589 = vmatpush.bf16.msra.mxu0 %v1238
        %1590 = vmatpush.bf16.msra.mxu0 %v1235
        %1591 = vmatpush.bf16.msra.mxu0 %v1232
        %1592 = vmatpush.bf16.msra.mxu0 %v1229
        %1593 = vmatmul.bf16.gmra.mxu0 %v1584
        %v1594 = vpop.f32.mrf.mxu0
        %v1595 = vadd.f32 0.0, %v1594
        %v1596 = vpop.f32.mrf.mxu0
        %v1597 = vadd.f32 0.0, %v1596
        %1598 = vdwg.mxu0
        %1599 = vmatpush.bf16.msra.mxu0 %v1251
        %1600 = vmatpush.bf16.msra.mxu0 %v1248
        %1601 = vmatpush.bf16.msra.mxu0 %v1245
        %1602 = vmatpush.bf16.msra.mxu0 %v1242
        %1603 = vmatpush.bf16.msra.mxu0 %v1239
        %1604 = vmatpush.bf16.msra.mxu0 %v1236
        %1605 = vmatpush.bf16.msra.mxu0 %v1233
        %1606 = vmatpush.bf16.msra.mxu0 %v1230
        %1607 = vmatmul.bf16.gmra.mxu0 %v1584
        %v1608 = vpop.f32.mrf.mxu0
        %v1609 = vadd.f32 0.0, %v1608
        %v1610 = vpop.f32.mrf.mxu0
        %v1611 = vadd.f32 0.0, %v1610
        %1612 = vdwg.mxu0
        %1613 = vmatpush.bf16.msra.mxu0 %v1252
        %1614 = vmatpush.bf16.msra.mxu0 %v1249
        %1615 = vmatpush.bf16.msra.mxu0 %v1246
        %1616 = vmatpush.bf16.msra.mxu0 %v1243
        %1617 = vmatpush.bf16.msra.mxu0 %v1240
        %1618 = vmatpush.bf16.msra.mxu0 %v1237
        %1619 = vmatpush.bf16.msra.mxu0 %v1234
        %1620 = vmatpush.bf16.msra.mxu0 %v1231
        %1621 = vmatmul.bf16.gmra.mxu0 %v1584
        %v1622 = vpop.f32.mrf.mxu0
        %v1623 = vadd.f32 0.0, %v1622
        %v1624 = vpop.f32.mrf.mxu0
        %v1625 = vadd.f32 0.0, %v1624
        %1626 = vdwg.mxu0
        %v1627 = vadd.f32 %v1578, %v1595
        %v1628 = vadd.f32 %v1581, %v1597
        %v1629 = vxor.u32 %v1627, 2147483648
        %v1630 = vxor.u32 %v1628, 2147483648
        %v1631 = vmul.f32 %v1629, 1.442695
        %v1632 = vpow.pop %v1631
        %v1633 = vmul.f32 %v1630, 1.442695
        %v1634 = vpow.pop %v1633
        %v1635 = vadd.f32 %v1632, 1.0
        %v1636 = vadd.f32 %v1634, 1.0
        %v1637 = vrcp.pop %v1635
        %v1638 = vmul.f32 %v1635, %v1637
        %v1639 = vsub.f32 1.0, %v1638
        %v1640 = vmul.f32 %v1637, %v1639
        %v1641 = vadd.f32 %v1637, %v1640
        %vm1642 = vweird.f32 %v1635
        %vm1643 = vweird.f32 %v1637
        %vm1644 = vmor %vm1642, %vm1643
        %v1645 = vsel %vm1644, %v1637, %v1641
        %v1646 = vand.u32 2147483647, %v1635
        %vm1647 = vcmp.eq.f32.partialorder %v1646, 8.507059e+37
        %v1648 = vand.u32 %v1635, 2147483648
        %v1649 = vor.u32 1.1754944e-38, %v1648
        %v1650 = vsel %vm1647, %v1649, %v1645
        %v1651 = vmul.f32 1.0, %v1650
        %v1652 = vrcp.pop %v1636
        %v1653 = vmul.f32 %v1636, %v1652
        %v1654 = vsub.f32 1.0, %v1653
        %v1655 = vmul.f32 %v1652, %v1654
        %v1656 = vadd.f32 %v1652, %v1655
        %vm1657 = vweird.f32 %v1636
        %vm1658 = vweird.f32 %v1652
        %vm1659 = vmor %vm1657, %vm1658
        %v1660 = vsel %vm1659, %v1652, %v1656
        %v1661 = vand.u32 2147483647, %v1636
        %vm1662 = vcmp.eq.f32.partialorder %v1661, 8.507059e+37
        %v1663 = vand.u32 %v1636, 2147483648
        %v1664 = vor.u32 1.1754944e-38, %v1663
        %v1665 = vsel %vm1662, %v1664, %v1660
        %v1666 = vmul.f32 1.0, %v1665
        %v1667 = vadd.f32 %v1579, %v1609
        %v1668 = vadd.f32 %v1582, %v1611
        %v1669 = vxor.u32 %v1667, 2147483648
        %v1670 = vxor.u32 %v1668, 2147483648
        %v1671 = vmul.f32 %v1669, 1.442695
        %v1672 = vpow.pop %v1671
        %v1673 = vmul.f32 %v1670, 1.442695
        %v1674 = vpow.pop %v1673
        %v1675 = vadd.f32 %v1672, 1.0
        %v1676 = vadd.f32 %v1674, 1.0
        %v1677 = vrcp.pop %v1675
        %v1678 = vmul.f32 %v1675, %v1677
        %v1679 = vsub.f32 1.0, %v1678
        %v1680 = vmul.f32 %v1677, %v1679
        %v1681 = vadd.f32 %v1677, %v1680
        %vm1682 = vweird.f32 %v1675
        %vm1683 = vweird.f32 %v1677
        %vm1684 = vmor %vm1682, %vm1683
        %v1685 = vsel %vm1684, %v1677, %v1681
        %v1686 = vand.u32 2147483647, %v1675
        %vm1687 = vcmp.eq.f32.partialorder %v1686, 8.507059e+37
        %v1688 = vand.u32 %v1675, 2147483648
        %v1689 = vor.u32 1.1754944e-38, %v1688
        %v1690 = vsel %vm1687, %v1689, %v1685
        %v1691 = vmul.f32 1.0, %v1690
        %v1692 = vrcp.pop %v1676
        %v1693 = vmul.f32 %v1676, %v1692
        %v1694 = vsub.f32 1.0, %v1693
        %v1695 = vmul.f32 %v1692, %v1694
        %v1696 = vadd.f32 %v1692, %v1695
        %vm1697 = vweird.f32 %v1676
        %vm1698 = vweird.f32 %v1692
        %vm1699 = vmor %vm1697, %vm1698
        %v1700 = vsel %vm1699, %v1692, %v1696
        %v1701 = vand.u32 2147483647, %v1676
        %vm1702 = vcmp.eq.f32.partialorder %v1701, 8.507059e+37
        %v1703 = vand.u32 %v1676, 2147483648
        %v1704 = vor.u32 1.1754944e-38, %v1703
        %v1705 = vsel %vm1702, %v1704, %v1700
        %v1706 = vmul.f32 1.0, %v1705
        %v1707 = vadd.f32 %v1623, %v1400
        %v1708 = vadd.f32 %v1625, %v1400
        %v1709 = vmul.f32 %v1651, %v1707
        %v1710 = vmul.f32 %v1666, %v1708
        %v1711 = vadd.f32 %v1580, %v1709
        %v1712 = vadd.f32 %v1583, %v1710
        %v1713 = vtanh.pop %v1711
        %v1714 = vtanh.pop %v1712
        %v1715 = vsub.f32 1.0, %v1691
        %v1716 = vsub.f32 1.0, %v1706
        %v1717 = vmul.f32 %v1715, %v1713
        %v1718 = vmul.f32 %v1716, %v1714
        %v1719 = vmul.f32 %v1691, %v1568
        %v1720 = vmul.f32 %v1706, %v1569
        %v1721 = vadd.f32 %v1717, %v1719
        %v1722 = vadd.f32 %v1718, %v1720
        %v1723 = vmax.f32 %v1721, 0.0
        %v1724 = vmax.f32 %v1722, 0.0
        %v1725 = vpack.c.bf16 %v1723, %v1723
        %v1726 = vpack.c.bf16 %v1724, %v1724
        %s1727 = scalar_lea.vmem [#allocation3], 16
        %1728 = vst [vmem:[%s1727] sm:$0xf] %v1725
        %1729 = vst [vmem:[%s1727 + $0x4] sm:$0xf] %v1726
        %s1730 = scalar_lea.vmem [#allocation2], 144
        %v1731 = vld [vmem:[%s1730] sm:$0xff]
        %v1732 = vld [vmem:[%s1730 + $0x8] sm:$0xff]
        %v1733 = vld [vmem:[%s1730 + $0x10] sm:$0xff]
        %v1734 = vld [vmem:[%s1730 + $0x18] sm:$0xff]
        %v1735 = vld [vmem:[%s1730 + $0x20] sm:$0xff]
        %v1736 = vld [vmem:[%s1730 + $0x28] sm:$0xff]
        %v1737 = vpack.c.bf16 %v1722, %v1721
        %1738 = vmatpush.bf16.msra.mxu0 %v1250
        %1739 = vmatpush.bf16.msra.mxu0 %v1247
        %1740 = vmatpush.bf16.msra.mxu0 %v1244
        %1741 = vmatpush.bf16.msra.mxu0 %v1241
        %1742 = vmatpush.bf16.msra.mxu0 %v1238
        %1743 = vmatpush.bf16.msra.mxu0 %v1235
        %1744 = vmatpush.bf16.msra.mxu0 %v1232
        %1745 = vmatpush.bf16.msra.mxu0 %v1229
        %1746 = vmatmul.bf16.gmra.mxu0 %v1737
        %v1747 = vpop.f32.mrf.mxu0
        %v1748 = vadd.f32 0.0, %v1747
        %v1749 = vpop.f32.mrf.mxu0
        %v1750 = vadd.f32 0.0, %v1749
        %1751 = vdwg.mxu0
        %1752 = vmatpush.bf16.msra.mxu0 %v1251
        %1753 = vmatpush.bf16.msra.mxu0 %v1248
        %1754 = vmatpush.bf16.msra.mxu0 %v1245
        %1755 = vmatpush.bf16.msra.mxu0 %v1242
        %1756 = vmatpush.bf16.msra.mxu0 %v1239
        %1757 = vmatpush.bf16.msra.mxu0 %v1236
        %1758 = vmatpush.bf16.msra.mxu0 %v1233
        %1759 = vmatpush.bf16.msra.mxu0 %v1230
        %1760 = vmatmul.bf16.gmra.mxu0 %v1737
        %v1761 = vpop.f32.mrf.mxu0
        %v1762 = vadd.f32 0.0, %v1761
        %v1763 = vpop.f32.mrf.mxu0
        %v1764 = vadd.f32 0.0, %v1763
        %1765 = vdwg.mxu0
        %1766 = vmatpush.bf16.msra.mxu0 %v1252
        %1767 = vmatpush.bf16.msra.mxu0 %v1249
        %1768 = vmatpush.bf16.msra.mxu0 %v1246
        %1769 = vmatpush.bf16.msra.mxu0 %v1243
        %1770 = vmatpush.bf16.msra.mxu0 %v1240
        %1771 = vmatpush.bf16.msra.mxu0 %v1237
        %1772 = vmatpush.bf16.msra.mxu0 %v1234
        %1773 = vmatpush.bf16.msra.mxu0 %v1231
        %1774 = vmatmul.bf16.gmra.mxu0 %v1737
        %v1775 = vpop.f32.mrf.mxu0
        %v1776 = vadd.f32 0.0, %v1775
        %v1777 = vpop.f32.mrf.mxu0
        %v1778 = vadd.f32 0.0, %v1777
        %1779 = vdwg.mxu0
        %v1780 = vadd.f32 %v1731, %v1748
        %v1781 = vadd.f32 %v1734, %v1750
        %v1782 = vxor.u32 %v1780, 2147483648
        %v1783 = vxor.u32 %v1781, 2147483648
        %v1784 = vmul.f32 %v1782, 1.442695
        %v1785 = vpow.pop %v1784
        %v1786 = vmul.f32 %v1783, 1.442695
        %v1787 = vpow.pop %v1786
        %v1788 = vadd.f32 %v1785, 1.0
        %v1789 = vadd.f32 %v1787, 1.0
        %v1790 = vrcp.pop %v1788
        %v1791 = vmul.f32 %v1788, %v1790
        %v1792 = vsub.f32 1.0, %v1791
        %v1793 = vmul.f32 %v1790, %v1792
        %v1794 = vadd.f32 %v1790, %v1793
        %vm1795 = vweird.f32 %v1788
        %vm1796 = vweird.f32 %v1790
        %vm1797 = vmor %vm1795, %vm1796
        %v1798 = vsel %vm1797, %v1790, %v1794
        %v1799 = vand.u32 2147483647, %v1788
        %vm1800 = vcmp.eq.f32.partialorder %v1799, 8.507059e+37
        %v1801 = vand.u32 %v1788, 2147483648
        %v1802 = vor.u32 1.1754944e-38, %v1801
        %v1803 = vsel %vm1800, %v1802, %v1798
        %v1804 = vmul.f32 1.0, %v1803
        %v1805 = vrcp.pop %v1789
        %v1806 = vmul.f32 %v1789, %v1805
        %v1807 = vsub.f32 1.0, %v1806
        %v1808 = vmul.f32 %v1805, %v1807
        %v1809 = vadd.f32 %v1805, %v1808
        %vm1810 = vweird.f32 %v1789
        %vm1811 = vweird.f32 %v1805
        %vm1812 = vmor %vm1810, %vm1811
        %v1813 = vsel %vm1812, %v1805, %v1809
        %v1814 = vand.u32 2147483647, %v1789
        %vm1815 = vcmp.eq.f32.partialorder %v1814, 8.507059e+37
        %v1816 = vand.u32 %v1789, 2147483648
        %v1817 = vor.u32 1.1754944e-38, %v1816
        %v1818 = vsel %vm1815, %v1817, %v1813
        %v1819 = vmul.f32 1.0, %v1818
        %v1820 = vadd.f32 %v1732, %v1762
        %v1821 = vadd.f32 %v1735, %v1764
        %v1822 = vxor.u32 %v1820, 2147483648
        %v1823 = vxor.u32 %v1821, 2147483648
        %v1824 = vmul.f32 %v1822, 1.442695
        %v1825 = vpow.pop %v1824
        %v1826 = vmul.f32 %v1823, 1.442695
        %v1827 = vpow.pop %v1826
        %v1828 = vadd.f32 %v1825, 1.0
        %v1829 = vadd.f32 %v1827, 1.0
        %v1830 = vrcp.pop %v1828
        %v1831 = vmul.f32 %v1828, %v1830
        %v1832 = vsub.f32 1.0, %v1831
        %v1833 = vmul.f32 %v1830, %v1832
        %v1834 = vadd.f32 %v1830, %v1833
        %vm1835 = vweird.f32 %v1828
        %vm1836 = vweird.f32 %v1830
        %vm1837 = vmor %vm1835, %vm1836
        %v1838 = vsel %vm1837, %v1830, %v1834
        %v1839 = vand.u32 2147483647, %v1828
        %vm1840 = vcmp.eq.f32.partialorder %v1839, 8.507059e+37
        %v1841 = vand.u32 %v1828, 2147483648
        %v1842 = vor.u32 1.1754944e-38, %v1841
        %v1843 = vsel %vm1840, %v1842, %v1838
        %v1844 = vmul.f32 1.0, %v1843
        %v1845 = vrcp.pop %v1829
        %v1846 = vmul.f32 %v1829, %v1845
        %v1847 = vsub.f32 1.0, %v1846
        %v1848 = vmul.f32 %v1845, %v1847
        %v1849 = vadd.f32 %v1845, %v1848
        %vm1850 = vweird.f32 %v1829
        %vm1851 = vweird.f32 %v1845
        %vm1852 = vmor %vm1850, %vm1851
        %v1853 = vsel %vm1852, %v1845, %v1849
        %v1854 = vand.u32 2147483647, %v1829
        %vm1855 = vcmp.eq.f32.partialorder %v1854, 8.507059e+37
        %v1856 = vand.u32 %v1829, 2147483648
        %v1857 = vor.u32 1.1754944e-38, %v1856
        %v1858 = vsel %vm1855, %v1857, %v1853
        %v1859 = vmul.f32 1.0, %v1858
        %v1860 = vadd.f32 %v1776, %v1400
        %v1861 = vadd.f32 %v1778, %v1400
        %v1862 = vmul.f32 %v1804, %v1860
        %v1863 = vmul.f32 %v1819, %v1861
        %v1864 = vadd.f32 %v1733, %v1862
        %v1865 = vadd.f32 %v1736, %v1863
        %v1866 = vtanh.pop %v1864
        %v1867 = vtanh.pop %v1865
        %v1868 = vsub.f32 1.0, %v1844
        %v1869 = vsub.f32 1.0, %v1859
        %v1870 = vmul.f32 %v1868, %v1866
        %v1871 = vmul.f32 %v1869, %v1867
        %v1872 = vmul.f32 %v1844, %v1721
        %v1873 = vmul.f32 %v1859, %v1722
        %v1874 = vadd.f32 %v1870, %v1872
        %v1875 = vadd.f32 %v1871, %v1873
        %v1876 = vmax.f32 %v1874, 0.0
        %v1877 = vmax.f32 %v1875, 0.0
        %v1878 = vpack.c.bf16 %v1876, %v1876
        %v1879 = vpack.c.bf16 %v1877, %v1877
        %s1880 = scalar_lea.vmem [#allocation3], 24
        %1881 = vst [vmem:[%s1880] sm:$0xf] %v1878
        %1882 = vst [vmem:[%s1880 + $0x4] sm:$0xf] %v1879
        %s1883 = scalar_lea.vmem [#allocation2], 192
        %v1884 = vld [vmem:[%s1883] sm:$0xff]
        %v1885 = vld [vmem:[%s1883 + $0x8] sm:$0xff]
        %v1886 = vld [vmem:[%s1883 + $0x10] sm:$0xff]
        %v1887 = vld [vmem:[%s1883 + $0x18] sm:$0xff]
        %v1888 = vld [vmem:[%s1883 + $0x20] sm:$0xff]
        %v1889 = vld [vmem:[%s1883 + $0x28] sm:$0xff]
        %v1890 = vpack.c.bf16 %v1875, %v1874
        %1891 = vmatpush.bf16.msra.mxu0 %v1250
        %1892 = vmatpush.bf16.msra.mxu0 %v1247
        %1893 = vmatpush.bf16.msra.mxu0 %v1244
        %1894 = vmatpush.bf16.msra.mxu0 %v1241
        %1895 = vmatpush.bf16.msra.mxu0 %v1238
        %1896 = vmatpush.bf16.msra.mxu0 %v1235
        %1897 = vmatpush.bf16.msra.mxu0 %v1232
        %1898 = vmatpush.bf16.msra.mxu0 %v1229
        %1899 = vmatmul.bf16.gmra.mxu0 %v1890
        %v1900 = vpop.f32.mrf.mxu0
        %v1901 = vadd.f32 0.0, %v1900
        %v1902 = vpop.f32.mrf.mxu0
        %v1903 = vadd.f32 0.0, %v1902
        %1904 = vdwg.mxu0
        %1905 = vmatpush.bf16.msra.mxu0 %v1251
        %1906 = vmatpush.bf16.msra.mxu0 %v1248
        %1907 = vmatpush.bf16.msra.mxu0 %v1245
        %1908 = vmatpush.bf16.msra.mxu0 %v1242
        %1909 = vmatpush.bf16.msra.mxu0 %v1239
        %1910 = vmatpush.bf16.msra.mxu0 %v1236
        %1911 = vmatpush.bf16.msra.mxu0 %v1233
        %1912 = vmatpush.bf16.msra.mxu0 %v1230
        %1913 = vmatmul.bf16.gmra.mxu0 %v1890
        %v1914 = vpop.f32.mrf.mxu0
        %v1915 = vadd.f32 0.0, %v1914
        %v1916 = vpop.f32.mrf.mxu0
        %v1917 = vadd.f32 0.0, %v1916
        %1918 = vdwg.mxu0
        %1919 = vmatpush.bf16.msra.mxu0 %v1252
        %1920 = vmatpush.bf16.msra.mxu0 %v1249
        %1921 = vmatpush.bf16.msra.mxu0 %v1246
        %1922 = vmatpush.bf16.msra.mxu0 %v1243
        %1923 = vmatpush.bf16.msra.mxu0 %v1240
        %1924 = vmatpush.bf16.msra.mxu0 %v1237
        %1925 = vmatpush.bf16.msra.mxu0 %v1234
        %1926 = vmatpush.bf16.msra.mxu0 %v1231
        %1927 = vmatmul.bf16.gmra.mxu0 %v1890
        %v1928 = vpop.f32.mrf.mxu0
        %v1929 = vadd.f32 0.0, %v1928
        %v1930 = vpop.f32.mrf.mxu0
        %v1931 = vadd.f32 0.0, %v1930
        %1932 = vdwg.mxu0
        %v1933 = vadd.f32 %v1884, %v1901
        %v1934 = vadd.f32 %v1887, %v1903
        %v1935 = vxor.u32 %v1933, 2147483648
        %v1936 = vxor.u32 %v1934, 2147483648
        %v1937 = vmul.f32 %v1935, 1.442695
        %v1938 = vpow.pop %v1937
        %v1939 = vmul.f32 %v1936, 1.442695
        %v1940 = vpow.pop %v1939
        %v1941 = vadd.f32 %v1938, 1.0
        %v1942 = vadd.f32 %v1940, 1.0
        %v1943 = vrcp.pop %v1941
        %v1944 = vmul.f32 %v1941, %v1943
        %v1945 = vsub.f32 1.0, %v1944
        %v1946 = vmul.f32 %v1943, %v1945
        %v1947 = vadd.f32 %v1943, %v1946
        %vm1948 = vweird.f32 %v1941
        %vm1949 = vweird.f32 %v1943
        %vm1950 = vmor %vm1948, %vm1949
        %v1951 = vsel %vm1950, %v1943, %v1947
        %v1952 = vand.u32 2147483647, %v1941
        %vm1953 = vcmp.eq.f32.partialorder %v1952, 8.507059e+37
        %v1954 = vand.u32 %v1941, 2147483648
        %v1955 = vor.u32 1.1754944e-38, %v1954
        %v1956 = vsel %vm1953, %v1955, %v1951
        %v1957 = vmul.f32 1.0, %v1956
        %v1958 = vrcp.pop %v1942
        %v1959 = vmul.f32 %v1942, %v1958
        %v1960 = vsub.f32 1.0, %v1959
        %v1961 = vmul.f32 %v1958, %v1960
        %v1962 = vadd.f32 %v1958, %v1961
        %vm1963 = vweird.f32 %v1942
        %vm1964 = vweird.f32 %v1958
        %vm1965 = vmor %vm1963, %vm1964
        %v1966 = vsel %vm1965, %v1958, %v1962
        %v1967 = vand.u32 2147483647, %v1942
        %vm1968 = vcmp.eq.f32.partialorder %v1967, 8.507059e+37
        %v1969 = vand.u32 %v1942, 2147483648
        %v1970 = vor.u32 1.1754944e-38, %v1969
        %v1971 = vsel %vm1968, %v1970, %v1966
        %v1972 = vmul.f32 1.0, %v1971
        %v1973 = vadd.f32 %v1885, %v1915
        %v1974 = vadd.f32 %v1888, %v1917
        %v1975 = vxor.u32 %v1973, 2147483648
        %v1976 = vxor.u32 %v1974, 2147483648
        %v1977 = vmul.f32 %v1975, 1.442695
        %v1978 = vpow.pop %v1977
        %v1979 = vmul.f32 %v1976, 1.442695
        %v1980 = vpow.pop %v1979
        %v1981 = vadd.f32 %v1978, 1.0
        %v1982 = vadd.f32 %v1980, 1.0
        %v1983 = vrcp.pop %v1981
        %v1984 = vmul.f32 %v1981, %v1983
        %v1985 = vsub.f32 1.0, %v1984
        %v1986 = vmul.f32 %v1983, %v1985
        %v1987 = vadd.f32 %v1983, %v1986
        %vm1988 = vweird.f32 %v1981
        %vm1989 = vweird.f32 %v1983
        %vm1990 = vmor %vm1988, %vm1989
        %v1991 = vsel %vm1990, %v1983, %v1987
        %v1992 = vand.u32 2147483647, %v1981
        %vm1993 = vcmp.eq.f32.partialorder %v1992, 8.507059e+37
        %v1994 = vand.u32 %v1981, 2147483648
        %v1995 = vor.u32 1.1754944e-38, %v1994
        %v1996 = vsel %vm1993, %v1995, %v1991
        %v1997 = vmul.f32 1.0, %v1996
        %v1998 = vrcp.pop %v1982
        %v1999 = vmul.f32 %v1982, %v1998
        %v2000 = vsub.f32 1.0, %v1999
        %v2001 = vmul.f32 %v1998, %v2000
        %v2002 = vadd.f32 %v1998, %v2001
        %vm2003 = vweird.f32 %v1982
        %vm2004 = vweird.f32 %v1998
        %vm2005 = vmor %vm2003, %vm2004
        %v2006 = vsel %vm2005, %v1998, %v2002
        %v2007 = vand.u32 2147483647, %v1982
        %vm2008 = vcmp.eq.f32.partialorder %v2007, 8.507059e+37
        %v2009 = vand.u32 %v1982, 2147483648
        %v2010 = vor.u32 1.1754944e-38, %v2009
        %v2011 = vsel %vm2008, %v2010, %v2006
        %v2012 = vmul.f32 1.0, %v2011
        %v2013 = vadd.f32 %v1929, %v1400
        %v2014 = vadd.f32 %v1931, %v1400
        %v2015 = vmul.f32 %v1957, %v2013
        %v2016 = vmul.f32 %v1972, %v2014
        %v2017 = vadd.f32 %v1886, %v2015
        %v2018 = vadd.f32 %v1889, %v2016
        %v2019 = vtanh.pop %v2017
        %v2020 = vtanh.pop %v2018
        %v2021 = vsub.f32 1.0, %v1997
        %v2022 = vsub.f32 1.0, %v2012
        %v2023 = vmul.f32 %v2021, %v2019
        %v2024 = vmul.f32 %v2022, %v2020
        %v2025 = vmul.f32 %v1997, %v1874
        %v2026 = vmul.f32 %v2012, %v1875
        %v2027 = vadd.f32 %v2023, %v2025
        %v2028 = vadd.f32 %v2024, %v2026
        %v2029 = vmax.f32 %v2027, 0.0
        %v2030 = vmax.f32 %v2028, 0.0
        %v2031 = vpack.c.bf16 %v2029, %v2029
        %v2032 = vpack.c.bf16 %v2030, %v2030
        %s2033 = scalar_lea.vmem [#allocation3], 32
        %2034 = vst [vmem:[%s2033] sm:$0xf] %v2031
        %2035 = vst [vmem:[%s2033 + $0x4] sm:$0xf] %v2032
        %s2036 = scalar_lea.vmem [#allocation2], 240
        %v2037 = vld [vmem:[%s2036] sm:$0xff]
        %v2038 = vld [vmem:[%s2036 + $0x8] sm:$0xff]
        %v2039 = vld [vmem:[%s2036 + $0x10] sm:$0xff]
        %v2040 = vld [vmem:[%s2036 + $0x18] sm:$0xff]
        %v2041 = vld [vmem:[%s2036 + $0x20] sm:$0xff]
        %v2042 = vld [vmem:[%s2036 + $0x28] sm:$0xff]
        %v2043 = vpack.c.bf16 %v2028, %v2027
        %2044 = vmatpush.bf16.msra.mxu0 %v1250
        %2045 = vmatpush.bf16.msra.mxu0 %v1247
        %2046 = vmatpush.bf16.msra.mxu0 %v1244
        %2047 = vmatpush.bf16.msra.mxu0 %v1241
        %2048 = vmatpush.bf16.msra.mxu0 %v1238
        %2049 = vmatpush.bf16.msra.mxu0 %v1235
        %2050 = vmatpush.bf16.msra.mxu0 %v1232
        %2051 = vmatpush.bf16.msra.mxu0 %v1229
        %2052 = vmatmul.bf16.gmra.mxu0 %v2043
        %v2053 = vpop.f32.mrf.mxu0
        %v2054 = vadd.f32 0.0, %v2053
        %v2055 = vpop.f32.mrf.mxu0
        %v2056 = vadd.f32 0.0, %v2055
        %2057 = vdwg.mxu0
        %2058 = vmatpush.bf16.msra.mxu0 %v1251
        %2059 = vmatpush.bf16.msra.mxu0 %v1248
        %2060 = vmatpush.bf16.msra.mxu0 %v1245
        %2061 = vmatpush.bf16.msra.mxu0 %v1242
        %2062 = vmatpush.bf16.msra.mxu0 %v1239
        %2063 = vmatpush.bf16.msra.mxu0 %v1236
        %2064 = vmatpush.bf16.msra.mxu0 %v1233
        %2065 = vmatpush.bf16.msra.mxu0 %v1230
        %2066 = vmatmul.bf16.gmra.mxu0 %v2043
        %v2067 = vpop.f32.mrf.mxu0
        %v2068 = vadd.f32 0.0, %v2067
        %v2069 = vpop.f32.mrf.mxu0
        %v2070 = vadd.f32 0.0, %v2069
        %2071 = vdwg.mxu0
        %2072 = vmatpush.bf16.msra.mxu0 %v1252
        %2073 = vmatpush.bf16.msra.mxu0 %v1249
        %2074 = vmatpush.bf16.msra.mxu0 %v1246
        %2075 = vmatpush.bf16.msra.mxu0 %v1243
        %2076 = vmatpush.bf16.msra.mxu0 %v1240
        %2077 = vmatpush.bf16.msra.mxu0 %v1237
        %2078 = vmatpush.bf16.msra.mxu0 %v1234
        %2079 = vmatpush.bf16.msra.mxu0 %v1231
        %2080 = vmatmul.bf16.gmra.mxu0 %v2043
        %v2081 = vpop.f32.mrf.mxu0
        %v2082 = vadd.f32 0.0, %v2081
        %v2083 = vpop.f32.mrf.mxu0
        %v2084 = vadd.f32 0.0, %v2083
        %2085 = vdwg.mxu0
        %v2086 = vadd.f32 %v2037, %v2054
        %v2087 = vadd.f32 %v2040, %v2056
        %v2088 = vxor.u32 %v2086, 2147483648
        %v2089 = vxor.u32 %v2087, 2147483648
        %v2090 = vmul.f32 %v2088, 1.442695
        %v2091 = vpow.pop %v2090
        %v2092 = vmul.f32 %v2089, 1.442695
        %v2093 = vpow.pop %v2092
        %v2094 = vadd.f32 %v2091, 1.0
        %v2095 = vadd.f32 %v2093, 1.0
        %v2096 = vrcp.pop %v2094
        %v2097 = vmul.f32 %v2094, %v2096
        %v2098 = vsub.f32 1.0, %v2097
        %v2099 = vmul.f32 %v2096, %v2098
        %v2100 = vadd.f32 %v2096, %v2099
        %vm2101 = vweird.f32 %v2094
        %vm2102 = vweird.f32 %v2096
        %vm2103 = vmor %vm2101, %vm2102
        %v2104 = vsel %vm2103, %v2096, %v2100
        %v2105 = vand.u32 2147483647, %v2094
        %vm2106 = vcmp.eq.f32.partialorder %v2105, 8.507059e+37
        %v2107 = vand.u32 %v2094, 2147483648
        %v2108 = vor.u32 1.1754944e-38, %v2107
        %v2109 = vsel %vm2106, %v2108, %v2104
        %v2110 = vmul.f32 1.0, %v2109
        %v2111 = vrcp.pop %v2095
        %v2112 = vmul.f32 %v2095, %v2111
        %v2113 = vsub.f32 1.0, %v2112
        %v2114 = vmul.f32 %v2111, %v2113
        %v2115 = vadd.f32 %v2111, %v2114
        %vm2116 = vweird.f32 %v2095
        %vm2117 = vweird.f32 %v2111
        %vm2118 = vmor %vm2116, %vm2117
        %v2119 = vsel %vm2118, %v2111, %v2115
        %v2120 = vand.u32 2147483647, %v2095
        %vm2121 = vcmp.eq.f32.partialorder %v2120, 8.507059e+37
        %v2122 = vand.u32 %v2095, 2147483648
        %v2123 = vor.u32 1.1754944e-38, %v2122
        %v2124 = vsel %vm2121, %v2123, %v2119
        %v2125 = vmul.f32 1.0, %v2124
        %v2126 = vadd.f32 %v2038, %v2068
        %v2127 = vadd.f32 %v2041, %v2070
        %v2128 = vxor.u32 %v2126, 2147483648
        %v2129 = vxor.u32 %v2127, 2147483648
        %v2130 = vmul.f32 %v2128, 1.442695
        %v2131 = vpow.pop %v2130
        %v2132 = vmul.f32 %v2129, 1.442695
        %v2133 = vpow.pop %v2132
        %v2134 = vadd.f32 %v2131, 1.0
        %v2135 = vadd.f32 %v2133, 1.0
        %v2136 = vrcp.pop %v2134
        %v2137 = vmul.f32 %v2134, %v2136
        %v2138 = vsub.f32 1.0, %v2137
        %v2139 = vmul.f32 %v2136, %v2138
        %v2140 = vadd.f32 %v2136, %v2139
        %vm2141 = vweird.f32 %v2134
        %vm2142 = vweird.f32 %v2136
        %vm2143 = vmor %vm2141, %vm2142
        %v2144 = vsel %vm2143, %v2136, %v2140
        %v2145 = vand.u32 2147483647, %v2134
        %vm2146 = vcmp.eq.f32.partialorder %v2145, 8.507059e+37
        %v2147 = vand.u32 %v2134, 2147483648
        %v2148 = vor.u32 1.1754944e-38, %v2147
        %v2149 = vsel %vm2146, %v2148, %v2144
        %v2150 = vmul.f32 1.0, %v2149
        %v2151 = vrcp.pop %v2135
        %v2152 = vmul.f32 %v2135, %v2151
        %v2153 = vsub.f32 1.0, %v2152
        %v2154 = vmul.f32 %v2151, %v2153
        %v2155 = vadd.f32 %v2151, %v2154
        %vm2156 = vweird.f32 %v2135
        %vm2157 = vweird.f32 %v2151
        %vm2158 = vmor %vm2156, %vm2157
        %v2159 = vsel %vm2158, %v2151, %v2155
        %v2160 = vand.u32 2147483647, %v2135
        %vm2161 = vcmp.eq.f32.partialorder %v2160, 8.507059e+37
        %v2162 = vand.u32 %v2135, 2147483648
        %v2163 = vor.u32 1.1754944e-38, %v2162
        %v2164 = vsel %vm2161, %v2163, %v2159
        %v2165 = vmul.f32 1.0, %v2164
        %v2166 = vadd.f32 %v2082, %v1400
        %v2167 = vadd.f32 %v2084, %v1400
        %v2168 = vmul.f32 %v2110, %v2166
        %v2169 = vmul.f32 %v2125, %v2167
        %v2170 = vadd.f32 %v2039, %v2168
        %v2171 = vadd.f32 %v2042, %v2169
        %v2172 = vtanh.pop %v2170
        %v2173 = vtanh.pop %v2171
        %v2174 = vsub.f32 1.0, %v2150
        %v2175 = vsub.f32 1.0, %v2165
        %v2176 = vmul.f32 %v2174, %v2172
        %v2177 = vmul.f32 %v2175, %v2173
        %v2178 = vmul.f32 %v2150, %v2027
        %v2179 = vmul.f32 %v2165, %v2028
        %v2180 = vadd.f32 %v2176, %v2178
        %v2181 = vadd.f32 %v2177, %v2179
        %v2182 = vmax.f32 %v2180, 0.0
        %v2183 = vmax.f32 %v2181, 0.0
        %v2184 = vpack.c.bf16 %v2182, %v2182
        %v2185 = vpack.c.bf16 %v2183, %v2183
        %s2186 = scalar_lea.vmem [#allocation3], 40
        %2187 = vst [vmem:[%s2186] sm:$0xf] %v2184
        %2188 = vst [vmem:[%s2186 + $0x4] sm:$0xf] %v2185
        %s2189 = scalar_lea.vmem [#allocation2], 288
        %v2190 = vld [vmem:[%s2189] sm:$0xff]
        %v2191 = vld [vmem:[%s2189 + $0x8] sm:$0xff]
        %v2192 = vld [vmem:[%s2189 + $0x10] sm:$0xff]
        %v2193 = vld [vmem:[%s2189 + $0x18] sm:$0xff]
        %v2194 = vld [vmem:[%s2189 + $0x20] sm:$0xff]
        %v2195 = vld [vmem:[%s2189 + $0x28] sm:$0xff]
        %v2196 = vpack.c.bf16 %v2181, %v2180
        %2197 = vmatpush.bf16.msra.mxu0 %v1250
        %2198 = vmatpush.bf16.msra.mxu0 %v1247
        %2199 = vmatpush.bf16.msra.mxu0 %v1244
        %2200 = vmatpush.bf16.msra.mxu0 %v1241
        %2201 = vmatpush.bf16.msra.mxu0 %v1238
        %2202 = vmatpush.bf16.msra.mxu0 %v1235
        %2203 = vmatpush.bf16.msra.mxu0 %v1232
        %2204 = vmatpush.bf16.msra.mxu0 %v1229
        %2205 = vmatmul.bf16.gmra.mxu0 %v2196
        %v2206 = vpop.f32.mrf.mxu0
        %v2207 = vadd.f32 0.0, %v2206
        %v2208 = vpop.f32.mrf.mxu0
        %v2209 = vadd.f32 0.0, %v2208
        %2210 = vdwg.mxu0
        %2211 = vmatpush.bf16.msra.mxu0 %v1251
        %2212 = vmatpush.bf16.msra.mxu0 %v1248
        %2213 = vmatpush.bf16.msra.mxu0 %v1245
        %2214 = vmatpush.bf16.msra.mxu0 %v1242
        %2215 = vmatpush.bf16.msra.mxu0 %v1239
        %2216 = vmatpush.bf16.msra.mxu0 %v1236
        %2217 = vmatpush.bf16.msra.mxu0 %v1233
        %2218 = vmatpush.bf16.msra.mxu0 %v1230
        %2219 = vmatmul.bf16.gmra.mxu0 %v2196
        %v2220 = vpop.f32.mrf.mxu0
        %v2221 = vadd.f32 0.0, %v2220
        %v2222 = vpop.f32.mrf.mxu0
        %v2223 = vadd.f32 0.0, %v2222
        %2224 = vdwg.mxu0
        %2225 = vmatpush.bf16.msra.mxu0 %v1252
        %2226 = vmatpush.bf16.msra.mxu0 %v1249
        %2227 = vmatpush.bf16.msra.mxu0 %v1246
        %2228 = vmatpush.bf16.msra.mxu0 %v1243
        %2229 = vmatpush.bf16.msra.mxu0 %v1240
        %2230 = vmatpush.bf16.msra.mxu0 %v1237
        %2231 = vmatpush.bf16.msra.mxu0 %v1234
        %2232 = vmatpush.bf16.msra.mxu0 %v1231
        %2233 = vmatmul.bf16.gmra.mxu0 %v2196
        %v2234 = vpop.f32.mrf.mxu0
        %v2235 = vadd.f32 0.0, %v2234
        %v2236 = vpop.f32.mrf.mxu0
        %v2237 = vadd.f32 0.0, %v2236
        %2238 = vdwg.mxu0
        %v2239 = vadd.f32 %v2190, %v2207
        %v2240 = vadd.f32 %v2193, %v2209
        %v2241 = vxor.u32 %v2239, 2147483648
        %v2242 = vxor.u32 %v2240, 2147483648
        %v2243 = vmul.f32 %v2241, 1.442695
        %v2244 = vpow.pop %v2243
        %v2245 = vmul.f32 %v2242, 1.442695
        %v2246 = vpow.pop %v2245
        %v2247 = vadd.f32 %v2244, 1.0
        %v2248 = vadd.f32 %v2246, 1.0
        %v2249 = vrcp.pop %v2247
        %v2250 = vmul.f32 %v2247, %v2249
        %v2251 = vsub.f32 1.0, %v2250
        %v2252 = vmul.f32 %v2249, %v2251
        %v2253 = vadd.f32 %v2249, %v2252
        %vm2254 = vweird.f32 %v2247
        %vm2255 = vweird.f32 %v2249
        %vm2256 = vmor %vm2254, %vm2255
        %v2257 = vsel %vm2256, %v2249, %v2253
        %v2258 = vand.u32 2147483647, %v2247
        %vm2259 = vcmp.eq.f32.partialorder %v2258, 8.507059e+37
        %v2260 = vand.u32 %v2247, 2147483648
        %v2261 = vor.u32 1.1754944e-38, %v2260
        %v2262 = vsel %vm2259, %v2261, %v2257
        %v2263 = vmul.f32 1.0, %v2262
        %v2264 = vrcp.pop %v2248
        %v2265 = vmul.f32 %v2248, %v2264
        %v2266 = vsub.f32 1.0, %v2265
        %v2267 = vmul.f32 %v2264, %v2266
        %v2268 = vadd.f32 %v2264, %v2267
        %vm2269 = vweird.f32 %v2248
        %vm2270 = vweird.f32 %v2264
        %vm2271 = vmor %vm2269, %vm2270
        %v2272 = vsel %vm2271, %v2264, %v2268
        %v2273 = vand.u32 2147483647, %v2248
        %vm2274 = vcmp.eq.f32.partialorder %v2273, 8.507059e+37
        %v2275 = vand.u32 %v2248, 2147483648
        %v2276 = vor.u32 1.1754944e-38, %v2275
        %v2277 = vsel %vm2274, %v2276, %v2272
        %v2278 = vmul.f32 1.0, %v2277
        %v2279 = vadd.f32 %v2191, %v2221
        %v2280 = vadd.f32 %v2194, %v2223
        %v2281 = vxor.u32 %v2279, 2147483648
        %v2282 = vxor.u32 %v2280, 2147483648
        %v2283 = vmul.f32 %v2281, 1.442695
        %v2284 = vpow.pop %v2283
        %v2285 = vmul.f32 %v2282, 1.442695
        %v2286 = vpow.pop %v2285
        %v2287 = vadd.f32 %v2284, 1.0
        %v2288 = vadd.f32 %v2286, 1.0
        %v2289 = vrcp.pop %v2287
        %v2290 = vmul.f32 %v2287, %v2289
        %v2291 = vsub.f32 1.0, %v2290
        %v2292 = vmul.f32 %v2289, %v2291
        %v2293 = vadd.f32 %v2289, %v2292
        %vm2294 = vweird.f32 %v2287
        %vm2295 = vweird.f32 %v2289
        %vm2296 = vmor %vm2294, %vm2295
        %v2297 = vsel %vm2296, %v2289, %v2293
        %v2298 = vand.u32 2147483647, %v2287
        %vm2299 = vcmp.eq.f32.partialorder %v2298, 8.507059e+37
        %v2300 = vand.u32 %v2287, 2147483648
        %v2301 = vor.u32 1.1754944e-38, %v2300
        %v2302 = vsel %vm2299, %v2301, %v2297
        %v2303 = vmul.f32 1.0, %v2302
        %v2304 = vrcp.pop %v2288
        %v2305 = vmul.f32 %v2288, %v2304
        %v2306 = vsub.f32 1.0, %v2305
        %v2307 = vmul.f32 %v2304, %v2306
        %v2308 = vadd.f32 %v2304, %v2307
        %vm2309 = vweird.f32 %v2288
        %vm2310 = vweird.f32 %v2304
        %vm2311 = vmor %vm2309, %vm2310
        %v2312 = vsel %vm2311, %v2304, %v2308
        %v2313 = vand.u32 2147483647, %v2288
        %vm2314 = vcmp.eq.f32.partialorder %v2313, 8.507059e+37
        %v2315 = vand.u32 %v2288, 2147483648
        %v2316 = vor.u32 1.1754944e-38, %v2315
        %v2317 = vsel %vm2314, %v2316, %v2312
        %v2318 = vmul.f32 1.0, %v2317
        %v2319 = vadd.f32 %v2235, %v1400
        %v2320 = vadd.f32 %v2237, %v1400
        %v2321 = vmul.f32 %v2263, %v2319
        %v2322 = vmul.f32 %v2278, %v2320
        %v2323 = vadd.f32 %v2192, %v2321
        %v2324 = vadd.f32 %v2195, %v2322
        %v2325 = vtanh.pop %v2323
        %v2326 = vtanh.pop %v2324
        %v2327 = vsub.f32 1.0, %v2303
        %v2328 = vsub.f32 1.0, %v2318
        %v2329 = vmul.f32 %v2327, %v2325
        %v2330 = vmul.f32 %v2328, %v2326
        %v2331 = vmul.f32 %v2303, %v2180
        %v2332 = vmul.f32 %v2318, %v2181
        %v2333 = vadd.f32 %v2329, %v2331
        %v2334 = vadd.f32 %v2330, %v2332
        %v2335 = vmax.f32 %v2333, 0.0
        %v2336 = vmax.f32 %v2334, 0.0
        %v2337 = vpack.c.bf16 %v2335, %v2335
        %v2338 = vpack.c.bf16 %v2336, %v2336
        %s2339 = scalar_lea.vmem [#allocation3], 48
        %2340 = vst [vmem:[%s2339] sm:$0xf] %v2337
        %2341 = vst [vmem:[%s2339 + $0x4] sm:$0xf] %v2338
        %s2342 = scalar_lea.vmem [#allocation2], 336
        %v2343 = vld [vmem:[%s2342] sm:$0xff]
        %v2344 = vld [vmem:[%s2342 + $0x8] sm:$0xff]
        %v2345 = vld [vmem:[%s2342 + $0x10] sm:$0xff]
        %v2346 = vld [vmem:[%s2342 + $0x18] sm:$0xff]
        %v2347 = vld [vmem:[%s2342 + $0x20] sm:$0xff]
        %v2348 = vld [vmem:[%s2342 + $0x28] sm:$0xff]
        %v2349 = vpack.c.bf16 %v2334, %v2333
        %2350 = vmatpush.bf16.msra.mxu0 %v1250
        %2351 = vmatpush.bf16.msra.mxu0 %v1247
        %2352 = vmatpush.bf16.msra.mxu0 %v1244
        %2353 = vmatpush.bf16.msra.mxu0 %v1241
        %2354 = vmatpush.bf16.msra.mxu0 %v1238
        %2355 = vmatpush.bf16.msra.mxu0 %v1235
        %2356 = vmatpush.bf16.msra.mxu0 %v1232
        %2357 = vmatpush.bf16.msra.mxu0 %v1229
        %2358 = vmatmul.bf16.gmra.mxu0 %v2349
        %v2359 = vpop.f32.mrf.mxu0
        %v2360 = vadd.f32 0.0, %v2359
        %v2361 = vpop.f32.mrf.mxu0
        %v2362 = vadd.f32 0.0, %v2361
        %2363 = vdwg.mxu0
        %2364 = vmatpush.bf16.msra.mxu0 %v1251
        %2365 = vmatpush.bf16.msra.mxu0 %v1248
        %2366 = vmatpush.bf16.msra.mxu0 %v1245
        %2367 = vmatpush.bf16.msra.mxu0 %v1242
        %2368 = vmatpush.bf16.msra.mxu0 %v1239
        %2369 = vmatpush.bf16.msra.mxu0 %v1236
        %2370 = vmatpush.bf16.msra.mxu0 %v1233
        %2371 = vmatpush.bf16.msra.mxu0 %v1230
        %2372 = vmatmul.bf16.gmra.mxu0 %v2349
        %v2373 = vpop.f32.mrf.mxu0
        %v2374 = vadd.f32 0.0, %v2373
        %v2375 = vpop.f32.mrf.mxu0
        %v2376 = vadd.f32 0.0, %v2375
        %2377 = vdwg.mxu0
        %2378 = vmatpush.bf16.msra.mxu0 %v1252
        %2379 = vmatpush.bf16.msra.mxu0 %v1249
        %2380 = vmatpush.bf16.msra.mxu0 %v1246
        %2381 = vmatpush.bf16.msra.mxu0 %v1243
        %2382 = vmatpush.bf16.msra.mxu0 %v1240
        %2383 = vmatpush.bf16.msra.mxu0 %v1237
        %2384 = vmatpush.bf16.msra.mxu0 %v1234
        %2385 = vmatpush.bf16.msra.mxu0 %v1231
        %2386 = vmatmul.bf16.gmra.mxu0 %v2349
        %v2387 = vpop.f32.mrf.mxu0
        %v2388 = vadd.f32 0.0, %v2387
        %v2389 = vpop.f32.mrf.mxu0
        %v2390 = vadd.f32 0.0, %v2389
        %2391 = vdwg.mxu0
        %v2392 = vadd.f32 %v2343, %v2360
        %v2393 = vadd.f32 %v2346, %v2362
        %v2394 = vxor.u32 %v2392, 2147483648
        %v2395 = vxor.u32 %v2393, 2147483648
        %v2396 = vmul.f32 %v2394, 1.442695
        %v2397 = vpow.pop %v2396
        %v2398 = vmul.f32 %v2395, 1.442695
        %v2399 = vpow.pop %v2398
        %v2400 = vadd.f32 %v2397, 1.0
        %v2401 = vadd.f32 %v2399, 1.0
        %v2402 = vrcp.pop %v2400
        %v2403 = vmul.f32 %v2400, %v2402
        %v2404 = vsub.f32 1.0, %v2403
        %v2405 = vmul.f32 %v2402, %v2404
        %v2406 = vadd.f32 %v2402, %v2405
        %vm2407 = vweird.f32 %v2400
        %vm2408 = vweird.f32 %v2402
        %vm2409 = vmor %vm2407, %vm2408
        %v2410 = vsel %vm2409, %v2402, %v2406
        %v2411 = vand.u32 2147483647, %v2400
        %vm2412 = vcmp.eq.f32.partialorder %v2411, 8.507059e+37
        %v2413 = vand.u32 %v2400, 2147483648
        %v2414 = vor.u32 1.1754944e-38, %v2413
        %v2415 = vsel %vm2412, %v2414, %v2410
        %v2416 = vmul.f32 1.0, %v2415
        %v2417 = vrcp.pop %v2401
        %v2418 = vmul.f32 %v2401, %v2417
        %v2419 = vsub.f32 1.0, %v2418
        %v2420 = vmul.f32 %v2417, %v2419
        %v2421 = vadd.f32 %v2417, %v2420
        %vm2422 = vweird.f32 %v2401
        %vm2423 = vweird.f32 %v2417
        %vm2424 = vmor %vm2422, %vm2423
        %v2425 = vsel %vm2424, %v2417, %v2421
        %v2426 = vand.u32 2147483647, %v2401
        %vm2427 = vcmp.eq.f32.partialorder %v2426, 8.507059e+37
        %v2428 = vand.u32 %v2401, 2147483648
        %v2429 = vor.u32 1.1754944e-38, %v2428
        %v2430 = vsel %vm2427, %v2429, %v2425
        %v2431 = vmul.f32 1.0, %v2430
        %v2432 = vadd.f32 %v2344, %v2374
        %v2433 = vadd.f32 %v2347, %v2376
        %v2434 = vxor.u32 %v2432, 2147483648
        %v2435 = vxor.u32 %v2433, 2147483648
        %v2436 = vmul.f32 %v2434, 1.442695
        %v2437 = vpow.pop %v2436
        %v2438 = vmul.f32 %v2435, 1.442695
        %v2439 = vpow.pop %v2438
        %v2440 = vadd.f32 %v2437, 1.0
        %v2441 = vadd.f32 %v2439, 1.0
        %v2442 = vrcp.pop %v2440
        %v2443 = vmul.f32 %v2440, %v2442
        %v2444 = vsub.f32 1.0, %v2443
        %v2445 = vmul.f32 %v2442, %v2444
        %v2446 = vadd.f32 %v2442, %v2445
        %vm2447 = vweird.f32 %v2440
        %vm2448 = vweird.f32 %v2442
        %vm2449 = vmor %vm2447, %vm2448
        %v2450 = vsel %vm2449, %v2442, %v2446
        %v2451 = vand.u32 2147483647, %v2440
        %vm2452 = vcmp.eq.f32.partialorder %v2451, 8.507059e+37
        %v2453 = vand.u32 %v2440, 2147483648
        %v2454 = vor.u32 1.1754944e-38, %v2453
        %v2455 = vsel %vm2452, %v2454, %v2450
        %v2456 = vmul.f32 1.0, %v2455
        %v2457 = vrcp.pop %v2441
        %v2458 = vmul.f32 %v2441, %v2457
        %v2459 = vsub.f32 1.0, %v2458
        %v2460 = vmul.f32 %v2457, %v2459
        %v2461 = vadd.f32 %v2457, %v2460
        %vm2462 = vweird.f32 %v2441
        %vm2463 = vweird.f32 %v2457
        %vm2464 = vmor %vm2462, %vm2463
        %v2465 = vsel %vm2464, %v2457, %v2461
        %v2466 = vand.u32 2147483647, %v2441
        %vm2467 = vcmp.eq.f32.partialorder %v2466, 8.507059e+37
        %v2468 = vand.u32 %v2441, 2147483648
        %v2469 = vor.u32 1.1754944e-38, %v2468
        %v2470 = vsel %vm2467, %v2469, %v2465
        %v2471 = vmul.f32 1.0, %v2470
        %v2472 = vadd.f32 %v2388, %v1400
        %v2473 = vadd.f32 %v2390, %v1400
        %v2474 = vmul.f32 %v2416, %v2472
        %v2475 = vmul.f32 %v2431, %v2473
        %v2476 = vadd.f32 %v2345, %v2474
        %v2477 = vadd.f32 %v2348, %v2475
        %v2478 = vtanh.pop %v2476
        %v2479 = vtanh.pop %v2477
        %v2480 = vsub.f32 1.0, %v2456
        %v2481 = vsub.f32 1.0, %v2471
        %v2482 = vmul.f32 %v2480, %v2478
        %v2483 = vmul.f32 %v2481, %v2479
        %v2484 = vmul.f32 %v2456, %v2333
        %v2485 = vmul.f32 %v2471, %v2334
        %v2486 = vadd.f32 %v2482, %v2484
        %v2487 = vadd.f32 %v2483, %v2485
        %v2488 = vmax.f32 %v2486, 0.0
        %v2489 = vmax.f32 %v2487, 0.0
        %v2490 = vpack.c.bf16 %v2488, %v2488
        %v2491 = vpack.c.bf16 %v2489, %v2489
        %s2492 = scalar_lea.vmem [#allocation3], 56
        %2493 = vst [vmem:[%s2492] sm:$0xf] %v2490
        %2494 = vst [vmem:[%s2492 + $0x4] sm:$0xf] %v2491
        %v2495 = vld [vmem:[#allocation3] sm:$0xf]
        %v2496 = vld [vmem:[#allocation3 + $0x4] sm:$0xf]
        %v2497 = vld [vmem:[#allocation3 + $0x8] sm:$0xf]
        %v2498 = vld [vmem:[#allocation3 + $0xc] sm:$0xf]
        %v2499 = vld [vmem:[#allocation3 + $0x10] sm:$0xf]
        %v2500 = vld [vmem:[#allocation3 + $0x14] sm:$0xf]
        %v2501 = vld [vmem:[#allocation3 + $0x18] sm:$0xf]
        %v2502 = vld [vmem:[#allocation3 + $0x1c] sm:$0xf]
        %v2503 = vld [vmem:[#allocation3 + $0x20] sm:$0xf]
        %v2504 = vld [vmem:[#allocation3 + $0x24] sm:$0xf]
        %v2505 = vld [vmem:[#allocation3 + $0x28] sm:$0xf]
        %v2506 = vld [vmem:[#allocation3 + $0x2c] sm:$0xf]
        %v2507 = vld [vmem:[#allocation3 + $0x30] sm:$0xf]
        %v2508 = vld [vmem:[#allocation3 + $0x34] sm:$0xf]
        %v2509 = vld [vmem:[#allocation3 + $0x38] sm:$0xf]
        %v2510 = vld [vmem:[#allocation3 + $0x3c] sm:$0xf]
        %v2511 = vld [vmem:[#allocation12] sm:$0xff]
        %v2512 = vld [vmem:[#allocation12 + $0x8] sm:$0xff]
        %v2513 = vld [vmem:[#allocation12 + $0x10] sm:$0xff]
        %v2514 = vld [vmem:[#allocation12 + $0x18] sm:$0xff]
        %v2515 = vld [vmem:[#allocation12 + $0x20] sm:$0xff]
        %v2516 = vld [vmem:[#allocation12 + $0x28] sm:$0xff]
        %v2517 = vld [vmem:[#allocation12 + $0x30] sm:$0xff]
        %v2518 = vld [vmem:[#allocation12 + $0x38] sm:$0xff]
        %v2519 = vld [vmem:[#allocation12 + $0x40] sm:$0xff]
        %v2520 = vld [vmem:[#allocation12 + $0x48] sm:$0xff]
        %v2521 = vld [vmem:[#allocation12 + $0x50] sm:$0xff]
        %v2522 = vld [vmem:[#allocation12 + $0x58] sm:$0xff]
        %v2523 = vld [vmem:[#allocation12 + $0x60] sm:$0xff]
        %v2524 = vld [vmem:[#allocation12 + $0x68] sm:$0xff]
        %v2525 = vld [vmem:[#allocation12 + $0x70] sm:$0xff]
        %v2526 = vld [vmem:[#allocation12 + $0x78] sm:$0xff]
        %v2527 = vld [vmem:[%s6] sm:$0x3]
        %v2529 = vperm.slane %v2527, 0
        %v2530 = vperm.slane %v2527, 1
        %v2549 = vunpack.c.l.b16 %v2495
        %v2550 = vunpack.c.l.b16 %v2496
        %v2551 = vunpack.c.l.b16 %v2497
        %v2552 = vunpack.c.l.b16 %v2498
        %v2553 = vunpack.c.l.b16 %v2499
        %v2554 = vunpack.c.l.b16 %v2500
        %v2555 = vunpack.c.l.b16 %v2501
        %v2556 = vunpack.c.l.b16 %v2502
        %v2557 = vunpack.c.l.b16 %v2503
        %v2558 = vunpack.c.l.b16 %v2504
        %v2559 = vunpack.c.l.b16 %v2505
        %v2560 = vunpack.c.l.b16 %v2506
        %v2561 = vunpack.c.l.b16 %v2507
        %v2562 = vunpack.c.l.b16 %v2508
        %v2563 = vunpack.c.l.b16 %v2509
        %v2564 = vunpack.c.l.b16 %v2510
        %v2565 = vpack.c.b16 %v2550, %v2549
        %v2566 = vpack.c.b16 %v2552, %v2551
        %v2567 = vpack.c.b16 %v2554, %v2553
        %v2568 = vpack.c.b16 %v2556, %v2555
        %v2569 = vpack.c.b16 %v2558, %v2557
        %v2570 = vpack.c.b16 %v2560, %v2559
        %v2571 = vpack.c.b16 %v2562, %v2561
        %v2572 = vpack.c.b16 %v2564, %v2563
        %v2597 = vunpack.c.l.b16 %v2511
        %v2598 = vunpack.c.h.b16 %v2511
        %v2599 = vunpack.c.l.b16 %v2512
        %v2600 = vunpack.c.h.b16 %v2512
        %v2601 = vunpack.c.l.b16 %v2513
        %v2602 = vunpack.c.h.b16 %v2513
        %v2603 = vunpack.c.l.b16 %v2514
        %v2604 = vunpack.c.h.b16 %v2514
        %v2605 = vunpack.c.l.b16 %v2515
        %v2606 = vunpack.c.h.b16 %v2515
        %v2607 = vunpack.c.l.b16 %v2516
        %v2608 = vunpack.c.h.b16 %v2516
        %v2609 = vunpack.c.l.b16 %v2517
        %v2610 = vunpack.c.h.b16 %v2517
        %v2611 = vunpack.c.l.b16 %v2518
        %v2612 = vunpack.c.h.b16 %v2518
        %v2613 = vunpack.c.l.b16 %v2519
        %v2614 = vunpack.c.h.b16 %v2519
        %v2615 = vunpack.c.l.b16 %v2520
        %v2616 = vunpack.c.h.b16 %v2520
        %v2617 = vunpack.c.l.b16 %v2521
        %v2618 = vunpack.c.h.b16 %v2521
        %v2619 = vunpack.c.l.b16 %v2522
        %v2620 = vunpack.c.h.b16 %v2522
        %v2621 = vunpack.c.l.b16 %v2523
        %v2622 = vunpack.c.h.b16 %v2523
        %v2623 = vunpack.c.l.b16 %v2524
        %v2624 = vunpack.c.h.b16 %v2524
        %v2625 = vunpack.c.l.b16 %v2525
        %v2626 = vunpack.c.h.b16 %v2525
        %v2627 = vunpack.c.l.b16 %v2526
        %v2628 = vunpack.c.h.b16 %v2526
        %v2629 = vpack.c.b16 %v2599, %v2597
        %v2630 = vpack.c.b16 %v2600, %v2598
        %v2631 = vpack.c.b16 %v2603, %v2601
        %v2632 = vpack.c.b16 %v2604, %v2602
        %v2633 = vpack.c.b16 %v2607, %v2605
        %v2634 = vpack.c.b16 %v2608, %v2606
        %v2635 = vpack.c.b16 %v2611, %v2609
        %v2636 = vpack.c.b16 %v2612, %v2610
        %v2637 = vpack.c.b16 %v2615, %v2613
        %v2638 = vpack.c.b16 %v2616, %v2614
        %v2639 = vpack.c.b16 %v2619, %v2617
        %v2640 = vpack.c.b16 %v2620, %v2618
        %v2641 = vpack.c.b16 %v2623, %v2621
        %v2642 = vpack.c.b16 %v2624, %v2622
        %v2643 = vpack.c.b16 %v2627, %v2625
        %v2644 = vpack.c.b16 %v2628, %v2626
        %2661 = vmatpush.bf16.msra.mxu0 %v2643
        %2662 = vmatpush.bf16.msra.mxu0 %v2641
        %2663 = vmatpush.bf16.msra.mxu0 %v2639
        %2664 = vmatpush.bf16.msra.mxu0 %v2637
        %2665 = vmatpush.bf16.msra.mxu0 %v2635
        %2666 = vmatpush.bf16.msra.mxu0 %v2633
        %2667 = vmatpush.bf16.msra.mxu0 %v2631
        %2668 = vmatpush.bf16.msra.mxu0 %v2629
        %2669 = vmatmul.bf16.gmra.mxu0 %v2565
        %v2670 = vpop.f32.mrf.mxu0
        %v2671 = vadd.f32 %v2529, %v2670
        %v2672 = vpop.f32.mrf.mxu0
        %v2673 = vadd.f32 %v2529, %v2672
        %2674 = vmatmul.bf16.gmra.mxu0 %v2566
        %v2675 = vpop.f32.mrf.mxu0
        %v2676 = vadd.f32 %v2529, %v2675
        %v2677 = vpop.f32.mrf.mxu0
        %v2678 = vadd.f32 %v2529, %v2677
        %2679 = vmatmul.bf16.gmra.mxu0 %v2567
        %v2680 = vpop.f32.mrf.mxu0
        %v2681 = vadd.f32 %v2529, %v2680
        %v2682 = vpop.f32.mrf.mxu0
        %v2683 = vadd.f32 %v2529, %v2682
        %2684 = vmatmul.bf16.gmra.mxu0 %v2568
        %v2685 = vpop.f32.mrf.mxu0
        %v2686 = vadd.f32 %v2529, %v2685
        %v2687 = vpop.f32.mrf.mxu0
        %v2688 = vadd.f32 %v2529, %v2687
        %2689 = vmatmul.bf16.gmra.mxu0 %v2569
        %v2690 = vpop.f32.mrf.mxu0
        %v2691 = vadd.f32 %v2529, %v2690
        %v2692 = vpop.f32.mrf.mxu0
        %v2693 = vadd.f32 %v2529, %v2692
        %2694 = vmatmul.bf16.gmra.mxu0 %v2570
        %v2695 = vpop.f32.mrf.mxu0
        %v2696 = vadd.f32 %v2529, %v2695
        %v2697 = vpop.f32.mrf.mxu0
        %v2698 = vadd.f32 %v2529, %v2697
        %2699 = vmatmul.bf16.gmra.mxu0 %v2571
        %v2700 = vpop.f32.mrf.mxu0
        %v2701 = vadd.f32 %v2529, %v2700
        %v2702 = vpop.f32.mrf.mxu0
        %v2703 = vadd.f32 %v2529, %v2702
        %2704 = vmatmul.bf16.gmra.mxu0 %v2572
        %v2705 = vpop.f32.mrf.mxu0
        %v2706 = vadd.f32 %v2529, %v2705
        %v2707 = vpop.f32.mrf.mxu0
        %v2708 = vadd.f32 %v2529, %v2707
        %2709 = vdwg.mxu0
        %2710 = vmatpush.bf16.msra.mxu0 %v2644
        %2711 = vmatpush.bf16.msra.mxu0 %v2642
        %2712 = vmatpush.bf16.msra.mxu0 %v2640
        %2713 = vmatpush.bf16.msra.mxu0 %v2638
        %2714 = vmatpush.bf16.msra.mxu0 %v2636
        %2715 = vmatpush.bf16.msra.mxu0 %v2634
        %2716 = vmatpush.bf16.msra.mxu0 %v2632
        %2717 = vmatpush.bf16.msra.mxu0 %v2630
        %2718 = vmatmul.bf16.gmra.mxu0 %v2565
        %v2719 = vpop.f32.mrf.mxu0
        %v2720 = vadd.f32 %v2530, %v2719
        %v2721 = vpop.f32.mrf.mxu0
        %v2722 = vadd.f32 %v2530, %v2721
        %2723 = vmatmul.bf16.gmra.mxu0 %v2566
        %v2724 = vpop.f32.mrf.mxu0
        %v2725 = vadd.f32 %v2530, %v2724
        %v2726 = vpop.f32.mrf.mxu0
        %v2727 = vadd.f32 %v2530, %v2726
        %2728 = vmatmul.bf16.gmra.mxu0 %v2567
        %v2729 = vpop.f32.mrf.mxu0
        %v2730 = vadd.f32 %v2530, %v2729
        %v2731 = vpop.f32.mrf.mxu0
        %v2732 = vadd.f32 %v2530, %v2731
        %2733 = vmatmul.bf16.gmra.mxu0 %v2568
        %v2734 = vpop.f32.mrf.mxu0
        %v2735 = vadd.f32 %v2530, %v2734
        %v2736 = vpop.f32.mrf.mxu0
        %v2737 = vadd.f32 %v2530, %v2736
        %2738 = vmatmul.bf16.gmra.mxu0 %v2569
        %v2739 = vpop.f32.mrf.mxu0
        %v2740 = vadd.f32 %v2530, %v2739
        %v2741 = vpop.f32.mrf.mxu0
        %v2742 = vadd.f32 %v2530, %v2741
        %2743 = vmatmul.bf16.gmra.mxu0 %v2570
        %v2744 = vpop.f32.mrf.mxu0
        %v2745 = vadd.f32 %v2530, %v2744
        %v2746 = vpop.f32.mrf.mxu0
        %v2747 = vadd.f32 %v2530, %v2746
        %2748 = vmatmul.bf16.gmra.mxu0 %v2571
        %v2749 = vpop.f32.mrf.mxu0
        %v2750 = vadd.f32 %v2530, %v2749
        %v2751 = vpop.f32.mrf.mxu0
        %v2752 = vadd.f32 %v2530, %v2751
        %2753 = vmatmul.bf16.gmra.mxu0 %v2572
        %v2754 = vpop.f32.mrf.mxu0
        %v2755 = vadd.f32 %v2530, %v2754
        %v2756 = vpop.f32.mrf.mxu0
        %v2757 = vadd.f32 %v2530, %v2756
        %2758 = vdwg.mxu0
        %v2759 = vadd.f32 %v2671, %v392
        %v2760 = vadd.f32 %v2720, %v393
        %v2761 = vadd.f32 %v2673, %v394
        %v2762 = vadd.f32 %v2722, %v395
        %v2763 = vadd.f32 %v2676, %v396
        %v2764 = vadd.f32 %v2725, %v397
        %v2765 = vadd.f32 %v2678, %v398
        %v2766 = vadd.f32 %v2727, %v399
        %v2767 = vadd.f32 %v2681, %v400
        %v2768 = vadd.f32 %v2730, %v401
        %v2769 = vadd.f32 %v2683, %v402
        %v2770 = vadd.f32 %v2732, %v403
        %v2771 = vadd.f32 %v2686, %v404
        %v2772 = vadd.f32 %v2735, %v405
        %v2773 = vadd.f32 %v2688, %v406
        %v2774 = vadd.f32 %v2737, %v407
        %v2775 = vadd.f32 %v2691, %v408
        %v2776 = vadd.f32 %v2740, %v409
        %v2777 = vadd.f32 %v2693, %v410
        %v2778 = vadd.f32 %v2742, %v411
        %v2779 = vadd.f32 %v2696, %v412
        %v2780 = vadd.f32 %v2745, %v413
        %v2781 = vadd.f32 %v2698, %v414
        %v2782 = vadd.f32 %v2747, %v415
        %v2783 = vadd.f32 %v2701, %v416
        %v2784 = vadd.f32 %v2750, %v417
        %v2785 = vadd.f32 %v2703, %v418
        %v2786 = vadd.f32 %v2752, %v419
        %v2787 = vadd.f32 %v2706, %v420
        %v2788 = vadd.f32 %v2755, %v421
        %v2789 = vadd.f32 %v2708, %v422
        %v2790 = vadd.f32 %v2757, %v423
        %2791 = vst [vmem:[%s388] sm:$0xff] %v2759
        %2792 = vst [vmem:[%s388 + $0x8] sm:$0xff] %v2760
        %2793 = vst [vmem:[%s388 + $0x10] sm:$0xff] %v2761
        %2794 = vst [vmem:[%s388 + $0x18] sm:$0xff] %v2762
        %2795 = vst [vmem:[%s388 + $0x20] sm:$0xff] %v2763
        %2796 = vst [vmem:[%s388 + $0x28] sm:$0xff] %v2764
        %2797 = vst [vmem:[%s388 + $0x30] sm:$0xff] %v2765
        %2798 = vst [vmem:[%s388 + $0x38] sm:$0xff] %v2766
        %2799 = vst [vmem:[%s388 + $0x40] sm:$0xff] %v2767
        %2800 = vst [vmem:[%s388 + $0x48] sm:$0xff] %v2768
        %2801 = vst [vmem:[%s388 + $0x50] sm:$0xff] %v2769
        %2802 = vst [vmem:[%s388 + $0x58] sm:$0xff] %v2770
        %2803 = vst [vmem:[%s388 + $0x60] sm:$0xff] %v2771
        %2804 = vst [vmem:[%s388 + $0x68] sm:$0xff] %v2772
        %2805 = vst [vmem:[%s388 + $0x70] sm:$0xff] %v2773
        %2806 = vst [vmem:[%s388 + $0x78] sm:$0xff] %v2774
        %2807 = vst [vmem:[%s388 + $0x80] sm:$0xff] %v2775
        %2808 = vst [vmem:[%s388 + $0x88] sm:$0xff] %v2776
        %2809 = vst [vmem:[%s388 + $0x90] sm:$0xff] %v2777
        %2810 = vst [vmem:[%s388 + $0x98] sm:$0xff] %v2778
        %2811 = vst [vmem:[%s388 + $0xa0] sm:$0xff] %v2779
        %2812 = vst [vmem:[%s388 + $0xa8] sm:$0xff] %v2780
        %2813 = vst [vmem:[%s388 + $0xb0] sm:$0xff] %v2781
        %2814 = vst [vmem:[%s388 + $0xb8] sm:$0xff] %v2782
        %2815 = vst [vmem:[%s388 + $0xc0] sm:$0xff] %v2783
        %2816 = vst [vmem:[%s388 + $0xc8] sm:$0xff] %v2784
        %2817 = vst [vmem:[%s388 + $0xd0] sm:$0xff] %v2785
        %2818 = vst [vmem:[%s388 + $0xd8] sm:$0xff] %v2786
        %2819 = vst [vmem:[%s388 + $0xe0] sm:$0xff] %v2787
        %2820 = vst [vmem:[%s388 + $0xe8] sm:$0xff] %v2788
        %2821 = vst [vmem:[%s388 + $0xf0] sm:$0xff] %v2789
        %2822 = vst [vmem:[%s388 + $0xf8] sm:$0xff] %v2790
        %s2823 = sand.u32 %s186, 1
        %s2824 = scalar_lea.sflag [#allocation6], %s2823
        %s2825 = sand.u32 %s186, 1
        %s2826 = smul.addr %s2825, 256
        %s2827 = scalar_lea.vmem [#allocation13], %s2826
        // Predicated region
        $region69: #{tpu_custom_call.1} parent=47 // pred_check
          %p2828 = pneg %p196
        $region70: #{tpu_custom_call.1} parent=47 // pred_check_branch
          %2830 = sbr.rel (%p2828) target = $region72
        $region71: #{tpu_custom_call.1} parent=47 // pred_region
          #allocation17 [shape = 'u32[6]{0}', space=smem, size = 0x18, scoped, tag = 'DMA stride descriptor']
          %s2831 = smul.u32 2, %s26
          %2833 = vsyncadd %s2824, 0
          %s2834 = smul.addr %s2831, 2
          %s2835 = smul.addr %s2834, 8
          %s2836 = scalar_lea.hbm %s7, %s2835
          %s2838 = sshll.u32 1, 14
          %s2839 = sxor.u32 4294967295, %s2838
          %s2842 = sshll.u32 7, 18
          %s2843 = sxor.u32 4294967295, %s2842
          %s2844 = sand.u32 0, %s2843
          %s2846 = sor.u32 %s2844, 0
          %s2847 = sshll.u32 %s2827, 4
          %s2848 = int_to_ptr.vmem [resolvable:$true] %s2847
          %s2849 = sshll.u32 %s2836, 4
          %s2850 = int_to_ptr.hbm [resolvable:$true] %s2849
          %2856 = sst [smem:[#allocation17]] 512
          %s2857 = scalar_lea.smem [#allocation17], 1
          %2858 = sst [smem:[%s2857]] 1024
          %s2859 = scalar_lea.smem [#allocation17], 2
          %2860 = sst [smem:[%s2859]] 2
          %s2861 = scalar_lea.smem [#allocation17], 3
          %2862 = sst [smem:[%s2861]] 256
          %s2863 = scalar_lea.smem [#allocation17], 4
          %2864 = sst [smem:[%s2863]] 256
          %s2865 = scalar_lea.smem [#allocation17], 5
          %2866 = sst [smem:[%s2865]] 16
          %2868 = dma.general %s2848, 4096, %s2850, %s2824, [#allocation16], [#allocation17], %s2846, 0
        $region72: #{tpu_custom_call.1} parent=47 // pred_fallthru
          _
      $region48: #{tpu_custom_call.1} parent=5 // pred_fallthru
        _
      %p2869 = scmp.le.s32.totalorder 2, %s21
      // Predicated region
      $region73: #{tpu_custom_call.1} parent=5 // pred_check
        %p2870 = pneg %p2869
      $region74: #{tpu_custom_call.1} parent=5 // pred_check_branch
        %2872 = sbr.rel (%p2870) target = $region76
      $region75: #{tpu_custom_call.1} parent=5 // pred_region
        %s2873 = ssub.s32 %s21, 2
        // Predicated region
        $region77: #{tpu_custom_call.1} parent=75 // pred_check
          %p2874 = pneg %p202
        $region78: #{tpu_custom_call.1} parent=75 // pred_check_branch
          %2876 = sbr.rel (%p2874) target = $region80
        $region79: #{tpu_custom_call.1} parent=75 // pred_region
          %s2877 = sand.u32 %s187, 1
          %s2878 = scalar_lea.sflag [#allocation6], %s2877
          %s2879 = sand.u32 %s187, 1
          %s2880 = smul.addr %s2879, 256
          %s2881 = scalar_lea.vmem [#allocation13], %s2880
          %2883 = dma.done %s2878, 4096
        $region80: #{tpu_custom_call.1} parent=75 // pred_fallthru
          _
      $region76: #{tpu_custom_call.1} parent=5 // pred_fallthru
        _
    $region6: #{tpu_custom_call.1} parent=1 // loop_footer
      %s25 = sadd.s32 1, %s21
    $region7: #{tpu_custom_call.1} parent=1 // loop_footer_branch
      %20 = sbr.rel target = $region3
    $region8: #{tpu_custom_call.1} parent=1 // loop_exit
      _
    %2884 = vsyncpa [#allocation5], 1
    %s2885 = scalar_lea.sflag [#allocation5], 1
    %2886 = vsyncpa %s2885, 1
    %2887 = vsyncpa [#allocation8], 1
    %2888 = vsyncpa [#allocation11], 1
    %2889 = vsyncpa [#allocation6], 1
    %s2890 = scalar_lea.sflag [#allocation6], 1
    %2891 = vsyncpa %s2890, 1

</llo_original>
